<compile_context>
chip_gen: v7x
topology: tpu7x:2x2x1
jax: 0.10.0
libtpu: 0.0.40
codegen_flags: <defaults>
</compile_context>

<pallas_src>
import functools

import jax
import jax.numpy as jnp
import numpy as np
from jax.experimental import pallas as pl
from jax.experimental.pallas import tpu as pltpu


# ---------------------------------------------------------------------------
# Hardware-aware configuration
# ---------------------------------------------------------------------------
def _detect_v5e():
    try:
        kind = jax.devices()[0].device_kind.lower()
    except Exception:
        return False
    return ("v5 lite" in kind) or ("v5e" in kind) or ("v5litepod" in kind)


def _vmem_config():
    """(vmem_limit_bytes, per-call block budget) for the current TPU generation."""
    try:
        cap = int(pltpu.get_tpu_info().vmem_capacity_bytes)
        limit = int(cap * 0.75)            # ~96 MiB on v5e/v6e, ~48 MiB on v7x
        return limit, int(limit * 0.70)    # headroom for spills / compiler temps
    except Exception:
        # Unknown generation: keep the default scoped limit, conservative budget.
        return None, 8 * 1024 * 1024


_IS_V5E = _detect_v5e()
_VMEM_LIMIT, _VMEM_BLOCK_BUDGET = _vmem_config()
# Below this (padded) c_in an im2col matmul (K = taps*c_in) beats per-tap
# accumulating dots; on v5e the MXU is already only 128 wide so direct dots win.
_IM2COL_MAX_CIN = 128 if _IS_V5E else 256
_LANE = 128


def _pad_up(x, m):
    return -(-x // m) * m


def _lane_pad(c):
    return _pad_up(c, _LANE)


def _tile_bytes(shape, dtype):
    """Approx VMEM footprint of a block (last dim -> 128 lanes, 2nd-last -> 8 sublanes)."""
    shape = tuple(int(d) for d in shape)
    if len(shape) == 1:
        shape = (1,) + shape
    lead = 1
    for d in shape[:-2]:
        lead *= d
    return lead * _pad_up(shape[-2], 8) * _pad_up(shape[-1], 128) * np.dtype(dtype).itemsize


def _pick_divisor(n, cost_fn, valid_fn, min_steps=1):
    """Largest divisor of n that is valid, fits the VMEM budget and (if possible)
    leaves at least `min_steps` grid steps so multi-TensorCore chips stay busy."""
    divs = [d for d in range(1, n + 1) if n % d == 0 and valid_fn(d)]
    fit = [d for d in divs if cost_fn(d) <= _VMEM_BLOCK_BUDGET]
    if not fit:
        return min(divs)
    multi = [d for d in fit if n // d >= min_steps]
    return max(multi) if multi else max(fit)


def _act_block_spec(block_shape, index_map):
    """Activation-input BlockSpec; on v5e request a 3-deep pipeline to hide HBM latency."""
    if _IS_V5E:
        try:
            return pl.BlockSpec(block_shape, index_map, pipeline_mode=pl.Buffered(3))
        except Exception:
            pass
    return pl.BlockSpec(block_shape, index_map)


def _compiler_params(semantics):
    return pltpu.CompilerParams(dimension_semantics=semantics,
                                vmem_limit_bytes=_VMEM_LIMIT)


# ---------------------------------------------------------------------------
# Pallas kernels
# ---------------------------------------------------------------------------
def _spatial_conv_kernel(*refs, stride, h_in, w_in, h_out, w_out,
                         c_in, c_out, fuse_bn, use_im2col):
    """Conv3d (1,3,3), stride (1,s,s), pad (0,1,1) on a block of F frames.

    Optional fused prologue (fuse_bn): x = relu(x*scale + bias) with the previous
    layer's batch statistics, applied before the zero halo is built (matching
    zero padding applied after bn+relu in the reference network).
    """
    if fuse_bn:
        x_ref, scale_ref, bias_ref, w_ref, b_ref, y_ref, st_ref = refs[:7]
        scratch = refs[7:]
    else:
        x_ref, w_ref, b_ref, y_ref, st_ref = refs[:5]
        scratch = refs[5:]
    if use_im2col:
        xpad_ref, col_ref = scratch
    else:
        (xpad_ref,) = scratch

    x = x_ref[...]                                   # (F, H, W, C_in)
    f = x.shape[0]
    if fuse_bn:
        x = jnp.maximum(x.astype(jnp.float32) * scale_ref[...] + bias_ref[...],
                        0.0).astype(x_ref.dtype)

    # Build the zero halo in VMEM.  Re-zeroed every step: the scratch is
    # per-TensorCore, so "zero only at grid step 0" would be wrong under megacore.
    zrow = jnp.zeros((f, 1, w_in + 2, c_in), xpad_ref.dtype)
    zcol = jnp.zeros((f, h_in, 1, c_in), xpad_ref.dtype)
    xpad_ref[:, 0:1, :, :] = zrow
    xpad_ref[:, h_in + 1:h_in + 2, :, :] = zrow
    xpad_ref[:, 1:h_in + 1, 0:1, :] = zcol
    xpad_ref[:, 1:h_in + 1, w_in + 1:w_in + 2, :] = zcol
    xpad_ref[:, 1:h_in + 1, 1:w_in + 1, :] = x

    m = f * h_out * w_out

    if stride == 1:
        def tap(dy, dx):
            return xpad_ref[:, dy:dy + h_out, dx:dx + w_out, :].reshape(m, c_in)
    else:
        xp = xpad_ref[...]

        def tap(dy, dx):
            return jax.lax.slice(
                xp, (0, dy, dx, 0),
                (f, dy + (h_out - 1) * stride + 1, dx + (w_out - 1) * stride + 1, c_in),
                (1, stride, stride, 1)).reshape(m, c_in)

    taps = [(dy, dx) for dy in range(3) for dx in range(3)]
    if use_im2col:
        # One MXU matmul with K = 9*c_in; every col store is a 128-aligned lane-dense slab.
        for k, (dy, dx) in enumerate(taps):
            col_ref[:, k * c_in:(k + 1) * c_in] = tap(dy, dx)
        acc = jnp.dot(col_ref[...], w_ref[...], preferred_element_type=jnp.float32)
    else:
        # c_in is already MXU-sized: accumulate 9 dots, no im2col VMEM traffic.
        acc = jnp.zeros((m, c_out), jnp.float32)
        for k, (dy, dx) in enumerate(taps):
            acc = acc + jnp.dot(tap(dy, dx), w_ref[k * c_in:(k + 1) * c_in, :],
                                preferred_element_type=jnp.float32)

    acc = acc + b_ref[...]
    y_ref[...] = acc.astype(y_ref.dtype)
    # per-channel partial [sum, sum_sq] for the next BatchNorm, written in one store.
    st_ref[...] = jnp.concatenate(
        [jnp.sum(acc, axis=0, keepdims=True),
         jnp.sum(acc * acc, axis=0, keepdims=True)], axis=0)


def _temporal_conv_kernel(*refs, stride, t_in, t_out, c_in, c_out, fuse_bn, use_im2col):
    """Conv3d (3,1,1), stride (ts,1,1), pad (1,0,0) on one (T, HW_tile, C_in) slab."""
    if fuse_bn:
        x_ref, scale_ref, bias_ref, w_ref, b_ref, y_ref, st_ref = refs[:7]
        scratch = refs[7:]
    else:
        x_ref, w_ref, b_ref, y_ref, st_ref = refs[:5]
        scratch = refs[5:]
    if use_im2col:
        xpad_ref, col_ref = scratch
    else:
        (xpad_ref,) = scratch

    x = x_ref[...]                                   # (T, HW_tile, C_in)
    hw = x.shape[1]
    if fuse_bn:
        x = jnp.maximum(x.astype(jnp.float32) * scale_ref[...] + bias_ref[...],
                        0.0).astype(x_ref.dtype)

    z = jnp.zeros((1, hw, c_in), xpad_ref.dtype)
    xpad_ref[0:1] = z
    xpad_ref[t_in + 1:t_in + 2] = z
    xpad_ref[1:t_in + 1] = x

    m = t_out * hw
    if stride == 1:
        def tap(dt):
            return xpad_ref[dt:dt + t_out].reshape(m, c_in)
    else:
        xp = xpad_ref[...]

        def tap(dt):
            return jax.lax.slice(xp, (dt, 0, 0),
                                 (dt + (t_out - 1) * stride + 1, hw, c_in),
                                 (stride, 1, 1)).reshape(m, c_in)

    if use_im2col:
        for dt in range(3):
            col_ref[:, dt * c_in:(dt + 1) * c_in] = tap(dt)
        acc = jnp.dot(col_ref[...], w_ref[...], preferred_element_type=jnp.float32)
    else:
        acc = jnp.zeros((m, c_out), jnp.float32)
        for dt in range(3):
            acc = acc + jnp.dot(tap(dt), w_ref[dt * c_in:(dt + 1) * c_in, :],
                                preferred_element_type=jnp.float32)

    acc = acc + b_ref[...]
    y_ref[...] = acc.reshape(t_out, hw, c_out).astype(y_ref.dtype)
    st_ref[...] = jnp.concatenate(
        [jnp.sum(acc, axis=0, keepdims=True),
         jnp.sum(acc * acc, axis=0, keepdims=True)], axis=0)


def _bn_add_relu_kernel(y_ref, res_ref, scale_ref, bias_ref, o_ref):
    y = y_ref[...].astype(jnp.float32)
    r = res_ref[...].astype(jnp.float32)
    o_ref[...] = jnp.maximum(y * scale_ref[...] + bias_ref[...] + r, 0.0).astype(o_ref.dtype)


# ---------------------------------------------------------------------------
# Pallas wrappers
# ---------------------------------------------------------------------------
def spatial_conv(x, w2, b2, stride, bn, compute_dtype):
    """x: (NT, H, W, Cp_in) channel-lane-padded, spatially UNPADDED.
    w2: (9*Cp_in, Cp_out) compute_dtype, b2: (1, Cp_out) f32.
    bn: None or (scale, bias) over Cp_in (fused relu(x*scale+bias) prologue).
    Returns y: (NT*H_out*W_out, Cp_out) and stats (2, Cp_out) = [sum, sum_sq]."""
    nt, h, w_dim, c_in = x.shape
    c_out = w2.shape[-1]
    h_out = (h - 1) // stride + 1
    w_out = (w_dim - 1) // stride + 1
    use_im2col = c_in < _IM2COL_MAX_CIN
    fuse_bn = bn is not None

    # TODO(synk): for very large H*W planes add an H-row tiling (1-row halo) so
    # the per-step halo/col scratch stays bounded; frame tiling suffices here.
    def cost(f):
        m = f * h_out * w_out
        c = 2 * _tile_bytes((f, h, w_dim, c_in), compute_dtype)          # input blocks
        c += _tile_bytes((f, h + 2, w_dim + 2, c_in), compute_dtype)     # halo scratch
        if use_im2col:
            c += _tile_bytes((m, 9 * c_in), compute_dtype)               # col scratch
        c += 2 * _tile_bytes((m, c_out), jnp.float32)                    # acc + acc*acc
        c += 2 * _tile_bytes((m, c_out), compute_dtype)                  # y out blocks
        c += 2 * _tile_bytes((9 * c_in, c_out), compute_dtype)           # weights
        return c

    f = _pick_divisor(nt, cost,
                      lambda d: (d * h_out * w_out) % 8 == 0 or d == nt,
                      min_steps=2)
    g = nt // f
    m = f * h_out * w_out

    kernel = functools.partial(_spatial_conv_kernel, stride=stride, h_in=h, w_in=w_dim,
                               h_out=h_out, w_out=w_out, c_in=c_in, c_out=c_out,
                               fuse_bn=fuse_bn, use_im2col=use_im2col)

    in_specs = [_act_block_spec((f, h, w_dim, c_in), lambda i: (i, 0, 0, 0))]
    inputs = [x]
    if fuse_bn:
        scale, bias = bn
        for v in (scale, bias):
            in_specs.append(pl.BlockSpec((1, c_in), lambda i: (0, 0)))
            inputs.append(v.reshape(1, c_in).astype(jnp.float32))
    in_specs += [pl.BlockSpec((9 * c_in, c_out), lambda i: (0, 0)),
                 pl.BlockSpec((1, c_out), lambda i: (0, 0))]
    inputs += [w2, b2]

    scratch = [pltpu.VMEM((f, h + 2, w_dim + 2, c_in), compute_dtype)]
    if use_im2col:
        scratch.append(pltpu.VMEM((m, 9 * c_in), compute_dtype))

    y, stats = pl.pallas_call(
        kernel,
        grid=(g,),
        in_specs=in_specs,
        out_specs=(pl.BlockSpec((m, c_out), lambda i: (i, 0)),
                   pl.BlockSpec((None, 2, c_out), lambda i: (i, 0, 0))),
        out_shape=(jax.ShapeDtypeStruct((nt * h_out * w_out, c_out), compute_dtype),
                   jax.ShapeDtypeStruct((g, 2, c_out), jnp.float32)),
        scratch_shapes=scratch,
        compiler_params=_compiler_params(("parallel",)),
    )(*inputs)
    return y, jnp.sum(stats, axis=0)


def temporal_conv(x, w2, b2, stride, bn, compute_dtype):
    """x: (N, T, HW, Cp_in) unpadded temporally.  Returns y: (N, T_out, HW, Cp_out)
    and stats (2, Cp_out)."""
    n, t, hw, c_in = x.shape
    c_out = w2.shape[-1]
    t_out = (t - 1) // stride + 1
    use_im2col = c_in < _IM2COL_MAX_CIN
    fuse_bn = bn is not None

    def cost(d):
        m = t_out * d
        c = 2 * _tile_bytes((t, d, c_in), compute_dtype)
        c += _tile_bytes((t + 2, d, c_in), compute_dtype)
        if use_im2col:
            c += _tile_bytes((m, 3 * c_in), compute_dtype)
        c += 2 * _tile_bytes((m, c_out), jnp.float32)
        c += 2 * _tile_bytes((t_out, d, c_out), compute_dtype)
        c += 2 * _tile_bytes((3 * c_in, c_out), compute_dtype)
        return c

    min_hw_steps = 2 if n < 2 else 1
    tile_hw = _pick_divisor(hw, cost, lambda d: d % 8 == 0 or d == hw,
                            min_steps=min_hw_steps)
    n_hw = hw // tile_hw
    m = t_out * tile_hw

    kernel = functools.partial(_temporal_conv_kernel, stride=stride, t_in=t, t_out=t_out,
                               c_in=c_in, c_out=c_out, fuse_bn=fuse_bn,
                               use_im2col=use_im2col)

    in_specs = [_act_block_spec((None, t, tile_hw, c_in), lambda i, j: (i, 0, j, 0))]
    inputs = [x]
    if fuse_bn:
        scale, bias = bn
        for v in (scale, bias):
            in_specs.append(pl.BlockSpec((1, c_in), lambda i, j: (0, 0)))
            inputs.append(v.reshape(1, c_in).astype(jnp.float32))
    in_specs += [pl.BlockSpec((3 * c_in, c_out), lambda i, j: (0, 0)),
                 pl.BlockSpec((1, c_out), lambda i, j: (0, 0))]
    inputs += [w2, b2]

    scratch = [pltpu.VMEM((t + 2, tile_hw, c_in), compute_dtype)]
    if use_im2col:
        scratch.append(pltpu.VMEM((m, 3 * c_in), compute_dtype))

    y, stats = pl.pallas_call(
        kernel,
        grid=(n, n_hw),
        in_specs=in_specs,
        out_specs=(pl.BlockSpec((None, t_out, tile_hw, c_out), lambda i, j: (i, 0, j, 0)),
                   pl.BlockSpec((None, None, 2, c_out), lambda i, j: (i, j, 0, 0))),
        out_shape=(jax.ShapeDtypeStruct((n, t_out, hw, c_out), compute_dtype),
                   jax.ShapeDtypeStruct((n, n_hw, 2, c_out), jnp.float32)),
        scratch_shapes=scratch,
        compiler_params=_compiler_params(("parallel", "parallel")),
    )(*inputs)
    return y, jnp.sum(stats, axis=(0, 1))


def bn_add_relu(y, residual, scale, bias, out_dtype):
    """Final bn2_2 + residual add + ReLU.  y/residual: (rows, Cp) lane-padded,
    both in compute_dtype (residual read stays narrow); output in out_dtype."""
    rows, c = y.shape

    def cost_rc(r, ct):
        return (2 * _tile_bytes((r, ct), y.dtype)
                + 2 * _tile_bytes((r, ct), residual.dtype)
                + 2 * _tile_bytes((r, ct), out_dtype)
                + 2 * _tile_bytes((1, ct), jnp.float32))

    # channel tile: largest 128-multiple divisor of c that fits with a minimal row block.
    c_divs = [d for d in range(_LANE, c + 1, _LANE) if c % d == 0]
    c_fit = [d for d in c_divs if cost_rc(8, d) <= _VMEM_BLOCK_BUDGET]
    c_tile = max(c_fit) if c_fit else min(c_divs)
    min_r_steps = 2 if (c // c_tile) < 2 else 1
    r_tile = _pick_divisor(rows, lambda r: cost_rc(r, c_tile),
                           lambda r: r % 8 == 0 or r == rows,
                           min_steps=min_r_steps)

    return pl.pallas_call(
        _bn_add_relu_kernel,
        grid=(rows // r_tile, c // c_tile),
        in_specs=[pl.BlockSpec((r_tile, c_tile), lambda i, j: (i, j)),
                  pl.BlockSpec((r_tile, c_tile), lambda i, j: (i, j)),
                  pl.BlockSpec((1, c_tile), lambda i, j: (0, j)),
                  pl.BlockSpec((1, c_tile), lambda i, j: (0, j))],
        out_specs=pl.BlockSpec((r_tile, c_tile), lambda i, j: (i, j)),
        out_shape=jax.ShapeDtypeStruct((rows, c), out_dtype),
        compiler_params=_compiler_params(("parallel", "parallel")),
    )(y, residual, scale.reshape(1, c).astype(jnp.float32),
      bias.reshape(1, c).astype(jnp.float32))


# ---------------------------------------------------------------------------
# Parameter padding / BN finalize helpers
# ---------------------------------------------------------------------------
def _pad_vec(v, cp):
    return jnp.pad(v.astype(jnp.float32), (0, cp - v.shape[0]))


def _pad_spatial_w(w, cpi, cpo, dtype):
    # (3, 3, Ci, Co) -> (9*Cp_i, Cp_o), zero rows/cols for padded channels.
    wp = jnp.pad(w, ((0, 0), (0, 0), (0, cpi - w.shape[2]), (0, cpo - w.shape[3])))
    return wp.reshape(9 * cpi, cpo).astype(dtype)


def _pad_temporal_w(w, cpi, cpo, dtype):
    # (3, Ci, Co) -> (3*Cp_i, Cp_o)
    wp = jnp.pad(w, ((0, 0), (0, cpi - w.shape[1]), (0, cpo - w.shape[2])))
    return wp.reshape(3 * cpi, cpo).astype(dtype)


def _finalize_bn(stats, count, gamma, beta, eps=1e-5):
    """Training-mode BN from fused [sum, sum_sq] (biased var), folded into a single
    fused multiply-add: y = x*scale + bias."""
    mean = stats[0] / count
    var = jnp.maximum(stats[1] / count - mean * mean, 0.0)
    scale = gamma * jax.lax.rsqrt(var + eps)
    bias = beta - mean * scale
    return scale, bias


# ---------------------------------------------------------------------------
# Block21d forward
# ---------------------------------------------------------------------------
def block21d_forward(x_ncdhw, p, s_stride=1, t_stride=1,
                     compute_dtype=jnp.bfloat16, eps=1e-5):
    n, c0, t, h, w = x_ncdhw.shape
    m1 = p["w1_1"].shape[-1]
    c1 = p["w1_2"].shape[-1]
    m2 = p["w2_1"].shape[-1]
    c2 = p["w2_2"].shape[-1]
    cp0, cpm1, cp1, cpm2, cp2 = (_lane_pad(c) for c in (c0, m1, c1, m2, c2))

    h1 = (h - 1) // s_stride + 1
    w1 = (w - 1) // s_stride + 1
    t1 = (t - 1) // t_stride + 1

    # NCDHW -> NTHWC, lane-pad channels with zeros, cast once to compute dtype.
    x = jnp.transpose(x_ncdhw, (0, 2, 3, 4, 1))
    x = jnp.pad(x, ((0, 0), (0, 0), (0, 0), (0, 0), (0, cp0 - c0))).astype(compute_dtype)
    residual = x        # narrow (compute_dtype) residual stream for the final kernel

    w11 = _pad_spatial_w(p["w1_1"], cp0, cpm1, compute_dtype)
    b11 = _pad_vec(p["b1_1"], cpm1).reshape(1, cpm1)
    w12 = _pad_temporal_w(p["w1_2"], cpm1, cp1, compute_dtype)
    b12 = _pad_vec(p["b1_2"], cp1).reshape(1, cp1)
    w21 = _pad_spatial_w(p["w2_1"], cp1, cpm2, compute_dtype)
    b21 = _pad_vec(p["b2_1"], cpm2).reshape(1, cpm2)
    w22 = _pad_temporal_w(p["w2_2"], cpm2, cp2, compute_dtype)
    b22 = _pad_vec(p["b2_2"], cp2).reshape(1, cp2)

    # conv1_1 (1,3,3); its BN+ReLU is fused into conv1_2's prologue.
    y1, st1 = spatial_conv(x.reshape(n * t, h, w, cp0), w11, b11,
                           s_stride, None, compute_dtype)
    s1, bi1 = _finalize_bn(st1, n * t * h1 * w1,
                           _pad_vec(p["g1_1"], cpm1), _pad_vec(p["be1_1"], cpm1), eps)

    # conv1_2 (3,1,1) with fused bn1_1 + ReLU prologue.
    y2, st2 = temporal_conv(y1.reshape(n, t, h1 * w1, cpm1), w12, b12,
                            t_stride, (s1, bi1), compute_dtype)
    s2, bi2 = _finalize_bn(st2, n * t1 * h1 * w1,
                           _pad_vec(p["g1_2"], cp1), _pad_vec(p["be1_2"], cp1), eps)

    # conv2_1 (1,3,3) with fused bn1_2 + ReLU prologue.
    y3, st3 = spatial_conv(y2.reshape(n * t1, h1, w1, cp1), w21, b21,
                           1, (s2, bi2), compute_dtype)
    s3, bi3 = _finalize_bn(st3, n * t1 * h1 * w1,
                           _pad_vec(p["g2_1"], cpm2), _pad_vec(p["be2_1"], cpm2), eps)

    # conv2_2 (3,1,1) with fused bn2_1 + ReLU prologue.
    y4, st4 = temporal_conv(y3.reshape(n, t1, h1 * w1, cpm2), w22, b22,
                            1, (s3, bi3), compute_dtype)
    s4, bi4 = _finalize_bn(st4, n * t1 * h1 * w1,
                           _pad_vec(p["g2_2"], cp2), _pad_vec(p["be2_2"], cp2), eps)

    # final bn2_2 + residual add + ReLU (lane-dense over padded channels).
    # TODO(synk): downsample branch not implemented (module is used with
    # downsample=None); the residual add therefore requires s_stride == t_stride == 1
    # and c2 == c0.
    out = bn_add_relu(y4.reshape(n * t1 * h1 * w1, cp2),
                      residual.reshape(n * t * h * w, cp0),
                      s4, bi4, x_ncdhw.dtype)
    out = out.reshape(n, t1, h1, w1, cp2)[..., :c2]
    return jnp.transpose(out, (0, 4, 1, 2, 3))  # NTHWC -> NCDHW


def init_params(key, in_channels, out_channels):
    m1 = int(in_channels * out_channels * 27 / (in_channels * 9 + out_channels * 3))
    m2 = int(out_channels * out_channels * 27 / (out_channels * 9 + out_channels * 3))
    ks = jax.random.split(key, 16)
    nrm = jax.random.normal
    return {
        # conv weights stored channels-last: spatial (3,3,Cin,Cout), temporal (3,Cin,Cout)
        "w1_1": 0.2 * nrm(ks[0], (3, 3, in_channels, m1), jnp.float32),
        "b1_1": 0.1 * nrm(ks[1], (m1,), jnp.float32),
        "w1_2": 0.2 * nrm(ks[2], (3, m1, out_channels), jnp.float32),
        "b1_2": 0.1 * nrm(ks[3], (out_channels,), jnp.float32),
        "w2_1": 0.2 * nrm(ks[4], (3, 3, out_channels, m2), jnp.float32),
        "b2_1": 0.1 * nrm(ks[5], (m2,), jnp.float32),
        "w2_2": 0.2 * nrm(ks[6], (3, m2, out_channels), jnp.float32),
        "b2_2": 0.1 * nrm(ks[7], (out_channels,), jnp.float32),
        "g1_1": 1.0 + 0.1 * nrm(ks[8], (m1,), jnp.float32),
        "be1_1": 0.1 * nrm(ks[9], (m1,), jnp.float32),
        "g1_2": 1.0 + 0.1 * nrm(ks[10], (out_channels,), jnp.float32),
        "be1_2": 0.1 * nrm(ks[11], (out_channels,), jnp.float32),
        "g2_1": 1.0 + 0.1 * nrm(ks[12], (m2,), jnp.float32),
        "be2_1": 0.1 * nrm(ks[13], (m2,), jnp.float32),
        "g2_2": 1.0 + 0.1 * nrm(ks[14], (out_channels,), jnp.float32),
        "be2_2": 0.1 * nrm(ks[15], (out_channels,), jnp.float32),
    }


# ---------------------------------------------------------------------------
# Pure-JAX reference (numerical verification)
# ---------------------------------------------------------------------------
def _ref_conv3d(x, w, b, strides, padding):
    dn = jax.lax.conv_dimension_numbers(x.shape, w.shape, ("NDHWC", "DHWIO", "NDHWC"))
    y = jax.lax.conv_general_dilated(x, w, strides, padding, dimension_numbers=dn,
                                     precision=jax.lax.Precision.HIGHEST)
    return y + b


def _ref_bn(x, gamma, beta, eps=1e-5):
    mean = jnp.mean(x, axis=(0, 1, 2, 3), keepdims=True)
    var = jnp.mean(jnp.square(x - mean), axis=(0, 1, 2, 3), keepdims=True)
    return (x - mean) * jax.lax.rsqrt(var + eps) * gamma + beta


def ref_forward(x_ncdhw, p, s_stride=1, t_stride=1):
    x = jnp.transpose(x_ncdhw, (0, 2, 3, 4, 1))
    residual = x
    out = _ref_conv3d(x, p["w1_1"][None], p["b1_1"],
                      (1, s_stride, s_stride), [(0, 0), (1, 1), (1, 1)])
    out = jax.nn.relu(_ref_bn(out, p["g1_1"], p["be1_1"]))
    out = _ref_conv3d(out, p["w1_2"][:, None, None], p["b1_2"],
                      (t_stride, 1, 1), [(1, 1), (0, 0), (0, 0)])
    out = jax.nn.relu(_ref_bn(out, p["g1_2"], p["be1_2"]))
    out = _ref_conv3d(out, p["w2_1"][None], p["b2_1"],
                      (1, 1, 1), [(0, 0), (1, 1), (1, 1)])
    out = jax.nn.relu(_ref_bn(out, p["g2_1"], p["be2_1"]))
    out = _ref_conv3d(out, p["w2_2"][:, None, None], p["b2_2"],
                      (1, 1, 1), [(1, 1), (0, 0), (0, 0)])
    out = jax.nn.relu(_ref_bn(out, p["g2_2"], p["be2_2"]) + residual)
    return jnp.transpose(out, (0, 4, 1, 2, 3))


if __name__ == "__main__":
    k1, k2, k3, k4 = jax.random.split(jax.random.PRNGKey(0), 4)

    fwd_f32 = jax.jit(functools.partial(block21d_forward, compute_dtype=jnp.float32))
    fwd_bf16 = jax.jit(functools.partial(block21d_forward, compute_dtype=jnp.bfloat16))

    # --- config 1: tiny channels (exercises the lane-aligned im2col conv path) ---
    in_channels = out_channels = 4
    N, T, H, W = 2, 4, 8, 8
    x = jax.random.normal(k1, (N, in_channels, T, H, W), jnp.float32)  # NCDHW
    params = init_params(k2, in_channels, out_channels)

    ref = jax.block_until_ready(ref_forward(x, params))

    out_f32 = jax.block_until_ready(fwd_f32(x, params))
    assert out_f32.shape == (N, out_channels, T, H, W)
    np.testing.assert_allclose(np.asarray(out_f32), np.asarray(ref), rtol=5e-3, atol=5e-3)

    out_bf16 = jax.block_until_ready(fwd_bf16(x, params))
    np.testing.assert_allclose(np.asarray(out_bf16), np.asarray(ref), rtol=5e-2, atol=5e-2)

    # --- config 2: wide channels (exercises the direct accumulating-dot conv path) ---
    in2 = out2 = 192
    N2, T2, H2, W2 = 1, 2, 4, 4
    x2 = jax.random.normal(k3, (N2, in2, T2, H2, W2), jnp.float32)
    params2 = init_params(k4, in2, out2)

    ref2 = jax.block_until_ready(ref_forward(x2, params2))
    out2_f32 = jax.block_until_ready(fwd_f32(x2, params2))
    assert out2_f32.shape == (N2, out2, T2, H2, W2)
    np.testing.assert_allclose(np.asarray(out2_f32), np.asarray(ref2), rtol=5e-2, atol=5e-2)

    print("KERNEL_OK")
</pallas_src>

<mosaic_0001>
module attributes {stable_mosaic.version = 11 : i64} {
  func.func @_spatial_conv_kernel(%arg0: i32, %arg1: memref<4x8x8x128xf32, #tpu.memory_space<vmem>>, %arg2: memref<1152x128xf32, #tpu.memory_space<vmem>>, %arg3: memref<1x128xf32, #tpu.memory_space<vmem>>, %arg4: memref<256x128xf32, #tpu.memory_space<vmem>>, %arg5: memref<1x2x128xf32, #tpu.memory_space<vmem>>, %arg6: memref<4x10x10x128xf32, #tpu.memory_space<vmem>>, %arg7: memref<256x1152xf32, #tpu.memory_space<vmem>>) attributes {dimension_semantics = [#tpu.dimension_semantics<parallel>], iteration_bounds = array<i64: 2>, scalar_prefetch = 0 : i64, scratch_operands = 2 : i64, tpu.core_type = #tpu.core_type<tc>, window_params = [{transform_indices = @transform_0, window_bounds = array<i64: 4, 8, 8, 128>}, {pipeline_mode = #tpu.pipeline_mode<synchronous>, transform_indices = @transform_1, window_bounds = array<i64: 1152, 128>}, {pipeline_mode = #tpu.pipeline_mode<synchronous>, transform_indices = @transform_2, window_bounds = array<i64: 1, 128>}, {transform_indices = @transform_3, window_bounds = array<i64: 256, 128>}, {transform_indices = @transform_4, window_bounds = array<i64: 1, 2, 128>}]} {
    %c0 = arith.constant 0 : index
    %c0_0 = arith.constant 0 : index
    %c0_1 = arith.constant 0 : index
    %c0_2 = arith.constant 0 : index
    %0 = vector.load %arg1[%c0, %c0_0, %c0_1, %c0_2] : memref<4x8x8x128xf32, #tpu.memory_space<vmem>>, vector<4x8x8x128xf32>
    %cst = arith.constant 0.000000e+00 : f32
    %1 = vector.broadcast %cst : f32 to vector<4x1x10x128xf32>
    %cst_3 = arith.constant 0.000000e+00 : f32
    %2 = vector.broadcast %cst_3 : f32 to vector<4x8x1x128xf32>
    %c0_4 = arith.constant 0 : index
    %c0_5 = arith.constant 0 : index
    %c0_6 = arith.constant 0 : index
    %c0_7 = arith.constant 0 : index
    %3 = vector.load %arg6[%c0_4, %c0_5, %c0_6, %c0_7] : memref<4x10x10x128xf32, #tpu.memory_space<vmem>>, vector<4x1x10x128xf32>
    tpu.vector_store %arg6[%c0_4, %c0_5, %c0_6, %c0_7], %1 {strides = array<i32>} : memref<4x10x10x128xf32, #tpu.memory_space<vmem>>, vector<4x1x10x128xf32>,
    %c0_8 = arith.constant 0 : index
    %c9 = arith.constant 9 : index
    %c0_9 = arith.constant 0 : index
    %c0_10 = arith.constant 0 : index
    %4 = vector.load %arg6[%c0_8, %c9, %c0_9, %c0_10] : memref<4x10x10x128xf32, #tpu.memory_space<vmem>>, vector<4x1x10x128xf32>
    tpu.vector_store %arg6[%c0_8, %c9, %c0_9, %c0_10], %1 {strides = array<i32>} : memref<4x10x10x128xf32, #tpu.memory_space<vmem>>, vector<4x1x10x128xf32>,
    %c0_11 = arith.constant 0 : index
    %c1 = arith.constant 1 : index
    %c0_12 = arith.constant 0 : index
    %c0_13 = arith.constant 0 : index
    %5 = vector.load %arg6[%c0_11, %c1, %c0_12, %c0_13] : memref<4x10x10x128xf32, #tpu.memory_space<vmem>>, vector<4x8x1x128xf32>
    tpu.vector_store %arg6[%c0_11, %c1, %c0_12, %c0_13], %2 {strides = array<i32>} : memref<4x10x10x128xf32, #tpu.memory_space<vmem>>, vector<4x8x1x128xf32>,
    %c0_14 = arith.constant 0 : index
    %c1_15 = arith.constant 1 : index
    %c9_16 = arith.constant 9 : index
    %c0_17 = arith.constant 0 : index
    %6 = vector.load %arg6[%c0_14, %c1_15, %c9_16, %c0_17] : memref<4x10x10x128xf32, #tpu.memory_space<vmem>>, vector<4x8x1x128xf32>
    tpu.vector_store %arg6[%c0_14, %c1_15, %c9_16, %c0_17], %2 {strides = array<i32>} : memref<4x10x10x128xf32, #tpu.memory_space<vmem>>, vector<4x8x1x128xf32>,
    %c0_18 = arith.constant 0 : index
    %c1_19 = arith.constant 1 : index
    %c1_20 = arith.constant 1 : index
    %c0_21 = arith.constant 0 : index
    %7 = vector.load %arg6[%c0_18, %c1_19, %c1_20, %c0_21] : memref<4x10x10x128xf32, #tpu.memory_space<vmem>>, vector<4x8x8x128xf32>
    tpu.vector_store %arg6[%c0_18, %c1_19, %c1_20, %c0_21], %0 {strides = array<i32>} : memref<4x10x10x128xf32, #tpu.memory_space<vmem>>, vector<4x8x8x128xf32>,
    %c0_22 = arith.constant 0 : index
    %c0_23 = arith.constant 0 : index
    %c0_24 = arith.constant 0 : index
    %c0_25 = arith.constant 0 : index
    %8 = vector.load %arg6[%c0_22, %c0_23, %c0_24, %c0_25] : memref<4x10x10x128xf32, #tpu.memory_space<vmem>>, vector<4x8x8x128xf32>
    %9 = vector.shape_cast %8 : vector<4x8x8x128xf32> to vector<256x128xf32>
    %c0_26 = arith.constant 0 : index
    %c0_27 = arith.constant 0 : index
    %10 = vector.load %arg7[%c0_26, %c0_27] : memref<256x1152xf32, #tpu.memory_space<vmem>>, vector<256x128xf32>
    tpu.vector_store %arg7[%c0_26, %c0_27], %9 {strides = array<i32>} : memref<256x1152xf32, #tpu.memory_space<vmem>>, vector<256x128xf32>,
    %c0_28 = arith.constant 0 : index
    %c0_29 = arith.constant 0 : index
    %c1_30 = arith.constant 1 : index
    %c0_31 = arith.constant 0 : index
    %11 = vector.load %arg6[%c0_28, %c0_29, %c1_30, %c0_31] : memref<4x10x10x128xf32, #tpu.memory_space<vmem>>, vector<4x8x8x128xf32>
    %12 = vector.shape_cast %11 : vector<4x8x8x128xf32> to vector<256x128xf32>
    %c0_32 = arith.constant 0 : index
    %c128 = arith.constant 128 : index
    %13 = vector.load %arg7[%c0_32, %c128] : memref<256x1152xf32, #tpu.memory_space<vmem>>, vector<256x128xf32>
    tpu.vector_store %arg7[%c0_32, %c128], %12 {strides = array<i32>} : memref<256x1152xf32, #tpu.memory_space<vmem>>, vector<256x128xf32>,
    %c0_33 = arith.constant 0 : index
    %c0_34 = arith.constant 0 : index
    %c2 = arith.constant 2 : index
    %c0_35 = arith.constant 0 : index
    %14 = vector.load %arg6[%c0_33, %c0_34, %c2, %c0_35] : memref<4x10x10x128xf32, #tpu.memory_space<vmem>>, vector<4x8x8x128xf32>
    %15 = vector.shape_cast %14 : vector<4x8x8x128xf32> to vector<256x128xf32>
    %c0_36 = arith.constant 0 : index
    %c256 = arith.constant 256 : index
    %16 = vector.load %arg7[%c0_36, %c256] : memref<256x1152xf32, #tpu.memory_space<vmem>>, vector<256x128xf32>
    tpu.vector_store %arg7[%c0_36, %c256], %15 {strides = array<i32>} : memref<256x1152xf32, #tpu.memory_space<vmem>>, vector<256x128xf32>,
    %c0_37 = arith.constant 0 : index
    %c1_38 = arith.constant 1 : index
    %c0_39 = arith.constant 0 : index
    %c0_40 = arith.constant 0 : index
    %17 = vector.load %arg6[%c0_37, %c1_38, %c0_39, %c0_40] : memref<4x10x10x128xf32, #tpu.memory_space<vmem>>, vector<4x8x8x128xf32>
    %18 = vector.shape_cast %17 : vector<4x8x8x128xf32> to vector<256x128xf32>
    %c0_41 = arith.constant 0 : index
    %c384 = arith.constant 384 : index
    %19 = vector.load %arg7[%c0_41, %c384] : memref<256x1152xf32, #tpu.memory_space<vmem>>, vector<256x128xf32>
    tpu.vector_store %arg7[%c0_41, %c384], %18 {strides = array<i32>} : memref<256x1152xf32, #tpu.memory_space<vmem>>, vector<256x128xf32>,
    %c0_42 = arith.constant 0 : index
    %c1_43 = arith.constant 1 : index
    %c1_44 = arith.constant 1 : index
    %c0_45 = arith.constant 0 : index
    %20 = vector.load %arg6[%c0_42, %c1_43, %c1_44, %c0_45] : memref<4x10x10x128xf32, #tpu.memory_space<vmem>>, vector<4x8x8x128xf32>
    %21 = vector.shape_cast %20 : vector<4x8x8x128xf32> to vector<256x128xf32>
    %c0_46 = arith.constant 0 : index
    %c512 = arith.constant 512 : index
    %22 = vector.load %arg7[%c0_46, %c512] : memref<256x1152xf32, #tpu.memory_space<vmem>>, vector<256x128xf32>
    tpu.vector_store %arg7[%c0_46, %c512], %21 {strides = array<i32>} : memref<256x1152xf32, #tpu.memory_space<vmem>>, vector<256x128xf32>,
    %c0_47 = arith.constant 0 : index
    %c1_48 = arith.constant 1 : index
    %c2_49 = arith.constant 2 : index
    %c0_50 = arith.constant 0 : index
    %23 = vector.load %arg6[%c0_47, %c1_48, %c2_49, %c0_50] : memref<4x10x10x128xf32, #tpu.memory_space<vmem>>, vector<4x8x8x128xf32>
    %24 = vector.shape_cast %23 : vector<4x8x8x128xf32> to vector<256x128xf32>
    %c0_51 = arith.constant 0 : index
    %c640 = arith.constant 640 : index
    %25 = vector.load %arg7[%c0_51, %c640] : memref<256x1152xf32, #tpu.memory_space<vmem>>, vector<256x128xf32>
    tpu.vector_store %arg7[%c0_51, %c640], %24 {strides = array<i32>} : memref<256x1152xf32, #tpu.memory_space<vmem>>, vector<256x128xf32>,
    %c0_52 = arith.constant 0 : index
    %c2_53 = arith.constant 2 : index
    %c0_54 = arith.constant 0 : index
    %c0_55 = arith.constant 0 : index
    %26 = vector.load %arg6[%c0_52, %c2_53, %c0_54, %c0_55] : memref<4x10x10x128xf32, #tpu.memory_space<vmem>>, vector<4x8x8x128xf32>
    %27 = vector.shape_cast %26 : vector<4x8x8x128xf32> to vector<256x128xf32>
    %c0_56 = arith.constant 0 : index
    %c768 = arith.constant 768 : index
    %28 = vector.load %arg7[%c0_56, %c768] : memref<256x1152xf32, #tpu.memory_space<vmem>>, vector<256x128xf32>
    tpu.vector_store %arg7[%c0_56, %c768], %27 {strides = array<i32>} : memref<256x1152xf32, #tpu.memory_space<vmem>>, vector<256x128xf32>,
    %c0_57 = arith.constant 0 : index
    %c2_58 = arith.constant 2 : index
    %c1_59 = arith.constant 1 : index
    %c0_60 = arith.constant 0 : index
    %29 = vector.load %arg6[%c0_57, %c2_58, %c1_59, %c0_60] : memref<4x10x10x128xf32, #tpu.memory_space<vmem>>, vector<4x8x8x128xf32>
    %30 = vector.shape_cast %29 : vector<4x8x8x128xf32> to vector<256x128xf32>
    %c0_61 = arith.constant 0 : index
    %c896 = arith.constant 896 : index
    %31 = vector.load %arg7[%c0_61, %c896] : memref<256x1152xf32, #tpu.memory_space<vmem>>, vector<256x128xf32>
    tpu.vector_store %arg7[%c0_61, %c896], %30 {strides = array<i32>} : memref<256x1152xf32, #tpu.memory_space<vmem>>, vector<256x128xf32>,
    %c0_62 = arith.constant 0 : index
    %c2_63 = arith.constant 2 : index
    %c2_64 = arith.constant 2 : index
    %c0_65 = arith.constant 0 : index
    %32 = vector.load %arg6[%c0_62, %c2_63, %c2_64, %c0_65] : memref<4x10x10x128xf32, #tpu.memory_space<vmem>>, vector<4x8x8x128xf32>
    %33 = vector.shape_cast %32 : vector<4x8x8x128xf32> to vector<256x128xf32>
    %c0_66 = arith.constant 0 : index
    %c1024 = arith.constant 1024 : index
    %34 = vector.load %arg7[%c0_66, %c1024] : memref<256x1152xf32, #tpu.memory_space<vmem>>, vector<256x128xf32>
    tpu.vector_store %arg7[%c0_66, %c1024], %33 {strides = array<i32>} : memref<256x1152xf32, #tpu.memory_space<vmem>>, vector<256x128xf32>,
    %c0_67 = arith.constant 0 : index
    %c0_68 = arith.constant 0 : index
    %35 = vector.load %arg7[%c0_67, %c0_68] : memref<256x1152xf32, #tpu.memory_space<vmem>>, vector<256x1152xf32>
    %c0_69 = arith.constant 0 : index
    %c0_70 = arith.constant 0 : index
    %36 = vector.load %arg2[%c0_69, %c0_70] : memref<1152x128xf32, #tpu.memory_space<vmem>>, vector<1152x128xf32>
    %cst_71 = arith.constant dense<0.000000e+00> : vector<256x128xf32>
    %37 = tpu.matmul %35, %36, %cst_71 {dimension_numbers = #tpu.dot_dimension_numbers<[1], [0], [0], [1], [0, 0, 1, 1], [], []>} : vector<256x1152xf32>, vector<1152x128xf32>, vector<256x128xf32> -> vector<256x128xf32>
    %c0_72 = arith.constant 0 : index
    %c0_73 = arith.constant 0 : index
    %38 = vector.load %arg3[%c0_72, %c0_73] : memref<1x128xf32, #tpu.memory_space<vmem>>, vector<1x128xf32>
    %39 = vector.broadcast %38 : vector<1x128xf32> to vector<256x128xf32>
    %40 = arith.addf %37, %39 : vector<256x128xf32>
    %c0_74 = arith.constant 0 : index
    %c0_75 = arith.constant 0 : index
    %41 = vector.load %arg4[%c0_74, %c0_75] : memref<256x128xf32, #tpu.memory_space<vmem>>, vector<256x128xf32>
    tpu.vector_store %arg4[%c0_74, %c0_75], %40 {strides = array<i32>} : memref<256x128xf32, #tpu.memory_space<vmem>>, vector<256x128xf32>,
    %cst_76 = arith.constant dense<0.000000e+00> : vector<128xf32>
    %42 = vector.multi_reduction <add>, %40, %cst_76 [0] : vector<256x128xf32> to vector<128xf32>
    %43 = vector.shape_cast %42 : vector<128xf32> to vector<1x128xf32>
    %44 = arith.mulf %40, %40 : vector<256x128xf32>
    %cst_77 = arith.constant dense<0.000000e+00> : vector<128xf32>
    %45 = vector.multi_reduction <add>, %44, %cst_77 [0] : vector<256x128xf32> to vector<128xf32>
    %46 = vector.shape_cast %45 : vector<128xf32> to vector<1x128xf32>
    %47 = tpu.concatenate %43, %46 in 0 : vector<1x128xf32>, vector<1x128xf32> -> vector<2x128xf32>
    %c0_78 = arith.constant 0 : index
    %c0_79 = arith.constant 0 : index
    %c0_80 = arith.constant 0 : index
    %48 = vector.load %arg5[%c0_78, %c0_79, %c0_80] : memref<1x2x128xf32, #tpu.memory_space<vmem>>, vector<1x2x128xf32>
    %49 = vector.shape_cast %48 : vector<1x2x128xf32> to vector<2x128xf32>
    %50 = vector.shape_cast %47 : vector<2x128xf32> to vector<1x2x128xf32>
    tpu.vector_store %arg5[%c0_78, %c0_79, %c0_80], %50 {strides = array<i32>} : memref<1x2x128xf32, #tpu.memory_space<vmem>>, vector<1x2x128xf32>,
    return
  }
  func.func @transform_0(%arg0: i32) -> (i32, i32, i32, i32) {
    %c0_i32 = arith.constant 0 : i32
    %c0_i32_0 = arith.constant 0 : i32
    %c0_i32_1 = arith.constant 0 : i32
    %c0_i32_2 = arith.constant 0 : i32
    return %arg0, %c0_i32, %c0_i32_0, %c0_i32_1 : i32, i32, i32, i32
  }
  func.func @transform_1(%arg0: i32) -> (i32, i32) {
    %c0_i32 = arith.constant 0 : i32
    %c0_i32_0 = arith.constant 0 : i32
    %c0_i32_1 = arith.constant 0 : i32
    return %c0_i32, %c0_i32_0 : i32, i32
  }
  func.func @transform_2(%arg0: i32) -> (i32, i32) {
    %c0_i32 = arith.constant 0 : i32
    %c0_i32_0 = arith.constant 0 : i32
    %c0_i32_1 = arith.constant 0 : i32
    return %c0_i32, %c0_i32_0 : i32, i32
  }
  func.func @transform_3(%arg0: i32) -> (i32, i32) {
    %c0_i32 = arith.constant 0 : i32
    %c0_i32_0 = arith.constant 0 : i32
    return %arg0, %c0_i32 : i32, i32
  }
  func.func @transform_4(%arg0: i32) -> (i32, i32, i32) {
    %c0_i32 = arith.constant 0 : i32
    %c0_i32_0 = arith.constant 0 : i32
    %c0_i32_1 = arith.constant 0 : i32
    return %arg0, %c0_i32, %c0_i32_0 : i32, i32, i32
  }
}

module attributes {stable_mosaic.version = 11 : i64} {
  func.func @_temporal_conv_kernel(%arg0: i32, %arg1: i32, %arg2: memref<1x4x64x128xf32, #tpu.memory_space<vmem>>, %arg3: memref<1x128xf32, #tpu.memory_space<vmem>>, %arg4: memref<1x128xf32, #tpu.memory_space<vmem>>, %arg5: memref<384x128xf32, #tpu.memory_space<vmem>>, %arg6: memref<1x128xf32, #tpu.memory_space<vmem>>, %arg7: memref<1x4x64x128xf32, #tpu.memory_space<vmem>>, %arg8: memref<1x1x2x128xf32, #tpu.memory_space<vmem>>, %arg9: memref<6x64x128xf32, #tpu.memory_space<vmem>>, %arg10: memref<256x384xf32, #tpu.memory_space<vmem>>) attributes {dimension_semantics = [#tpu.dimension_semantics<parallel>, #tpu.dimension_semantics<parallel>], iteration_bounds = array<i64: 2, 1>, scalar_prefetch = 0 : i64, scratch_operands = 2 : i64, tpu.core_type = #tpu.core_type<tc>, window_params = [{transform_indices = @transform_0, window_bounds = array<i64: 1, 4, 64, 128>}, {pipeline_mode = #tpu.pipeline_mode<synchronous>, transform_indices = @transform_1, window_bounds = array<i64: 1, 128>}, {pipeline_mode = #tpu.pipeline_mode<synchronous>, transform_indices = @transform_2, window_bounds = array<i64: 1, 128>}, {pipeline_mode = #tpu.pipeline_mode<synchronous>, transform_indices = @transform_3, window_bounds = array<i64: 384, 128>}, {pipeline_mode = #tpu.pipeline_mode<synchronous>, transform_indices = @transform_4, window_bounds = array<i64: 1, 128>}, {transform_indices = @transform_5, window_bounds = array<i64: 1, 4, 64, 128>}, {transform_indices = @transform_6, window_bounds = array<i64: 1, 1, 2, 128>}]} {
    %c0 = arith.constant 0 : index
    %c0_0 = arith.constant 0 : index
    %c0_1 = arith.constant 0 : index
    %c0_2 = arith.constant 0 : index
    %0 = vector.load %arg2[%c0, %c0_0, %c0_1, %c0_2] : memref<1x4x64x128xf32, #tpu.memory_space<vmem>>, vector<1x4x64x128xf32>
    %1 = vector.shape_cast %0 : vector<1x4x64x128xf32> to vector<4x64x128xf32>
    %c0_3 = arith.constant 0 : index
    %c0_4 = arith.constant 0 : index
    %2 = vector.load %arg3[%c0_3, %c0_4] : memref<1x128xf32, #tpu.memory_space<vmem>>, vector<1x128xf32>
    %3 = vector.shape_cast %2 : vector<1x128xf32> to vector<1x1x128xf32>
    %4 = vector.broadcast %3 : vector<1x1x128xf32> to vector<4x64x128xf32>
    %5 = arith.mulf %1, %4 : vector<4x64x128xf32>
    %c0_5 = arith.constant 0 : index
    %c0_6 = arith.constant 0 : index
    %6 = vector.load %arg4[%c0_5, %c0_6] : memref<1x128xf32, #tpu.memory_space<vmem>>, vector<1x128xf32>
    %7 = vector.shape_cast %6 : vector<1x128xf32> to vector<1x1x128xf32>
    %8 = vector.broadcast %7 : vector<1x1x128xf32> to vector<4x64x128xf32>
    %9 = arith.addf %5, %8 : vector<4x64x128xf32>
    %cst = arith.constant 0.000000e+00 : f32
    %10 = vector.broadcast %cst : f32 to vector<4x64x128xf32>
    %11 = arith.maximumf %9, %10 : vector<4x64x128xf32>
    %cst_7 = arith.constant 0.000000e+00 : f32
    %12 = vector.broadcast %cst_7 : f32 to vector<1x64x128xf32>
    %c0_8 = arith.constant 0 : index
    %c0_9 = arith.constant 0 : index
    %c0_10 = arith.constant 0 : index
    %13 = vector.load %arg9[%c0_8, %c0_9, %c0_10] : memref<6x64x128xf32, #tpu.memory_space<vmem>>, vector<1x64x128xf32>
    tpu.vector_store %arg9[%c0_8, %c0_9, %c0_10], %12 {strides = array<i32>} : memref<6x64x128xf32, #tpu.memory_space<vmem>>, vector<1x64x128xf32>,
    %c5 = arith.constant 5 : index
    %c0_11 = arith.constant 0 : index
    %c0_12 = arith.constant 0 : index
    %14 = vector.load %arg9[%c5, %c0_11, %c0_12] : memref<6x64x128xf32, #tpu.memory_space<vmem>>, vector<1x64x128xf32>
    tpu.vector_store %arg9[%c5, %c0_11, %c0_12], %12 {strides = array<i32>} : memref<6x64x128xf32, #tpu.memory_space<vmem>>, vector<1x64x128xf32>,
    %c1 = arith.constant 1 : index
    %c0_13 = arith.constant 0 : index
    %c0_14 = arith.constant 0 : index
    %15 = vector.load %arg9[%c1, %c0_13, %c0_14] : memref<6x64x128xf32, #tpu.memory_space<vmem>>, vector<4x64x128xf32>
    tpu.vector_store %arg9[%c1, %c0_13, %c0_14], %11 {strides = array<i32>} : memref<6x64x128xf32, #tpu.memory_space<vmem>>, vector<4x64x128xf32>,
    %c0_15 = arith.constant 0 : index
    %c0_16 = arith.constant 0 : index
    %c0_17 = arith.constant 0 : index
    %16 = vector.load %arg9[%c0_15, %c0_16, %c0_17] : memref<6x64x128xf32, #tpu.memory_space<vmem>>, vector<4x64x128xf32>
    %17 = vector.shape_cast %16 : vector<4x64x128xf32> to vector<256x128xf32>
    %c0_18 = arith.constant 0 : index
    %c0_19 = arith.constant 0 : index
    %18 = vector.load %arg10[%c0_18, %c0_19] : memref<256x384xf32, #tpu.memory_space<vmem>>, vector<256x128xf32>
    tpu.vector_store %arg10[%c0_18, %c0_19], %17 {strides = array<i32>} : memref<256x384xf32, #tpu.memory_space<vmem>>, vector<256x128xf32>,
    %c1_20 = arith.constant 1 : index
    %c0_21 = arith.constant 0 : index
    %c0_22 = arith.constant 0 : index
    %19 = vector.load %arg9[%c1_20, %c0_21, %c0_22] : memref<6x64x128xf32, #tpu.memory_space<vmem>>, vector<4x64x128xf32>
    %20 = vector.shape_cast %19 : vector<4x64x128xf32> to vector<256x128xf32>
    %c0_23 = arith.constant 0 : index
    %c128 = arith.constant 128 : index
    %21 = vector.load %arg10[%c0_23, %c128] : memref<256x384xf32, #tpu.memory_space<vmem>>, vector<256x128xf32>
    tpu.vector_store %arg10[%c0_23, %c128], %20 {strides = array<i32>} : memref<256x384xf32, #tpu.memory_space<vmem>>, vector<256x128xf32>,
    %c2 = arith.constant 2 : index
    %c0_24 = arith.constant 0 : index
    %c0_25 = arith.constant 0 : index
    %22 = vector.load %arg9[%c2, %c0_24, %c0_25] : memref<6x64x128xf32, #tpu.memory_space<vmem>>, vector<4x64x128xf32>
    %23 = vector.shape_cast %22 : vector<4x64x128xf32> to vector<256x128xf32>
    %c0_26 = arith.constant 0 : index
    %c256 = arith.constant 256 : index
    %24 = vector.load %arg10[%c0_26, %c256] : memref<256x384xf32, #tpu.memory_space<vmem>>, vector<256x128xf32>
    tpu.vector_store %arg10[%c0_26, %c256], %23 {strides = array<i32>} : memref<256x384xf32, #tpu.memory_space<vmem>>, vector<256x128xf32>,
    %c0_27 = arith.constant 0 : index
    %c0_28 = arith.constant 0 : index
    %25 = vector.load %arg10[%c0_27, %c0_28] : memref<256x384xf32, #tpu.memory_space<vmem>>, vector<256x384xf32>
    %c0_29 = arith.constant 0 : index
    %c0_30 = arith.constant 0 : index
    %26 = vector.load %arg5[%c0_29, %c0_30] : memref<384x128xf32, #tpu.memory_space<vmem>>, vector<384x128xf32>
    %cst_31 = arith.constant dense<0.000000e+00> : vector<256x128xf32>
    %27 = tpu.matmul %25, %26, %cst_31 {dimension_numbers = #tpu.dot_dimension_numbers<[1], [0], [0], [1], [0, 0, 1, 1], [], []>} : vector<256x384xf32>, vector<384x128xf32>, vector<256x128xf32> -> vector<256x128xf32>
    %c0_32 = arith.constant 0 : index
    %c0_33 = arith.constant 0 : index
    %28 = vector.load %arg6[%c0_32, %c0_33] : memref<1x128xf32, #tpu.memory_space<vmem>>, vector<1x128xf32>
    %29 = vector.broadcast %28 : vector<1x128xf32> to vector<256x128xf32>
    %30 = arith.addf %27, %29 : vector<256x128xf32>
    %31 = vector.shape_cast %30 : vector<256x128xf32> to vector<4x64x128xf32>
    %c0_34 = arith.constant 0 : index
    %c0_35 = arith.constant 0 : index
    %c0_36 = arith.constant 0 : index
    %c0_37 = arith.constant 0 : index
    %32 = vector.load %arg7[%c0_34, %c0_35, %c0_36, %c0_37] : memref<1x4x64x128xf32, #tpu.memory_space<vmem>>, vector<1x4x64x128xf32>
    %33 = vector.shape_cast %32 : vector<1x4x64x128xf32> to vector<4x64x128xf32>
    %34 = vector.shape_cast %31 : vector<4x64x128xf32> to vector<1x4x64x128xf32>
    tpu.vector_store %arg7[%c0_34, %c0_35, %c0_36, %c0_37], %34 {strides = array<i32>} : memref<1x4x64x128xf32, #tpu.memory_space<vmem>>, vector<1x4x64x128xf32>,
    %cst_38 = arith.constant dense<0.000000e+00> : vector<128xf32>
    %35 = vector.multi_reduction <add>, %30, %cst_38 [0] : vector<256x128xf32> to vector<128xf32>
    %36 = vector.shape_cast %35 : vector<128xf32> to vector<1x128xf32>
    %37 = arith.mulf %30, %30 : vector<256x128xf32>
    %cst_39 = arith.constant dense<0.000000e+00> : vector<128xf32>
    %38 = vector.multi_reduction <add>, %37, %cst_39 [0] : vector<256x128xf32> to vector<128xf32>
    %39 = vector.shape_cast %38 : vector<128xf32> to vector<1x128xf32>
    %40 = tpu.concatenate %36, %39 in 0 : vector<1x128xf32>, vector<1x128xf32> -> vector<2x128xf32>
    %c0_40 = arith.constant 0 : index
    %c0_41 = arith.constant 0 : index
    %c0_42 = arith.constant 0 : index
    %c0_43 = arith.constant 0 : index
    %41 = vector.load %arg8[%c0_40, %c0_41, %c0_42, %c0_43] : memref<1x1x2x128xf32, #tpu.memory_space<vmem>>, vector<1x1x2x128xf32>
    %42 = vector.shape_cast %41 : vector<1x1x2x128xf32> to vector<2x128xf32>
    %43 = vector.shape_cast %40 : vector<2x128xf32> to vector<1x1x2x128xf32>
    tpu.vector_store %arg8[%c0_40, %c0_41, %c0_42, %c0_43], %43 {strides = array<i32>} : memref<1x1x2x128xf32, #tpu.memory_space<vmem>>, vector<1x1x2x128xf32>,
    return
  }
  func.func @transform_0(%arg0: i32, %arg1: i32) -> (i32, i32, i32, i32) {
    %c0_i32 = arith.constant 0 : i32
    %c0_i32_0 = arith.constant 0 : i32
    %c0_i32_1 = arith.constant 0 : i32
    return %arg0, %c0_i32, %arg1, %c0_i32_0 : i32, i32, i32, i32
  }
  func.func @transform_1(%arg0: i32, %arg1: i32) -> (i32, i32) {
    %c0_i32 = arith.constant 0 : i32
    %c0_i32_0 = arith.constant 0 : i32
    %c0_i32_1 = arith.constant 0 : i32
    return %c0_i32, %c0_i32_0 : i32, i32
  }
  func.func @transform_2(%arg0: i32, %arg1: i32) -> (i32, i32) {
    %c0_i32 = arith.constant 0 : i32
    %c0_i32_0 = arith.constant 0 : i32
    %c0_i32_1 = arith.constant 0 : i32
    return %c0_i32, %c0_i32_0 : i32, i32
  }
  func.func @transform_3(%arg0: i32, %arg1: i32) -> (i32, i32) {
    %c0_i32 = arith.constant 0 : i32
    %c0_i32_0 = arith.constant 0 : i32
    %c0_i32_1 = arith.constant 0 : i32
    return %c0_i32, %c0_i32_0 : i32, i32
  }
  func.func @transform_4(%arg0: i32, %arg1: i32) -> (i32, i32) {
    %c0_i32 = arith.constant 0 : i32
    %c0_i32_0 = arith.constant 0 : i32
    %c0_i32_1 = arith.constant 0 : i32
    return %c0_i32, %c0_i32_0 : i32, i32
  }
  func.func @transform_5(%arg0: i32, %arg1: i32) -> (i32, i32, i32, i32) {
    %c0_i32 = arith.constant 0 : i32
    %c0_i32_0 = arith.constant 0 : i32
    %c0_i32_1 = arith.constant 0 : i32
    return %arg0, %c0_i32, %arg1, %c0_i32_0 : i32, i32, i32, i32
  }
  func.func @transform_6(%arg0: i32, %arg1: i32) -> (i32, i32, i32, i32) {
    %c0_i32 = arith.constant 0 : i32
    %c0_i32_0 = arith.constant 0 : i32
    %c0_i32_1 = arith.constant 0 : i32
    return %arg0, %arg1, %c0_i32, %c0_i32_0 : i32, i32, i32, i32
  }
}

module attributes {stable_mosaic.version = 11 : i64} {
  func.func @_spatial_conv_kernel(%arg0: i32, %arg1: memref<4x8x8x128xf32, #tpu.memory_space<vmem>>, %arg2: memref<1x128xf32, #tpu.memory_space<vmem>>, %arg3: memref<1x128xf32, #tpu.memory_space<vmem>>, %arg4: memref<1152x128xf32, #tpu.memory_space<vmem>>, %arg5: memref<1x128xf32, #tpu.memory_space<vmem>>, %arg6: memref<256x128xf32, #tpu.memory_space<vmem>>, %arg7: memref<1x2x128xf32, #tpu.memory_space<vmem>>, %arg8: memref<4x10x10x128xf32, #tpu.memory_space<vmem>>, %arg9: memref<256x1152xf32, #tpu.memory_space<vmem>>) attributes {dimension_semantics = [#tpu.dimension_semantics<parallel>], iteration_bounds = array<i64: 2>, scalar_prefetch = 0 : i64, scratch_operands = 2 : i64, tpu.core_type = #tpu.core_type<tc>, window_params = [{transform_indices = @transform_0, window_bounds = array<i64: 4, 8, 8, 128>}, {pipeline_mode = #tpu.pipeline_mode<synchronous>, transform_indices = @transform_1, window_bounds = array<i64: 1, 128>}, {pipeline_mode = #tpu.pipeline_mode<synchronous>, transform_indices = @transform_2, window_bounds = array<i64: 1, 128>}, {pipeline_mode = #tpu.pipeline_mode<synchronous>, transform_indices = @transform_3, window_bounds = array<i64: 1152, 128>}, {pipeline_mode = #tpu.pipeline_mode<synchronous>, transform_indices = @transform_4, window_bounds = array<i64: 1, 128>}, {transform_indices = @transform_5, window_bounds = array<i64: 256, 128>}, {transform_indices = @transform_6, window_bounds = array<i64: 1, 2, 128>}]} {
    %c0 = arith.constant 0 : index
    %c0_0 = arith.constant 0 : index
    %c0_1 = arith.constant 0 : index
    %c0_2 = arith.constant 0 : index
    %0 = vector.load %arg1[%c0, %c0_0, %c0_1, %c0_2] : memref<4x8x8x128xf32, #tpu.memory_space<vmem>>, vector<4x8x8x128xf32>
    %c0_3 = arith.constant 0 : index
    %c0_4 = arith.constant 0 : index
    %1 = vector.load %arg2[%c0_3, %c0_4] : memref<1x128xf32, #tpu.memory_space<vmem>>, vector<1x128xf32>
    %2 = vector.shape_cast %1 : vector<1x128xf32> to vector<1x1x1x128xf32>
    %3 = vector.broadcast %2 : vector<1x1x1x128xf32> to vector<4x8x8x128xf32>
    %4 = arith.mulf %0, %3 : vector<4x8x8x128xf32>
    %c0_5 = arith.constant 0 : index
    %c0_6 = arith.constant 0 : index
    %5 = vector.load %arg3[%c0_5, %c0_6] : memref<1x128xf32, #tpu.memory_space<vmem>>, vector<1x128xf32>
    %6 = vector.shape_cast %5 : vector<1x128xf32> to vector<1x1x1x128xf32>
    %7 = vector.broadcast %6 : vector<1x1x1x128xf32> to vector<4x8x8x128xf32>
    %8 = arith.addf %4, %7 : vector<4x8x8x128xf32>
    %cst = arith.constant 0.000000e+00 : f32
    %9 = vector.broadcast %cst : f32 to vector<4x8x8x128xf32>
    %10 = arith.maximumf %8, %9 : vector<4x8x8x128xf32>
    %cst_7 = arith.constant 0.000000e+00 : f32
    %11 = vector.broadcast %cst_7 : f32 to vector<4x1x10x128xf32>
    %cst_8 = arith.constant 0.000000e+00 : f32
    %12 = vector.broadcast %cst_8 : f32 to vector<4x8x1x128xf32>
    %c0_9 = arith.constant 0 : index
    %c0_10 = arith.constant 0 : index
    %c0_11 = arith.constant 0 : index
    %c0_12 = arith.constant 0 : index
    %13 = vector.load %arg8[%c0_9, %c0_10, %c0_11, %c0_12] : memref<4x10x10x128xf32, #tpu.memory_space<vmem>>, vector<4x1x10x128xf32>
    tpu.vector_store %arg8[%c0_9, %c0_10, %c0_11, %c0_12], %11 {strides = array<i32>} : memref<4x10x10x128xf32, #tpu.memory_space<vmem>>, vector<4x1x10x128xf32>,
    %c0_13 = arith.constant 0 : index
    %c9 = arith.constant 9 : index
    %c0_14 = arith.constant 0 : index
    %c0_15 = arith.constant 0 : index
    %14 = vector.load %arg8[%c0_13, %c9, %c0_14, %c0_15] : memref<4x10x10x128xf32, #tpu.memory_space<vmem>>, vector<4x1x10x128xf32>
    tpu.vector_store %arg8[%c0_13, %c9, %c0_14, %c0_15], %11 {strides = array<i32>} : memref<4x10x10x128xf32, #tpu.memory_space<vmem>>, vector<4x1x10x128xf32>,
    %c0_16 = arith.constant 0 : index
    %c1 = arith.constant 1 : index
    %c0_17 = arith.constant 0 : index
    %c0_18 = arith.constant 0 : index
    %15 = vector.load %arg8[%c0_16, %c1, %c0_17, %c0_18] : memref<4x10x10x128xf32, #tpu.memory_space<vmem>>, vector<4x8x1x128xf32>
    tpu.vector_store %arg8[%c0_16, %c1, %c0_17, %c0_18], %12 {strides = array<i32>} : memref<4x10x10x128xf32, #tpu.memory_space<vmem>>, vector<4x8x1x128xf32>,
    %c0_19 = arith.constant 0 : index
    %c1_20 = arith.constant 1 : index
    %c9_21 = arith.constant 9 : index
    %c0_22 = arith.constant 0 : index
    %16 = vector.load %arg8[%c0_19, %c1_20, %c9_21, %c0_22] : memref<4x10x10x128xf32, #tpu.memory_space<vmem>>, vector<4x8x1x128xf32>
    tpu.vector_store %arg8[%c0_19, %c1_20, %c9_21, %c0_22], %12 {strides = array<i32>} : memref<4x10x10x128xf32, #tpu.memory_space<vmem>>, vector<4x8x1x128xf32>,
    %c0_23 = arith.constant 0 : index
    %c1_24 = arith.constant 1 : index
    %c1_25 = arith.constant 1 : index
    %c0_26 = arith.constant 0 : index
    %17 = vector.load %arg8[%c0_23, %c1_24, %c1_25, %c0_26] : memref<4x10x10x128xf32, #tpu.memory_space<vmem>>, vector<4x8x8x128xf32>
    tpu.vector_store %arg8[%c0_23, %c1_24, %c1_25, %c0_26], %10 {strides = array<i32>} : memref<4x10x10x128xf32, #tpu.memory_space<vmem>>, vector<4x8x8x128xf32>,
    %c0_27 = arith.constant 0 : index
    %c0_28 = arith.constant 0 : index
    %c0_29 = arith.constant 0 : index
    %c0_30 = arith.constant 0 : index
    %18 = vector.load %arg8[%c0_27, %c0_28, %c0_29, %c0_30] : memref<4x10x10x128xf32, #tpu.memory_space<vmem>>, vector<4x8x8x128xf32>
    %19 = vector.shape_cast %18 : vector<4x8x8x128xf32> to vector<256x128xf32>
    %c0_31 = arith.constant 0 : index
    %c0_32 = arith.constant 0 : index
    %20 = vector.load %arg9[%c0_31, %c0_32] : memref<256x1152xf32, #tpu.memory_space<vmem>>, vector<256x128xf32>
    tpu.vector_store %arg9[%c0_31, %c0_32], %19 {strides = array<i32>} : memref<256x1152xf32, #tpu.memory_space<vmem>>, vector<256x128xf32>,
    %c0_33 = arith.constant 0 : index
    %c0_34 = arith.constant 0 : index
    %c1_35 = arith.constant 1 : index
    %c0_36 = arith.constant 0 : index
    %21 = vector.load %arg8[%c0_33, %c0_34, %c1_35, %c0_36] : memref<4x10x10x128xf32, #tpu.memory_space<vmem>>, vector<4x8x8x128xf32>
    %22 = vector.shape_cast %21 : vector<4x8x8x128xf32> to vector<256x128xf32>
    %c0_37 = arith.constant 0 : index
    %c128 = arith.constant 128 : index
    %23 = vector.load %arg9[%c0_37, %c128] : memref<256x1152xf32, #tpu.memory_space<vmem>>, vector<256x128xf32>
    tpu.vector_store %arg9[%c0_37, %c128], %22 {strides = array<i32>} : memref<256x1152xf32, #tpu.memory_space<vmem>>, vector<256x128xf32>,
    %c0_38 = arith.constant 0 : index
    %c0_39 = arith.constant 0 : index
    %c2 = arith.constant 2 : index
    %c0_40 = arith.constant 0 : index
    %24 = vector.load %arg8[%c0_38, %c0_39, %c2, %c0_40] : memref<4x10x10x128xf32, #tpu.memory_space<vmem>>, vector<4x8x8x128xf32>
    %25 = vector.shape_cast %24 : vector<4x8x8x128xf32> to vector<256x128xf32>
    %c0_41 = arith.constant 0 : index
    %c256 = arith.constant 256 : index
    %26 = vector.load %arg9[%c0_41, %c256] : memref<256x1152xf32, #tpu.memory_space<vmem>>, vector<256x128xf32>
    tpu.vector_store %arg9[%c0_41, %c256], %25 {strides = array<i32>} : memref<256x1152xf32, #tpu.memory_space<vmem>>, vector<256x128xf32>,
    %c0_42 = arith.constant 0 : index
    %c1_43 = arith.constant 1 : index
    %c0_44 = arith.constant 0 : index
    %c0_45 = arith.constant 0 : index
    %27 = vector.load %arg8[%c0_42, %c1_43, %c0_44, %c0_45] : memref<4x10x10x128xf32, #tpu.memory_space<vmem>>, vector<4x8x8x128xf32>
    %28 = vector.shape_cast %27 : vector<4x8x8x128xf32> to vector<256x128xf32>
    %c0_46 = arith.constant 0 : index
    %c384 = arith.constant 384 : index
    %29 = vector.load %arg9[%c0_46, %c384] : memref<256x1152xf32, #tpu.memory_space<vmem>>, vector<256x128xf32>
    tpu.vector_store %arg9[%c0_46, %c384], %28 {strides = array<i32>} : memref<256x1152xf32, #tpu.memory_space<vmem>>, vector<256x128xf32>,
    %c0_47 = arith.constant 0 : index
    %c1_48 = arith.constant 1 : index
    %c1_49 = arith.constant 1 : index
    %c0_50 = arith.constant 0 : index
    %30 = vector.load %arg8[%c0_47, %c1_48, %c1_49, %c0_50] : memref<4x10x10x128xf32, #tpu.memory_space<vmem>>, vector<4x8x8x128xf32>
    %31 = vector.shape_cast %30 : vector<4x8x8x128xf32> to vector<256x128xf32>
    %c0_51 = arith.constant 0 : index
    %c512 = arith.constant 512 : index
    %32 = vector.load %arg9[%c0_51, %c512] : memref<256x1152xf32, #tpu.memory_space<vmem>>, vector<256x128xf32>
    tpu.vector_store %arg9[%c0_51, %c512], %31 {strides = array<i32>} : memref<256x1152xf32, #tpu.memory_space<vmem>>, vector<256x128xf32>,
    %c0_52 = arith.constant 0 : index
    %c1_53 = arith.constant 1 : index
    %c2_54 = arith.constant 2 : index
    %c0_55 = arith.constant 0 : index
    %33 = vector.load %arg8[%c0_52, %c1_53, %c2_54, %c0_55] : memref<4x10x10x128xf32, #tpu.memory_space<vmem>>, vector<4x8x8x128xf32>
    %34 = vector.shape_cast %33 : vector<4x8x8x128xf32> to vector<256x128xf32>
    %c0_56 = arith.constant 0 : index
    %c640 = arith.constant 640 : index
    %35 = vector.load %arg9[%c0_56, %c640] : memref<256x1152xf32, #tpu.memory_space<vmem>>, vector<256x128xf32>
    tpu.vector_store %arg9[%c0_56, %c640], %34 {strides = array<i32>} : memref<256x1152xf32, #tpu.memory_space<vmem>>, vector<256x128xf32>,
    %c0_57 = arith.constant 0 : index
    %c2_58 = arith.constant 2 : index
    %c0_59 = arith.constant 0 : index
    %c0_60 = arith.constant 0 : index
    %36 = vector.load %arg8[%c0_57, %c2_58, %c0_59, %c0_60] : memref<4x10x10x128xf32, #tpu.memory_space<vmem>>, vector<4x8x8x128xf32>
    %37 = vector.shape_cast %36 : vector<4x8x8x128xf32> to vector<256x128xf32>
    %c0_61 = arith.constant 0 : index
    %c768 = arith.constant 768 : index
    %38 = vector.load %arg9[%c0_61, %c768] : memref<256x1152xf32, #tpu.memory_space<vmem>>, vector<256x128xf32>
    tpu.vector_store %arg9[%c0_61, %c768], %37 {strides = array<i32>} : memref<256x1152xf32, #tpu.memory_space<vmem>>, vector<256x128xf32>,
    %c0_62 = arith.constant 0 : index
    %c2_63 = arith.constant 2 : index
    %c1_64 = arith.constant 1 : index
    %c0_65 = arith.constant 0 : index
    %39 = vector.load %arg8[%c0_62, %c2_63, %c1_64, %c0_65] : memref<4x10x10x128xf32, #tpu.memory_space<vmem>>, vector<4x8x8x128xf32>
    %40 = vector.shape_cast %39 : vector<4x8x8x128xf32> to vector<256x128xf32>
    %c0_66 = arith.constant 0 : index
    %c896 = arith.constant 896 : index
    %41 = vector.load %arg9[%c0_66, %c896] : memref<256x1152xf32, #tpu.memory_space<vmem>>, vector<256x128xf32>
    tpu.vector_store %arg9[%c0_66, %c896], %40 {strides = array<i32>} : memref<256x1152xf32, #tpu.memory_space<vmem>>, vector<256x128xf32>,
    %c0_67 = arith.constant 0 : index
    %c2_68 = arith.constant 2 : index
    %c2_69 = arith.constant 2 : index
    %c0_70 = arith.constant 0 : index
    %42 = vector.load %arg8[%c0_67, %c2_68, %c2_69, %c0_70] : memref<4x10x10x128xf32, #tpu.memory_space<vmem>>, vector<4x8x8x128xf32>
    %43 = vector.shape_cast %42 : vector<4x8x8x128xf32> to vector<256x128xf32>
    %c0_71 = arith.constant 0 : index
    %c1024 = arith.constant 1024 : index
    %44 = vector.load %arg9[%c0_71, %c1024] : memref<256x1152xf32, #tpu.memory_space<vmem>>, vector<256x128xf32>
    tpu.vector_store %arg9[%c0_71, %c1024], %43 {strides = array<i32>} : memref<256x1152xf32, #tpu.memory_space<vmem>>, vector<256x128xf32>,
    %c0_72 = arith.constant 0 : index
    %c0_73 = arith.constant 0 : index
    %45 = vector.load %arg9[%c0_72, %c0_73] : memref<256x1152xf32, #tpu.memory_space<vmem>>, vector<256x1152xf32>
    %c0_74 = arith.constant 0 : index
    %c0_75 = arith.constant 0 : index
    %46 = vector.load %arg4[%c0_74, %c0_75] : memref<1152x128xf32, #tpu.memory_space<vmem>>, vector<1152x128xf32>
    %cst_76 = arith.constant dense<0.000000e+00> : vector<256x128xf32>
    %47 = tpu.matmul %45, %46, %cst_76 {dimension_numbers = #tpu.dot_dimension_numbers<[1], [0], [0], [1], [0, 0, 1, 1], [], []>} : vector<256x1152xf32>, vector<1152x128xf32>, vector<256x128xf32> -> vector<256x128xf32>
    %c0_77 = arith.constant 0 : index
    %c0_78 = arith.constant 0 : index
    %48 = vector.load %arg5[%c0_77, %c0_78] : memref<1x128xf32, #tpu.memory_space<vmem>>, vector<1x128xf32>
    %49 = vector.broadcast %48 : vector<1x128xf32> to vector<256x128xf32>
    %50 = arith.addf %47, %49 : vector<256x128xf32>
    %c0_79 = arith.constant 0 : index
    %c0_80 = arith.constant 0 : index
    %51 = vector.load %arg6[%c0_79, %c0_80] : memref<256x128xf32, #tpu.memory_space<vmem>>, vector<256x128xf32>
    tpu.vector_store %arg6[%c0_79, %c0_80], %50 {strides = array<i32>} : memref<256x128xf32, #tpu.memory_space<vmem>>, vector<256x128xf32>,
    %cst_81 = arith.constant dense<0.000000e+00> : vector<128xf32>
    %52 = vector.multi_reduction <add>, %50, %cst_81 [0] : vector<256x128xf32> to vector<128xf32>
    %53 = vector.shape_cast %52 : vector<128xf32> to vector<1x128xf32>
    %54 = arith.mulf %50, %50 : vector<256x128xf32>
    %cst_82 = arith.constant dense<0.000000e+00> : vector<128xf32>
    %55 = vector.multi_reduction <add>, %54, %cst_82 [0] : vector<256x128xf32> to vector<128xf32>
    %56 = vector.shape_cast %55 : vector<128xf32> to vector<1x128xf32>
    %57 = tpu.concatenate %53, %56 in 0 : vector<1x128xf32>, vector<1x128xf32> -> vector<2x128xf32>
    %c0_83 = arith.constant 0 : index
    %c0_84 = arith.constant 0 : index
    %c0_85 = arith.constant 0 : index
    %58 = vector.load %arg7[%c0_83, %c0_84, %c0_85] : memref<1x2x128xf32, #tpu.memory_space<vmem>>, vector<1x2x128xf32>
    %59 = vector.shape_cast %58 : vector<1x2x128xf32> to vector<2x128xf32>
    %60 = vector.shape_cast %57 : vector<2x128xf32> to vector<1x2x128xf32>
    tpu.vector_store %arg7[%c0_83, %c0_84, %c0_85], %60 {strides = array<i32>} : memref<1x2x128xf32, #tpu.memory_space<vmem>>, vector<1x2x128xf32>,
    return
  }
  func.func @transform_0(%arg0: i32) -> (i32, i32, i32, i32) {
    %c0_i32 = arith.constant 0 : i32
    %c0_i32_0 = arith.constant 0 : i32
    %c0_i32_1 = arith.constant 0 : i32
    %c0_i32_2 = arith.constant 0 : i32
    return %arg0, %c0_i32, %c0_i32_0, %c0_i32_1 : i32, i32, i32, i32
  }
  func.func @transform_1(%arg0: i32) -> (i32, i32) {
    %c0_i32 = arith.constant 0 : i32
    %c0_i32_0 = arith.constant 0 : i32
    %c0_i32_1 = arith.constant 0 : i32
    return %c0_i32, %c0_i32_0 : i32, i32
  }
  func.func @transform_2(%arg0: i32) -> (i32, i32) {
    %c0_i32 = arith.constant 0 : i32
    %c0_i32_0 = arith.constant 0 : i32
    %c0_i32_1 = arith.constant 0 : i32
    return %c0_i32, %c0_i32_0 : i32, i32
  }
  func.func @transform_3(%arg0: i32) -> (i32, i32) {
    %c0_i32 = arith.constant 0 : i32
    %c0_i32_0 = arith.constant 0 : i32
    %c0_i32_1 = arith.constant 0 : i32
    return %c0_i32, %c0_i32_0 : i32, i32
  }
  func.func @transform_4(%arg0: i32) -> (i32, i32) {
    %c0_i32 = arith.constant 0 : i32
    %c0_i32_0 = arith.constant 0 : i32
    %c0_i32_1 = arith.constant 0 : i32
    return %c0_i32, %c0_i32_0 : i32, i32
  }
  func.func @transform_5(%arg0: i32) -> (i32, i32) {
    %c0_i32 = arith.constant 0 : i32
    %c0_i32_0 = arith.constant 0 : i32
    return %arg0, %c0_i32 : i32, i32
  }
  func.func @transform_6(%arg0: i32) -> (i32, i32, i32) {
    %c0_i32 = arith.constant 0 : i32
    %c0_i32_0 = arith.constant 0 : i32
    %c0_i32_1 = arith.constant 0 : i32
    return %arg0, %c0_i32, %c0_i32_0 : i32, i32, i32
  }
}

module attributes {stable_mosaic.version = 11 : i64} {
  func.func @_bn_add_relu_kernel(%arg0: i32, %arg1: i32, %arg2: memref<256x128xf32, #tpu.memory_space<vmem>>, %arg3: memref<256x128xf32, #tpu.memory_space<vmem>>, %arg4: memref<1x128xf32, #tpu.memory_space<vmem>>, %arg5: memref<1x128xf32, #tpu.memory_space<vmem>>, %arg6: memref<256x128xf32, #tpu.memory_space<vmem>>) attributes {dimension_semantics = [#tpu.dimension_semantics<parallel>, #tpu.dimension_semantics<parallel>], iteration_bounds = array<i64: 2, 1>, scalar_prefetch = 0 : i64, scratch_operands = 0 : i64, tpu.core_type = #tpu.core_type<tc>, window_params = [{transform_indices = @transform_0, window_bounds = array<i64: 256, 128>}, {transform_indices = @transform_1, window_bounds = array<i64: 256, 128>}, {transform_indices = @transform_2, window_bounds = array<i64: 1, 128>}, {transform_indices = @transform_3, window_bounds = array<i64: 1, 128>}, {transform_indices = @transform_4, window_bounds = array<i64: 256, 128>}]} {
    %c0 = arith.constant 0 : index
    %c0_0 = arith.constant 0 : index
    %0 = vector.load %arg2[%c0, %c0_0] : memref<256x128xf32, #tpu.memory_space<vmem>>, vector<256x128xf32>
    %c0_1 = arith.constant 0 : index
    %c0_2 = arith.constant 0 : index
    %1 = vector.load %arg3[%c0_1, %c0_2] : memref<256x128xf32, #tpu.memory_space<vmem>>, vector<256x128xf32>
    %c0_3 = arith.constant 0 : index
    %c0_4 = arith.constant 0 : index
    %2 = vector.load %arg4[%c0_3, %c0_4] : memref<1x128xf32, #tpu.memory_space<vmem>>, vector<1x128xf32>
    %3 = vector.broadcast %2 : vector<1x128xf32> to vector<256x128xf32>
    %4 = arith.mulf %0, %3 : vector<256x128xf32>
    %c0_5 = arith.constant 0 : index
    %c0_6 = arith.constant 0 : index
    %5 = vector.load %arg5[%c0_5, %c0_6] : memref<1x128xf32, #tpu.memory_space<vmem>>, vector<1x128xf32>
    %6 = vector.broadcast %5 : vector<1x128xf32> to vector<256x128xf32>
    %7 = arith.addf %4, %6 : vector<256x128xf32>
    %8 = arith.addf %7, %1 : vector<256x128xf32>
    %cst = arith.constant 0.000000e+00 : f32
    %9 = vector.broadcast %cst : f32 to vector<256x128xf32>
    %10 = arith.maximumf %8, %9 : vector<256x128xf32>
    %c0_7 = arith.constant 0 : index
    %c0_8 = arith.constant 0 : index
    %11 = vector.load %arg6[%c0_7, %c0_8] : memref<256x128xf32, #tpu.memory_space<vmem>>, vector<256x128xf32>
    tpu.vector_store %arg6[%c0_7, %c0_8], %10 {strides = array<i32>} : memref<256x128xf32, #tpu.memory_space<vmem>>, vector<256x128xf32>,
    return
  }
  func.func @transform_0(%arg0: i32, %arg1: i32) -> (i32, i32) {
    %c0_i32 = arith.constant 0 : i32
    return %arg0, %arg1 : i32, i32
  }
  func.func @transform_1(%arg0: i32, %arg1: i32) -> (i32, i32) {
    %c0_i32 = arith.constant 0 : i32
    return %arg0, %arg1 : i32, i32
  }
  func.func @transform_2(%arg0: i32, %arg1: i32) -> (i32, i32) {
    %c0_i32 = arith.constant 0 : i32
    %c0_i32_0 = arith.constant 0 : i32
    return %c0_i32, %arg1 : i32, i32
  }
  func.func @transform_3(%arg0: i32, %arg1: i32) -> (i32, i32) {
    %c0_i32 = arith.constant 0 : i32
    %c0_i32_0 = arith.constant 0 : i32
    return %c0_i32, %arg1 : i32, i32
  }
  func.func @transform_4(%arg0: i32, %arg1: i32) -> (i32, i32) {
    %c0_i32 = arith.constant 0 : i32
    return %arg0, %arg1 : i32, i32
  }
}

</mosaic_0001>

<llo_original>
// kernel: block21d_forward.9
$region0: #{block21d_forward.9}
  #allocation0 [shape = 'u32[]', space=smem, size = 0x4, offset = 0x4, fixed_abs, tag = 'smem constant byte address 0x4 - core index']
  #allocation1 [shape = 'u32[144,128]{1,0:T(1,128)}', space=vmem, size = 0x12000, scoped, tag = 'internal scratch']
  %s0 = inlined_call_operand.vmem [shape: f32[512,128], index: 0, kind: input, shape index: {}]
  %s1 = inlined_call_operand.vmem [shape: f32[512,128], index: 1, kind: input, shape index: {}]
  %s2 = inlined_call_operand.vmem [shape: f32[1,128], index: 2, kind: input, shape index: {}]
  %s3 = inlined_call_operand.vmem [shape: f32[1,128], index: 3, kind: input, shape index: {}]
  %s4 = inlined_call_operand.vmem [shape: f32[512,128], index: 4, kind: output, shape index: {}]
  %s5 = sld [smem:[#allocation0]]
  $region49: #{block21d_forward.9} parent=0
    _
  %s7 = ssub.s32 1, %s5
  %s8 = scalar_select 0, %s7, %s5
  loop: start=0, step=1, limit=4
  $region2: #{block21d_forward.9} parent=0 // loop_pre_header
    _
  $region3: #{block21d_forward.9} parent=0 // loop_header
    %s10 = sphi 0, %s14
    %p11 = scmp.ge.s32.totalorder %s10, 4
    %s17 = sphi 0, %s29
    %s18 = sphi 0, %s25
    %s19 = sphi 0, %s17
    %s20 = sphi 0, %s18
    %s21 = sphi 0, %s19
    %s22 = sphi 0, %s20
    %s34 = sphi 0, %s36
    %s37 = sphi 0, %s34
    %s38 = sphi 0, %s37
    %s54 = sphi 0, %s38
    %s62 = sphi 0, %s64
    %s65 = sphi 0, %s62
    %s66 = sphi 0, %s65
    %s82 = sphi 0, %s66
    %s88 = sphi 0, %s90
    %s91 = sphi 0, %s88
    %s92 = sphi 0, %s91
    %s108 = sphi 0, %s92
    %s114 = sphi 0, %s116
    %s117 = sphi 0, %s114
    %s118 = sphi 0, %s117
    %s134 = sphi 0, %s118
    %s142 = sphi 0, %s144
    %s145 = sphi 0, %s142
    %s146 = sphi 0, %s145
    %s162 = sphi 0, %s146
  $region4: #{block21d_forward.9} parent=0 // loop_header_branch
    %13 = sbr.rel (%p11) target = $region8
  $region5: #{block21d_forward.9} parent=0 // loop_body
    %s15 = ssub.s32 %s10, 1
    %s16 = ssub.s32 %s10, 2
    %s23 = sadd.s32 1, %s18
    %p24 = scmp.ge.s32.totalorder %s23, 1
    %s25 = scalar_select %p24, 0, %s23
    %s26 = sadd.s32 1, %s17
    %s27 = scalar_select %p24, %s26, %s17
    %p28 = scmp.ge.s32.totalorder %s27, 2
    %s29 = scalar_select %p28, 0, %s27
    %s30 = ssub.s32 %s17, %s29
    %s31 = ssub.s32 %s18, %s25
    %s32 = sor.u32 %s30, %s31
    %p33 = scmp.eq.s32.totalorder %s32, 0
    %s35 = sadd.s32 %s34, 1
    %s36 = scalar_select %p33, %s34, %s35
    %p39 = pneg %p33
    %p40 = scmp.eq.s32.totalorder %s10, 1
    %p41 = por %p39, %p40
    %p42 = scmp.ne.s32.totalorder %s34, %s37
    %p43 = scmp.eq.s32.totalorder %s10, 0
    %p44 = por %p42, %p43
    %p45 = scmp.ne.s32.totalorder %s34, %s37
    %p46 = scmp.eq.s32.totalorder %s15, 1
    %p47 = por %p45, %p46
    %p48 = scmp.ne.s32.totalorder %s37, %s38
    %p49 = scmp.eq.s32.totalorder %s15, 0
    %p50 = por %p48, %p49
    %p51 = scmp.ne.s32.totalorder %s37, %s38
    %p52 = scmp.eq.s32.totalorder %s16, 1
    %p53 = por %p51, %p52
    %p55 = scmp.ne.s32.totalorder %s38, %s54
    %p56 = scmp.eq.s32.totalorder %s16, 0
    %p57 = por %p55, %p56
    %s58 = ssub.s32 %s17, %s29
    %s59 = ssub.s32 %s18, %s25
    %s60 = sor.u32 %s58, %s59
    %p61 = scmp.eq.s32.totalorder %s60, 0
    %s63 = sadd.s32 %s62, 1
    %s64 = scalar_select %p61, %s62, %s63
    %p67 = pneg %p61
    %p68 = scmp.eq.s32.totalorder %s10, 1
    %p69 = por %p67, %p68
    %p70 = scmp.ne.s32.totalorder %s62, %s65
    %p71 = scmp.eq.s32.totalorder %s10, 0
    %p72 = por %p70, %p71
    %p73 = scmp.ne.s32.totalorder %s62, %s65
    %p74 = scmp.eq.s32.totalorder %s15, 1
    %p75 = por %p73, %p74
    %p76 = scmp.ne.s32.totalorder %s65, %s66
    %p77 = scmp.eq.s32.totalorder %s15, 0
    %p78 = por %p76, %p77
    %p79 = scmp.ne.s32.totalorder %s65, %s66
    %p80 = scmp.eq.s32.totalorder %s16, 1
    %p81 = por %p79, %p80
    %p83 = scmp.ne.s32.totalorder %s66, %s82
    %p84 = scmp.eq.s32.totalorder %s16, 0
    %p85 = por %p83, %p84
    %s86 = ssub.s32 %s18, %s25
    %p87 = scmp.eq.s32.totalorder %s86, 0
    %s89 = sadd.s32 %s88, 1
    %s90 = scalar_select %p87, %s88, %s89
    %p93 = pneg %p87
    %p94 = scmp.eq.s32.totalorder %s10, 1
    %p95 = por %p93, %p94
    %p96 = scmp.ne.s32.totalorder %s88, %s91
    %p97 = scmp.eq.s32.totalorder %s10, 0
    %p98 = por %p96, %p97
    %p99 = scmp.ne.s32.totalorder %s88, %s91
    %p100 = scmp.eq.s32.totalorder %s15, 1
    %p101 = por %p99, %p100
    %p102 = scmp.ne.s32.totalorder %s91, %s92
    %p103 = scmp.eq.s32.totalorder %s15, 0
    %p104 = por %p102, %p103
    %p105 = scmp.ne.s32.totalorder %s91, %s92
    %p106 = scmp.eq.s32.totalorder %s16, 1
    %p107 = por %p105, %p106
    %p109 = scmp.ne.s32.totalorder %s92, %s108
    %p110 = scmp.eq.s32.totalorder %s16, 0
    %p111 = por %p109, %p110
    %s112 = ssub.s32 %s18, %s25
    %p113 = scmp.eq.s32.totalorder %s112, 0
    %s115 = sadd.s32 %s114, 1
    %s116 = scalar_select %p113, %s114, %s115
    %p119 = pneg %p113
    %p120 = scmp.eq.s32.totalorder %s10, 1
    %p121 = por %p119, %p120
    %p122 = scmp.ne.s32.totalorder %s114, %s117
    %p123 = scmp.eq.s32.totalorder %s10, 0
    %p124 = por %p122, %p123
    %p125 = scmp.ne.s32.totalorder %s114, %s117
    %p126 = scmp.eq.s32.totalorder %s15, 1
    %p127 = por %p125, %p126
    %p128 = scmp.ne.s32.totalorder %s117, %s118
    %p129 = scmp.eq.s32.totalorder %s15, 0
    %p130 = por %p128, %p129
    %p131 = scmp.ne.s32.totalorder %s117, %s118
    %p132 = scmp.eq.s32.totalorder %s16, 1
    %p133 = por %p131, %p132
    %p135 = scmp.ne.s32.totalorder %s118, %s134
    %p136 = scmp.eq.s32.totalorder %s16, 0
    %p137 = por %p135, %p136
    %s138 = ssub.s32 %s17, %s29
    %s139 = ssub.s32 %s18, %s25
    %s140 = sor.u32 %s138, %s139
    %p141 = scmp.eq.s32.totalorder %s140, 0
    %s143 = sadd.s32 %s142, 1
    %s144 = scalar_select %p141, %s142, %s143
    %p147 = pneg %p141
    %p148 = scmp.eq.s32.totalorder %s10, 1
    %p149 = por %p147, %p148
    %p150 = scmp.ne.s32.totalorder %s142, %s145
    %p151 = scmp.eq.s32.totalorder %s10, 0
    %p152 = por %p150, %p151
    %p153 = scmp.ne.s32.totalorder %s142, %s145
    %p154 = scmp.eq.s32.totalorder %s15, 1
    %p155 = por %p153, %p154
    %p156 = scmp.ne.s32.totalorder %s145, %s146
    %p157 = scmp.eq.s32.totalorder %s15, 0
    %p158 = por %p156, %p157
    %p159 = scmp.ne.s32.totalorder %s145, %s146
    %p160 = scmp.eq.s32.totalorder %s16, 1
    %p161 = por %p159, %p160
    %p163 = scmp.ne.s32.totalorder %s146, %s162
    %p164 = scmp.eq.s32.totalorder %s16, 0
    %p165 = por %p163, %p164
    %p166 = scmp.le.s32.totalorder 1, %s10
    %p167 = scmp.lt.s32.totalorder %s10, 3
    %p168 = pnand %p166, %p167
    %p169 = pneg %p168
    // Predicated region
    $region9: #{block21d_forward.9} parent=5 // pred_check
      _
    $region10: #{block21d_forward.9} parent=5 // pred_check_branch
      %171 = sbr.rel (%p168) target = $region12
    $region11: #{block21d_forward.9} parent=5 // pred_region
      %s172 = ssub.s32 %s10, 1
      // Predicated region
      $region13: #{block21d_forward.9} parent=11 // pred_check
        %p173 = pneg %p104
      $region14: #{block21d_forward.9} parent=11 // pred_check_branch
        %175 = sbr.rel (%p173) target = $region16
      $region15: #{block21d_forward.9} parent=11 // pred_region
        %p176 = scmp.lt.s32.totalorder %s20, 0
        %s177 = scalar_select %p176, %s20, 0
        %s178 = scalar_lea.vmem %s2, %s177
      $region16: #{block21d_forward.9} parent=11 // pred_fallthru
        _
      // Predicated region
      $region17: #{block21d_forward.9} parent=11 // pred_check
        %p179 = pneg %p130
      $region18: #{block21d_forward.9} parent=11 // pred_check_branch
        %181 = sbr.rel (%p179) target = $region20
      $region19: #{block21d_forward.9} parent=11 // pred_region
        %p182 = scmp.lt.s32.totalorder %s20, 0
        %s183 = scalar_select %p182, %s20, 0
        %s184 = scalar_lea.vmem %s3, %s183
      $region20: #{block21d_forward.9} parent=11 // pred_fallthru
        _
    $region12: #{block21d_forward.9} parent=5 // pred_fallthru
      _
    %p185 = scmp.lt.s32.totalorder %s10, 2
    // Predicated region
    $region21: #{block21d_forward.9} parent=5 // pred_check
      %p186 = pneg %p185
    $region22: #{block21d_forward.9} parent=5 // pred_check_branch
      %188 = sbr.rel (%p186) target = $region24
    $region23: #{block21d_forward.9} parent=5 // pred_region
      // Predicated region
      $region25: #{block21d_forward.9} parent=23 // pred_check
        %p189 = pneg %p44
      $region26: #{block21d_forward.9} parent=23 // pred_check_branch
        %191 = sbr.rel (%p189) target = $region28
      $region27: #{block21d_forward.9} parent=23 // pred_region
        %s192 = smul.u32 32, %s17
        %p193 = scmp.lt.s32.totalorder %s192, 63
        %s194 = scalar_select %p193, %s192, 63
        %p195 = scmp.lt.s32.totalorder %s18, 0
        %s196 = scalar_select %p195, %s18, 0
        %s197 = sadd.s32 %s196, %s194
        %s198 = smul.addr %s197, 8
        %s199 = scalar_lea.vmem %s0, %s198
        %s200 = smul.u32 32, %s17
      $region28: #{block21d_forward.9} parent=23 // pred_fallthru
        _
      // Predicated region
      $region29: #{block21d_forward.9} parent=23 // pred_check
        %p201 = pneg %p72
      $region30: #{block21d_forward.9} parent=23 // pred_check_branch
        %203 = sbr.rel (%p201) target = $region32
      $region31: #{block21d_forward.9} parent=23 // pred_region
        %s204 = smul.u32 32, %s17
        %p205 = scmp.lt.s32.totalorder %s204, 63
        %s206 = scalar_select %p205, %s204, 63
        %p207 = scmp.lt.s32.totalorder %s18, 0
        %s208 = scalar_select %p207, %s18, 0
        %s209 = sadd.s32 %s208, %s206
        %s210 = smul.addr %s209, 8
        %s211 = scalar_lea.vmem %s1, %s210
        %s212 = smul.u32 32, %s17
      $region32: #{block21d_forward.9} parent=23 // pred_fallthru
        _
    $region24: #{block21d_forward.9} parent=5 // pred_fallthru
      _
    %p213 = scmp.le.s32.totalorder 1, %s10
    %p214 = scmp.lt.s32.totalorder %s10, 3
    %p215 = pnand %p213, %p214
    %p216 = pneg %p215
    // Predicated region
    $region33: #{block21d_forward.9} parent=5 // pred_check
      _
    $region34: #{block21d_forward.9} parent=5 // pred_check_branch
      %218 = sbr.rel (%p215) target = $region36
    $region35: #{block21d_forward.9} parent=5 // pred_region
      %s219 = ssub.s32 %s10, 1
      %s220 = smul.u32 32, %s19
      %p221 = scmp.lt.s32.totalorder %s220, 63
      %s222 = scalar_select %p221, %s220, 63
      %p223 = scmp.lt.s32.totalorder %s20, 0
      %s224 = scalar_select %p223, %s20, 0
      %s225 = sadd.s32 %s224, %s222
      %s226 = smul.addr %s225, 8
      %s227 = scalar_lea.vmem %s0, %s226
      %p228 = pneg %p50
      %p229 = pneg %p47
      %s230 = smul.u32 32, %s19
      %p231 = scmp.lt.s32.totalorder %s230, 63
      %s232 = scalar_select %p231, %s230, 63
      %p233 = scmp.lt.s32.totalorder %s20, 0
      %s234 = scalar_select %p233, %s20, 0
      %s235 = sadd.s32 %s234, %s232
      %s236 = smul.addr %s235, 8
      %s237 = scalar_lea.vmem %s1, %s236
      %p238 = pneg %p78
      %p239 = pneg %p75
      %p240 = scmp.lt.s32.totalorder %s20, 0
      %s241 = scalar_select %p240, %s20, 0
      %s242 = scalar_lea.vmem %s2, %s241
      %p243 = pneg %p104
      %p244 = pneg %p101
      %p245 = scmp.lt.s32.totalorder %s20, 0
      %s246 = scalar_select %p245, %s20, 0
      %s247 = scalar_lea.vmem %s3, %s246
      %p248 = pneg %p130
      %p249 = pneg %p127
      %p250 = pneg %p158
      %p251 = pneg %p155
      %s252 = smul.u32 32, %s19
      %p253 = scmp.lt.s32.totalorder %s252, 63
      %s254 = scalar_select %p253, %s252, 63
      %p255 = scmp.lt.s32.totalorder %s20, 0
      %s256 = scalar_select %p255, %s20, 0
      %s257 = sadd.s32 %s256, %s254
      %s258 = smul.addr %s257, 8
      %s259 = scalar_lea.vmem %s4, %s258
      %s260 = smul.u32 32, %s19
      %p261 = scmp.lt.s32.totalorder %s260, 63
      %s262 = scalar_select %p261, %s260, 63
      %p263 = scmp.lt.s32.totalorder %s20, 0
      %s264 = scalar_select %p263, %s20, 0
      %s265 = sadd.s32 %s264, %s262
      %s266 = smul.addr %s265, 8
      %s267 = scalar_lea.vmem %s0, %s266
      %s268 = smul.u32 32, %s19
      %s269 = smul.u32 32, %s19
      %p270 = scmp.lt.s32.totalorder %s269, 63
      %s271 = scalar_select %p270, %s269, 63
      %p272 = scmp.lt.s32.totalorder %s20, 0
      %s273 = scalar_select %p272, %s20, 0
      %s274 = sadd.s32 %s273, %s271
      %s275 = smul.addr %s274, 8
      %s276 = scalar_lea.vmem %s1, %s275
      %s277 = smul.u32 32, %s19
      %p278 = scmp.lt.s32.totalorder %s20, 0
      %s279 = scalar_select %p278, %s20, 0
      %s280 = scalar_lea.vmem %s2, %s279
      %p281 = scmp.lt.s32.totalorder %s20, 0
      %s282 = scalar_select %p281, %s20, 0
      %s283 = scalar_lea.vmem %s3, %s282
      %s284 = smul.u32 32, %s19
      %p285 = scmp.lt.s32.totalorder %s284, 63
      %s286 = scalar_select %p285, %s284, 63
      %p287 = scmp.lt.s32.totalorder %s20, 0
      %s288 = scalar_select %p287, %s20, 0
      %s289 = sadd.s32 %s288, %s286
      %s290 = smul.addr %s289, 8
      %s291 = scalar_lea.vmem %s4, %s290
      %s292 = smul.u32 32, %s19
      %v293 = vld [vmem:[%s267] sm:$0xff]
      %v294 = vld [vmem:[%s267 + $0x8] sm:$0xff]
      %v295 = vld [vmem:[%s267 + $0x10] sm:$0xff]
      %v296 = vld [vmem:[%s267 + $0x18] sm:$0xff]
      %v297 = vld [vmem:[%s267 + $0x20] sm:$0xff]
      %v298 = vld [vmem:[%s267 + $0x28] sm:$0xff]
      %v299 = vld [vmem:[%s267 + $0x30] sm:$0xff]
      %v300 = vld [vmem:[%s267 + $0x38] sm:$0xff]
      %v301 = vld [vmem:[%s267 + $0x40] sm:$0xff]
      %v302 = vld [vmem:[%s267 + $0x48] sm:$0xff]
      %v303 = vld [vmem:[%s267 + $0x50] sm:$0xff]
      %v304 = vld [vmem:[%s267 + $0x58] sm:$0xff]
      %v305 = vld [vmem:[%s267 + $0x60] sm:$0xff]
      %v306 = vld [vmem:[%s267 + $0x68] sm:$0xff]
      %v307 = vld [vmem:[%s267 + $0x70] sm:$0xff]
      %v308 = vld [vmem:[%s267 + $0x78] sm:$0xff]
      %v309 = vld [vmem:[%s267 + $0x80] sm:$0xff]
      %v310 = vld [vmem:[%s267 + $0x88] sm:$0xff]
      %v311 = vld [vmem:[%s267 + $0x90] sm:$0xff]
      %v312 = vld [vmem:[%s267 + $0x98] sm:$0xff]
      %v313 = vld [vmem:[%s267 + $0xa0] sm:$0xff]
      %v314 = vld [vmem:[%s267 + $0xa8] sm:$0xff]
      %v315 = vld [vmem:[%s267 + $0xb0] sm:$0xff]
      %v316 = vld [vmem:[%s267 + $0xb8] sm:$0xff]
      %v317 = vld [vmem:[%s267 + $0xc0] sm:$0xff]
      %v318 = vld [vmem:[%s267 + $0xc8] sm:$0xff]
      %v319 = vld [vmem:[%s267 + $0xd0] sm:$0xff]
      %v320 = vld [vmem:[%s267 + $0xd8] sm:$0xff]
      %v321 = vld [vmem:[%s267 + $0xe0] sm:$0xff]
      %v322 = vld [vmem:[%s267 + $0xe8] sm:$0xff]
      %v323 = vld [vmem:[%s267 + $0xf0] sm:$0xff]
      %v324 = vld [vmem:[%s267 + $0xf8] sm:$0xff]
      %v325 = vld [vmem:[%s276] sm:$0xff]
      %v326 = vld [vmem:[%s276 + $0x8] sm:$0xff]
      %v327 = vld [vmem:[%s276 + $0x10] sm:$0xff]
      %v328 = vld [vmem:[%s276 + $0x18] sm:$0xff]
      %v329 = vld [vmem:[%s276 + $0x20] sm:$0xff]
      %v330 = vld [vmem:[%s276 + $0x28] sm:$0xff]
      %v331 = vld [vmem:[%s276 + $0x30] sm:$0xff]
      %v332 = vld [vmem:[%s276 + $0x38] sm:$0xff]
      %v333 = vld [vmem:[%s276 + $0x40] sm:$0xff]
      %v334 = vld [vmem:[%s276 + $0x48] sm:$0xff]
      %v335 = vld [vmem:[%s276 + $0x50] sm:$0xff]
      %v336 = vld [vmem:[%s276 + $0x58] sm:$0xff]
      %v337 = vld [vmem:[%s276 + $0x60] sm:$0xff]
      %v338 = vld [vmem:[%s276 + $0x68] sm:$0xff]
      %v339 = vld [vmem:[%s276 + $0x70] sm:$0xff]
      %v340 = vld [vmem:[%s276 + $0x78] sm:$0xff]
      %v341 = vld [vmem:[%s276 + $0x80] sm:$0xff]
      %v342 = vld [vmem:[%s276 + $0x88] sm:$0xff]
      %v343 = vld [vmem:[%s276 + $0x90] sm:$0xff]
      %v344 = vld [vmem:[%s276 + $0x98] sm:$0xff]
      %v345 = vld [vmem:[%s276 + $0xa0] sm:$0xff]
      %v346 = vld [vmem:[%s276 + $0xa8] sm:$0xff]
      %v347 = vld [vmem:[%s276 + $0xb0] sm:$0xff]
      %v348 = vld [vmem:[%s276 + $0xb8] sm:$0xff]
      %v349 = vld [vmem:[%s276 + $0xc0] sm:$0xff]
      %v350 = vld [vmem:[%s276 + $0xc8] sm:$0xff]
      %v351 = vld [vmem:[%s276 + $0xd0] sm:$0xff]
      %v352 = vld [vmem:[%s276 + $0xd8] sm:$0xff]
      %v353 = vld [vmem:[%s276 + $0xe0] sm:$0xff]
      %v354 = vld [vmem:[%s276 + $0xe8] sm:$0xff]
      %v355 = vld [vmem:[%s276 + $0xf0] sm:$0xff]
      %v356 = vld [vmem:[%s276 + $0xf8] sm:$0xff]
      %v357 = vld [vmem:[%s280] sm:$0x1]
      %v359 = vlaneseq
      %v360 = vshrl.u32 %v359, 7
      %v361 = vsub.s32 0, %v360
      %v362 = vrot.slane %v357, %v361
      %v364 = vmul.f32 %v293, %v362
      %v365 = vmul.f32 %v294, %v362
      %v366 = vmul.f32 %v295, %v362
      %v367 = vmul.f32 %v296, %v362
      %v368 = vmul.f32 %v297, %v362
      %v369 = vmul.f32 %v298, %v362
      %v370 = vmul.f32 %v299, %v362
      %v371 = vmul.f32 %v300, %v362
      %v372 = vmul.f32 %v301, %v362
      %v373 = vmul.f32 %v302, %v362
      %v374 = vmul.f32 %v303, %v362
      %v375 = vmul.f32 %v304, %v362
      %v376 = vmul.f32 %v305, %v362
      %v377 = vmul.f32 %v306, %v362
      %v378 = vmul.f32 %v307, %v362
      %v379 = vmul.f32 %v308, %v362
      %v380 = vmul.f32 %v309, %v362
      %v381 = vmul.f32 %v310, %v362
      %v382 = vmul.f32 %v311, %v362
      %v383 = vmul.f32 %v312, %v362
      %v384 = vmul.f32 %v313, %v362
      %v385 = vmul.f32 %v314, %v362
      %v386 = vmul.f32 %v315, %v362
      %v387 = vmul.f32 %v316, %v362
      %v388 = vmul.f32 %v317, %v362
      %v389 = vmul.f32 %v318, %v362
      %v390 = vmul.f32 %v319, %v362
      %v391 = vmul.f32 %v320, %v362
      %v392 = vmul.f32 %v321, %v362
      %v393 = vmul.f32 %v322, %v362
      %v394 = vmul.f32 %v323, %v362
      %v395 = vmul.f32 %v324, %v362
      %v396 = vld [vmem:[%s283] sm:$0x1]
      %v398 = vlaneseq
      %v399 = vshrl.u32 %v398, 7
      %v400 = vsub.s32 0, %v399
      %v401 = vrot.slane %v396, %v400
      %v403 = vadd.f32 %v364, %v401
      %v404 = vadd.f32 %v365, %v401
      %v405 = vadd.f32 %v366, %v401
      %v406 = vadd.f32 %v367, %v401
      %v407 = vadd.f32 %v368, %v401
      %v408 = vadd.f32 %v369, %v401
      %v409 = vadd.f32 %v370, %v401
      %v410 = vadd.f32 %v371, %v401
      %v411 = vadd.f32 %v372, %v401
      %v412 = vadd.f32 %v373, %v401
      %v413 = vadd.f32 %v374, %v401
      %v414 = vadd.f32 %v375, %v401
      %v415 = vadd.f32 %v376, %v401
      %v416 = vadd.f32 %v377, %v401
      %v417 = vadd.f32 %v378, %v401
      %v418 = vadd.f32 %v379, %v401
      %v419 = vadd.f32 %v380, %v401
      %v420 = vadd.f32 %v381, %v401
      %v421 = vadd.f32 %v382, %v401
      %v422 = vadd.f32 %v383, %v401
      %v423 = vadd.f32 %v384, %v401
      %v424 = vadd.f32 %v385, %v401
      %v425 = vadd.f32 %v386, %v401
      %v426 = vadd.f32 %v387, %v401
      %v427 = vadd.f32 %v388, %v401
      %v428 = vadd.f32 %v389, %v401
      %v429 = vadd.f32 %v390, %v401
      %v430 = vadd.f32 %v391, %v401
      %v431 = vadd.f32 %v392, %v401
      %v432 = vadd.f32 %v393, %v401
      %v433 = vadd.f32 %v394, %v401
      %v434 = vadd.f32 %v395, %v401
      %v435 = vadd.f32 %v403, %v325
      %v436 = vadd.f32 %v404, %v326
      %v437 = vadd.f32 %v405, %v327
      %v438 = vadd.f32 %v406, %v328
      %v439 = vadd.f32 %v407, %v329
      %v440 = vadd.f32 %v408, %v330
      %v441 = vadd.f32 %v409, %v331
      %v442 = vadd.f32 %v410, %v332
      %v443 = vadd.f32 %v411, %v333
      %v444 = vadd.f32 %v412, %v334
      %v445 = vadd.f32 %v413, %v335
      %v446 = vadd.f32 %v414, %v336
      %v447 = vadd.f32 %v415, %v337
      %v448 = vadd.f32 %v416, %v338
      %v449 = vadd.f32 %v417, %v339
      %v450 = vadd.f32 %v418, %v340
      %v451 = vadd.f32 %v419, %v341
      %v452 = vadd.f32 %v420, %v342
      %v453 = vadd.f32 %v421, %v343
      %v454 = vadd.f32 %v422, %v344
      %v455 = vadd.f32 %v423, %v345
      %v456 = vadd.f32 %v424, %v346
      %v457 = vadd.f32 %v425, %v347
      %v458 = vadd.f32 %v426, %v348
      %v459 = vadd.f32 %v427, %v349
      %v460 = vadd.f32 %v428, %v350
      %v461 = vadd.f32 %v429, %v351
      %v462 = vadd.f32 %v430, %v352
      %v463 = vadd.f32 %v431, %v353
      %v464 = vadd.f32 %v432, %v354
      %v465 = vadd.f32 %v433, %v355
      %v466 = vadd.f32 %v434, %v356
      %v467 = vmax.f32 %v435, 0.0
      %v468 = vmax.f32 %v436, 0.0
      %v469 = vmax.f32 %v437, 0.0
      %v470 = vmax.f32 %v438, 0.0
      %v471 = vmax.f32 %v439, 0.0
      %v472 = vmax.f32 %v440, 0.0
      %v473 = vmax.f32 %v441, 0.0
      %v474 = vmax.f32 %v442, 0.0
      %v475 = vmax.f32 %v443, 0.0
      %v476 = vmax.f32 %v444, 0.0
      %v477 = vmax.f32 %v445, 0.0
      %v478 = vmax.f32 %v446, 0.0
      %v479 = vmax.f32 %v447, 0.0
      %v480 = vmax.f32 %v448, 0.0
      %v481 = vmax.f32 %v449, 0.0
      %v482 = vmax.f32 %v450, 0.0
      %v483 = vmax.f32 %v451, 0.0
      %v484 = vmax.f32 %v452, 0.0
      %v485 = vmax.f32 %v453, 0.0
      %v486 = vmax.f32 %v454, 0.0
      %v487 = vmax.f32 %v455, 0.0
      %v488 = vmax.f32 %v456, 0.0
      %v489 = vmax.f32 %v457, 0.0
      %v490 = vmax.f32 %v458, 0.0
      %v491 = vmax.f32 %v459, 0.0
      %v492 = vmax.f32 %v460, 0.0
      %v493 = vmax.f32 %v461, 0.0
      %v494 = vmax.f32 %v462, 0.0
      %v495 = vmax.f32 %v463, 0.0
      %v496 = vmax.f32 %v464, 0.0
      %v497 = vmax.f32 %v465, 0.0
      %v498 = vmax.f32 %v466, 0.0
      %499 = vst [vmem:[%s291] sm:$0xff] %v467
      %500 = vst [vmem:[%s291 + $0x8] sm:$0xff] %v468
      %501 = vst [vmem:[%s291 + $0x10] sm:$0xff] %v469
      %502 = vst [vmem:[%s291 + $0x18] sm:$0xff] %v470
      %503 = vst [vmem:[%s291 + $0x20] sm:$0xff] %v471
      %504 = vst [vmem:[%s291 + $0x28] sm:$0xff] %v472
      %505 = vst [vmem:[%s291 + $0x30] sm:$0xff] %v473
      %506 = vst [vmem:[%s291 + $0x38] sm:$0xff] %v474
      %507 = vst [vmem:[%s291 + $0x40] sm:$0xff] %v475
      %508 = vst [vmem:[%s291 + $0x48] sm:$0xff] %v476
      %509 = vst [vmem:[%s291 + $0x50] sm:$0xff] %v477
      %510 = vst [vmem:[%s291 + $0x58] sm:$0xff] %v478
      %511 = vst [vmem:[%s291 + $0x60] sm:$0xff] %v479
      %512 = vst [vmem:[%s291 + $0x68] sm:$0xff] %v480
      %513 = vst [vmem:[%s291 + $0x70] sm:$0xff] %v481
      %514 = vst [vmem:[%s291 + $0x78] sm:$0xff] %v482
      %515 = vst [vmem:[%s291 + $0x80] sm:$0xff] %v483
      %516 = vst [vmem:[%s291 + $0x88] sm:$0xff] %v484
      %517 = vst [vmem:[%s291 + $0x90] sm:$0xff] %v485
      %518 = vst [vmem:[%s291 + $0x98] sm:$0xff] %v486
      %519 = vst [vmem:[%s291 + $0xa0] sm:$0xff] %v487
      %520 = vst [vmem:[%s291 + $0xa8] sm:$0xff] %v488
      %521 = vst [vmem:[%s291 + $0xb0] sm:$0xff] %v489
      %522 = vst [vmem:[%s291 + $0xb8] sm:$0xff] %v490
      %523 = vst [vmem:[%s291 + $0xc0] sm:$0xff] %v491
      %524 = vst [vmem:[%s291 + $0xc8] sm:$0xff] %v492
      %525 = vst [vmem:[%s291 + $0xd0] sm:$0xff] %v493
      %526 = vst [vmem:[%s291 + $0xd8] sm:$0xff] %v494
      %527 = vst [vmem:[%s291 + $0xe0] sm:$0xff] %v495
      %528 = vst [vmem:[%s291 + $0xe8] sm:$0xff] %v496
      %529 = vst [vmem:[%s291 + $0xf0] sm:$0xff] %v497
      %530 = vst [vmem:[%s291 + $0xf8] sm:$0xff] %v498
      %s531 = smul.u32 32, %s19
      %p532 = scmp.lt.s32.totalorder %s531, 63
      %s533 = scalar_select %p532, %s531, 63
      %p534 = scmp.lt.s32.totalorder %s20, 0
      %s535 = scalar_select %p534, %s20, 0
      %s536 = sadd.s32 %s535, %s533
      %s537 = smul.addr %s536, 8
      %s538 = scalar_lea.vmem %s4, %s537
      // Predicated region
      $region37: #{block21d_forward.9} parent=35 // pred_check
        %p539 = pneg %p155
      $region38: #{block21d_forward.9} parent=35 // pred_check_branch
        %541 = sbr.rel (%p539) target = $region40
      $region39: #{block21d_forward.9} parent=35 // pred_region
        %s542 = smul.u32 32, %s19
      $region40: #{block21d_forward.9} parent=35 // pred_fallthru
        _
    $region36: #{block21d_forward.9} parent=5 // pred_fallthru
      _
    %p543 = scmp.le.s32.totalorder 2, %s10
    // Predicated region
    $region41: #{block21d_forward.9} parent=5 // pred_check
      %p544 = pneg %p543
    $region42: #{block21d_forward.9} parent=5 // pred_check_branch
      %546 = sbr.rel (%p544) target = $region44
    $region43: #{block21d_forward.9} parent=5 // pred_region
      %s547 = ssub.s32 %s10, 2
      // Predicated region
      $region45: #{block21d_forward.9} parent=43 // pred_check
        %p548 = pneg %p161
      $region46: #{block21d_forward.9} parent=43 // pred_check_branch
        %550 = sbr.rel (%p548) target = $region48
      $region47: #{block21d_forward.9} parent=43 // pred_region
        %s551 = smul.u32 32, %s21
        %p552 = scmp.lt.s32.totalorder %s551, 63
        %s553 = scalar_select %p552, %s551, 63
        %p554 = scmp.lt.s32.totalorder %s22, 0
        %s555 = scalar_select %p554, %s22, 0
        %s556 = sadd.s32 %s555, %s553
        %s557 = smul.addr %s556, 8
        %s558 = scalar_lea.vmem %s4, %s557
      $region48: #{block21d_forward.9} parent=43 // pred_fallthru
        _
    $region44: #{block21d_forward.9} parent=5 // pred_fallthru
      _
  $region6: #{block21d_forward.9} parent=0 // loop_footer
    %s14 = sadd.s32 1, %s10
  $region7: #{block21d_forward.9} parent=0 // loop_footer_branch
    %9 = sbr.rel target = $region3
  $region8: #{block21d_forward.9} parent=0 // loop_exit
    _

// kernel: block21d_forward.6
$region0: #{block21d_forward.6}
  #allocation0 [shape = 'u32[]', space=smem, size = 0x4, offset = 0x4, fixed_abs, tag = 'smem constant byte address 0x4 - core index']
  #allocation1 [shape = 'u32[144,128]{1,0:T(1,128)}', space=vmem, size = 0x12000, scoped, tag = 'internal scratch']
  #allocation2 [shape = 'f32[6,64,128]{2,1,0:T(8,128)}', space=vmem, size = 0x30000, scoped, tag = 'scratch operand']
  #allocation3 [shape = 'f32[256,384]{1,0:T(8,128)}', space=vmem, size = 0x60000, scoped, tag = 'scratch operand']
  %s0 = inlined_call_operand.vmem [shape: f32[2,4,64,128], index: 0, kind: input, shape index: {}]
  %s1 = inlined_call_operand.vmem [shape: f32[1,128], index: 1, kind: input, shape index: {}]
  %s2 = inlined_call_operand.vmem [shape: f32[1,128], index: 2, kind: input, shape index: {}]
  %s3 = inlined_call_operand.vmem [shape: f32[384,128], index: 3, kind: input, shape index: {}]
  %s4 = inlined_call_operand.vmem [shape: f32[1,128], index: 4, kind: input, shape index: {}]
  %s5 = inlined_call_operand.vmem [shape: f32[2,4,64,128], index: 5, kind: output, shape index: {0}]
  %s6 = inlined_call_operand.vmem [shape: f32[2,1,2,128], index: 6, kind: output, shape index: {1}]
  %7 = xla_tuple %s5, %s6
  %s8 = sld [smem:[#allocation0]]
  $region61: #{block21d_forward.6} parent=0
    _
  %s10 = ssub.s32 1, %s8
  %s11 = scalar_select 0, %s10, %s8
  loop: start=0, step=1, limit=4
  $region2: #{block21d_forward.6} parent=0 // loop_pre_header
    _
  $region3: #{block21d_forward.6} parent=0 // loop_header
    %s13 = sphi 0, %s17
    %p14 = scmp.ge.s32.totalorder %s13, 4
    %s20 = sphi 0, %s32
    %s21 = sphi 0, %s28
    %s22 = sphi 0, %s20
    %s23 = sphi 0, %s21
    %s24 = sphi 0, %s22
    %s25 = sphi 0, %s23
    %s37 = sphi 0, %s39
    %s40 = sphi 0, %s37
    %s41 = sphi 0, %s40
    %s57 = sphi 0, %s41
    %s61 = sphi 0, %s61
    %s63 = sphi 0, %s61
    %s64 = sphi 0, %s63
    %s78 = sphi 0, %s64
    %s82 = sphi 0, %s82
    %s84 = sphi 0, %s82
    %s85 = sphi 0, %s84
    %s99 = sphi 0, %s85
    %s103 = sphi 0, %s103
    %s105 = sphi 0, %s103
    %s106 = sphi 0, %s105
    %s120 = sphi 0, %s106
    %s124 = sphi 0, %s124
    %s126 = sphi 0, %s124
    %s127 = sphi 0, %s126
    %s141 = sphi 0, %s127
    %s149 = sphi 0, %s151
    %s152 = sphi 0, %s149
    %s153 = sphi 0, %s152
    %s169 = sphi 0, %s153
    %s177 = sphi 0, %s179
    %s180 = sphi 0, %s177
    %s181 = sphi 0, %s180
    %s197 = sphi 0, %s181
  $region4: #{block21d_forward.6} parent=0 // loop_header_branch
    %16 = sbr.rel (%p14) target = $region8
  $region5: #{block21d_forward.6} parent=0 // loop_body
    %s18 = ssub.s32 %s13, 1
    %s19 = ssub.s32 %s13, 2
    %s26 = sadd.s32 1, %s21
    %p27 = scmp.ge.s32.totalorder %s26, 1
    %s28 = scalar_select %p27, 0, %s26
    %s29 = sadd.s32 1, %s20
    %s30 = scalar_select %p27, %s29, %s20
    %p31 = scmp.ge.s32.totalorder %s30, 2
    %s32 = scalar_select %p31, 0, %s30
    %s33 = ssub.s32 %s20, %s32
    %s34 = ssub.s32 %s21, %s28
    %s35 = sor.u32 %s33, %s34
    %p36 = scmp.eq.s32.totalorder %s35, 0
    %s38 = sadd.s32 %s37, 1
    %s39 = scalar_select %p36, %s37, %s38
    %p42 = pneg %p36
    %p43 = scmp.eq.s32.totalorder %s13, 1
    %p44 = por %p42, %p43
    %p45 = scmp.ne.s32.totalorder %s37, %s40
    %p46 = scmp.eq.s32.totalorder %s13, 0
    %p47 = por %p45, %p46
    %p48 = scmp.ne.s32.totalorder %s37, %s40
    %p49 = scmp.eq.s32.totalorder %s18, 1
    %p50 = por %p48, %p49
    %p51 = scmp.ne.s32.totalorder %s40, %s41
    %p52 = scmp.eq.s32.totalorder %s18, 0
    %p53 = por %p51, %p52
    %p54 = scmp.ne.s32.totalorder %s40, %s41
    %p55 = scmp.eq.s32.totalorder %s19, 1
    %p56 = por %p54, %p55
    %p58 = scmp.ne.s32.totalorder %s41, %s57
    %p59 = scmp.eq.s32.totalorder %s19, 0
    %p60 = por %p58, %p59
    %s62 = sadd.s32 %s61, 1
    %p65 = scmp.eq.s32.totalorder %s13, 1
    %p66 = scmp.ne.s32.totalorder %s61, %s63
    %p67 = scmp.eq.s32.totalorder %s13, 0
    %p68 = por %p66, %p67
    %p69 = scmp.ne.s32.totalorder %s61, %s63
    %p70 = scmp.eq.s32.totalorder %s18, 1
    %p71 = por %p69, %p70
    %p72 = scmp.ne.s32.totalorder %s63, %s64
    %p73 = scmp.eq.s32.totalorder %s18, 0
    %p74 = por %p72, %p73
    %p75 = scmp.ne.s32.totalorder %s63, %s64
    %p76 = scmp.eq.s32.totalorder %s19, 1
    %p77 = por %p75, %p76
    %p79 = scmp.ne.s32.totalorder %s64, %s78
    %p80 = scmp.eq.s32.totalorder %s19, 0
    %p81 = por %p79, %p80
    %s83 = sadd.s32 %s82, 1
    %p86 = scmp.eq.s32.totalorder %s13, 1
    %p87 = scmp.ne.s32.totalorder %s82, %s84
    %p88 = scmp.eq.s32.totalorder %s13, 0
    %p89 = por %p87, %p88
    %p90 = scmp.ne.s32.totalorder %s82, %s84
    %p91 = scmp.eq.s32.totalorder %s18, 1
    %p92 = por %p90, %p91
    %p93 = scmp.ne.s32.totalorder %s84, %s85
    %p94 = scmp.eq.s32.totalorder %s18, 0
    %p95 = por %p93, %p94
    %p96 = scmp.ne.s32.totalorder %s84, %s85
    %p97 = scmp.eq.s32.totalorder %s19, 1
    %p98 = por %p96, %p97
    %p100 = scmp.ne.s32.totalorder %s85, %s99
    %p101 = scmp.eq.s32.totalorder %s19, 0
    %p102 = por %p100, %p101
    %s104 = sadd.s32 %s103, 1
    %p107 = scmp.eq.s32.totalorder %s13, 1
    %p108 = scmp.ne.s32.totalorder %s103, %s105
    %p109 = scmp.eq.s32.totalorder %s13, 0
    %p110 = por %p108, %p109
    %p111 = scmp.ne.s32.totalorder %s103, %s105
    %p112 = scmp.eq.s32.totalorder %s18, 1
    %p113 = por %p111, %p112
    %p114 = scmp.ne.s32.totalorder %s105, %s106
    %p115 = scmp.eq.s32.totalorder %s18, 0
    %p116 = por %p114, %p115
    %p117 = scmp.ne.s32.totalorder %s105, %s106
    %p118 = scmp.eq.s32.totalorder %s19, 1
    %p119 = por %p117, %p118
    %p121 = scmp.ne.s32.totalorder %s106, %s120
    %p122 = scmp.eq.s32.totalorder %s19, 0
    %p123 = por %p121, %p122
    %s125 = sadd.s32 %s124, 1
    %p128 = scmp.eq.s32.totalorder %s13, 1
    %p129 = scmp.ne.s32.totalorder %s124, %s126
    %p130 = scmp.eq.s32.totalorder %s13, 0
    %p131 = por %p129, %p130
    %p132 = scmp.ne.s32.totalorder %s124, %s126
    %p133 = scmp.eq.s32.totalorder %s18, 1
    %p134 = por %p132, %p133
    %p135 = scmp.ne.s32.totalorder %s126, %s127
    %p136 = scmp.eq.s32.totalorder %s18, 0
    %p137 = por %p135, %p136
    %p138 = scmp.ne.s32.totalorder %s126, %s127
    %p139 = scmp.eq.s32.totalorder %s19, 1
    %p140 = por %p138, %p139
    %p142 = scmp.ne.s32.totalorder %s127, %s141
    %p143 = scmp.eq.s32.totalorder %s19, 0
    %p144 = por %p142, %p143
    %s145 = ssub.s32 %s20, %s32
    %s146 = ssub.s32 %s21, %s28
    %s147 = sor.u32 %s145, %s146
    %p148 = scmp.eq.s32.totalorder %s147, 0
    %s150 = sadd.s32 %s149, 1
    %s151 = scalar_select %p148, %s149, %s150
    %p154 = pneg %p148
    %p155 = scmp.eq.s32.totalorder %s13, 1
    %p156 = por %p154, %p155
    %p157 = scmp.ne.s32.totalorder %s149, %s152
    %p158 = scmp.eq.s32.totalorder %s13, 0
    %p159 = por %p157, %p158
    %p160 = scmp.ne.s32.totalorder %s149, %s152
    %p161 = scmp.eq.s32.totalorder %s18, 1
    %p162 = por %p160, %p161
    %p163 = scmp.ne.s32.totalorder %s152, %s153
    %p164 = scmp.eq.s32.totalorder %s18, 0
    %p165 = por %p163, %p164
    %p166 = scmp.ne.s32.totalorder %s152, %s153
    %p167 = scmp.eq.s32.totalorder %s19, 1
    %p168 = por %p166, %p167
    %p170 = scmp.ne.s32.totalorder %s153, %s169
    %p171 = scmp.eq.s32.totalorder %s19, 0
    %p172 = por %p170, %p171
    %s173 = ssub.s32 %s20, %s32
    %s174 = ssub.s32 %s21, %s28
    %s175 = sor.u32 %s173, %s174
    %p176 = scmp.eq.s32.totalorder %s175, 0
    %s178 = sadd.s32 %s177, 1
    %s179 = scalar_select %p176, %s177, %s178
    %p182 = pneg %p176
    %p183 = scmp.eq.s32.totalorder %s13, 1
    %p184 = por %p182, %p183
    %p185 = scmp.ne.s32.totalorder %s177, %s180
    %p186 = scmp.eq.s32.totalorder %s13, 0
    %p187 = por %p185, %p186
    %p188 = scmp.ne.s32.totalorder %s177, %s180
    %p189 = scmp.eq.s32.totalorder %s18, 1
    %p190 = por %p188, %p189
    %p191 = scmp.ne.s32.totalorder %s180, %s181
    %p192 = scmp.eq.s32.totalorder %s18, 0
    %p193 = por %p191, %p192
    %p194 = scmp.ne.s32.totalorder %s180, %s181
    %p195 = scmp.eq.s32.totalorder %s19, 1
    %p196 = por %p194, %p195
    %p198 = scmp.ne.s32.totalorder %s181, %s197
    %p199 = scmp.eq.s32.totalorder %s19, 0
    %p200 = por %p198, %p199
    %p201 = scmp.le.s32.totalorder 1, %s13
    %p202 = scmp.lt.s32.totalorder %s13, 3
    %p203 = pnand %p201, %p202
    %p204 = pneg %p203
    // Predicated region
    $region9: #{block21d_forward.6} parent=5 // pred_check
      _
    $region10: #{block21d_forward.6} parent=5 // pred_check_branch
      %206 = sbr.rel (%p203) target = $region12
    $region11: #{block21d_forward.6} parent=5 // pred_region
      %s207 = ssub.s32 %s13, 1
      // Predicated region
      $region13: #{block21d_forward.6} parent=11 // pred_check
        %p208 = pneg %p74
      $region14: #{block21d_forward.6} parent=11 // pred_check_branch
        %210 = sbr.rel (%p208) target = $region16
      $region15: #{block21d_forward.6} parent=11 // pred_region
        _
      $region16: #{block21d_forward.6} parent=11 // pred_fallthru
        _
      // Predicated region
      $region17: #{block21d_forward.6} parent=11 // pred_check
        %p211 = pneg %p95
      $region18: #{block21d_forward.6} parent=11 // pred_check_branch
        %213 = sbr.rel (%p211) target = $region20
      $region19: #{block21d_forward.6} parent=11 // pred_region
        _
      $region20: #{block21d_forward.6} parent=11 // pred_fallthru
        _
      // Predicated region
      $region21: #{block21d_forward.6} parent=11 // pred_check
        %p214 = pneg %p116
      $region22: #{block21d_forward.6} parent=11 // pred_check_branch
        %216 = sbr.rel (%p214) target = $region24
      $region23: #{block21d_forward.6} parent=11 // pred_region
        _
      $region24: #{block21d_forward.6} parent=11 // pred_fallthru
        _
      // Predicated region
      $region25: #{block21d_forward.6} parent=11 // pred_check
        %p217 = pneg %p137
      $region26: #{block21d_forward.6} parent=11 // pred_check_branch
        %219 = sbr.rel (%p217) target = $region28
      $region27: #{block21d_forward.6} parent=11 // pred_region
        _
      $region28: #{block21d_forward.6} parent=11 // pred_fallthru
        _
    $region12: #{block21d_forward.6} parent=5 // pred_fallthru
      _
    %p220 = scmp.lt.s32.totalorder %s13, 2
    // Predicated region
    $region29: #{block21d_forward.6} parent=5 // pred_check
      %p221 = pneg %p220
    $region30: #{block21d_forward.6} parent=5 // pred_check_branch
      %223 = sbr.rel (%p221) target = $region32
    $region31: #{block21d_forward.6} parent=5 // pred_region
      // Predicated region
      $region33: #{block21d_forward.6} parent=31 // pred_check
        %p224 = pneg %p47
      $region34: #{block21d_forward.6} parent=31 // pred_check_branch
        %226 = sbr.rel (%p224) target = $region36
      $region35: #{block21d_forward.6} parent=31 // pred_region
        %s227 = smul.u32 8, %s21
        %p228 = scmp.lt.s32.totalorder %s20, 1
        %s229 = scalar_select %p228, %s20, 1
        %p230 = scmp.lt.s32.totalorder %s227, 7
        %s231 = scalar_select %p230, %s227, 7
        %s232 = smul.addr %s229, 32
        %s233 = sadd.s32 %s231, %s232
        %s234 = smul.addr %s233, 8
        %s235 = scalar_lea.vmem %s0, %s234
        %s236 = smul.u32 8, %s21
      $region36: #{block21d_forward.6} parent=31 // pred_fallthru
        _
    $region32: #{block21d_forward.6} parent=5 // pred_fallthru
      _
    %p237 = scmp.le.s32.totalorder 1, %s13
    %p238 = scmp.lt.s32.totalorder %s13, 3
    %p239 = pnand %p237, %p238
    %p240 = pneg %p239
    // Predicated region
    $region37: #{block21d_forward.6} parent=5 // pred_check
      _
    $region38: #{block21d_forward.6} parent=5 // pred_check_branch
      %242 = sbr.rel (%p239) target = $region40
    $region39: #{block21d_forward.6} parent=5 // pred_region
      %s243 = ssub.s32 %s13, 1
      %s244 = smul.u32 8, %s23
      %p245 = scmp.lt.s32.totalorder %s22, 1
      %s246 = scalar_select %p245, %s22, 1
      %p247 = scmp.lt.s32.totalorder %s244, 7
      %s248 = scalar_select %p247, %s244, 7
      %s249 = smul.addr %s246, 32
      %s250 = sadd.s32 %s248, %s249
      %s251 = smul.addr %s250, 8
      %s252 = scalar_lea.vmem %s0, %s251
      %p253 = pneg %p53
      %p254 = pneg %p50
      %p255 = pneg %p74
      %p256 = pneg %p71
      %p257 = pneg %p95
      %p258 = pneg %p92
      %p259 = pneg %p116
      %p260 = pneg %p113
      %p261 = pneg %p137
      %p262 = pneg %p134
      %p263 = pneg %p165
      %p264 = pneg %p162
      %s265 = smul.u32 8, %s23
      %p266 = scmp.lt.s32.totalorder %s22, 1
      %s267 = scalar_select %p266, %s22, 1
      %p268 = scmp.lt.s32.totalorder %s265, 7
      %s269 = scalar_select %p268, %s265, 7
      %s270 = smul.addr %s267, 32
      %s271 = sadd.s32 %s269, %s270
      %s272 = smul.addr %s271, 8
      %s273 = scalar_lea.vmem %s5, %s272
      %p274 = pneg %p193
      %p275 = pneg %p190
      %p276 = scmp.lt.s32.totalorder %s22, 1
      %s277 = scalar_select %p276, %s22, 1
      %p278 = scmp.lt.s32.totalorder %s23, 0
      %s279 = scalar_select %p278, %s23, 0
      %s280 = sadd.s32 %s279, %s277
      %s281 = smul.addr %s280, 2
      %s282 = scalar_lea.vmem %s6, %s281
      %s283 = smul.u32 8, %s23
      %p284 = scmp.lt.s32.totalorder %s22, 1
      %s285 = scalar_select %p284, %s22, 1
      %p286 = scmp.lt.s32.totalorder %s283, 7
      %s287 = scalar_select %p286, %s283, 7
      %s288 = smul.addr %s285, 32
      %s289 = sadd.s32 %s287, %s288
      %s290 = smul.addr %s289, 8
      %s291 = scalar_lea.vmem %s0, %s290
      %s292 = smul.u32 8, %s23
      %s293 = smul.u32 8, %s23
      %p294 = scmp.lt.s32.totalorder %s22, 1
      %s295 = scalar_select %p294, %s22, 1
      %p296 = scmp.lt.s32.totalorder %s293, 7
      %s297 = scalar_select %p296, %s293, 7
      %s298 = smul.addr %s295, 32
      %s299 = sadd.s32 %s297, %s298
      %s300 = smul.addr %s299, 8
      %s301 = scalar_lea.vmem %s5, %s300
      %s302 = smul.u32 8, %s23
      %p303 = scmp.lt.s32.totalorder %s22, 1
      %s304 = scalar_select %p303, %s22, 1
      %p305 = scmp.lt.s32.totalorder %s23, 0
      %s306 = scalar_select %p305, %s23, 0
      %s307 = sadd.s32 %s306, %s304
      %s308 = smul.addr %s307, 2
      %s309 = scalar_lea.vmem %s6, %s308
      %v310 = vld [vmem:[%s291] sm:$0xff]
      %v311 = vld [vmem:[%s291 + $0x8] sm:$0xff]
      %v312 = vld [vmem:[%s291 + $0x10] sm:$0xff]
      %v313 = vld [vmem:[%s291 + $0x18] sm:$0xff]
      %v314 = vld [vmem:[%s291 + $0x20] sm:$0xff]
      %v315 = vld [vmem:[%s291 + $0x28] sm:$0xff]
      %v316 = vld [vmem:[%s291 + $0x30] sm:$0xff]
      %v317 = vld [vmem:[%s291 + $0x38] sm:$0xff]
      %v318 = vld [vmem:[%s291 + $0x40] sm:$0xff]
      %v319 = vld [vmem:[%s291 + $0x48] sm:$0xff]
      %v320 = vld [vmem:[%s291 + $0x50] sm:$0xff]
      %v321 = vld [vmem:[%s291 + $0x58] sm:$0xff]
      %v322 = vld [vmem:[%s291 + $0x60] sm:$0xff]
      %v323 = vld [vmem:[%s291 + $0x68] sm:$0xff]
      %v324 = vld [vmem:[%s291 + $0x70] sm:$0xff]
      %v325 = vld [vmem:[%s291 + $0x78] sm:$0xff]
      %v326 = vld [vmem:[%s291 + $0x80] sm:$0xff]
      %v327 = vld [vmem:[%s291 + $0x88] sm:$0xff]
      %v328 = vld [vmem:[%s291 + $0x90] sm:$0xff]
      %v329 = vld [vmem:[%s291 + $0x98] sm:$0xff]
      %v330 = vld [vmem:[%s291 + $0xa0] sm:$0xff]
      %v331 = vld [vmem:[%s291 + $0xa8] sm:$0xff]
      %v332 = vld [vmem:[%s291 + $0xb0] sm:$0xff]
      %v333 = vld [vmem:[%s291 + $0xb8] sm:$0xff]
      %v334 = vld [vmem:[%s291 + $0xc0] sm:$0xff]
      %v335 = vld [vmem:[%s291 + $0xc8] sm:$0xff]
      %v336 = vld [vmem:[%s291 + $0xd0] sm:$0xff]
      %v337 = vld [vmem:[%s291 + $0xd8] sm:$0xff]
      %v338 = vld [vmem:[%s291 + $0xe0] sm:$0xff]
      %v339 = vld [vmem:[%s291 + $0xe8] sm:$0xff]
      %v340 = vld [vmem:[%s291 + $0xf0] sm:$0xff]
      %v341 = vld [vmem:[%s291 + $0xf8] sm:$0xff]
      %v342 = vld [vmem:[%s1] sm:$0x1]
      %v344 = vlaneseq
      %v345 = vshrl.u32 %v344, 7
      %v346 = vsub.s32 0, %v345
      %v347 = vrot.slane %v342, %v346
      %v349 = vmul.f32 %v310, %v347
      %v350 = vmul.f32 %v311, %v347
      %v351 = vmul.f32 %v312, %v347
      %v352 = vmul.f32 %v313, %v347
      %v353 = vmul.f32 %v314, %v347
      %v354 = vmul.f32 %v315, %v347
      %v355 = vmul.f32 %v316, %v347
      %v356 = vmul.f32 %v317, %v347
      %v357 = vmul.f32 %v318, %v347
      %v358 = vmul.f32 %v319, %v347
      %v359 = vmul.f32 %v320, %v347
      %v360 = vmul.f32 %v321, %v347
      %v361 = vmul.f32 %v322, %v347
      %v362 = vmul.f32 %v323, %v347
      %v363 = vmul.f32 %v324, %v347
      %v364 = vmul.f32 %v325, %v347
      %v365 = vmul.f32 %v326, %v347
      %v366 = vmul.f32 %v327, %v347
      %v367 = vmul.f32 %v328, %v347
      %v368 = vmul.f32 %v329, %v347
      %v369 = vmul.f32 %v330, %v347
      %v370 = vmul.f32 %v331, %v347
      %v371 = vmul.f32 %v332, %v347
      %v372 = vmul.f32 %v333, %v347
      %v373 = vmul.f32 %v334, %v347
      %v374 = vmul.f32 %v335, %v347
      %v375 = vmul.f32 %v336, %v347
      %v376 = vmul.f32 %v337, %v347
      %v377 = vmul.f32 %v338, %v347
      %v378 = vmul.f32 %v339, %v347
      %v379 = vmul.f32 %v340, %v347
      %v380 = vmul.f32 %v341, %v347
      %v381 = vld [vmem:[%s2] sm:$0x1]
      %v383 = vlaneseq
      %v384 = vshrl.u32 %v383, 7
      %v385 = vsub.s32 0, %v384
      %v386 = vrot.slane %v381, %v385
      %v388 = vadd.f32 %v349, %v386
      %v389 = vadd.f32 %v350, %v386
      %v390 = vadd.f32 %v351, %v386
      %v391 = vadd.f32 %v352, %v386
      %v392 = vadd.f32 %v353, %v386
      %v393 = vadd.f32 %v354, %v386
      %v394 = vadd.f32 %v355, %v386
      %v395 = vadd.f32 %v356, %v386
      %v396 = vadd.f32 %v357, %v386
      %v397 = vadd.f32 %v358, %v386
      %v398 = vadd.f32 %v359, %v386
      %v399 = vadd.f32 %v360, %v386
      %v400 = vadd.f32 %v361, %v386
      %v401 = vadd.f32 %v362, %v386
      %v402 = vadd.f32 %v363, %v386
      %v403 = vadd.f32 %v364, %v386
      %v404 = vadd.f32 %v365, %v386
      %v405 = vadd.f32 %v366, %v386
      %v406 = vadd.f32 %v367, %v386
      %v407 = vadd.f32 %v368, %v386
      %v408 = vadd.f32 %v369, %v386
      %v409 = vadd.f32 %v370, %v386
      %v410 = vadd.f32 %v371, %v386
      %v411 = vadd.f32 %v372, %v386
      %v412 = vadd.f32 %v373, %v386
      %v413 = vadd.f32 %v374, %v386
      %v414 = vadd.f32 %v375, %v386
      %v415 = vadd.f32 %v376, %v386
      %v416 = vadd.f32 %v377, %v386
      %v417 = vadd.f32 %v378, %v386
      %v418 = vadd.f32 %v379, %v386
      %v419 = vadd.f32 %v380, %v386
      %v420 = vmax.f32 %v388, 0.0
      %v421 = vmax.f32 %v389, 0.0
      %v422 = vmax.f32 %v390, 0.0
      %v423 = vmax.f32 %v391, 0.0
      %v424 = vmax.f32 %v392, 0.0
      %v425 = vmax.f32 %v393, 0.0
      %v426 = vmax.f32 %v394, 0.0
      %v427 = vmax.f32 %v395, 0.0
      %v428 = vmax.f32 %v396, 0.0
      %v429 = vmax.f32 %v397, 0.0
      %v430 = vmax.f32 %v398, 0.0
      %v431 = vmax.f32 %v399, 0.0
      %v432 = vmax.f32 %v400, 0.0
      %v433 = vmax.f32 %v401, 0.0
      %v434 = vmax.f32 %v402, 0.0
      %v435 = vmax.f32 %v403, 0.0
      %v436 = vmax.f32 %v404, 0.0
      %v437 = vmax.f32 %v405, 0.0
      %v438 = vmax.f32 %v406, 0.0
      %v439 = vmax.f32 %v407, 0.0
      %v440 = vmax.f32 %v408, 0.0
      %v441 = vmax.f32 %v409, 0.0
      %v442 = vmax.f32 %v410, 0.0
      %v443 = vmax.f32 %v411, 0.0
      %v444 = vmax.f32 %v412, 0.0
      %v445 = vmax.f32 %v413, 0.0
      %v446 = vmax.f32 %v414, 0.0
      %v447 = vmax.f32 %v415, 0.0
      %v448 = vmax.f32 %v416, 0.0
      %v449 = vmax.f32 %v417, 0.0
      %v450 = vmax.f32 %v418, 0.0
      %v451 = vmax.f32 %v419, 0.0
      %452 = vst [vmem:[#allocation2] sm:$0xff] 0.0
      %453 = vst [vmem:[#allocation2 + $0x8] sm:$0xff] 0.0
      %454 = vst [vmem:[#allocation2 + $0x10] sm:$0xff] 0.0
      %455 = vst [vmem:[#allocation2 + $0x18] sm:$0xff] 0.0
      %456 = vst [vmem:[#allocation2 + $0x20] sm:$0xff] 0.0
      %457 = vst [vmem:[#allocation2 + $0x28] sm:$0xff] 0.0
      %458 = vst [vmem:[#allocation2 + $0x30] sm:$0xff] 0.0
      %459 = vst [vmem:[#allocation2 + $0x38] sm:$0xff] 0.0
      %s460 = scalar_lea.vmem [#allocation2], 320
      %461 = vst [vmem:[%s460] sm:$0xff] 0.0
      %462 = vst [vmem:[%s460 + $0x8] sm:$0xff] 0.0
      %463 = vst [vmem:[%s460 + $0x10] sm:$0xff] 0.0
      %464 = vst [vmem:[%s460 + $0x18] sm:$0xff] 0.0
      %465 = vst [vmem:[%s460 + $0x20] sm:$0xff] 0.0
      %466 = vst [vmem:[%s460 + $0x28] sm:$0xff] 0.0
      %467 = vst [vmem:[%s460 + $0x30] sm:$0xff] 0.0
      %468 = vst [vmem:[%s460 + $0x38] sm:$0xff] 0.0
      %s469 = scalar_lea.vmem [#allocation2], 64
      %470 = vst [vmem:[%s469] sm:$0xff] %v420
      %471 = vst [vmem:[%s469 + $0x8] sm:$0xff] %v421
      %472 = vst [vmem:[%s469 + $0x10] sm:$0xff] %v422
      %473 = vst [vmem:[%s469 + $0x18] sm:$0xff] %v423
      %474 = vst [vmem:[%s469 + $0x20] sm:$0xff] %v424
      %475 = vst [vmem:[%s469 + $0x28] sm:$0xff] %v425
      %476 = vst [vmem:[%s469 + $0x30] sm:$0xff] %v426
      %477 = vst [vmem:[%s469 + $0x38] sm:$0xff] %v427
      %478 = vst [vmem:[%s469 + $0x40] sm:$0xff] %v428
      %479 = vst [vmem:[%s469 + $0x48] sm:$0xff] %v429
      %480 = vst [vmem:[%s469 + $0x50] sm:$0xff] %v430
      %481 = vst [vmem:[%s469 + $0x58] sm:$0xff] %v431
      %482 = vst [vmem:[%s469 + $0x60] sm:$0xff] %v432
      %483 = vst [vmem:[%s469 + $0x68] sm:$0xff] %v433
      %484 = vst [vmem:[%s469 + $0x70] sm:$0xff] %v434
      %485 = vst [vmem:[%s469 + $0x78] sm:$0xff] %v435
      %486 = vst [vmem:[%s469 + $0x80] sm:$0xff] %v436
      %487 = vst [vmem:[%s469 + $0x88] sm:$0xff] %v437
      %488 = vst [vmem:[%s469 + $0x90] sm:$0xff] %v438
      %489 = vst [vmem:[%s469 + $0x98] sm:$0xff] %v439
      %490 = vst [vmem:[%s469 + $0xa0] sm:$0xff] %v440
      %491 = vst [vmem:[%s469 + $0xa8] sm:$0xff] %v441
      %492 = vst [vmem:[%s469 + $0xb0] sm:$0xff] %v442
      %493 = vst [vmem:[%s469 + $0xb8] sm:$0xff] %v443
      %494 = vst [vmem:[%s469 + $0xc0] sm:$0xff] %v444
      %495 = vst [vmem:[%s469 + $0xc8] sm:$0xff] %v445
      %496 = vst [vmem:[%s469 + $0xd0] sm:$0xff] %v446
      %497 = vst [vmem:[%s469 + $0xd8] sm:$0xff] %v447
      %498 = vst [vmem:[%s469 + $0xe0] sm:$0xff] %v448
      %499 = vst [vmem:[%s469 + $0xe8] sm:$0xff] %v449
      %500 = vst [vmem:[%s469 + $0xf0] sm:$0xff] %v450
      %501 = vst [vmem:[%s469 + $0xf8] sm:$0xff] %v451
      %v502 = vld [vmem:[#allocation2] sm:$0xff]
      %v503 = vld [vmem:[#allocation2 + $0x8] sm:$0xff]
      %v504 = vld [vmem:[#allocation2 + $0x10] sm:$0xff]
      %v505 = vld [vmem:[#allocation2 + $0x18] sm:$0xff]
      %v506 = vld [vmem:[#allocation2 + $0x20] sm:$0xff]
      %v507 = vld [vmem:[#allocation2 + $0x28] sm:$0xff]
      %v508 = vld [vmem:[#allocation2 + $0x30] sm:$0xff]
      %v509 = vld [vmem:[#allocation2 + $0x38] sm:$0xff]
      %v510 = vld [vmem:[#allocation2 + $0x40] sm:$0xff]
      %v511 = vld [vmem:[#allocation2 + $0x48] sm:$0xff]
      %v512 = vld [vmem:[#allocation2 + $0x50] sm:$0xff]
      %v513 = vld [vmem:[#allocation2 + $0x58] sm:$0xff]
      %v514 = vld [vmem:[#allocation2 + $0x60] sm:$0xff]
      %v515 = vld [vmem:[#allocation2 + $0x68] sm:$0xff]
      %v516 = vld [vmem:[#allocation2 + $0x70] sm:$0xff]
      %v517 = vld [vmem:[#allocation2 + $0x78] sm:$0xff]
      %v518 = vld [vmem:[#allocation2 + $0x80] sm:$0xff]
      %v519 = vld [vmem:[#allocation2 + $0x88] sm:$0xff]
      %v520 = vld [vmem:[#allocation2 + $0x90] sm:$0xff]
      %v521 = vld [vmem:[#allocation2 + $0x98] sm:$0xff]
      %v522 = vld [vmem:[#allocation2 + $0xa0] sm:$0xff]
      %v523 = vld [vmem:[#allocation2 + $0xa8] sm:$0xff]
      %v524 = vld [vmem:[#allocation2 + $0xb0] sm:$0xff]
      %v525 = vld [vmem:[#allocation2 + $0xb8] sm:$0xff]
      %v526 = vld [vmem:[#allocation2 + $0xc0] sm:$0xff]
      %v527 = vld [vmem:[#allocation2 + $0xc8] sm:$0xff]
      %v528 = vld [vmem:[#allocation2 + $0xd0] sm:$0xff]
      %v529 = vld [vmem:[#allocation2 + $0xd8] sm:$0xff]
      %v530 = vld [vmem:[#allocation2 + $0xe0] sm:$0xff]
      %v531 = vld [vmem:[#allocation2 + $0xe8] sm:$0xff]
      %v532 = vld [vmem:[#allocation2 + $0xf0] sm:$0xff]
      %v533 = vld [vmem:[#allocation2 + $0xf8] sm:$0xff]
      %534 = vst [vmem:[#allocation3] sm:$0xff] %v502
      %535 = vst [vmem:[#allocation3 + $0x18] sm:$0xff] %v503
      %536 = vst [vmem:[#allocation3 + $0x30] sm:$0xff] %v504
      %537 = vst [vmem:[#allocation3 + $0x48] sm:$0xff] %v505
      %538 = vst [vmem:[#allocation3 + $0x60] sm:$0xff] %v506
      %539 = vst [vmem:[#allocation3 + $0x78] sm:$0xff] %v507
      %540 = vst [vmem:[#allocation3 + $0x90] sm:$0xff] %v508
      %541 = vst [vmem:[#allocation3 + $0xa8] sm:$0xff] %v509
      %542 = vst [vmem:[#allocation3 + $0xc0] sm:$0xff] %v510
      %543 = vst [vmem:[#allocation3 + $0xd8] sm:$0xff] %v511
      %544 = vst [vmem:[#allocation3 + $0xf0] sm:$0xff] %v512
      %545 = vst [vmem:[#allocation3 + $0x108] sm:$0xff] %v513
      %546 = vst [vmem:[#allocation3 + $0x120] sm:$0xff] %v514
      %547 = vst [vmem:[#allocation3 + $0x138] sm:$0xff] %v515
      %548 = vst [vmem:[#allocation3 + $0x150] sm:$0xff] %v516
      %549 = vst [vmem:[#allocation3 + $0x168] sm:$0xff] %v517
      %550 = vst [vmem:[#allocation3 + $0x180] sm:$0xff] %v518
      %551 = vst [vmem:[#allocation3 + $0x198] sm:$0xff] %v519
      %552 = vst [vmem:[#allocation3 + $0x1b0] sm:$0xff] %v520
      %553 = vst [vmem:[#allocation3 + $0x1c8] sm:$0xff] %v521
      %554 = vst [vmem:[#allocation3 + $0x1e0] sm:$0xff] %v522
      %555 = vst [vmem:[#allocation3 + $0x1f8] sm:$0xff] %v523
      %556 = vst [vmem:[#allocation3 + $0x210] sm:$0xff] %v524
      %557 = vst [vmem:[#allocation3 + $0x228] sm:$0xff] %v525
      %558 = vst [vmem:[#allocation3 + $0x240] sm:$0xff] %v526
      %559 = vst [vmem:[#allocation3 + $0x258] sm:$0xff] %v527
      %560 = vst [vmem:[#allocation3 + $0x270] sm:$0xff] %v528
      %561 = vst [vmem:[#allocation3 + $0x288] sm:$0xff] %v529
      %562 = vst [vmem:[#allocation3 + $0x2a0] sm:$0xff] %v530
      %563 = vst [vmem:[#allocation3 + $0x2b8] sm:$0xff] %v531
      %564 = vst [vmem:[#allocation3 + $0x2d0] sm:$0xff] %v532
      %565 = vst [vmem:[#allocation3 + $0x2e8] sm:$0xff] %v533
      %v566 = vld [vmem:[%s469] sm:$0xff]
      %v567 = vld [vmem:[%s469 + $0x8] sm:$0xff]
      %v568 = vld [vmem:[%s469 + $0x10] sm:$0xff]
      %v569 = vld [vmem:[%s469 + $0x18] sm:$0xff]
      %v570 = vld [vmem:[%s469 + $0x20] sm:$0xff]
      %v571 = vld [vmem:[%s469 + $0x28] sm:$0xff]
      %v572 = vld [vmem:[%s469 + $0x30] sm:$0xff]
      %v573 = vld [vmem:[%s469 + $0x38] sm:$0xff]
      %v574 = vld [vmem:[%s469 + $0x40] sm:$0xff]
      %v575 = vld [vmem:[%s469 + $0x48] sm:$0xff]
      %v576 = vld [vmem:[%s469 + $0x50] sm:$0xff]
      %v577 = vld [vmem:[%s469 + $0x58] sm:$0xff]
      %v578 = vld [vmem:[%s469 + $0x60] sm:$0xff]
      %v579 = vld [vmem:[%s469 + $0x68] sm:$0xff]
      %v580 = vld [vmem:[%s469 + $0x70] sm:$0xff]
      %v581 = vld [vmem:[%s469 + $0x78] sm:$0xff]
      %v582 = vld [vmem:[%s469 + $0x80] sm:$0xff]
      %v583 = vld [vmem:[%s469 + $0x88] sm:$0xff]
      %v584 = vld [vmem:[%s469 + $0x90] sm:$0xff]
      %v585 = vld [vmem:[%s469 + $0x98] sm:$0xff]
      %v586 = vld [vmem:[%s469 + $0xa0] sm:$0xff]
      %v587 = vld [vmem:[%s469 + $0xa8] sm:$0xff]
      %v588 = vld [vmem:[%s469 + $0xb0] sm:$0xff]
      %v589 = vld [vmem:[%s469 + $0xb8] sm:$0xff]
      %v590 = vld [vmem:[%s469 + $0xc0] sm:$0xff]
      %v591 = vld [vmem:[%s469 + $0xc8] sm:$0xff]
      %v592 = vld [vmem:[%s469 + $0xd0] sm:$0xff]
      %v593 = vld [vmem:[%s469 + $0xd8] sm:$0xff]
      %v594 = vld [vmem:[%s469 + $0xe0] sm:$0xff]
      %v595 = vld [vmem:[%s469 + $0xe8] sm:$0xff]
      %v596 = vld [vmem:[%s469 + $0xf0] sm:$0xff]
      %v597 = vld [vmem:[%s469 + $0xf8] sm:$0xff]
      %598 = vst [vmem:[#allocation3 + $0x8] sm:$0xff] %v566
      %599 = vst [vmem:[#allocation3 + $0x20] sm:$0xff] %v567
      %600 = vst [vmem:[#allocation3 + $0x38] sm:$0xff] %v568
      %601 = vst [vmem:[#allocation3 + $0x50] sm:$0xff] %v569
      %602 = vst [vmem:[#allocation3 + $0x68] sm:$0xff] %v570
      %603 = vst [vmem:[#allocation3 + $0x80] sm:$0xff] %v571
      %604 = vst [vmem:[#allocation3 + $0x98] sm:$0xff] %v572
      %605 = vst [vmem:[#allocation3 + $0xb0] sm:$0xff] %v573
      %606 = vst [vmem:[#allocation3 + $0xc8] sm:$0xff] %v574
      %607 = vst [vmem:[#allocation3 + $0xe0] sm:$0xff] %v575
      %608 = vst [vmem:[#allocation3 + $0xf8] sm:$0xff] %v576
      %609 = vst [vmem:[#allocation3 + $0x110] sm:$0xff] %v577
      %610 = vst [vmem:[#allocation3 + $0x128] sm:$0xff] %v578
      %611 = vst [vmem:[#allocation3 + $0x140] sm:$0xff] %v579
      %612 = vst [vmem:[#allocation3 + $0x158] sm:$0xff] %v580
      %613 = vst [vmem:[#allocation3 + $0x170] sm:$0xff] %v581
      %614 = vst [vmem:[#allocation3 + $0x188] sm:$0xff] %v582
      %615 = vst [vmem:[#allocation3 + $0x1a0] sm:$0xff] %v583
      %616 = vst [vmem:[#allocation3 + $0x1b8] sm:$0xff] %v584
      %617 = vst [vmem:[#allocation3 + $0x1d0] sm:$0xff] %v585
      %618 = vst [vmem:[#allocation3 + $0x1e8] sm:$0xff] %v586
      %619 = vst [vmem:[#allocation3 + $0x200] sm:$0xff] %v587
      %620 = vst [vmem:[#allocation3 + $0x218] sm:$0xff] %v588
      %621 = vst [vmem:[#allocation3 + $0x230] sm:$0xff] %v589
      %622 = vst [vmem:[#allocation3 + $0x248] sm:$0xff] %v590
      %623 = vst [vmem:[#allocation3 + $0x260] sm:$0xff] %v591
      %624 = vst [vmem:[#allocation3 + $0x278] sm:$0xff] %v592
      %625 = vst [vmem:[#allocation3 + $0x290] sm:$0xff] %v593
      %626 = vst [vmem:[#allocation3 + $0x2a8] sm:$0xff] %v594
      %627 = vst [vmem:[#allocation3 + $0x2c0] sm:$0xff] %v595
      %628 = vst [vmem:[#allocation3 + $0x2d8] sm:$0xff] %v596
      %629 = vst [vmem:[#allocation3 + $0x2f0] sm:$0xff] %v597
      %s630 = scalar_lea.vmem [#allocation2], 128
      %v631 = vld [vmem:[%s630] sm:$0xff]
      %v632 = vld [vmem:[%s630 + $0x8] sm:$0xff]
      %v633 = vld [vmem:[%s630 + $0x10] sm:$0xff]
      %v634 = vld [vmem:[%s630 + $0x18] sm:$0xff]
      %v635 = vld [vmem:[%s630 + $0x20] sm:$0xff]
      %v636 = vld [vmem:[%s630 + $0x28] sm:$0xff]
      %v637 = vld [vmem:[%s630 + $0x30] sm:$0xff]
      %v638 = vld [vmem:[%s630 + $0x38] sm:$0xff]
      %v639 = vld [vmem:[%s630 + $0x40] sm:$0xff]
      %v640 = vld [vmem:[%s630 + $0x48] sm:$0xff]
      %v641 = vld [vmem:[%s630 + $0x50] sm:$0xff]
      %v642 = vld [vmem:[%s630 + $0x58] sm:$0xff]
      %v643 = vld [vmem:[%s630 + $0x60] sm:$0xff]
      %v644 = vld [vmem:[%s630 + $0x68] sm:$0xff]
      %v645 = vld [vmem:[%s630 + $0x70] sm:$0xff]
      %v646 = vld [vmem:[%s630 + $0x78] sm:$0xff]
      %v647 = vld [vmem:[%s630 + $0x80] sm:$0xff]
      %v648 = vld [vmem:[%s630 + $0x88] sm:$0xff]
      %v649 = vld [vmem:[%s630 + $0x90] sm:$0xff]
      %v650 = vld [vmem:[%s630 + $0x98] sm:$0xff]
      %v651 = vld [vmem:[%s630 + $0xa0] sm:$0xff]
      %v652 = vld [vmem:[%s630 + $0xa8] sm:$0xff]
      %v653 = vld [vmem:[%s630 + $0xb0] sm:$0xff]
      %v654 = vld [vmem:[%s630 + $0xb8] sm:$0xff]
      %v655 = vld [vmem:[%s630 + $0xc0] sm:$0xff]
      %v656 = vld [vmem:[%s630 + $0xc8] sm:$0xff]
      %v657 = vld [vmem:[%s630 + $0xd0] sm:$0xff]
      %v658 = vld [vmem:[%s630 + $0xd8] sm:$0xff]
      %v659 = vld [vmem:[%s630 + $0xe0] sm:$0xff]
      %v660 = vld [vmem:[%s630 + $0xe8] sm:$0xff]
      %v661 = vld [vmem:[%s630 + $0xf0] sm:$0xff]
      %v662 = vld [vmem:[%s630 + $0xf8] sm:$0xff]
      %663 = vst [vmem:[#allocation3 + $0x10] sm:$0xff] %v631
      %664 = vst [vmem:[#allocation3 + $0x28] sm:$0xff] %v632
      %665 = vst [vmem:[#allocation3 + $0x40] sm:$0xff] %v633
      %666 = vst [vmem:[#allocation3 + $0x58] sm:$0xff] %v634
      %667 = vst [vmem:[#allocation3 + $0x70] sm:$0xff] %v635
      %668 = vst [vmem:[#allocation3 + $0x88] sm:$0xff] %v636
      %669 = vst [vmem:[#allocation3 + $0xa0] sm:$0xff] %v637
      %670 = vst [vmem:[#allocation3 + $0xb8] sm:$0xff] %v638
      %671 = vst [vmem:[#allocation3 + $0xd0] sm:$0xff] %v639
      %672 = vst [vmem:[#allocation3 + $0xe8] sm:$0xff] %v640
      %673 = vst [vmem:[#allocation3 + $0x100] sm:$0xff] %v641
      %674 = vst [vmem:[#allocation3 + $0x118] sm:$0xff] %v642
      %675 = vst [vmem:[#allocation3 + $0x130] sm:$0xff] %v643
      %676 = vst [vmem:[#allocation3 + $0x148] sm:$0xff] %v644
      %677 = vst [vmem:[#allocation3 + $0x160] sm:$0xff] %v645
      %678 = vst [vmem:[#allocation3 + $0x178] sm:$0xff] %v646
      %679 = vst [vmem:[#allocation3 + $0x190] sm:$0xff] %v647
      %680 = vst [vmem:[#allocation3 + $0x1a8] sm:$0xff] %v648
      %681 = vst [vmem:[#allocation3 + $0x1c0] sm:$0xff] %v649
      %682 = vst [vmem:[#allocation3 + $0x1d8] sm:$0xff] %v650
      %683 = vst [vmem:[#allocation3 + $0x1f0] sm:$0xff] %v651
      %684 = vst [vmem:[#allocation3 + $0x208] sm:$0xff] %v652
      %685 = vst [vmem:[#allocation3 + $0x220] sm:$0xff] %v653
      %686 = vst [vmem:[#allocation3 + $0x238] sm:$0xff] %v654
      %687 = vst [vmem:[#allocation3 + $0x250] sm:$0xff] %v655
      %688 = vst [vmem:[#allocation3 + $0x268] sm:$0xff] %v656
      %689 = vst [vmem:[#allocation3 + $0x280] sm:$0xff] %v657
      %690 = vst [vmem:[#allocation3 + $0x298] sm:$0xff] %v658
      %691 = vst [vmem:[#allocation3 + $0x2b0] sm:$0xff] %v659
      %692 = vst [vmem:[#allocation3 + $0x2c8] sm:$0xff] %v660
      %693 = vst [vmem:[#allocation3 + $0x2e0] sm:$0xff] %v661
      %694 = vst [vmem:[#allocation3 + $0x2f8] sm:$0xff] %v662
      %v695 = vld [vmem:[#allocation3] sm:$0xff]
      %v696 = vld [vmem:[#allocation3 + $0x8] sm:$0xff]
      %v697 = vld [vmem:[#allocation3 + $0x10] sm:$0xff]
      %v698 = vld [vmem:[#allocation3 + $0x18] sm:$0xff]
      %v699 = vld [vmem:[#allocation3 + $0x20] sm:$0xff]
      %v700 = vld [vmem:[#allocation3 + $0x28] sm:$0xff]
      %v701 = vld [vmem:[#allocation3 + $0x30] sm:$0xff]
      %v702 = vld [vmem:[#allocation3 + $0x38] sm:$0xff]
      %v703 = vld [vmem:[#allocation3 + $0x40] sm:$0xff]
      %v704 = vld [vmem:[#allocation3 + $0x48] sm:$0xff]
      %v705 = vld [vmem:[#allocation3 + $0x50] sm:$0xff]
      %v706 = vld [vmem:[#allocation3 + $0x58] sm:$0xff]
      %v707 = vld [vmem:[#allocation3 + $0x60] sm:$0xff]
      %v708 = vld [vmem:[#allocation3 + $0x68] sm:$0xff]
      %v709 = vld [vmem:[#allocation3 + $0x70] sm:$0xff]
      %v710 = vld [vmem:[#allocation3 + $0x78] sm:$0xff]
      %v711 = vld [vmem:[#allocation3 + $0x80] sm:$0xff]
      %v712 = vld [vmem:[#allocation3 + $0x88] sm:$0xff]
      %v713 = vld [vmem:[#allocation3 + $0x90] sm:$0xff]
      %v714 = vld [vmem:[#allocation3 + $0x98] sm:$0xff]
      %v715 = vld [vmem:[#allocation3 + $0xa0] sm:$0xff]
      %v716 = vld [vmem:[#allocation3 + $0xa8] sm:$0xff]
      %v717 = vld [vmem:[#allocation3 + $0xb0] sm:$0xff]
      %v718 = vld [vmem:[#allocation3 + $0xb8] sm:$0xff]
      %v719 = vld [vmem:[#allocation3 + $0xc0] sm:$0xff]
      %v720 = vld [vmem:[#allocation3 + $0xc8] sm:$0xff]
      %v721 = vld [vmem:[#allocation3 + $0xd0] sm:$0xff]
      %v722 = vld [vmem:[#allocation3 + $0xd8] sm:$0xff]
      %v723 = vld [vmem:[#allocation3 + $0xe0] sm:$0xff]
      %v724 = vld [vmem:[#allocation3 + $0xe8] sm:$0xff]
      %v725 = vld [vmem:[#allocation3 + $0xf0] sm:$0xff]
      %v726 = vld [vmem:[#allocation3 + $0xf8] sm:$0xff]
      %v727 = vld [vmem:[#allocation3 + $0x100] sm:$0xff]
      %v728 = vld [vmem:[#allocation3 + $0x108] sm:$0xff]
      %v729 = vld [vmem:[#allocation3 + $0x110] sm:$0xff]
      %v730 = vld [vmem:[#allocation3 + $0x118] sm:$0xff]
      %v731 = vld [vmem:[#allocation3 + $0x120] sm:$0xff]
      %v732 = vld [vmem:[#allocation3 + $0x128] sm:$0xff]
      %v733 = vld [vmem:[#allocation3 + $0x130] sm:$0xff]
      %v734 = vld [vmem:[#allocation3 + $0x138] sm:$0xff]
      %v735 = vld [vmem:[#allocation3 + $0x140] sm:$0xff]
      %v736 = vld [vmem:[#allocation3 + $0x148] sm:$0xff]
      %v737 = vld [vmem:[#allocation3 + $0x150] sm:$0xff]
      %v738 = vld [vmem:[#allocation3 + $0x158] sm:$0xff]
      %v739 = vld [vmem:[#allocation3 + $0x160] sm:$0xff]
      %v740 = vld [vmem:[#allocation3 + $0x168] sm:$0xff]
      %v741 = vld [vmem:[#allocation3 + $0x170] sm:$0xff]
      %v742 = vld [vmem:[#allocation3 + $0x178] sm:$0xff]
      %v743 = vld [vmem:[#allocation3 + $0x180] sm:$0xff]
      %v744 = vld [vmem:[#allocation3 + $0x188] sm:$0xff]
      %v745 = vld [vmem:[#allocation3 + $0x190] sm:$0xff]
      %v746 = vld [vmem:[#allocation3 + $0x198] sm:$0xff]
      %v747 = vld [vmem:[#allocation3 + $0x1a0] sm:$0xff]
      %v748 = vld [vmem:[#allocation3 + $0x1a8] sm:$0xff]
      %v749 = vld [vmem:[#allocation3 + $0x1b0] sm:$0xff]
      %v750 = vld [vmem:[#allocation3 + $0x1b8] sm:$0xff]
      %v751 = vld [vmem:[#allocation3 + $0x1c0] sm:$0xff]
      %v752 = vld [vmem:[#allocation3 + $0x1c8] sm:$0xff]
      %v753 = vld [vmem:[#allocation3 + $0x1d0] sm:$0xff]
      %v754 = vld [vmem:[#allocation3 + $0x1d8] sm:$0xff]
      %v755 = vld [vmem:[#allocation3 + $0x1e0] sm:$0xff]
      %v756 = vld [vmem:[#allocation3 + $0x1e8] sm:$0xff]
      %v757 = vld [vmem:[#allocation3 + $0x1f0] sm:$0xff]
      %v758 = vld [vmem:[#allocation3 + $0x1f8] sm:$0xff]
      %v759 = vld [vmem:[#allocation3 + $0x200] sm:$0xff]
      %v760 = vld [vmem:[#allocation3 + $0x208] sm:$0xff]
      %v761 = vld [vmem:[#allocation3 + $0x210] sm:$0xff]
      %v762 = vld [vmem:[#allocation3 + $0x218] sm:$0xff]
      %v763 = vld [vmem:[#allocation3 + $0x220] sm:$0xff]
      %v764 = vld [vmem:[#allocation3 + $0x228] sm:$0xff]
      %v765 = vld [vmem:[#allocation3 + $0x230] sm:$0xff]
      %v766 = vld [vmem:[#allocation3 + $0x238] sm:$0xff]
      %v767 = vld [vmem:[#allocation3 + $0x240] sm:$0xff]
      %v768 = vld [vmem:[#allocation3 + $0x248] sm:$0xff]
      %v769 = vld [vmem:[#allocation3 + $0x250] sm:$0xff]
      %v770 = vld [vmem:[#allocation3 + $0x258] sm:$0xff]
      %v771 = vld [vmem:[#allocation3 + $0x260] sm:$0xff]
      %v772 = vld [vmem:[#allocation3 + $0x268] sm:$0xff]
      %v773 = vld [vmem:[#allocation3 + $0x270] sm:$0xff]
      %v774 = vld [vmem:[#allocation3 + $0x278] sm:$0xff]
      %v775 = vld [vmem:[#allocation3 + $0x280] sm:$0xff]
      %v776 = vld [vmem:[#allocation3 + $0x288] sm:$0xff]
      %v777 = vld [vmem:[#allocation3 + $0x290] sm:$0xff]
      %v778 = vld [vmem:[#allocation3 + $0x298] sm:$0xff]
      %v779 = vld [vmem:[#allocation3 + $0x2a0] sm:$0xff]
      %v780 = vld [vmem:[#allocation3 + $0x2a8] sm:$0xff]
      %v781 = vld [vmem:[#allocation3 + $0x2b0] sm:$0xff]
      %v782 = vld [vmem:[#allocation3 + $0x2b8] sm:$0xff]
      %v783 = vld [vmem:[#allocation3 + $0x2c0] sm:$0xff]
      %v784 = vld [vmem:[#allocation3 + $0x2c8] sm:$0xff]
      %v785 = vld [vmem:[#allocation3 + $0x2d0] sm:$0xff]
      %v786 = vld [vmem:[#allocation3 + $0x2d8] sm:$0xff]
      %v787 = vld [vmem:[#allocation3 + $0x2e0] sm:$0xff]
      %v788 = vld [vmem:[#allocation3 + $0x2e8] sm:$0xff]
      %v789 = vld [vmem:[#allocation3 + $0x2f0] sm:$0xff]
      %v790 = vld [vmem:[#allocation3 + $0x2f8] sm:$0xff]
      %v791 = vld [vmem:[%s3] sm:$0xff]
      %v792 = vld [vmem:[%s3 + $0x8] sm:$0xff]
      %v793 = vld [vmem:[%s3 + $0x10] sm:$0xff]
      %v794 = vld [vmem:[%s3 + $0x18] sm:$0xff]
      %v795 = vld [vmem:[%s3 + $0x20] sm:$0xff]
      %v796 = vld [vmem:[%s3 + $0x28] sm:$0xff]
      %v797 = vld [vmem:[%s3 + $0x30] sm:$0xff]
      %v798 = vld [vmem:[%s3 + $0x38] sm:$0xff]
      %v799 = vld [vmem:[%s3 + $0x40] sm:$0xff]
      %v800 = vld [vmem:[%s3 + $0x48] sm:$0xff]
      %v801 = vld [vmem:[%s3 + $0x50] sm:$0xff]
      %v802 = vld [vmem:[%s3 + $0x58] sm:$0xff]
      %v803 = vld [vmem:[%s3 + $0x60] sm:$0xff]
      %v804 = vld [vmem:[%s3 + $0x68] sm:$0xff]
      %v805 = vld [vmem:[%s3 + $0x70] sm:$0xff]
      %v806 = vld [vmem:[%s3 + $0x78] sm:$0xff]
      %v807 = vld [vmem:[%s3 + $0x80] sm:$0xff]
      %v808 = vld [vmem:[%s3 + $0x88] sm:$0xff]
      %v809 = vld [vmem:[%s3 + $0x90] sm:$0xff]
      %v810 = vld [vmem:[%s3 + $0x98] sm:$0xff]
      %v811 = vld [vmem:[%s3 + $0xa0] sm:$0xff]
      %v812 = vld [vmem:[%s3 + $0xa8] sm:$0xff]
      %v813 = vld [vmem:[%s3 + $0xb0] sm:$0xff]
      %v814 = vld [vmem:[%s3 + $0xb8] sm:$0xff]
      %v815 = vld [vmem:[%s3 + $0xc0] sm:$0xff]
      %v816 = vld [vmem:[%s3 + $0xc8] sm:$0xff]
      %v817 = vld [vmem:[%s3 + $0xd0] sm:$0xff]
      %v818 = vld [vmem:[%s3 + $0xd8] sm:$0xff]
      %v819 = vld [vmem:[%s3 + $0xe0] sm:$0xff]
      %v820 = vld [vmem:[%s3 + $0xe8] sm:$0xff]
      %v821 = vld [vmem:[%s3 + $0xf0] sm:$0xff]
      %v822 = vld [vmem:[%s3 + $0xf8] sm:$0xff]
      %v823 = vld [vmem:[%s3 + $0x100] sm:$0xff]
      %v824 = vld [vmem:[%s3 + $0x108] sm:$0xff]
      %v825 = vld [vmem:[%s3 + $0x110] sm:$0xff]
      %v826 = vld [vmem:[%s3 + $0x118] sm:$0xff]
      %v827 = vld [vmem:[%s3 + $0x120] sm:$0xff]
      %v828 = vld [vmem:[%s3 + $0x128] sm:$0xff]
      %v829 = vld [vmem:[%s3 + $0x130] sm:$0xff]
      %v830 = vld [vmem:[%s3 + $0x138] sm:$0xff]
      %v831 = vld [vmem:[%s3 + $0x140] sm:$0xff]
      %v832 = vld [vmem:[%s3 + $0x148] sm:$0xff]
      %v833 = vld [vmem:[%s3 + $0x150] sm:$0xff]
      %v834 = vld [vmem:[%s3 + $0x158] sm:$0xff]
      %v835 = vld [vmem:[%s3 + $0x160] sm:$0xff]
      %v836 = vld [vmem:[%s3 + $0x168] sm:$0xff]
      %v837 = vld [vmem:[%s3 + $0x170] sm:$0xff]
      %v838 = vld [vmem:[%s3 + $0x178] sm:$0xff]
      %v839 = vld [vmem:[%s4] sm:$0x1]
      %v841 = vlaneseq
      %v842 = vshrl.u32 %v841, 7
      %v843 = vsub.s32 0, %v842
      %v844 = vrot.slane %v839, %v843
      %846 = vmatprep.subr.mxu0 0.0
      %847 = vmatpush1.msra.mxu0 %v791
      %848 = vmatprep.subr.mxu0 0.0
      %849 = vmatpush1.msra.mxu0 %v792
      %850 = vmatprep.subr.mxu0 0.0
      %851 = vmatpush1.msra.mxu0 %v793
      %852 = vmatprep.subr.mxu0 0.0
      %853 = vmatpush1.msra.mxu0 %v794
      %854 = vmatprep.subr.mxu0 0.0
      %855 = vmatpush1.msra.mxu0 %v795
      %856 = vmatprep.subr.mxu0 0.0
      %857 = vmatpush1.msra.mxu0 %v796
      %858 = vmatprep.subr.mxu0 0.0
      %859 = vmatpush1.msra.mxu0 %v797
      %860 = vmatprep.subr.mxu0 0.0
      %861 = vmatpush1.msra.mxu0 %v798
      %862 = vmatprep.subr.mxu0 0.0
      %863 = vmatpush1.msra.mxu0 %v799
      %864 = vmatprep.subr.mxu0 0.0
      %865 = vmatpush1.msra.mxu0 %v800
      %866 = vmatprep.subr.mxu0 0.0
      %867 = vmatpush1.msra.mxu0 %v801
      %868 = vmatprep.subr.mxu0 0.0
      %869 = vmatpush1.msra.mxu0 %v802
      %870 = vmatprep.subr.mxu0 0.0
      %871 = vmatpush1.msra.mxu0 %v803
      %872 = vmatprep.subr.mxu0 0.0
      %873 = vmatpush1.msra.mxu0 %v804
      %874 = vmatprep.subr.mxu0 0.0
      %875 = vmatpush1.msra.mxu0 %v805
      %876 = vmatprep.subr.mxu0 0.0
      %877 = vmatpush1.msra.mxu0 %v806
      %878 = vmatprep.subr.mxu0 0.0
      %879 = vmatpush1.msra.mxu0 %v807
      %880 = vmatprep.subr.mxu0 0.0
      %881 = vmatpush1.msra.mxu0 %v808
      %882 = vmatprep.subr.mxu0 0.0
      %883 = vmatpush1.msra.mxu0 %v809
      %884 = vmatprep.subr.mxu0 0.0
      %885 = vmatpush1.msra.mxu0 %v810
      %886 = vmatprep.subr.mxu0 0.0
      %887 = vmatpush1.msra.mxu0 %v811
      %888 = vmatprep.subr.mxu0 0.0
      %889 = vmatpush1.msra.mxu0 %v812
      %890 = vmatprep.subr.mxu0 0.0
      %891 = vmatpush1.msra.mxu0 %v813
      %892 = vmatprep.subr.mxu0 0.0
      %893 = vmatpush1.msra.mxu0 %v814
      %894 = vmatprep.subr.mxu0 0.0
      %895 = vmatpush1.msra.mxu0 %v815
      %896 = vmatprep.subr.mxu0 0.0
      %897 = vmatpush1.msra.mxu0 %v816
      %898 = vmatprep.subr.mxu0 0.0
      %899 = vmatpush1.msra.mxu0 %v817
      %900 = vmatprep.subr.mxu0 0.0
      %901 = vmatpush1.msra.mxu0 %v818
      %902 = vmatprep.subr.mxu0 0.0
      %903 = vmatpush1.msra.mxu0 %v819
      %904 = vmatprep.subr.mxu0 0.0
      %905 = vmatpush1.msra.mxu0 %v820
      %906 = vmatprep.subr.mxu0 0.0
      %907 = vmatpush1.msra.mxu0 %v821
      %908 = vmatprep.subr.mxu0 0.0
      %909 = vmatpush1.msra.mxu0 %v822
      %910 = vmatprep.mubr.f32.mxu0 %v696
      %911 = vmatmul.mubr.f32.gmra.mrb[0].mxu0 %v695
      %v912 = vpop.f32.mrb[0].mxu0
      %v913 = vadd.f32 %v844, %v912
      %v914 = vpop.f32.mrb[0].mxu0
      %915 = vmatprep.mubr.f32.mxu0 %v699
      %916 = vmatmul.mubr.f32.gmra.mrb[0].mxu0 %v698
      %v917 = vpop.f32.mrb[0].mxu0
      %v918 = vadd.f32 %v844, %v917
      %v919 = vpop.f32.mrb[0].mxu0
      %920 = vmatprep.mubr.f32.mxu0 %v702
      %921 = vmatmul.mubr.f32.gmra.mrb[0].mxu0 %v701
      %v922 = vpop.f32.mrb[0].mxu0
      %v923 = vadd.f32 %v844, %v922
      %v924 = vpop.f32.mrb[0].mxu0
      %925 = vmatprep.mubr.f32.mxu0 %v705
      %926 = vmatmul.mubr.f32.gmra.mrb[0].mxu0 %v704
      %v927 = vpop.f32.mrb[0].mxu0
      %v928 = vadd.f32 %v844, %v927
      %v929 = vpop.f32.mrb[0].mxu0
      %930 = vmatprep.mubr.f32.mxu0 %v708
      %931 = vmatmul.mubr.f32.gmra.mrb[0].mxu0 %v707
      %v932 = vpop.f32.mrb[0].mxu0
      %v933 = vadd.f32 %v844, %v932
      %v934 = vpop.f32.mrb[0].mxu0
      %935 = vmatprep.mubr.f32.mxu0 %v711
      %936 = vmatmul.mubr.f32.gmra.mrb[0].mxu0 %v710
      %v937 = vpop.f32.mrb[0].mxu0
      %v938 = vadd.f32 %v844, %v937
      %v939 = vpop.f32.mrb[0].mxu0
      %940 = vmatprep.mubr.f32.mxu0 %v714
      %941 = vmatmul.mubr.f32.gmra.mrb[0].mxu0 %v713
      %v942 = vpop.f32.mrb[0].mxu0
      %v943 = vadd.f32 %v844, %v942
      %v944 = vpop.f32.mrb[0].mxu0
      %945 = vmatprep.mubr.f32.mxu0 %v717
      %946 = vmatmul.mubr.f32.gmra.mrb[0].mxu0 %v716
      %v947 = vpop.f32.mrb[0].mxu0
      %v948 = vadd.f32 %v844, %v947
      %v949 = vpop.f32.mrb[0].mxu0
      %950 = vmatprep.mubr.f32.mxu0 %v720
      %951 = vmatmul.mubr.f32.gmra.mrb[0].mxu0 %v719
      %v952 = vpop.f32.mrb[0].mxu0
      %v953 = vadd.f32 %v844, %v952
      %v954 = vpop.f32.mrb[0].mxu0
      %955 = vmatprep.mubr.f32.mxu0 %v723
      %956 = vmatmul.mubr.f32.gmra.mrb[0].mxu0 %v722
      %v957 = vpop.f32.mrb[0].mxu0
      %v958 = vadd.f32 %v844, %v957
      %v959 = vpop.f32.mrb[0].mxu0
      %960 = vmatprep.mubr.f32.mxu0 %v726
      %961 = vmatmul.mubr.f32.gmra.mrb[0].mxu0 %v725
      %v962 = vpop.f32.mrb[0].mxu0
      %v963 = vadd.f32 %v844, %v962
      %v964 = vpop.f32.mrb[0].mxu0
      %965 = vmatprep.mubr.f32.mxu0 %v729
      %966 = vmatmul.mubr.f32.gmra.mrb[0].mxu0 %v728
      %v967 = vpop.f32.mrb[0].mxu0
      %v968 = vadd.f32 %v844, %v967
      %v969 = vpop.f32.mrb[0].mxu0
      %970 = vmatprep.mubr.f32.mxu0 %v732
      %971 = vmatmul.mubr.f32.gmra.mrb[0].mxu0 %v731
      %v972 = vpop.f32.mrb[0].mxu0
      %v973 = vadd.f32 %v844, %v972
      %v974 = vpop.f32.mrb[0].mxu0
      %975 = vmatprep.mubr.f32.mxu0 %v735
      %976 = vmatmul.mubr.f32.gmra.mrb[0].mxu0 %v734
      %v977 = vpop.f32.mrb[0].mxu0
      %v978 = vadd.f32 %v844, %v977
      %v979 = vpop.f32.mrb[0].mxu0
      %980 = vmatprep.mubr.f32.mxu0 %v738
      %981 = vmatmul.mubr.f32.gmra.mrb[0].mxu0 %v737
      %v982 = vpop.f32.mrb[0].mxu0
      %v983 = vadd.f32 %v844, %v982
      %v984 = vpop.f32.mrb[0].mxu0
      %985 = vmatprep.mubr.f32.mxu0 %v741
      %986 = vmatmul.mubr.f32.gmra.mrb[0].mxu0 %v740
      %v987 = vpop.f32.mrb[0].mxu0
      %v988 = vadd.f32 %v844, %v987
      %v989 = vpop.f32.mrb[0].mxu0
      %990 = vmatprep.mubr.f32.mxu0 %v744
      %991 = vmatmul.mubr.f32.gmra.mrb[0].mxu0 %v743
      %v992 = vpop.f32.mrb[0].mxu0
      %v993 = vadd.f32 %v844, %v992
      %v994 = vpop.f32.mrb[0].mxu0
      %995 = vmatprep.mubr.f32.mxu0 %v747
      %996 = vmatmul.mubr.f32.gmra.mrb[0].mxu0 %v746
      %v997 = vpop.f32.mrb[0].mxu0
      %v998 = vadd.f32 %v844, %v997
      %v999 = vpop.f32.mrb[0].mxu0
      %1000 = vmatprep.mubr.f32.mxu0 %v750
      %1001 = vmatmul.mubr.f32.gmra.mrb[0].mxu0 %v749
      %v1002 = vpop.f32.mrb[0].mxu0
      %v1003 = vadd.f32 %v844, %v1002
      %v1004 = vpop.f32.mrb[0].mxu0
      %1005 = vmatprep.mubr.f32.mxu0 %v753
      %1006 = vmatmul.mubr.f32.gmra.mrb[0].mxu0 %v752
      %v1007 = vpop.f32.mrb[0].mxu0
      %v1008 = vadd.f32 %v844, %v1007
      %v1009 = vpop.f32.mrb[0].mxu0
      %1010 = vmatprep.mubr.f32.mxu0 %v756
      %1011 = vmatmul.mubr.f32.gmra.mrb[0].mxu0 %v755
      %v1012 = vpop.f32.mrb[0].mxu0
      %v1013 = vadd.f32 %v844, %v1012
      %v1014 = vpop.f32.mrb[0].mxu0
      %1015 = vmatprep.mubr.f32.mxu0 %v759
      %1016 = vmatmul.mubr.f32.gmra.mrb[0].mxu0 %v758
      %v1017 = vpop.f32.mrb[0].mxu0
      %v1018 = vadd.f32 %v844, %v1017
      %v1019 = vpop.f32.mrb[0].mxu0
      %1020 = vmatprep.mubr.f32.mxu0 %v762
      %1021 = vmatmul.mubr.f32.gmra.mrb[0].mxu0 %v761
      %v1022 = vpop.f32.mrb[0].mxu0
      %v1023 = vadd.f32 %v844, %v1022
      %v1024 = vpop.f32.mrb[0].mxu0
      %1025 = vmatprep.mubr.f32.mxu0 %v765
      %1026 = vmatmul.mubr.f32.gmra.mrb[0].mxu0 %v764
      %v1027 = vpop.f32.mrb[0].mxu0
      %v1028 = vadd.f32 %v844, %v1027
      %v1029 = vpop.f32.mrb[0].mxu0
      %1030 = vmatprep.mubr.f32.mxu0 %v768
      %1031 = vmatmul.mubr.f32.gmra.mrb[0].mxu0 %v767
      %v1032 = vpop.f32.mrb[0].mxu0
      %v1033 = vadd.f32 %v844, %v1032
      %v1034 = vpop.f32.mrb[0].mxu0
      %1035 = vmatprep.mubr.f32.mxu0 %v771
      %1036 = vmatmul.mubr.f32.gmra.mrb[0].mxu0 %v770
      %v1037 = vpop.f32.mrb[0].mxu0
      %v1038 = vadd.f32 %v844, %v1037
      %v1039 = vpop.f32.mrb[0].mxu0
      %1040 = vmatprep.mubr.f32.mxu0 %v774
      %1041 = vmatmul.mubr.f32.gmra.mrb[0].mxu0 %v773
      %v1042 = vpop.f32.mrb[0].mxu0
      %v1043 = vadd.f32 %v844, %v1042
      %v1044 = vpop.f32.mrb[0].mxu0
      %1045 = vmatprep.mubr.f32.mxu0 %v777
      %1046 = vmatmul.mubr.f32.gmra.mrb[0].mxu0 %v776
      %v1047 = vpop.f32.mrb[0].mxu0
      %v1048 = vadd.f32 %v844, %v1047
      %v1049 = vpop.f32.mrb[0].mxu0
      %1050 = vmatprep.mubr.f32.mxu0 %v780
      %1051 = vmatmul.mubr.f32.gmra.mrb[0].mxu0 %v779
      %v1052 = vpop.f32.mrb[0].mxu0
      %v1053 = vadd.f32 %v844, %v1052
      %v1054 = vpop.f32.mrb[0].mxu0
      %1055 = vmatprep.mubr.f32.mxu0 %v783
      %1056 = vmatmul.mubr.f32.gmra.mrb[0].mxu0 %v782
      %v1057 = vpop.f32.mrb[0].mxu0
      %v1058 = vadd.f32 %v844, %v1057
      %v1059 = vpop.f32.mrb[0].mxu0
      %1060 = vmatprep.mubr.f32.mxu0 %v786
      %1061 = vmatmul.mubr.f32.gmra.mrb[0].mxu0 %v785
      %v1062 = vpop.f32.mrb[0].mxu0
      %v1063 = vadd.f32 %v844, %v1062
      %v1064 = vpop.f32.mrb[0].mxu0
      %1065 = vmatprep.mubr.f32.mxu0 %v789
      %1066 = vmatmul.mubr.f32.gmra.mrb[0].mxu0 %v788
      %v1067 = vpop.f32.mrb[0].mxu0
      %v1068 = vadd.f32 %v844, %v1067
      %v1069 = vpop.f32.mrb[0].mxu0
      %1070 = vdwg.mxu0
      %1071 = vmatprep.subr.mxu0 0.0
      %1072 = vmatpush1.msra.mxu0 %v823
      %1073 = vmatprep.subr.mxu0 0.0
      %1074 = vmatpush1.msra.mxu0 %v824
      %1075 = vmatprep.subr.mxu0 0.0
      %1076 = vmatpush1.msra.mxu0 %v825
      %1077 = vmatprep.subr.mxu0 0.0
      %1078 = vmatpush1.msra.mxu0 %v826
      %1079 = vmatprep.subr.mxu0 0.0
      %1080 = vmatpush1.msra.mxu0 %v827
      %1081 = vmatprep.subr.mxu0 0.0
      %1082 = vmatpush1.msra.mxu0 %v828
      %1083 = vmatprep.subr.mxu0 0.0
      %1084 = vmatpush1.msra.mxu0 %v829
      %1085 = vmatprep.subr.mxu0 0.0
      %1086 = vmatpush1.msra.mxu0 %v830
      %1087 = vmatprep.subr.mxu0 0.0
      %1088 = vmatpush1.msra.mxu0 %v831
      %1089 = vmatprep.subr.mxu0 0.0
      %1090 = vmatpush1.msra.mxu0 %v832
      %1091 = vmatprep.subr.mxu0 0.0
      %1092 = vmatpush1.msra.mxu0 %v833
      %1093 = vmatprep.subr.mxu0 0.0
      %1094 = vmatpush1.msra.mxu0 %v834
      %1095 = vmatprep.subr.mxu0 0.0
      %1096 = vmatpush1.msra.mxu0 %v835
      %1097 = vmatprep.subr.mxu0 0.0
      %1098 = vmatpush1.msra.mxu0 %v836
      %1099 = vmatprep.subr.mxu0 0.0
      %1100 = vmatpush1.msra.mxu0 %v837
      %1101 = vmatprep.subr.mxu0 0.0
      %1102 = vmatpush1.msra.mxu0 %v838
      %1103 = vmatprep.subr.mxu0 0.0
      %1104 = vmatpush1.msra.mxu0 0.0
      %1105 = vmatprep.subr.mxu0 0.0
      %1106 = vmatpush1.msra.mxu0 0.0
      %1107 = vmatprep.subr.mxu0 0.0
      %1108 = vmatpush1.msra.mxu0 0.0
      %1109 = vmatprep.subr.mxu0 0.0
      %1110 = vmatpush1.msra.mxu0 0.0
      %1111 = vmatprep.subr.mxu0 0.0
      %1112 = vmatpush1.msra.mxu0 0.0
      %1113 = vmatprep.subr.mxu0 0.0
      %1114 = vmatpush1.msra.mxu0 0.0
      %1115 = vmatprep.subr.mxu0 0.0
      %1116 = vmatpush1.msra.mxu0 0.0
      %1117 = vmatprep.subr.mxu0 0.0
      %1118 = vmatpush1.msra.mxu0 0.0
      %1119 = vmatprep.subr.mxu0 0.0
      %1120 = vmatpush1.msra.mxu0 0.0
      %1121 = vmatprep.subr.mxu0 0.0
      %1122 = vmatpush1.msra.mxu0 0.0
      %1123 = vmatprep.subr.mxu0 0.0
      %1124 = vmatpush1.msra.mxu0 0.0
      %1125 = vmatprep.subr.mxu0 0.0
      %1126 = vmatpush1.msra.mxu0 0.0
      %1127 = vmatprep.subr.mxu0 0.0
      %1128 = vmatpush1.msra.mxu0 0.0
      %1129 = vmatprep.subr.mxu0 0.0
      %1130 = vmatpush1.msra.mxu0 0.0
      %1131 = vmatprep.subr.mxu0 0.0
      %1132 = vmatpush1.msra.mxu0 0.0
      %1133 = vmatprep.subr.mxu0 0.0
      %1134 = vmatpush1.msra.mxu0 0.0
      %1135 = vmatprep.mubr.f32.mxu0 0.0
      %1136 = vmatmul.mubr.f32.gmra.mrb[0].mxu0 %v697
      %v1137 = vpop.f32.mrb[0].mxu0
      %v1138 = vadd.f32 %v913, %v1137
      %v1139 = vpop.f32.mrb[0].mxu0
      %1140 = vmatprep.mubr.f32.mxu0 0.0
      %1141 = vmatmul.mubr.f32.gmra.mrb[0].mxu0 %v700
      %v1142 = vpop.f32.mrb[0].mxu0
      %v1143 = vadd.f32 %v918, %v1142
      %v1144 = vpop.f32.mrb[0].mxu0
      %1145 = vmatprep.mubr.f32.mxu0 0.0
      %1146 = vmatmul.mubr.f32.gmra.mrb[0].mxu0 %v703
      %v1147 = vpop.f32.mrb[0].mxu0
      %v1148 = vadd.f32 %v923, %v1147
      %v1149 = vpop.f32.mrb[0].mxu0
      %1150 = vmatprep.mubr.f32.mxu0 0.0
      %1151 = vmatmul.mubr.f32.gmra.mrb[0].mxu0 %v706
      %v1152 = vpop.f32.mrb[0].mxu0
      %v1153 = vadd.f32 %v928, %v1152
      %v1154 = vpop.f32.mrb[0].mxu0
      %1155 = vmatprep.mubr.f32.mxu0 0.0
      %1156 = vmatmul.mubr.f32.gmra.mrb[0].mxu0 %v709
      %v1157 = vpop.f32.mrb[0].mxu0
      %v1158 = vadd.f32 %v933, %v1157
      %v1159 = vpop.f32.mrb[0].mxu0
      %1160 = vmatprep.mubr.f32.mxu0 0.0
      %1161 = vmatmul.mubr.f32.gmra.mrb[0].mxu0 %v712
      %v1162 = vpop.f32.mrb[0].mxu0
      %v1163 = vadd.f32 %v938, %v1162
      %v1164 = vpop.f32.mrb[0].mxu0
      %1165 = vmatprep.mubr.f32.mxu0 0.0
      %1166 = vmatmul.mubr.f32.gmra.mrb[0].mxu0 %v715
      %v1167 = vpop.f32.mrb[0].mxu0
      %v1168 = vadd.f32 %v943, %v1167
      %v1169 = vpop.f32.mrb[0].mxu0
      %1170 = vmatprep.mubr.f32.mxu0 0.0
      %1171 = vmatmul.mubr.f32.gmra.mrb[0].mxu0 %v718
      %v1172 = vpop.f32.mrb[0].mxu0
      %v1173 = vadd.f32 %v948, %v1172
      %v1174 = vpop.f32.mrb[0].mxu0
      %1175 = vmatprep.mubr.f32.mxu0 0.0
      %1176 = vmatmul.mubr.f32.gmra.mrb[0].mxu0 %v721
      %v1177 = vpop.f32.mrb[0].mxu0
      %v1178 = vadd.f32 %v953, %v1177
      %v1179 = vpop.f32.mrb[0].mxu0
      %1180 = vmatprep.mubr.f32.mxu0 0.0
      %1181 = vmatmul.mubr.f32.gmra.mrb[0].mxu0 %v724
      %v1182 = vpop.f32.mrb[0].mxu0
      %v1183 = vadd.f32 %v958, %v1182
      %v1184 = vpop.f32.mrb[0].mxu0
      %1185 = vmatprep.mubr.f32.mxu0 0.0
      %1186 = vmatmul.mubr.f32.gmra.mrb[0].mxu0 %v727
      %v1187 = vpop.f32.mrb[0].mxu0
      %v1188 = vadd.f32 %v963, %v1187
      %v1189 = vpop.f32.mrb[0].mxu0
      %1190 = vmatprep.mubr.f32.mxu0 0.0
      %1191 = vmatmul.mubr.f32.gmra.mrb[0].mxu0 %v730
      %v1192 = vpop.f32.mrb[0].mxu0
      %v1193 = vadd.f32 %v968, %v1192
      %v1194 = vpop.f32.mrb[0].mxu0
      %1195 = vmatprep.mubr.f32.mxu0 0.0
      %1196 = vmatmul.mubr.f32.gmra.mrb[0].mxu0 %v733
      %v1197 = vpop.f32.mrb[0].mxu0
      %v1198 = vadd.f32 %v973, %v1197
      %v1199 = vpop.f32.mrb[0].mxu0
      %1200 = vmatprep.mubr.f32.mxu0 0.0
      %1201 = vmatmul.mubr.f32.gmra.mrb[0].mxu0 %v736
      %v1202 = vpop.f32.mrb[0].mxu0
      %v1203 = vadd.f32 %v978, %v1202
      %v1204 = vpop.f32.mrb[0].mxu0
      %1205 = vmatprep.mubr.f32.mxu0 0.0
      %1206 = vmatmul.mubr.f32.gmra.mrb[0].mxu0 %v739
      %v1207 = vpop.f32.mrb[0].mxu0
      %v1208 = vadd.f32 %v983, %v1207
      %v1209 = vpop.f32.mrb[0].mxu0
      %1210 = vmatprep.mubr.f32.mxu0 0.0
      %1211 = vmatmul.mubr.f32.gmra.mrb[0].mxu0 %v742
      %v1212 = vpop.f32.mrb[0].mxu0
      %v1213 = vadd.f32 %v988, %v1212
      %v1214 = vpop.f32.mrb[0].mxu0
      %1215 = vmatprep.mubr.f32.mxu0 0.0
      %1216 = vmatmul.mubr.f32.gmra.mrb[0].mxu0 %v745
      %v1217 = vpop.f32.mrb[0].mxu0
      %v1218 = vadd.f32 %v993, %v1217
      %v1219 = vpop.f32.mrb[0].mxu0
      %1220 = vmatprep.mubr.f32.mxu0 0.0
      %1221 = vmatmul.mubr.f32.gmra.mrb[0].mxu0 %v748
      %v1222 = vpop.f32.mrb[0].mxu0
      %v1223 = vadd.f32 %v998, %v1222
      %v1224 = vpop.f32.mrb[0].mxu0
      %1225 = vmatprep.mubr.f32.mxu0 0.0
      %1226 = vmatmul.mubr.f32.gmra.mrb[0].mxu0 %v751
      %v1227 = vpop.f32.mrb[0].mxu0
      %v1228 = vadd.f32 %v1003, %v1227
      %v1229 = vpop.f32.mrb[0].mxu0
      %1230 = vmatprep.mubr.f32.mxu0 0.0
      %1231 = vmatmul.mubr.f32.gmra.mrb[0].mxu0 %v754
      %v1232 = vpop.f32.mrb[0].mxu0
      %v1233 = vadd.f32 %v1008, %v1232
      %v1234 = vpop.f32.mrb[0].mxu0
      %1235 = vmatprep.mubr.f32.mxu0 0.0
      %1236 = vmatmul.mubr.f32.gmra.mrb[0].mxu0 %v757
      %v1237 = vpop.f32.mrb[0].mxu0
      %v1238 = vadd.f32 %v1013, %v1237
      %v1239 = vpop.f32.mrb[0].mxu0
      %1240 = vmatprep.mubr.f32.mxu0 0.0
      %1241 = vmatmul.mubr.f32.gmra.mrb[0].mxu0 %v760
      %v1242 = vpop.f32.mrb[0].mxu0
      %v1243 = vadd.f32 %v1018, %v1242
      %v1244 = vpop.f32.mrb[0].mxu0
      %1245 = vmatprep.mubr.f32.mxu0 0.0
      %1246 = vmatmul.mubr.f32.gmra.mrb[0].mxu0 %v763
      %v1247 = vpop.f32.mrb[0].mxu0
      %v1248 = vadd.f32 %v1023, %v1247
      %v1249 = vpop.f32.mrb[0].mxu0
      %1250 = vmatprep.mubr.f32.mxu0 0.0
      %1251 = vmatmul.mubr.f32.gmra.mrb[0].mxu0 %v766
      %v1252 = vpop.f32.mrb[0].mxu0
      %v1253 = vadd.f32 %v1028, %v1252
      %v1254 = vpop.f32.mrb[0].mxu0
      %1255 = vmatprep.mubr.f32.mxu0 0.0
      %1256 = vmatmul.mubr.f32.gmra.mrb[0].mxu0 %v769
      %v1257 = vpop.f32.mrb[0].mxu0
      %v1258 = vadd.f32 %v1033, %v1257
      %v1259 = vpop.f32.mrb[0].mxu0
      %1260 = vmatprep.mubr.f32.mxu0 0.0
      %1261 = vmatmul.mubr.f32.gmra.mrb[0].mxu0 %v772
      %v1262 = vpop.f32.mrb[0].mxu0
      %v1263 = vadd.f32 %v1038, %v1262
      %v1264 = vpop.f32.mrb[0].mxu0
      %1265 = vmatprep.mubr.f32.mxu0 0.0
      %1266 = vmatmul.mubr.f32.gmra.mrb[0].mxu0 %v775
      %v1267 = vpop.f32.mrb[0].mxu0
      %v1268 = vadd.f32 %v1043, %v1267
      %v1269 = vpop.f32.mrb[0].mxu0
      %1270 = vmatprep.mubr.f32.mxu0 0.0
      %1271 = vmatmul.mubr.f32.gmra.mrb[0].mxu0 %v778
      %v1272 = vpop.f32.mrb[0].mxu0
      %v1273 = vadd.f32 %v1048, %v1272
      %v1274 = vpop.f32.mrb[0].mxu0
      %1275 = vmatprep.mubr.f32.mxu0 0.0
      %1276 = vmatmul.mubr.f32.gmra.mrb[0].mxu0 %v781
      %v1277 = vpop.f32.mrb[0].mxu0
      %v1278 = vadd.f32 %v1053, %v1277
      %v1279 = vpop.f32.mrb[0].mxu0
      %1280 = vmatprep.mubr.f32.mxu0 0.0
      %1281 = vmatmul.mubr.f32.gmra.mrb[0].mxu0 %v784
      %v1282 = vpop.f32.mrb[0].mxu0
      %v1283 = vadd.f32 %v1058, %v1282
      %v1284 = vpop.f32.mrb[0].mxu0
      %1285 = vmatprep.mubr.f32.mxu0 0.0
      %1286 = vmatmul.mubr.f32.gmra.mrb[0].mxu0 %v787
      %v1287 = vpop.f32.mrb[0].mxu0
      %v1288 = vadd.f32 %v1063, %v1287
      %v1289 = vpop.f32.mrb[0].mxu0
      %1290 = vmatprep.mubr.f32.mxu0 0.0
      %1291 = vmatmul.mubr.f32.gmra.mrb[0].mxu0 %v790
      %v1292 = vpop.f32.mrb[0].mxu0
      %v1293 = vadd.f32 %v1068, %v1292
      %v1294 = vpop.f32.mrb[0].mxu0
      %1295 = vdwg.mxu0
      %1296 = vst [vmem:[%s301] sm:$0xff] %v1138
      %1297 = vst [vmem:[%s301 + $0x8] sm:$0xff] %v1143
      %1298 = vst [vmem:[%s301 + $0x10] sm:$0xff] %v1148
      %1299 = vst [vmem:[%s301 + $0x18] sm:$0xff] %v1153
      %1300 = vst [vmem:[%s301 + $0x20] sm:$0xff] %v1158
      %1301 = vst [vmem:[%s301 + $0x28] sm:$0xff] %v1163
      %1302 = vst [vmem:[%s301 + $0x30] sm:$0xff] %v1168
      %1303 = vst [vmem:[%s301 + $0x38] sm:$0xff] %v1173
      %1304 = vst [vmem:[%s301 + $0x40] sm:$0xff] %v1178
      %1305 = vst [vmem:[%s301 + $0x48] sm:$0xff] %v1183
      %1306 = vst [vmem:[%s301 + $0x50] sm:$0xff] %v1188
      %1307 = vst [vmem:[%s301 + $0x58] sm:$0xff] %v1193
      %1308 = vst [vmem:[%s301 + $0x60] sm:$0xff] %v1198
      %1309 = vst [vmem:[%s301 + $0x68] sm:$0xff] %v1203
      %1310 = vst [vmem:[%s301 + $0x70] sm:$0xff] %v1208
      %1311 = vst [vmem:[%s301 + $0x78] sm:$0xff] %v1213
      %1312 = vst [vmem:[%s301 + $0x80] sm:$0xff] %v1218
      %1313 = vst [vmem:[%s301 + $0x88] sm:$0xff] %v1223
      %1314 = vst [vmem:[%s301 + $0x90] sm:$0xff] %v1228
      %1315 = vst [vmem:[%s301 + $0x98] sm:$0xff] %v1233
      %1316 = vst [vmem:[%s301 + $0xa0] sm:$0xff] %v1238
      %1317 = vst [vmem:[%s301 + $0xa8] sm:$0xff] %v1243
      %1318 = vst [vmem:[%s301 + $0xb0] sm:$0xff] %v1248
      %1319 = vst [vmem:[%s301 + $0xb8] sm:$0xff] %v1253
      %1320 = vst [vmem:[%s301 + $0xc0] sm:$0xff] %v1258
      %1321 = vst [vmem:[%s301 + $0xc8] sm:$0xff] %v1263
      %1322 = vst [vmem:[%s301 + $0xd0] sm:$0xff] %v1268
      %1323 = vst [vmem:[%s301 + $0xd8] sm:$0xff] %v1273
      %1324 = vst [vmem:[%s301 + $0xe0] sm:$0xff] %v1278
      %1325 = vst [vmem:[%s301 + $0xe8] sm:$0xff] %v1283
      %1326 = vst [vmem:[%s301 + $0xf0] sm:$0xff] %v1288
      %1327 = vst [vmem:[%s301 + $0xf8] sm:$0xff] %v1293
      %v1328 = vadd.f32 %v1138, %v1143
      %v1329 = vadd.f32 %v1328, %v1148
      %v1330 = vadd.f32 %v1329, %v1153
      %v1331 = vadd.f32 %v1330, %v1158
      %v1332 = vadd.f32 %v1331, %v1163
      %v1333 = vadd.f32 %v1332, %v1168
      %v1334 = vadd.f32 %v1333, %v1173
      %v1335 = vadd.f32 %v1334, %v1178
      %v1336 = vadd.f32 %v1335, %v1183
      %v1337 = vadd.f32 %v1336, %v1188
      %v1338 = vadd.f32 %v1337, %v1193
      %v1339 = vadd.f32 %v1338, %v1198
      %v1340 = vadd.f32 %v1339, %v1203
      %v1341 = vadd.f32 %v1340, %v1208
      %v1342 = vadd.f32 %v1341, %v1213
      %v1343 = vadd.f32 %v1342, %v1218
      %v1344 = vadd.f32 %v1343, %v1223
      %v1345 = vadd.f32 %v1344, %v1228
      %v1346 = vadd.f32 %v1345, %v1233
      %v1347 = vadd.f32 %v1346, %v1238
      %v1348 = vadd.f32 %v1347, %v1243
      %v1349 = vadd.f32 %v1348, %v1248
      %v1350 = vadd.f32 %v1349, %v1253
      %v1351 = vadd.f32 %v1350, %v1258
      %v1352 = vadd.f32 %v1351, %v1263
      %v1353 = vadd.f32 %v1352, %v1268
      %v1354 = vadd.f32 %v1353, %v1273
      %v1355 = vadd.f32 %v1354, %v1278
      %v1356 = vadd.f32 %v1355, %v1283
      %v1357 = vadd.f32 %v1356, %v1288
      %v1358 = vadd.f32 %v1357, %v1293
      %v1359 = vrot.slane %v1358, 4
      %v1360 = vadd.f32 %v1358, %v1359
      %v1361 = vrot.slane %v1360, 2
      %v1362 = vadd.f32 %v1360, %v1361
      %v1363 = vrot.slane %v1362, 1
      %v1364 = vadd.f32 %v1362, %v1363
      %v1365 = vmul.f32 %v1138, %v1138
      %v1366 = vmul.f32 %v1143, %v1143
      %v1367 = vmul.f32 %v1148, %v1148
      %v1368 = vmul.f32 %v1153, %v1153
      %v1369 = vmul.f32 %v1158, %v1158
      %v1370 = vmul.f32 %v1163, %v1163
      %v1371 = vmul.f32 %v1168, %v1168
      %v1372 = vmul.f32 %v1173, %v1173
      %v1373 = vmul.f32 %v1178, %v1178
      %v1374 = vmul.f32 %v1183, %v1183
      %v1375 = vmul.f32 %v1188, %v1188
      %v1376 = vmul.f32 %v1193, %v1193
      %v1377 = vmul.f32 %v1198, %v1198
      %v1378 = vmul.f32 %v1203, %v1203
      %v1379 = vmul.f32 %v1208, %v1208
      %v1380 = vmul.f32 %v1213, %v1213
      %v1381 = vmul.f32 %v1218, %v1218
      %v1382 = vmul.f32 %v1223, %v1223
      %v1383 = vmul.f32 %v1228, %v1228
      %v1384 = vmul.f32 %v1233, %v1233
      %v1385 = vmul.f32 %v1238, %v1238
      %v1386 = vmul.f32 %v1243, %v1243
      %v1387 = vmul.f32 %v1248, %v1248
      %v1388 = vmul.f32 %v1253, %v1253
      %v1389 = vmul.f32 %v1258, %v1258
      %v1390 = vmul.f32 %v1263, %v1263
      %v1391 = vmul.f32 %v1268, %v1268
      %v1392 = vmul.f32 %v1273, %v1273
      %v1393 = vmul.f32 %v1278, %v1278
      %v1394 = vmul.f32 %v1283, %v1283
      %v1395 = vmul.f32 %v1288, %v1288
      %v1396 = vmul.f32 %v1293, %v1293
      %v1397 = vadd.f32 %v1365, %v1366
      %v1398 = vadd.f32 %v1397, %v1367
      %v1399 = vadd.f32 %v1398, %v1368
      %v1400 = vadd.f32 %v1399, %v1369
      %v1401 = vadd.f32 %v1400, %v1370
      %v1402 = vadd.f32 %v1401, %v1371
      %v1403 = vadd.f32 %v1402, %v1372
      %v1404 = vadd.f32 %v1403, %v1373
      %v1405 = vadd.f32 %v1404, %v1374
      %v1406 = vadd.f32 %v1405, %v1375
      %v1407 = vadd.f32 %v1406, %v1376
      %v1408 = vadd.f32 %v1407, %v1377
      %v1409 = vadd.f32 %v1408, %v1378
      %v1410 = vadd.f32 %v1409, %v1379
      %v1411 = vadd.f32 %v1410, %v1380
      %v1412 = vadd.f32 %v1411, %v1381
      %v1413 = vadd.f32 %v1412, %v1382
      %v1414 = vadd.f32 %v1413, %v1383
      %v1415 = vadd.f32 %v1414, %v1384
      %v1416 = vadd.f32 %v1415, %v1385
      %v1417 = vadd.f32 %v1416, %v1386
      %v1418 = vadd.f32 %v1417, %v1387
      %v1419 = vadd.f32 %v1418, %v1388
      %v1420 = vadd.f32 %v1419, %v1389
      %v1421 = vadd.f32 %v1420, %v1390
      %v1422 = vadd.f32 %v1421, %v1391
      %v1423 = vadd.f32 %v1422, %v1392
      %v1424 = vadd.f32 %v1423, %v1393
      %v1425 = vadd.f32 %v1424, %v1394
      %v1426 = vadd.f32 %v1425, %v1395
      %v1427 = vadd.f32 %v1426, %v1396
      %v1428 = vrot.slane %v1427, 4
      %v1429 = vadd.f32 %v1427, %v1428
      %v1430 = vrot.slane %v1429, 2
      %v1431 = vadd.f32 %v1429, %v1430
      %v1432 = vrot.slane %v1431, 1
      %v1433 = vadd.f32 %v1431, %v1432
      %vm1434 = vcmask 1040384
      %v1435 = vsel %vm1434, %v1364, %v1433
      %1436 = vst [vmem:[%s309] sm:$0x3] %v1435
      %s1437 = smul.u32 8, %s23
      %p1438 = scmp.lt.s32.totalorder %s22, 1
      %s1439 = scalar_select %p1438, %s22, 1
      %p1440 = scmp.lt.s32.totalorder %s1437, 7
      %s1441 = scalar_select %p1440, %s1437, 7
      %s1442 = smul.addr %s1439, 32
      %s1443 = sadd.s32 %s1441, %s1442
      %s1444 = smul.addr %s1443, 8
      %s1445 = scalar_lea.vmem %s5, %s1444
      %p1446 = scmp.lt.s32.totalorder %s22, 1
      %s1447 = scalar_select %p1446, %s22, 1
      %p1448 = scmp.lt.s32.totalorder %s23, 0
      %s1449 = scalar_select %p1448, %s23, 0
      %s1450 = sadd.s32 %s1449, %s1447
      %s1451 = smul.addr %s1450, 2
      %s1452 = scalar_lea.vmem %s6, %s1451
      // Predicated region
      $region41: #{block21d_forward.6} parent=39 // pred_check
        %p1453 = pneg %p162
      $region42: #{block21d_forward.6} parent=39 // pred_check_branch
        %1455 = sbr.rel (%p1453) target = $region44
      $region43: #{block21d_forward.6} parent=39 // pred_region
        %s1456 = smul.u32 8, %s23
      $region44: #{block21d_forward.6} parent=39 // pred_fallthru
        _
      // Predicated region
      $region45: #{block21d_forward.6} parent=39 // pred_check
        %p1457 = pneg %p190
      $region46: #{block21d_forward.6} parent=39 // pred_check_branch
        %1459 = sbr.rel (%p1457) target = $region48
      $region47: #{block21d_forward.6} parent=39 // pred_region
        _
      $region48: #{block21d_forward.6} parent=39 // pred_fallthru
        _
    $region40: #{block21d_forward.6} parent=5 // pred_fallthru
      _
    %p1460 = scmp.le.s32.totalorder 2, %s13
    // Predicated region
    $region49: #{block21d_forward.6} parent=5 // pred_check
      %p1461 = pneg %p1460
    $region50: #{block21d_forward.6} parent=5 // pred_check_branch
      %1463 = sbr.rel (%p1461) target = $region52
    $region51: #{block21d_forward.6} parent=5 // pred_region
      %s1464 = ssub.s32 %s13, 2
      // Predicated region
      $region53: #{block21d_forward.6} parent=51 // pred_check
        %p1465 = pneg %p168
      $region54: #{block21d_forward.6} parent=51 // pred_check_branch
        %1467 = sbr.rel (%p1465) target = $region56
      $region55: #{block21d_forward.6} parent=51 // pred_region
        %s1468 = smul.u32 8, %s25
        %p1469 = scmp.lt.s32.totalorder %s24, 1
        %s1470 = scalar_select %p1469, %s24, 1
        %p1471 = scmp.lt.s32.totalorder %s1468, 7
        %s1472 = scalar_select %p1471, %s1468, 7
        %s1473 = smul.addr %s1470, 32
        %s1474 = sadd.s32 %s1472, %s1473
        %s1475 = smul.addr %s1474, 8
        %s1476 = scalar_lea.vmem %s5, %s1475
      $region56: #{block21d_forward.6} parent=51 // pred_fallthru
        _
      // Predicated region
      $region57: #{block21d_forward.6} parent=51 // pred_check
        %p1477 = pneg %p196
      $region58: #{block21d_forward.6} parent=51 // pred_check_branch
        %1479 = sbr.rel (%p1477) target = $region60
      $region59: #{block21d_forward.6} parent=51 // pred_region
        %p1480 = scmp.lt.s32.totalorder %s24, 1
        %s1481 = scalar_select %p1480, %s24, 1
        %p1482 = scmp.lt.s32.totalorder %s25, 0
        %s1483 = scalar_select %p1482, %s25, 0
        %s1484 = sadd.s32 %s1483, %s1481
        %s1485 = smul.addr %s1484, 2
        %s1486 = scalar_lea.vmem %s6, %s1485
      $region60: #{block21d_forward.6} parent=51 // pred_fallthru
        _
    $region52: #{block21d_forward.6} parent=5 // pred_fallthru
      _
  $region6: #{block21d_forward.6} parent=0 // loop_footer
    %s17 = sadd.s32 1, %s13
  $region7: #{block21d_forward.6} parent=0 // loop_footer_branch
    %12 = sbr.rel target = $region3
  $region8: #{block21d_forward.6} parent=0 // loop_exit
    _

// kernel: block21d_forward.5
$region0: #{block21d_forward.5}
  #allocation0 [shape = 'u32[]', space=smem, size = 0x4, offset = 0x4, fixed_abs, tag = 'smem constant byte address 0x4 - core index']
  #allocation1 [shape = 'u32[144,128]{1,0:T(1,128)}', space=vmem, size = 0x12000, scoped, tag = 'internal scratch']
  #allocation2 [shape = 'f32[4,10,10,128]{3,2,1,0:T(8,128)}', space=vmem, size = 0x50000, scoped, tag = 'scratch operand']
  #allocation3 [shape = 'f32[256,1152]{1,0:T(8,128)}', space=vmem, size = 0x120000, scoped, tag = 'scratch operand']
  %s0 = inlined_call_operand.vmem [shape: f32[8,8,8,128], index: 0, kind: input, shape index: {}]
  %s1 = inlined_call_operand.vmem [shape: f32[1152,128], index: 1, kind: input, shape index: {}]
  %s2 = inlined_call_operand.vmem [shape: f32[1,128], index: 2, kind: input, shape index: {}]
  %s3 = inlined_call_operand.vmem [shape: f32[512,128], index: 3, kind: output, shape index: {0}]
  %s4 = inlined_call_operand.vmem [shape: f32[2,2,128], index: 4, kind: output, shape index: {1}]
  %5 = xla_tuple %s3, %s4
  %s6 = sld [smem:[#allocation0]]
  $region53: #{block21d_forward.5} parent=0
    _
  %s8 = ssub.s32 1, %s6
  %s9 = scalar_select 0, %s8, %s6
  loop: start=0, step=1, limit=4
  $region2: #{block21d_forward.5} parent=0 // loop_pre_header
    _
  $region3: #{block21d_forward.5} parent=0 // loop_header
    %s11 = sphi 0, %s15
    %p12 = scmp.ge.s32.totalorder %s11, 4
    %s21 = sphi 0, %s23
    %s24 = sphi 0, %s21
    %s25 = sphi 0, %s24
    %s41 = sphi 0, %s25
    %s45 = sphi 0, %s45
    %s47 = sphi 0, %s45
    %s48 = sphi 0, %s47
    %s62 = sphi 0, %s48
    %s66 = sphi 0, %s66
    %s68 = sphi 0, %s66
    %s69 = sphi 0, %s68
    %s83 = sphi 0, %s69
    %s89 = sphi 0, %s91
    %s92 = sphi 0, %s89
    %s93 = sphi 0, %s92
    %s109 = sphi 0, %s93
    %s115 = sphi 0, %s117
    %s118 = sphi 0, %s115
    %s119 = sphi 0, %s118
    %s135 = sphi 0, %s119
  $region4: #{block21d_forward.5} parent=0 // loop_header_branch
    %14 = sbr.rel (%p12) target = $region8
  $region5: #{block21d_forward.5} parent=0 // loop_body
    %s16 = ssub.s32 %s11, 1
    %s17 = ssub.s32 %s11, 2
    %s18 = sadd.s32 %s11, 1
    %s19 = ssub.s32 %s11, %s18
    %p20 = scmp.eq.s32.totalorder %s19, 0
    %s22 = sadd.s32 %s21, 1
    %s23 = scalar_select %p20, %s21, %s22
    %p26 = pneg %p20
    %p27 = scmp.eq.s32.totalorder %s11, 1
    %p28 = por %p26, %p27
    %p29 = scmp.ne.s32.totalorder %s21, %s24
    %p30 = scmp.eq.s32.totalorder %s11, 0
    %p31 = por %p29, %p30
    %p32 = scmp.ne.s32.totalorder %s21, %s24
    %p33 = scmp.eq.s32.totalorder %s16, 1
    %p34 = por %p32, %p33
    %p35 = scmp.ne.s32.totalorder %s24, %s25
    %p36 = scmp.eq.s32.totalorder %s16, 0
    %p37 = por %p35, %p36
    %p38 = scmp.ne.s32.totalorder %s24, %s25
    %p39 = scmp.eq.s32.totalorder %s17, 1
    %p40 = por %p38, %p39
    %p42 = scmp.ne.s32.totalorder %s25, %s41
    %p43 = scmp.eq.s32.totalorder %s17, 0
    %p44 = por %p42, %p43
    %s46 = sadd.s32 %s45, 1
    %p49 = scmp.eq.s32.totalorder %s11, 1
    %p50 = scmp.ne.s32.totalorder %s45, %s47
    %p51 = scmp.eq.s32.totalorder %s11, 0
    %p52 = por %p50, %p51
    %p53 = scmp.ne.s32.totalorder %s45, %s47
    %p54 = scmp.eq.s32.totalorder %s16, 1
    %p55 = por %p53, %p54
    %p56 = scmp.ne.s32.totalorder %s47, %s48
    %p57 = scmp.eq.s32.totalorder %s16, 0
    %p58 = por %p56, %p57
    %p59 = scmp.ne.s32.totalorder %s47, %s48
    %p60 = scmp.eq.s32.totalorder %s17, 1
    %p61 = por %p59, %p60
    %p63 = scmp.ne.s32.totalorder %s48, %s62
    %p64 = scmp.eq.s32.totalorder %s17, 0
    %p65 = por %p63, %p64
    %s67 = sadd.s32 %s66, 1
    %p70 = scmp.eq.s32.totalorder %s11, 1
    %p71 = scmp.ne.s32.totalorder %s66, %s68
    %p72 = scmp.eq.s32.totalorder %s11, 0
    %p73 = por %p71, %p72
    %p74 = scmp.ne.s32.totalorder %s66, %s68
    %p75 = scmp.eq.s32.totalorder %s16, 1
    %p76 = por %p74, %p75
    %p77 = scmp.ne.s32.totalorder %s68, %s69
    %p78 = scmp.eq.s32.totalorder %s16, 0
    %p79 = por %p77, %p78
    %p80 = scmp.ne.s32.totalorder %s68, %s69
    %p81 = scmp.eq.s32.totalorder %s17, 1
    %p82 = por %p80, %p81
    %p84 = scmp.ne.s32.totalorder %s69, %s83
    %p85 = scmp.eq.s32.totalorder %s17, 0
    %p86 = por %p84, %p85
    %s87 = ssub.s32 %s11, %s18
    %p88 = scmp.eq.s32.totalorder %s87, 0
    %s90 = sadd.s32 %s89, 1
    %s91 = scalar_select %p88, %s89, %s90
    %p94 = pneg %p88
    %p95 = scmp.eq.s32.totalorder %s11, 1
    %p96 = por %p94, %p95
    %p97 = scmp.ne.s32.totalorder %s89, %s92
    %p98 = scmp.eq.s32.totalorder %s11, 0
    %p99 = por %p97, %p98
    %p100 = scmp.ne.s32.totalorder %s89, %s92
    %p101 = scmp.eq.s32.totalorder %s16, 1
    %p102 = por %p100, %p101
    %p103 = scmp.ne.s32.totalorder %s92, %s93
    %p104 = scmp.eq.s32.totalorder %s16, 0
    %p105 = por %p103, %p104
    %p106 = scmp.ne.s32.totalorder %s92, %s93
    %p107 = scmp.eq.s32.totalorder %s17, 1
    %p108 = por %p106, %p107
    %p110 = scmp.ne.s32.totalorder %s93, %s109
    %p111 = scmp.eq.s32.totalorder %s17, 0
    %p112 = por %p110, %p111
    %s113 = ssub.s32 %s11, %s18
    %p114 = scmp.eq.s32.totalorder %s113, 0
    %s116 = sadd.s32 %s115, 1
    %s117 = scalar_select %p114, %s115, %s116
    %p120 = pneg %p114
    %p121 = scmp.eq.s32.totalorder %s11, 1
    %p122 = por %p120, %p121
    %p123 = scmp.ne.s32.totalorder %s115, %s118
    %p124 = scmp.eq.s32.totalorder %s11, 0
    %p125 = por %p123, %p124
    %p126 = scmp.ne.s32.totalorder %s115, %s118
    %p127 = scmp.eq.s32.totalorder %s16, 1
    %p128 = por %p126, %p127
    %p129 = scmp.ne.s32.totalorder %s118, %s119
    %p130 = scmp.eq.s32.totalorder %s16, 0
    %p131 = por %p129, %p130
    %p132 = scmp.ne.s32.totalorder %s118, %s119
    %p133 = scmp.eq.s32.totalorder %s17, 1
    %p134 = por %p132, %p133
    %p136 = scmp.ne.s32.totalorder %s119, %s135
    %p137 = scmp.eq.s32.totalorder %s17, 0
    %p138 = por %p136, %p137
    %p139 = scmp.le.s32.totalorder 1, %s11
    %p140 = scmp.lt.s32.totalorder %s11, 3
    %p141 = pnand %p139, %p140
    %p142 = pneg %p141
    // Predicated region
    $region9: #{block21d_forward.5} parent=5 // pred_check
      _
    $region10: #{block21d_forward.5} parent=5 // pred_check_branch
      %144 = sbr.rel (%p141) target = $region12
    $region11: #{block21d_forward.5} parent=5 // pred_region
      %s145 = ssub.s32 %s11, 1
      // Predicated region
      $region13: #{block21d_forward.5} parent=11 // pred_check
        %p146 = pneg %p58
      $region14: #{block21d_forward.5} parent=11 // pred_check_branch
        %148 = sbr.rel (%p146) target = $region16
      $region15: #{block21d_forward.5} parent=11 // pred_region
        _
      $region16: #{block21d_forward.5} parent=11 // pred_fallthru
        _
      // Predicated region
      $region17: #{block21d_forward.5} parent=11 // pred_check
        %p149 = pneg %p79
      $region18: #{block21d_forward.5} parent=11 // pred_check_branch
        %151 = sbr.rel (%p149) target = $region20
      $region19: #{block21d_forward.5} parent=11 // pred_region
        _
      $region20: #{block21d_forward.5} parent=11 // pred_fallthru
        _
    $region12: #{block21d_forward.5} parent=5 // pred_fallthru
      _
    %p152 = scmp.lt.s32.totalorder %s11, 2
    // Predicated region
    $region21: #{block21d_forward.5} parent=5 // pred_check
      %p153 = pneg %p152
    $region22: #{block21d_forward.5} parent=5 // pred_check_branch
      %155 = sbr.rel (%p153) target = $region24
    $region23: #{block21d_forward.5} parent=5 // pred_region
      // Predicated region
      $region25: #{block21d_forward.5} parent=23 // pred_check
        %p156 = pneg %p31
      $region26: #{block21d_forward.5} parent=23 // pred_check_branch
        %158 = sbr.rel (%p156) target = $region28
      $region27: #{block21d_forward.5} parent=23 // pred_region
        %s159 = smul.u32 4, %s11
        %p160 = scmp.lt.s32.totalorder %s159, 7
        %s161 = scalar_select %p160, %s159, 7
        %s162 = smul.addr %s161, 8
        %s163 = smul.addr %s162, 8
        %s164 = scalar_lea.vmem %s0, %s163
        %s165 = smul.u32 4, %s11
      $region28: #{block21d_forward.5} parent=23 // pred_fallthru
        _
    $region24: #{block21d_forward.5} parent=5 // pred_fallthru
      _
    %p166 = scmp.le.s32.totalorder 1, %s11
    %p167 = scmp.lt.s32.totalorder %s11, 3
    %p168 = pnand %p166, %p167
    %p169 = pneg %p168
    // Predicated region
    $region29: #{block21d_forward.5} parent=5 // pred_check
      _
    $region30: #{block21d_forward.5} parent=5 // pred_check_branch
      %171 = sbr.rel (%p168) target = $region32
    $region31: #{block21d_forward.5} parent=5 // pred_region
      %s172 = ssub.s32 %s11, 1
      %s173 = smul.u32 4, %s16
      %p174 = scmp.lt.s32.totalorder %s173, 7
      %s175 = scalar_select %p174, %s173, 7
      %s176 = smul.addr %s175, 8
      %s177 = smul.addr %s176, 8
      %s178 = scalar_lea.vmem %s0, %s177
      %p179 = pneg %p37
      %p180 = pneg %p34
      %p181 = pneg %p58
      %p182 = pneg %p55
      %p183 = pneg %p79
      %p184 = pneg %p76
      %p185 = pneg %p105
      %p186 = pneg %p102
      %s187 = smul.u32 32, %s16
      %p188 = scmp.lt.s32.totalorder %s187, 63
      %s189 = scalar_select %p188, %s187, 63
      %s190 = smul.addr %s189, 8
      %s191 = scalar_lea.vmem %s3, %s190
      %p192 = pneg %p131
      %p193 = pneg %p128
      %p194 = scmp.lt.s32.totalorder %s16, 1
      %s195 = scalar_select %p194, %s16, 1
      %s196 = smul.addr %s195, 2
      %s197 = scalar_lea.vmem %s4, %s196
      %s198 = smul.u32 4, %s16
      %p199 = scmp.lt.s32.totalorder %s198, 7
      %s200 = scalar_select %p199, %s198, 7
      %s201 = smul.addr %s200, 8
      %s202 = smul.addr %s201, 8
      %s203 = scalar_lea.vmem %s0, %s202
      %s204 = smul.u32 4, %s16
      %s205 = smul.u32 32, %s16
      %p206 = scmp.lt.s32.totalorder %s205, 63
      %s207 = scalar_select %p206, %s205, 63
      %s208 = smul.addr %s207, 8
      %s209 = scalar_lea.vmem %s3, %s208
      %s210 = smul.u32 32, %s16
      %p211 = scmp.lt.s32.totalorder %s16, 1
      %s212 = scalar_select %p211, %s16, 1
      %s213 = smul.addr %s212, 2
      %s214 = scalar_lea.vmem %s4, %s213
      %v215 = vld [vmem:[%s203] sm:$0xff]
      %v216 = vld [vmem:[%s203 + $0x8] sm:$0xff]
      %v217 = vld [vmem:[%s203 + $0x10] sm:$0xff]
      %v218 = vld [vmem:[%s203 + $0x18] sm:$0xff]
      %v219 = vld [vmem:[%s203 + $0x20] sm:$0xff]
      %v220 = vld [vmem:[%s203 + $0x28] sm:$0xff]
      %v221 = vld [vmem:[%s203 + $0x30] sm:$0xff]
      %v222 = vld [vmem:[%s203 + $0x38] sm:$0xff]
      %v223 = vld [vmem:[%s203 + $0x40] sm:$0xff]
      %v224 = vld [vmem:[%s203 + $0x48] sm:$0xff]
      %v225 = vld [vmem:[%s203 + $0x50] sm:$0xff]
      %v226 = vld [vmem:[%s203 + $0x58] sm:$0xff]
      %v227 = vld [vmem:[%s203 + $0x60] sm:$0xff]
      %v228 = vld [vmem:[%s203 + $0x68] sm:$0xff]
      %v229 = vld [vmem:[%s203 + $0x70] sm:$0xff]
      %v230 = vld [vmem:[%s203 + $0x78] sm:$0xff]
      %v231 = vld [vmem:[%s203 + $0x80] sm:$0xff]
      %v232 = vld [vmem:[%s203 + $0x88] sm:$0xff]
      %v233 = vld [vmem:[%s203 + $0x90] sm:$0xff]
      %v234 = vld [vmem:[%s203 + $0x98] sm:$0xff]
      %v235 = vld [vmem:[%s203 + $0xa0] sm:$0xff]
      %v236 = vld [vmem:[%s203 + $0xa8] sm:$0xff]
      %v237 = vld [vmem:[%s203 + $0xb0] sm:$0xff]
      %v238 = vld [vmem:[%s203 + $0xb8] sm:$0xff]
      %v239 = vld [vmem:[%s203 + $0xc0] sm:$0xff]
      %v240 = vld [vmem:[%s203 + $0xc8] sm:$0xff]
      %v241 = vld [vmem:[%s203 + $0xd0] sm:$0xff]
      %v242 = vld [vmem:[%s203 + $0xd8] sm:$0xff]
      %v243 = vld [vmem:[%s203 + $0xe0] sm:$0xff]
      %v244 = vld [vmem:[%s203 + $0xe8] sm:$0xff]
      %v245 = vld [vmem:[%s203 + $0xf0] sm:$0xff]
      %v246 = vld [vmem:[%s203 + $0xf8] sm:$0xff]
      %247 = vst [vmem:[#allocation2] sm:$0xff] 0.0
      %248 = vst [vmem:[#allocation2 + $0x8] sm:$0x3] 0.0
      %249 = vst [vmem:[#allocation2 + $0xa0] sm:$0xff] 0.0
      %250 = vst [vmem:[#allocation2 + $0xa8] sm:$0x3] 0.0
      %251 = vst [vmem:[#allocation2 + $0x140] sm:$0xff] 0.0
      %252 = vst [vmem:[#allocation2 + $0x148] sm:$0x3] 0.0
      %253 = vst [vmem:[#allocation2 + $0x1e0] sm:$0xff] 0.0
      %254 = vst [vmem:[#allocation2 + $0x1e8] sm:$0x3] 0.0
      %s255 = scalar_lea.vmem [#allocation2], 144
      %256 = vst [vmem:[%s255] sm:$0xff] 0.0
      %257 = vst [vmem:[%s255 + $0x8] sm:$0x3] 0.0
      %258 = vst [vmem:[%s255 + $0xa0] sm:$0xff] 0.0
      %259 = vst [vmem:[%s255 + $0xa8] sm:$0x3] 0.0
      %260 = vst [vmem:[%s255 + $0x140] sm:$0xff] 0.0
      %261 = vst [vmem:[%s255 + $0x148] sm:$0x3] 0.0
      %262 = vst [vmem:[%s255 + $0x1e0] sm:$0xff] 0.0
      %263 = vst [vmem:[%s255 + $0x1e8] sm:$0x3] 0.0
      %s264 = scalar_lea.vmem [#allocation2], 16
      %265 = vst [vmem:[%s264] sm:$0x1] 0.0
      %266 = vst [vmem:[%s264 + $0x10] sm:$0x1] 0.0
      %267 = vst [vmem:[%s264 + $0x20] sm:$0x1] 0.0
      %268 = vst [vmem:[%s264 + $0x30] sm:$0x1] 0.0
      %269 = vst [vmem:[%s264 + $0x40] sm:$0x1] 0.0
      %270 = vst [vmem:[%s264 + $0x50] sm:$0x1] 0.0
      %271 = vst [vmem:[%s264 + $0x60] sm:$0x1] 0.0
      %272 = vst [vmem:[%s264 + $0x70] sm:$0x1] 0.0
      %273 = vst [vmem:[%s264 + $0xa0] sm:$0x1] 0.0
      %274 = vst [vmem:[%s264 + $0xb0] sm:$0x1] 0.0
      %275 = vst [vmem:[%s264 + $0xc0] sm:$0x1] 0.0
      %276 = vst [vmem:[%s264 + $0xd0] sm:$0x1] 0.0
      %277 = vst [vmem:[%s264 + $0xe0] sm:$0x1] 0.0
      %278 = vst [vmem:[%s264 + $0xf0] sm:$0x1] 0.0
      %279 = vst [vmem:[%s264 + $0x100] sm:$0x1] 0.0
      %280 = vst [vmem:[%s264 + $0x110] sm:$0x1] 0.0
      %281 = vst [vmem:[%s264 + $0x140] sm:$0x1] 0.0
      %282 = vst [vmem:[%s264 + $0x150] sm:$0x1] 0.0
      %283 = vst [vmem:[%s264 + $0x160] sm:$0x1] 0.0
      %284 = vst [vmem:[%s264 + $0x170] sm:$0x1] 0.0
      %285 = vst [vmem:[%s264 + $0x180] sm:$0x1] 0.0
      %286 = vst [vmem:[%s264 + $0x190] sm:$0x1] 0.0
      %287 = vst [vmem:[%s264 + $0x1a0] sm:$0x1] 0.0
      %288 = vst [vmem:[%s264 + $0x1b0] sm:$0x1] 0.0
      %289 = vst [vmem:[%s264 + $0x1e0] sm:$0x1] 0.0
      %290 = vst [vmem:[%s264 + $0x1f0] sm:$0x1] 0.0
      %291 = vst [vmem:[%s264 + $0x200] sm:$0x1] 0.0
      %292 = vst [vmem:[%s264 + $0x210] sm:$0x1] 0.0
      %293 = vst [vmem:[%s264 + $0x220] sm:$0x1] 0.0
      %294 = vst [vmem:[%s264 + $0x230] sm:$0x1] 0.0
      %295 = vst [vmem:[%s264 + $0x240] sm:$0x1] 0.0
      %296 = vst [vmem:[%s264 + $0x250] sm:$0x1] 0.0
      %297 = vst [vmem:[%s264 + $0x9] sm:$0x1] 0.0
      %298 = vst [vmem:[%s264 + $0x19] sm:$0x1] 0.0
      %299 = vst [vmem:[%s264 + $0x29] sm:$0x1] 0.0
      %300 = vst [vmem:[%s264 + $0x39] sm:$0x1] 0.0
      %301 = vst [vmem:[%s264 + $0x49] sm:$0x1] 0.0
      %302 = vst [vmem:[%s264 + $0x59] sm:$0x1] 0.0
      %303 = vst [vmem:[%s264 + $0x69] sm:$0x1] 0.0
      %304 = vst [vmem:[%s264 + $0x79] sm:$0x1] 0.0
      %305 = vst [vmem:[%s264 + $0xa9] sm:$0x1] 0.0
      %306 = vst [vmem:[%s264 + $0xb9] sm:$0x1] 0.0
      %307 = vst [vmem:[%s264 + $0xc9] sm:$0x1] 0.0
      %308 = vst [vmem:[%s264 + $0xd9] sm:$0x1] 0.0
      %309 = vst [vmem:[%s264 + $0xe9] sm:$0x1] 0.0
      %310 = vst [vmem:[%s264 + $0xf9] sm:$0x1] 0.0
      %311 = vst [vmem:[%s264 + $0x109] sm:$0x1] 0.0
      %312 = vst [vmem:[%s264 + $0x119] sm:$0x1] 0.0
      %313 = vst [vmem:[%s264 + $0x149] sm:$0x1] 0.0
      %314 = vst [vmem:[%s264 + $0x159] sm:$0x1] 0.0
      %315 = vst [vmem:[%s264 + $0x169] sm:$0x1] 0.0
      %316 = vst [vmem:[%s264 + $0x179] sm:$0x1] 0.0
      %317 = vst [vmem:[%s264 + $0x189] sm:$0x1] 0.0
      %318 = vst [vmem:[%s264 + $0x199] sm:$0x1] 0.0
      %319 = vst [vmem:[%s264 + $0x1a9] sm:$0x1] 0.0
      %320 = vst [vmem:[%s264 + $0x1b9] sm:$0x1] 0.0
      %321 = vst [vmem:[%s264 + $0x1e9] sm:$0x1] 0.0
      %322 = vst [vmem:[%s264 + $0x1f9] sm:$0x1] 0.0
      %323 = vst [vmem:[%s264 + $0x209] sm:$0x1] 0.0
      %324 = vst [vmem:[%s264 + $0x219] sm:$0x1] 0.0
      %325 = vst [vmem:[%s264 + $0x229] sm:$0x1] 0.0
      %326 = vst [vmem:[%s264 + $0x239] sm:$0x1] 0.0
      %327 = vst [vmem:[%s264 + $0x249] sm:$0x1] 0.0
      %328 = vst [vmem:[%s264 + $0x259] sm:$0x1] 0.0
      %329 = vst [vmem:[%s264 + $0x1] sm:$0xff] %v215
      %330 = vst [vmem:[%s264 + $0x11] sm:$0xff] %v216
      %331 = vst [vmem:[%s264 + $0x21] sm:$0xff] %v217
      %332 = vst [vmem:[%s264 + $0x31] sm:$0xff] %v218
      %333 = vst [vmem:[%s264 + $0x41] sm:$0xff] %v219
      %334 = vst [vmem:[%s264 + $0x51] sm:$0xff] %v220
      %335 = vst [vmem:[%s264 + $0x61] sm:$0xff] %v221
      %336 = vst [vmem:[%s264 + $0x71] sm:$0xff] %v222
      %337 = vst [vmem:[%s264 + $0xa1] sm:$0xff] %v223
      %338 = vst [vmem:[%s264 + $0xb1] sm:$0xff] %v224
      %339 = vst [vmem:[%s264 + $0xc1] sm:$0xff] %v225
      %340 = vst [vmem:[%s264 + $0xd1] sm:$0xff] %v226
      %341 = vst [vmem:[%s264 + $0xe1] sm:$0xff] %v227
      %342 = vst [vmem:[%s264 + $0xf1] sm:$0xff] %v228
      %343 = vst [vmem:[%s264 + $0x101] sm:$0xff] %v229
      %344 = vst [vmem:[%s264 + $0x111] sm:$0xff] %v230
      %345 = vst [vmem:[%s264 + $0x141] sm:$0xff] %v231
      %346 = vst [vmem:[%s264 + $0x151] sm:$0xff] %v232
      %347 = vst [vmem:[%s264 + $0x161] sm:$0xff] %v233
      %348 = vst [vmem:[%s264 + $0x171] sm:$0xff] %v234
      %349 = vst [vmem:[%s264 + $0x181] sm:$0xff] %v235
      %350 = vst [vmem:[%s264 + $0x191] sm:$0xff] %v236
      %351 = vst [vmem:[%s264 + $0x1a1] sm:$0xff] %v237
      %352 = vst [vmem:[%s264 + $0x1b1] sm:$0xff] %v238
      %353 = vst [vmem:[%s264 + $0x1e1] sm:$0xff] %v239
      %354 = vst [vmem:[%s264 + $0x1f1] sm:$0xff] %v240
      %355 = vst [vmem:[%s264 + $0x201] sm:$0xff] %v241
      %356 = vst [vmem:[%s264 + $0x211] sm:$0xff] %v242
      %357 = vst [vmem:[%s264 + $0x221] sm:$0xff] %v243
      %358 = vst [vmem:[%s264 + $0x231] sm:$0xff] %v244
      %359 = vst [vmem:[%s264 + $0x241] sm:$0xff] %v245
      %360 = vst [vmem:[%s264 + $0x251] sm:$0xff] %v246
      %v361 = vld [vmem:[#allocation2] sm:$0xff]
      %v362 = vld [vmem:[#allocation2 + $0x10] sm:$0xff]
      %v363 = vld [vmem:[#allocation2 + $0x20] sm:$0xff]
      %v364 = vld [vmem:[#allocation2 + $0x30] sm:$0xff]
      %v365 = vld [vmem:[#allocation2 + $0x40] sm:$0xff]
      %v366 = vld [vmem:[#allocation2 + $0x50] sm:$0xff]
      %v367 = vld [vmem:[#allocation2 + $0x60] sm:$0xff]
      %v368 = vld [vmem:[#allocation2 + $0x70] sm:$0xff]
      %v369 = vld [vmem:[#allocation2 + $0xa0] sm:$0xff]
      %v370 = vld [vmem:[#allocation2 + $0xb0] sm:$0xff]
      %v371 = vld [vmem:[#allocation2 + $0xc0] sm:$0xff]
      %v372 = vld [vmem:[#allocation2 + $0xd0] sm:$0xff]
      %v373 = vld [vmem:[#allocation2 + $0xe0] sm:$0xff]
      %v374 = vld [vmem:[#allocation2 + $0xf0] sm:$0xff]
      %v375 = vld [vmem:[#allocation2 + $0x100] sm:$0xff]
      %v376 = vld [vmem:[#allocation2 + $0x110] sm:$0xff]
      %v377 = vld [vmem:[#allocation2 + $0x140] sm:$0xff]
      %v378 = vld [vmem:[#allocation2 + $0x150] sm:$0xff]
      %v379 = vld [vmem:[#allocation2 + $0x160] sm:$0xff]
      %v380 = vld [vmem:[#allocation2 + $0x170] sm:$0xff]
      %v381 = vld [vmem:[#allocation2 + $0x180] sm:$0xff]
      %v382 = vld [vmem:[#allocation2 + $0x190] sm:$0xff]
      %v383 = vld [vmem:[#allocation2 + $0x1a0] sm:$0xff]
      %v384 = vld [vmem:[#allocation2 + $0x1b0] sm:$0xff]
      %v385 = vld [vmem:[#allocation2 + $0x1e0] sm:$0xff]
      %v386 = vld [vmem:[#allocation2 + $0x1f0] sm:$0xff]
      %v387 = vld [vmem:[#allocation2 + $0x200] sm:$0xff]
      %v388 = vld [vmem:[#allocation2 + $0x210] sm:$0xff]
      %v389 = vld [vmem:[#allocation2 + $0x220] sm:$0xff]
      %v390 = vld [vmem:[#allocation2 + $0x230] sm:$0xff]
      %v391 = vld [vmem:[#allocation2 + $0x240] sm:$0xff]
      %v392 = vld [vmem:[#allocation2 + $0x250] sm:$0xff]
      %393 = vst [vmem:[#allocation3] sm:$0xff] %v361
      %394 = vst [vmem:[#allocation3 + $0x48] sm:$0xff] %v362
      %395 = vst [vmem:[#allocation3 + $0x90] sm:$0xff] %v363
      %396 = vst [vmem:[#allocation3 + $0xd8] sm:$0xff] %v364
      %397 = vst [vmem:[#allocation3 + $0x120] sm:$0xff] %v365
      %398 = vst [vmem:[#allocation3 + $0x168] sm:$0xff] %v366
      %399 = vst [vmem:[#allocation3 + $0x1b0] sm:$0xff] %v367
      %400 = vst [vmem:[#allocation3 + $0x1f8] sm:$0xff] %v368
      %401 = vst [vmem:[#allocation3 + $0x240] sm:$0xff] %v369
      %402 = vst [vmem:[#allocation3 + $0x288] sm:$0xff] %v370
      %403 = vst [vmem:[#allocation3 + $0x2d0] sm:$0xff] %v371
      %404 = vst [vmem:[#allocation3 + $0x318] sm:$0xff] %v372
      %405 = vst [vmem:[#allocation3 + $0x360] sm:$0xff] %v373
      %406 = vst [vmem:[#allocation3 + $0x3a8] sm:$0xff] %v374
      %407 = vst [vmem:[#allocation3 + $0x3f0] sm:$0xff] %v375
      %408 = vst [vmem:[#allocation3 + $0x438] sm:$0xff] %v376
      %409 = vst [vmem:[#allocation3 + $0x480] sm:$0xff] %v377
      %410 = vst [vmem:[#allocation3 + $0x4c8] sm:$0xff] %v378
      %411 = vst [vmem:[#allocation3 + $0x510] sm:$0xff] %v379
      %412 = vst [vmem:[#allocation3 + $0x558] sm:$0xff] %v380
      %413 = vst [vmem:[#allocation3 + $0x5a0] sm:$0xff] %v381
      %414 = vst [vmem:[#allocation3 + $0x5e8] sm:$0xff] %v382
      %415 = vst [vmem:[#allocation3 + $0x630] sm:$0xff] %v383
      %416 = vst [vmem:[#allocation3 + $0x678] sm:$0xff] %v384
      %417 = vst [vmem:[#allocation3 + $0x6c0] sm:$0xff] %v385
      %418 = vst [vmem:[#allocation3 + $0x708] sm:$0xff] %v386
      %419 = vst [vmem:[#allocation3 + $0x750] sm:$0xff] %v387
      %420 = vst [vmem:[#allocation3 + $0x798] sm:$0xff] %v388
      %421 = vst [vmem:[#allocation3 + $0x7e0] sm:$0xff] %v389
      %422 = vst [vmem:[#allocation3 + $0x828] sm:$0xff] %v390
      %423 = vst [vmem:[#allocation3 + $0x870] sm:$0xff] %v391
      %424 = vst [vmem:[#allocation3 + $0x8b8] sm:$0xff] %v392
      %v425 = vld [vmem:[#allocation2 + $0x1] sm:$0xff]
      %v426 = vld [vmem:[#allocation2 + $0x11] sm:$0xff]
      %v427 = vld [vmem:[#allocation2 + $0x21] sm:$0xff]
      %v428 = vld [vmem:[#allocation2 + $0x31] sm:$0xff]
      %v429 = vld [vmem:[#allocation2 + $0x41] sm:$0xff]
      %v430 = vld [vmem:[#allocation2 + $0x51] sm:$0xff]
      %v431 = vld [vmem:[#allocation2 + $0x61] sm:$0xff]
      %v432 = vld [vmem:[#allocation2 + $0x71] sm:$0xff]
      %v433 = vld [vmem:[#allocation2 + $0xa1] sm:$0xff]
      %v434 = vld [vmem:[#allocation2 + $0xb1] sm:$0xff]
      %v435 = vld [vmem:[#allocation2 + $0xc1] sm:$0xff]
      %v436 = vld [vmem:[#allocation2 + $0xd1] sm:$0xff]
      %v437 = vld [vmem:[#allocation2 + $0xe1] sm:$0xff]
      %v438 = vld [vmem:[#allocation2 + $0xf1] sm:$0xff]
      %v439 = vld [vmem:[#allocation2 + $0x101] sm:$0xff]
      %v440 = vld [vmem:[#allocation2 + $0x111] sm:$0xff]
      %v441 = vld [vmem:[#allocation2 + $0x141] sm:$0xff]
      %v442 = vld [vmem:[#allocation2 + $0x151] sm:$0xff]
      %v443 = vld [vmem:[#allocation2 + $0x161] sm:$0xff]
      %v444 = vld [vmem:[#allocation2 + $0x171] sm:$0xff]
      %v445 = vld [vmem:[#allocation2 + $0x181] sm:$0xff]
      %v446 = vld [vmem:[#allocation2 + $0x191] sm:$0xff]
      %v447 = vld [vmem:[#allocation2 + $0x1a1] sm:$0xff]
      %v448 = vld [vmem:[#allocation2 + $0x1b1] sm:$0xff]
      %v449 = vld [vmem:[#allocation2 + $0x1e1] sm:$0xff]
      %v450 = vld [vmem:[#allocation2 + $0x1f1] sm:$0xff]
      %v451 = vld [vmem:[#allocation2 + $0x201] sm:$0xff]
      %v452 = vld [vmem:[#allocation2 + $0x211] sm:$0xff]
      %v453 = vld [vmem:[#allocation2 + $0x221] sm:$0xff]
      %v454 = vld [vmem:[#allocation2 + $0x231] sm:$0xff]
      %v455 = vld [vmem:[#allocation2 + $0x241] sm:$0xff]
      %v456 = vld [vmem:[#allocation2 + $0x251] sm:$0xff]
      %457 = vst [vmem:[#allocation3 + $0x8] sm:$0xff] %v425
      %458 = vst [vmem:[#allocation3 + $0x50] sm:$0xff] %v426
      %459 = vst [vmem:[#allocation3 + $0x98] sm:$0xff] %v427
      %460 = vst [vmem:[#allocation3 + $0xe0] sm:$0xff] %v428
      %461 = vst [vmem:[#allocation3 + $0x128] sm:$0xff] %v429
      %462 = vst [vmem:[#allocation3 + $0x170] sm:$0xff] %v430
      %463 = vst [vmem:[#allocation3 + $0x1b8] sm:$0xff] %v431
      %464 = vst [vmem:[#allocation3 + $0x200] sm:$0xff] %v432
      %465 = vst [vmem:[#allocation3 + $0x248] sm:$0xff] %v433
      %466 = vst [vmem:[#allocation3 + $0x290] sm:$0xff] %v434
      %467 = vst [vmem:[#allocation3 + $0x2d8] sm:$0xff] %v435
      %468 = vst [vmem:[#allocation3 + $0x320] sm:$0xff] %v436
      %469 = vst [vmem:[#allocation3 + $0x368] sm:$0xff] %v437
      %470 = vst [vmem:[#allocation3 + $0x3b0] sm:$0xff] %v438
      %471 = vst [vmem:[#allocation3 + $0x3f8] sm:$0xff] %v439
      %472 = vst [vmem:[#allocation3 + $0x440] sm:$0xff] %v440
      %473 = vst [vmem:[#allocation3 + $0x488] sm:$0xff] %v441
      %474 = vst [vmem:[#allocation3 + $0x4d0] sm:$0xff] %v442
      %475 = vst [vmem:[#allocation3 + $0x518] sm:$0xff] %v443
      %476 = vst [vmem:[#allocation3 + $0x560] sm:$0xff] %v444
      %477 = vst [vmem:[#allocation3 + $0x5a8] sm:$0xff] %v445
      %478 = vst [vmem:[#allocation3 + $0x5f0] sm:$0xff] %v446
      %479 = vst [vmem:[#allocation3 + $0x638] sm:$0xff] %v447
      %480 = vst [vmem:[#allocation3 + $0x680] sm:$0xff] %v448
      %481 = vst [vmem:[#allocation3 + $0x6c8] sm:$0xff] %v449
      %482 = vst [vmem:[#allocation3 + $0x710] sm:$0xff] %v450
      %483 = vst [vmem:[#allocation3 + $0x758] sm:$0xff] %v451
      %484 = vst [vmem:[#allocation3 + $0x7a0] sm:$0xff] %v452
      %485 = vst [vmem:[#allocation3 + $0x7e8] sm:$0xff] %v453
      %486 = vst [vmem:[#allocation3 + $0x830] sm:$0xff] %v454
      %487 = vst [vmem:[#allocation3 + $0x878] sm:$0xff] %v455
      %488 = vst [vmem:[#allocation3 + $0x8c0] sm:$0xff] %v456
      %v489 = vld [vmem:[#allocation2 + $0x2] sm:$0xff]
      %v490 = vld [vmem:[#allocation2 + $0x12] sm:$0xff]
      %v491 = vld [vmem:[#allocation2 + $0x22] sm:$0xff]
      %v492 = vld [vmem:[#allocation2 + $0x32] sm:$0xff]
      %v493 = vld [vmem:[#allocation2 + $0x42] sm:$0xff]
      %v494 = vld [vmem:[#allocation2 + $0x52] sm:$0xff]
      %v495 = vld [vmem:[#allocation2 + $0x62] sm:$0xff]
      %v496 = vld [vmem:[#allocation2 + $0x72] sm:$0xff]
      %v497 = vld [vmem:[#allocation2 + $0xa2] sm:$0xff]
      %v498 = vld [vmem:[#allocation2 + $0xb2] sm:$0xff]
      %v499 = vld [vmem:[#allocation2 + $0xc2] sm:$0xff]
      %v500 = vld [vmem:[#allocation2 + $0xd2] sm:$0xff]
      %v501 = vld [vmem:[#allocation2 + $0xe2] sm:$0xff]
      %v502 = vld [vmem:[#allocation2 + $0xf2] sm:$0xff]
      %v503 = vld [vmem:[#allocation2 + $0x102] sm:$0xff]
      %v504 = vld [vmem:[#allocation2 + $0x112] sm:$0xff]
      %v505 = vld [vmem:[#allocation2 + $0x142] sm:$0xff]
      %v506 = vld [vmem:[#allocation2 + $0x152] sm:$0xff]
      %v507 = vld [vmem:[#allocation2 + $0x162] sm:$0xff]
      %v508 = vld [vmem:[#allocation2 + $0x172] sm:$0xff]
      %v509 = vld [vmem:[#allocation2 + $0x182] sm:$0xff]
      %v510 = vld [vmem:[#allocation2 + $0x192] sm:$0xff]
      %v511 = vld [vmem:[#allocation2 + $0x1a2] sm:$0xff]
      %v512 = vld [vmem:[#allocation2 + $0x1b2] sm:$0xff]
      %v513 = vld [vmem:[#allocation2 + $0x1e2] sm:$0xff]
      %v514 = vld [vmem:[#allocation2 + $0x1f2] sm:$0xff]
      %v515 = vld [vmem:[#allocation2 + $0x202] sm:$0xff]
      %v516 = vld [vmem:[#allocation2 + $0x212] sm:$0xff]
      %v517 = vld [vmem:[#allocation2 + $0x222] sm:$0xff]
      %v518 = vld [vmem:[#allocation2 + $0x232] sm:$0xff]
      %v519 = vld [vmem:[#allocation2 + $0x242] sm:$0xff]
      %v520 = vld [vmem:[#allocation2 + $0x252] sm:$0xff]
      %521 = vst [vmem:[#allocation3 + $0x10] sm:$0xff] %v489
      %522 = vst [vmem:[#allocation3 + $0x58] sm:$0xff] %v490
      %523 = vst [vmem:[#allocation3 + $0xa0] sm:$0xff] %v491
      %524 = vst [vmem:[#allocation3 + $0xe8] sm:$0xff] %v492
      %525 = vst [vmem:[#allocation3 + $0x130] sm:$0xff] %v493
      %526 = vst [vmem:[#allocation3 + $0x178] sm:$0xff] %v494
      %527 = vst [vmem:[#allocation3 + $0x1c0] sm:$0xff] %v495
      %528 = vst [vmem:[#allocation3 + $0x208] sm:$0xff] %v496
      %529 = vst [vmem:[#allocation3 + $0x250] sm:$0xff] %v497
      %530 = vst [vmem:[#allocation3 + $0x298] sm:$0xff] %v498
      %531 = vst [vmem:[#allocation3 + $0x2e0] sm:$0xff] %v499
      %532 = vst [vmem:[#allocation3 + $0x328] sm:$0xff] %v500
      %533 = vst [vmem:[#allocation3 + $0x370] sm:$0xff] %v501
      %534 = vst [vmem:[#allocation3 + $0x3b8] sm:$0xff] %v502
      %535 = vst [vmem:[#allocation3 + $0x400] sm:$0xff] %v503
      %536 = vst [vmem:[#allocation3 + $0x448] sm:$0xff] %v504
      %537 = vst [vmem:[#allocation3 + $0x490] sm:$0xff] %v505
      %538 = vst [vmem:[#allocation3 + $0x4d8] sm:$0xff] %v506
      %539 = vst [vmem:[#allocation3 + $0x520] sm:$0xff] %v507
      %540 = vst [vmem:[#allocation3 + $0x568] sm:$0xff] %v508
      %541 = vst [vmem:[#allocation3 + $0x5b0] sm:$0xff] %v509
      %542 = vst [vmem:[#allocation3 + $0x5f8] sm:$0xff] %v510
      %543 = vst [vmem:[#allocation3 + $0x640] sm:$0xff] %v511
      %544 = vst [vmem:[#allocation3 + $0x688] sm:$0xff] %v512
      %545 = vst [vmem:[#allocation3 + $0x6d0] sm:$0xff] %v513
      %546 = vst [vmem:[#allocation3 + $0x718] sm:$0xff] %v514
      %547 = vst [vmem:[#allocation3 + $0x760] sm:$0xff] %v515
      %548 = vst [vmem:[#allocation3 + $0x7a8] sm:$0xff] %v516
      %549 = vst [vmem:[#allocation3 + $0x7f0] sm:$0xff] %v517
      %550 = vst [vmem:[#allocation3 + $0x838] sm:$0xff] %v518
      %551 = vst [vmem:[#allocation3 + $0x880] sm:$0xff] %v519
      %552 = vst [vmem:[#allocation3 + $0x8c8] sm:$0xff] %v520
      %v553 = vld [vmem:[%s264] sm:$0xff]
      %v554 = vld [vmem:[%s264 + $0x10] sm:$0xff]
      %v555 = vld [vmem:[%s264 + $0x20] sm:$0xff]
      %v556 = vld [vmem:[%s264 + $0x30] sm:$0xff]
      %v557 = vld [vmem:[%s264 + $0x40] sm:$0xff]
      %v558 = vld [vmem:[%s264 + $0x50] sm:$0xff]
      %v559 = vld [vmem:[%s264 + $0x60] sm:$0xff]
      %v560 = vld [vmem:[%s264 + $0x70] sm:$0xff]
      %v561 = vld [vmem:[%s264 + $0xa0] sm:$0xff]
      %v562 = vld [vmem:[%s264 + $0xb0] sm:$0xff]
      %v563 = vld [vmem:[%s264 + $0xc0] sm:$0xff]
      %v564 = vld [vmem:[%s264 + $0xd0] sm:$0xff]
      %v565 = vld [vmem:[%s264 + $0xe0] sm:$0xff]
      %v566 = vld [vmem:[%s264 + $0xf0] sm:$0xff]
      %v567 = vld [vmem:[%s264 + $0x100] sm:$0xff]
      %v568 = vld [vmem:[%s264 + $0x110] sm:$0xff]
      %v569 = vld [vmem:[%s264 + $0x140] sm:$0xff]
      %v570 = vld [vmem:[%s264 + $0x150] sm:$0xff]
      %v571 = vld [vmem:[%s264 + $0x160] sm:$0xff]
      %v572 = vld [vmem:[%s264 + $0x170] sm:$0xff]
      %v573 = vld [vmem:[%s264 + $0x180] sm:$0xff]
      %v574 = vld [vmem:[%s264 + $0x190] sm:$0xff]
      %v575 = vld [vmem:[%s264 + $0x1a0] sm:$0xff]
      %v576 = vld [vmem:[%s264 + $0x1b0] sm:$0xff]
      %v577 = vld [vmem:[%s264 + $0x1e0] sm:$0xff]
      %v578 = vld [vmem:[%s264 + $0x1f0] sm:$0xff]
      %v579 = vld [vmem:[%s264 + $0x200] sm:$0xff]
      %v580 = vld [vmem:[%s264 + $0x210] sm:$0xff]
      %v581 = vld [vmem:[%s264 + $0x220] sm:$0xff]
      %v582 = vld [vmem:[%s264 + $0x230] sm:$0xff]
      %v583 = vld [vmem:[%s264 + $0x240] sm:$0xff]
      %v584 = vld [vmem:[%s264 + $0x250] sm:$0xff]
      %585 = vst [vmem:[#allocation3 + $0x18] sm:$0xff] %v553
      %586 = vst [vmem:[#allocation3 + $0x60] sm:$0xff] %v554
      %587 = vst [vmem:[#allocation3 + $0xa8] sm:$0xff] %v555
      %588 = vst [vmem:[#allocation3 + $0xf0] sm:$0xff] %v556
      %589 = vst [vmem:[#allocation3 + $0x138] sm:$0xff] %v557
      %590 = vst [vmem:[#allocation3 + $0x180] sm:$0xff] %v558
      %591 = vst [vmem:[#allocation3 + $0x1c8] sm:$0xff] %v559
      %592 = vst [vmem:[#allocation3 + $0x210] sm:$0xff] %v560
      %593 = vst [vmem:[#allocation3 + $0x258] sm:$0xff] %v561
      %594 = vst [vmem:[#allocation3 + $0x2a0] sm:$0xff] %v562
      %595 = vst [vmem:[#allocation3 + $0x2e8] sm:$0xff] %v563
      %596 = vst [vmem:[#allocation3 + $0x330] sm:$0xff] %v564
      %597 = vst [vmem:[#allocation3 + $0x378] sm:$0xff] %v565
      %598 = vst [vmem:[#allocation3 + $0x3c0] sm:$0xff] %v566
      %599 = vst [vmem:[#allocation3 + $0x408] sm:$0xff] %v567
      %600 = vst [vmem:[#allocation3 + $0x450] sm:$0xff] %v568
      %601 = vst [vmem:[#allocation3 + $0x498] sm:$0xff] %v569
      %602 = vst [vmem:[#allocation3 + $0x4e0] sm:$0xff] %v570
      %603 = vst [vmem:[#allocation3 + $0x528] sm:$0xff] %v571
      %604 = vst [vmem:[#allocation3 + $0x570] sm:$0xff] %v572
      %605 = vst [vmem:[#allocation3 + $0x5b8] sm:$0xff] %v573
      %606 = vst [vmem:[#allocation3 + $0x600] sm:$0xff] %v574
      %607 = vst [vmem:[#allocation3 + $0x648] sm:$0xff] %v575
      %608 = vst [vmem:[#allocation3 + $0x690] sm:$0xff] %v576
      %609 = vst [vmem:[#allocation3 + $0x6d8] sm:$0xff] %v577
      %610 = vst [vmem:[#allocation3 + $0x720] sm:$0xff] %v578
      %611 = vst [vmem:[#allocation3 + $0x768] sm:$0xff] %v579
      %612 = vst [vmem:[#allocation3 + $0x7b0] sm:$0xff] %v580
      %613 = vst [vmem:[#allocation3 + $0x7f8] sm:$0xff] %v581
      %614 = vst [vmem:[#allocation3 + $0x840] sm:$0xff] %v582
      %615 = vst [vmem:[#allocation3 + $0x888] sm:$0xff] %v583
      %616 = vst [vmem:[#allocation3 + $0x8d0] sm:$0xff] %v584
      %v617 = vld [vmem:[%s264 + $0x1] sm:$0xff]
      %v618 = vld [vmem:[%s264 + $0x11] sm:$0xff]
      %v619 = vld [vmem:[%s264 + $0x21] sm:$0xff]
      %v620 = vld [vmem:[%s264 + $0x31] sm:$0xff]
      %v621 = vld [vmem:[%s264 + $0x41] sm:$0xff]
      %v622 = vld [vmem:[%s264 + $0x51] sm:$0xff]
      %v623 = vld [vmem:[%s264 + $0x61] sm:$0xff]
      %v624 = vld [vmem:[%s264 + $0x71] sm:$0xff]
      %v625 = vld [vmem:[%s264 + $0xa1] sm:$0xff]
      %v626 = vld [vmem:[%s264 + $0xb1] sm:$0xff]
      %v627 = vld [vmem:[%s264 + $0xc1] sm:$0xff]
      %v628 = vld [vmem:[%s264 + $0xd1] sm:$0xff]
      %v629 = vld [vmem:[%s264 + $0xe1] sm:$0xff]
      %v630 = vld [vmem:[%s264 + $0xf1] sm:$0xff]
      %v631 = vld [vmem:[%s264 + $0x101] sm:$0xff]
      %v632 = vld [vmem:[%s264 + $0x111] sm:$0xff]
      %v633 = vld [vmem:[%s264 + $0x141] sm:$0xff]
      %v634 = vld [vmem:[%s264 + $0x151] sm:$0xff]
      %v635 = vld [vmem:[%s264 + $0x161] sm:$0xff]
      %v636 = vld [vmem:[%s264 + $0x171] sm:$0xff]
      %v637 = vld [vmem:[%s264 + $0x181] sm:$0xff]
      %v638 = vld [vmem:[%s264 + $0x191] sm:$0xff]
      %v639 = vld [vmem:[%s264 + $0x1a1] sm:$0xff]
      %v640 = vld [vmem:[%s264 + $0x1b1] sm:$0xff]
      %v641 = vld [vmem:[%s264 + $0x1e1] sm:$0xff]
      %v642 = vld [vmem:[%s264 + $0x1f1] sm:$0xff]
      %v643 = vld [vmem:[%s264 + $0x201] sm:$0xff]
      %v644 = vld [vmem:[%s264 + $0x211] sm:$0xff]
      %v645 = vld [vmem:[%s264 + $0x221] sm:$0xff]
      %v646 = vld [vmem:[%s264 + $0x231] sm:$0xff]
      %v647 = vld [vmem:[%s264 + $0x241] sm:$0xff]
      %v648 = vld [vmem:[%s264 + $0x251] sm:$0xff]
      %649 = vst [vmem:[#allocation3 + $0x20] sm:$0xff] %v617
      %650 = vst [vmem:[#allocation3 + $0x68] sm:$0xff] %v618
      %651 = vst [vmem:[#allocation3 + $0xb0] sm:$0xff] %v619
      %652 = vst [vmem:[#allocation3 + $0xf8] sm:$0xff] %v620
      %653 = vst [vmem:[#allocation3 + $0x140] sm:$0xff] %v621
      %654 = vst [vmem:[#allocation3 + $0x188] sm:$0xff] %v622
      %655 = vst [vmem:[#allocation3 + $0x1d0] sm:$0xff] %v623
      %656 = vst [vmem:[#allocation3 + $0x218] sm:$0xff] %v624
      %657 = vst [vmem:[#allocation3 + $0x260] sm:$0xff] %v625
      %658 = vst [vmem:[#allocation3 + $0x2a8] sm:$0xff] %v626
      %659 = vst [vmem:[#allocation3 + $0x2f0] sm:$0xff] %v627
      %660 = vst [vmem:[#allocation3 + $0x338] sm:$0xff] %v628
      %661 = vst [vmem:[#allocation3 + $0x380] sm:$0xff] %v629
      %662 = vst [vmem:[#allocation3 + $0x3c8] sm:$0xff] %v630
      %663 = vst [vmem:[#allocation3 + $0x410] sm:$0xff] %v631
      %664 = vst [vmem:[#allocation3 + $0x458] sm:$0xff] %v632
      %665 = vst [vmem:[#allocation3 + $0x4a0] sm:$0xff] %v633
      %666 = vst [vmem:[#allocation3 + $0x4e8] sm:$0xff] %v634
      %667 = vst [vmem:[#allocation3 + $0x530] sm:$0xff] %v635
      %668 = vst [vmem:[#allocation3 + $0x578] sm:$0xff] %v636
      %669 = vst [vmem:[#allocation3 + $0x5c0] sm:$0xff] %v637
      %670 = vst [vmem:[#allocation3 + $0x608] sm:$0xff] %v638
      %671 = vst [vmem:[#allocation3 + $0x650] sm:$0xff] %v639
      %672 = vst [vmem:[#allocation3 + $0x698] sm:$0xff] %v640
      %673 = vst [vmem:[#allocation3 + $0x6e0] sm:$0xff] %v641
      %674 = vst [vmem:[#allocation3 + $0x728] sm:$0xff] %v642
      %675 = vst [vmem:[#allocation3 + $0x770] sm:$0xff] %v643
      %676 = vst [vmem:[#allocation3 + $0x7b8] sm:$0xff] %v644
      %677 = vst [vmem:[#allocation3 + $0x800] sm:$0xff] %v645
      %678 = vst [vmem:[#allocation3 + $0x848] sm:$0xff] %v646
      %679 = vst [vmem:[#allocation3 + $0x890] sm:$0xff] %v647
      %680 = vst [vmem:[#allocation3 + $0x8d8] sm:$0xff] %v648
      %v681 = vld [vmem:[%s264 + $0x2] sm:$0xff]
      %v682 = vld [vmem:[%s264 + $0x12] sm:$0xff]
      %v683 = vld [vmem:[%s264 + $0x22] sm:$0xff]
      %v684 = vld [vmem:[%s264 + $0x32] sm:$0xff]
      %v685 = vld [vmem:[%s264 + $0x42] sm:$0xff]
      %v686 = vld [vmem:[%s264 + $0x52] sm:$0xff]
      %v687 = vld [vmem:[%s264 + $0x62] sm:$0xff]
      %v688 = vld [vmem:[%s264 + $0x72] sm:$0xff]
      %v689 = vld [vmem:[%s264 + $0xa2] sm:$0xff]
      %v690 = vld [vmem:[%s264 + $0xb2] sm:$0xff]
      %v691 = vld [vmem:[%s264 + $0xc2] sm:$0xff]
      %v692 = vld [vmem:[%s264 + $0xd2] sm:$0xff]
      %v693 = vld [vmem:[%s264 + $0xe2] sm:$0xff]
      %v694 = vld [vmem:[%s264 + $0xf2] sm:$0xff]
      %v695 = vld [vmem:[%s264 + $0x102] sm:$0xff]
      %v696 = vld [vmem:[%s264 + $0x112] sm:$0xff]
      %v697 = vld [vmem:[%s264 + $0x142] sm:$0xff]
      %v698 = vld [vmem:[%s264 + $0x152] sm:$0xff]
      %v699 = vld [vmem:[%s264 + $0x162] sm:$0xff]
      %v700 = vld [vmem:[%s264 + $0x172] sm:$0xff]
      %v701 = vld [vmem:[%s264 + $0x182] sm:$0xff]
      %v702 = vld [vmem:[%s264 + $0x192] sm:$0xff]
      %v703 = vld [vmem:[%s264 + $0x1a2] sm:$0xff]
      %v704 = vld [vmem:[%s264 + $0x1b2] sm:$0xff]
      %v705 = vld [vmem:[%s264 + $0x1e2] sm:$0xff]
      %v706 = vld [vmem:[%s264 + $0x1f2] sm:$0xff]
      %v707 = vld [vmem:[%s264 + $0x202] sm:$0xff]
      %v708 = vld [vmem:[%s264 + $0x212] sm:$0xff]
      %v709 = vld [vmem:[%s264 + $0x222] sm:$0xff]
      %v710 = vld [vmem:[%s264 + $0x232] sm:$0xff]
      %v711 = vld [vmem:[%s264 + $0x242] sm:$0xff]
      %v712 = vld [vmem:[%s264 + $0x252] sm:$0xff]
      %713 = vst [vmem:[#allocation3 + $0x28] sm:$0xff] %v681
      %714 = vst [vmem:[#allocation3 + $0x70] sm:$0xff] %v682
      %715 = vst [vmem:[#allocation3 + $0xb8] sm:$0xff] %v683
      %716 = vst [vmem:[#allocation3 + $0x100] sm:$0xff] %v684
      %717 = vst [vmem:[#allocation3 + $0x148] sm:$0xff] %v685
      %718 = vst [vmem:[#allocation3 + $0x190] sm:$0xff] %v686
      %719 = vst [vmem:[#allocation3 + $0x1d8] sm:$0xff] %v687
      %720 = vst [vmem:[#allocation3 + $0x220] sm:$0xff] %v688
      %721 = vst [vmem:[#allocation3 + $0x268] sm:$0xff] %v689
      %722 = vst [vmem:[#allocation3 + $0x2b0] sm:$0xff] %v690
      %723 = vst [vmem:[#allocation3 + $0x2f8] sm:$0xff] %v691
      %724 = vst [vmem:[#allocation3 + $0x340] sm:$0xff] %v692
      %725 = vst [vmem:[#allocation3 + $0x388] sm:$0xff] %v693
      %726 = vst [vmem:[#allocation3 + $0x3d0] sm:$0xff] %v694
      %727 = vst [vmem:[#allocation3 + $0x418] sm:$0xff] %v695
      %728 = vst [vmem:[#allocation3 + $0x460] sm:$0xff] %v696
      %729 = vst [vmem:[#allocation3 + $0x4a8] sm:$0xff] %v697
      %730 = vst [vmem:[#allocation3 + $0x4f0] sm:$0xff] %v698
      %731 = vst [vmem:[#allocation3 + $0x538] sm:$0xff] %v699
      %732 = vst [vmem:[#allocation3 + $0x580] sm:$0xff] %v700
      %733 = vst [vmem:[#allocation3 + $0x5c8] sm:$0xff] %v701
      %734 = vst [vmem:[#allocation3 + $0x610] sm:$0xff] %v702
      %735 = vst [vmem:[#allocation3 + $0x658] sm:$0xff] %v703
      %736 = vst [vmem:[#allocation3 + $0x6a0] sm:$0xff] %v704
      %737 = vst [vmem:[#allocation3 + $0x6e8] sm:$0xff] %v705
      %738 = vst [vmem:[#allocation3 + $0x730] sm:$0xff] %v706
      %739 = vst [vmem:[#allocation3 + $0x778] sm:$0xff] %v707
      %740 = vst [vmem:[#allocation3 + $0x7c0] sm:$0xff] %v708
      %741 = vst [vmem:[#allocation3 + $0x808] sm:$0xff] %v709
      %742 = vst [vmem:[#allocation3 + $0x850] sm:$0xff] %v710
      %743 = vst [vmem:[#allocation3 + $0x898] sm:$0xff] %v711
      %744 = vst [vmem:[#allocation3 + $0x8e0] sm:$0xff] %v712
      %s745 = scalar_lea.vmem [#allocation2], 32
      %v746 = vld [vmem:[%s745] sm:$0xff]
      %v747 = vld [vmem:[%s745 + $0x10] sm:$0xff]
      %v748 = vld [vmem:[%s745 + $0x20] sm:$0xff]
      %v749 = vld [vmem:[%s745 + $0x30] sm:$0xff]
      %v750 = vld [vmem:[%s745 + $0x40] sm:$0xff]
      %v751 = vld [vmem:[%s745 + $0x50] sm:$0xff]
      %v752 = vld [vmem:[%s745 + $0x60] sm:$0xff]
      %v753 = vld [vmem:[%s745 + $0x70] sm:$0xff]
      %v754 = vld [vmem:[%s745 + $0xa0] sm:$0xff]
      %v755 = vld [vmem:[%s745 + $0xb0] sm:$0xff]
      %v756 = vld [vmem:[%s745 + $0xc0] sm:$0xff]
      %v757 = vld [vmem:[%s745 + $0xd0] sm:$0xff]
      %v758 = vld [vmem:[%s745 + $0xe0] sm:$0xff]
      %v759 = vld [vmem:[%s745 + $0xf0] sm:$0xff]
      %v760 = vld [vmem:[%s745 + $0x100] sm:$0xff]
      %v761 = vld [vmem:[%s745 + $0x110] sm:$0xff]
      %v762 = vld [vmem:[%s745 + $0x140] sm:$0xff]
      %v763 = vld [vmem:[%s745 + $0x150] sm:$0xff]
      %v764 = vld [vmem:[%s745 + $0x160] sm:$0xff]
      %v765 = vld [vmem:[%s745 + $0x170] sm:$0xff]
      %v766 = vld [vmem:[%s745 + $0x180] sm:$0xff]
      %v767 = vld [vmem:[%s745 + $0x190] sm:$0xff]
      %v768 = vld [vmem:[%s745 + $0x1a0] sm:$0xff]
      %v769 = vld [vmem:[%s745 + $0x1b0] sm:$0xff]
      %v770 = vld [vmem:[%s745 + $0x1e0] sm:$0xff]
      %v771 = vld [vmem:[%s745 + $0x1f0] sm:$0xff]
      %v772 = vld [vmem:[%s745 + $0x200] sm:$0xff]
      %v773 = vld [vmem:[%s745 + $0x210] sm:$0xff]
      %v774 = vld [vmem:[%s745 + $0x220] sm:$0xff]
      %v775 = vld [vmem:[%s745 + $0x230] sm:$0xff]
      %v776 = vld [vmem:[%s745 + $0x240] sm:$0xff]
      %v777 = vld [vmem:[%s745 + $0x250] sm:$0xff]
      %778 = vst [vmem:[#allocation3 + $0x30] sm:$0xff] %v746
      %779 = vst [vmem:[#allocation3 + $0x78] sm:$0xff] %v747
      %780 = vst [vmem:[#allocation3 + $0xc0] sm:$0xff] %v748
      %781 = vst [vmem:[#allocation3 + $0x108] sm:$0xff] %v749
      %782 = vst [vmem:[#allocation3 + $0x150] sm:$0xff] %v750
      %783 = vst [vmem:[#allocation3 + $0x198] sm:$0xff] %v751
      %784 = vst [vmem:[#allocation3 + $0x1e0] sm:$0xff] %v752
      %785 = vst [vmem:[#allocation3 + $0x228] sm:$0xff] %v753
      %786 = vst [vmem:[#allocation3 + $0x270] sm:$0xff] %v754
      %787 = vst [vmem:[#allocation3 + $0x2b8] sm:$0xff] %v755
      %788 = vst [vmem:[#allocation3 + $0x300] sm:$0xff] %v756
      %789 = vst [vmem:[#allocation3 + $0x348] sm:$0xff] %v757
      %790 = vst [vmem:[#allocation3 + $0x390] sm:$0xff] %v758
      %791 = vst [vmem:[#allocation3 + $0x3d8] sm:$0xff] %v759
      %792 = vst [vmem:[#allocation3 + $0x420] sm:$0xff] %v760
      %793 = vst [vmem:[#allocation3 + $0x468] sm:$0xff] %v761
      %794 = vst [vmem:[#allocation3 + $0x4b0] sm:$0xff] %v762
      %795 = vst [vmem:[#allocation3 + $0x4f8] sm:$0xff] %v763
      %796 = vst [vmem:[#allocation3 + $0x540] sm:$0xff] %v764
      %797 = vst [vmem:[#allocation3 + $0x588] sm:$0xff] %v765
      %798 = vst [vmem:[#allocation3 + $0x5d0] sm:$0xff] %v766
      %799 = vst [vmem:[#allocation3 + $0x618] sm:$0xff] %v767
      %800 = vst [vmem:[#allocation3 + $0x660] sm:$0xff] %v768
      %801 = vst [vmem:[#allocation3 + $0x6a8] sm:$0xff] %v769
      %802 = vst [vmem:[#allocation3 + $0x6f0] sm:$0xff] %v770
      %803 = vst [vmem:[#allocation3 + $0x738] sm:$0xff] %v771
      %804 = vst [vmem:[#allocation3 + $0x780] sm:$0xff] %v772
      %805 = vst [vmem:[#allocation3 + $0x7c8] sm:$0xff] %v773
      %806 = vst [vmem:[#allocation3 + $0x810] sm:$0xff] %v774
      %807 = vst [vmem:[#allocation3 + $0x858] sm:$0xff] %v775
      %808 = vst [vmem:[#allocation3 + $0x8a0] sm:$0xff] %v776
      %809 = vst [vmem:[#allocation3 + $0x8e8] sm:$0xff] %v777
      %v810 = vld [vmem:[%s745 + $0x1] sm:$0xff]
      %v811 = vld [vmem:[%s745 + $0x11] sm:$0xff]
      %v812 = vld [vmem:[%s745 + $0x21] sm:$0xff]
      %v813 = vld [vmem:[%s745 + $0x31] sm:$0xff]
      %v814 = vld [vmem:[%s745 + $0x41] sm:$0xff]
      %v815 = vld [vmem:[%s745 + $0x51] sm:$0xff]
      %v816 = vld [vmem:[%s745 + $0x61] sm:$0xff]
      %v817 = vld [vmem:[%s745 + $0x71] sm:$0xff]
      %v818 = vld [vmem:[%s745 + $0xa1] sm:$0xff]
      %v819 = vld [vmem:[%s745 + $0xb1] sm:$0xff]
      %v820 = vld [vmem:[%s745 + $0xc1] sm:$0xff]
      %v821 = vld [vmem:[%s745 + $0xd1] sm:$0xff]
      %v822 = vld [vmem:[%s745 + $0xe1] sm:$0xff]
      %v823 = vld [vmem:[%s745 + $0xf1] sm:$0xff]
      %v824 = vld [vmem:[%s745 + $0x101] sm:$0xff]
      %v825 = vld [vmem:[%s745 + $0x111] sm:$0xff]
      %v826 = vld [vmem:[%s745 + $0x141] sm:$0xff]
      %v827 = vld [vmem:[%s745 + $0x151] sm:$0xff]
      %v828 = vld [vmem:[%s745 + $0x161] sm:$0xff]
      %v829 = vld [vmem:[%s745 + $0x171] sm:$0xff]
      %v830 = vld [vmem:[%s745 + $0x181] sm:$0xff]
      %v831 = vld [vmem:[%s745 + $0x191] sm:$0xff]
      %v832 = vld [vmem:[%s745 + $0x1a1] sm:$0xff]
      %v833 = vld [vmem:[%s745 + $0x1b1] sm:$0xff]
      %v834 = vld [vmem:[%s745 + $0x1e1] sm:$0xff]
      %v835 = vld [vmem:[%s745 + $0x1f1] sm:$0xff]
      %v836 = vld [vmem:[%s745 + $0x201] sm:$0xff]
      %v837 = vld [vmem:[%s745 + $0x211] sm:$0xff]
      %v838 = vld [vmem:[%s745 + $0x221] sm:$0xff]
      %v839 = vld [vmem:[%s745 + $0x231] sm:$0xff]
      %v840 = vld [vmem:[%s745 + $0x241] sm:$0xff]
      %v841 = vld [vmem:[%s745 + $0x251] sm:$0xff]
      %842 = vst [vmem:[#allocation3 + $0x38] sm:$0xff] %v810
      %843 = vst [vmem:[#allocation3 + $0x80] sm:$0xff] %v811
      %844 = vst [vmem:[#allocation3 + $0xc8] sm:$0xff] %v812
      %845 = vst [vmem:[#allocation3 + $0x110] sm:$0xff] %v813
      %846 = vst [vmem:[#allocation3 + $0x158] sm:$0xff] %v814
      %847 = vst [vmem:[#allocation3 + $0x1a0] sm:$0xff] %v815
      %848 = vst [vmem:[#allocation3 + $0x1e8] sm:$0xff] %v816
      %849 = vst [vmem:[#allocation3 + $0x230] sm:$0xff] %v817
      %850 = vst [vmem:[#allocation3 + $0x278] sm:$0xff] %v818
      %851 = vst [vmem:[#allocation3 + $0x2c0] sm:$0xff] %v819
      %852 = vst [vmem:[#allocation3 + $0x308] sm:$0xff] %v820
      %853 = vst [vmem:[#allocation3 + $0x350] sm:$0xff] %v821
      %854 = vst [vmem:[#allocation3 + $0x398] sm:$0xff] %v822
      %855 = vst [vmem:[#allocation3 + $0x3e0] sm:$0xff] %v823
      %856 = vst [vmem:[#allocation3 + $0x428] sm:$0xff] %v824
      %857 = vst [vmem:[#allocation3 + $0x470] sm:$0xff] %v825
      %858 = vst [vmem:[#allocation3 + $0x4b8] sm:$0xff] %v826
      %859 = vst [vmem:[#allocation3 + $0x500] sm:$0xff] %v827
      %860 = vst [vmem:[#allocation3 + $0x548] sm:$0xff] %v828
      %861 = vst [vmem:[#allocation3 + $0x590] sm:$0xff] %v829
      %862 = vst [vmem:[#allocation3 + $0x5d8] sm:$0xff] %v830
      %863 = vst [vmem:[#allocation3 + $0x620] sm:$0xff] %v831
      %864 = vst [vmem:[#allocation3 + $0x668] sm:$0xff] %v832
      %865 = vst [vmem:[#allocation3 + $0x6b0] sm:$0xff] %v833
      %866 = vst [vmem:[#allocation3 + $0x6f8] sm:$0xff] %v834
      %867 = vst [vmem:[#allocation3 + $0x740] sm:$0xff] %v835
      %868 = vst [vmem:[#allocation3 + $0x788] sm:$0xff] %v836
      %869 = vst [vmem:[#allocation3 + $0x7d0] sm:$0xff] %v837
      %870 = vst [vmem:[#allocation3 + $0x818] sm:$0xff] %v838
      %871 = vst [vmem:[#allocation3 + $0x860] sm:$0xff] %v839
      %872 = vst [vmem:[#allocation3 + $0x8a8] sm:$0xff] %v840
      %873 = vst [vmem:[#allocation3 + $0x8f0] sm:$0xff] %v841
      %v874 = vld [vmem:[%s745 + $0x2] sm:$0xff]
      %v875 = vld [vmem:[%s745 + $0x12] sm:$0xff]
      %v876 = vld [vmem:[%s745 + $0x22] sm:$0xff]
      %v877 = vld [vmem:[%s745 + $0x32] sm:$0xff]
      %v878 = vld [vmem:[%s745 + $0x42] sm:$0xff]
      %v879 = vld [vmem:[%s745 + $0x52] sm:$0xff]
      %v880 = vld [vmem:[%s745 + $0x62] sm:$0xff]
      %v881 = vld [vmem:[%s745 + $0x72] sm:$0xff]
      %v882 = vld [vmem:[%s745 + $0xa2] sm:$0xff]
      %v883 = vld [vmem:[%s745 + $0xb2] sm:$0xff]
      %v884 = vld [vmem:[%s745 + $0xc2] sm:$0xff]
      %v885 = vld [vmem:[%s745 + $0xd2] sm:$0xff]
      %v886 = vld [vmem:[%s745 + $0xe2] sm:$0xff]
      %v887 = vld [vmem:[%s745 + $0xf2] sm:$0xff]
      %v888 = vld [vmem:[%s745 + $0x102] sm:$0xff]
      %v889 = vld [vmem:[%s745 + $0x112] sm:$0xff]
      %v890 = vld [vmem:[%s745 + $0x142] sm:$0xff]
      %v891 = vld [vmem:[%s745 + $0x152] sm:$0xff]
      %v892 = vld [vmem:[%s745 + $0x162] sm:$0xff]
      %v893 = vld [vmem:[%s745 + $0x172] sm:$0xff]
      %v894 = vld [vmem:[%s745 + $0x182] sm:$0xff]
      %v895 = vld [vmem:[%s745 + $0x192] sm:$0xff]
      %v896 = vld [vmem:[%s745 + $0x1a2] sm:$0xff]
      %v897 = vld [vmem:[%s745 + $0x1b2] sm:$0xff]
      %v898 = vld [vmem:[%s745 + $0x1e2] sm:$0xff]
      %v899 = vld [vmem:[%s745 + $0x1f2] sm:$0xff]
      %v900 = vld [vmem:[%s745 + $0x202] sm:$0xff]
      %v901 = vld [vmem:[%s745 + $0x212] sm:$0xff]
      %v902 = vld [vmem:[%s745 + $0x222] sm:$0xff]
      %v903 = vld [vmem:[%s745 + $0x232] sm:$0xff]
      %v904 = vld [vmem:[%s745 + $0x242] sm:$0xff]
      %v905 = vld [vmem:[%s745 + $0x252] sm:$0xff]
      %906 = vst [vmem:[#allocation3 + $0x40] sm:$0xff] %v874
      %907 = vst [vmem:[#allocation3 + $0x88] sm:$0xff] %v875
      %908 = vst [vmem:[#allocation3 + $0xd0] sm:$0xff] %v876
      %909 = vst [vmem:[#allocation3 + $0x118] sm:$0xff] %v877
      %910 = vst [vmem:[#allocation3 + $0x160] sm:$0xff] %v878
      %911 = vst [vmem:[#allocation3 + $0x1a8] sm:$0xff] %v879
      %912 = vst [vmem:[#allocation3 + $0x1f0] sm:$0xff] %v880
      %913 = vst [vmem:[#allocation3 + $0x238] sm:$0xff] %v881
      %914 = vst [vmem:[#allocation3 + $0x280] sm:$0xff] %v882
      %915 = vst [vmem:[#allocation3 + $0x2c8] sm:$0xff] %v883
      %916 = vst [vmem:[#allocation3 + $0x310] sm:$0xff] %v884
      %917 = vst [vmem:[#allocation3 + $0x358] sm:$0xff] %v885
      %918 = vst [vmem:[#allocation3 + $0x3a0] sm:$0xff] %v886
      %919 = vst [vmem:[#allocation3 + $0x3e8] sm:$0xff] %v887
      %920 = vst [vmem:[#allocation3 + $0x430] sm:$0xff] %v888
      %921 = vst [vmem:[#allocation3 + $0x478] sm:$0xff] %v889
      %922 = vst [vmem:[#allocation3 + $0x4c0] sm:$0xff] %v890
      %923 = vst [vmem:[#allocation3 + $0x508] sm:$0xff] %v891
      %924 = vst [vmem:[#allocation3 + $0x550] sm:$0xff] %v892
      %925 = vst [vmem:[#allocation3 + $0x598] sm:$0xff] %v893
      %926 = vst [vmem:[#allocation3 + $0x5e0] sm:$0xff] %v894
      %927 = vst [vmem:[#allocation3 + $0x628] sm:$0xff] %v895
      %928 = vst [vmem:[#allocation3 + $0x670] sm:$0xff] %v896
      %929 = vst [vmem:[#allocation3 + $0x6b8] sm:$0xff] %v897
      %930 = vst [vmem:[#allocation3 + $0x700] sm:$0xff] %v898
      %931 = vst [vmem:[#allocation3 + $0x748] sm:$0xff] %v899
      %932 = vst [vmem:[#allocation3 + $0x790] sm:$0xff] %v900
      %933 = vst [vmem:[#allocation3 + $0x7d8] sm:$0xff] %v901
      %934 = vst [vmem:[#allocation3 + $0x820] sm:$0xff] %v902
      %935 = vst [vmem:[#allocation3 + $0x868] sm:$0xff] %v903
      %936 = vst [vmem:[#allocation3 + $0x8b0] sm:$0xff] %v904
      %937 = vst [vmem:[#allocation3 + $0x8f8] sm:$0xff] %v905
      %v938 = vld [vmem:[#allocation3] sm:$0xff]
      %v939 = vld [vmem:[#allocation3 + $0x8] sm:$0xff]
      %v940 = vld [vmem:[#allocation3 + $0x10] sm:$0xff]
      %v941 = vld [vmem:[#allocation3 + $0x18] sm:$0xff]
      %v942 = vld [vmem:[#allocation3 + $0x20] sm:$0xff]
      %v943 = vld [vmem:[#allocation3 + $0x28] sm:$0xff]
      %v944 = vld [vmem:[#allocation3 + $0x30] sm:$0xff]
      %v945 = vld [vmem:[#allocation3 + $0x38] sm:$0xff]
      %v946 = vld [vmem:[#allocation3 + $0x40] sm:$0xff]
      %v947 = vld [vmem:[#allocation3 + $0x48] sm:$0xff]
      %v948 = vld [vmem:[#allocation3 + $0x50] sm:$0xff]
      %v949 = vld [vmem:[#allocation3 + $0x58] sm:$0xff]
      %v950 = vld [vmem:[#allocation3 + $0x60] sm:$0xff]
      %v951 = vld [vmem:[#allocation3 + $0x68] sm:$0xff]
      %v952 = vld [vmem:[#allocation3 + $0x70] sm:$0xff]
      %v953 = vld [vmem:[#allocation3 + $0x78] sm:$0xff]
      %v954 = vld [vmem:[#allocation3 + $0x80] sm:$0xff]
      %v955 = vld [vmem:[#allocation3 + $0x88] sm:$0xff]
      %v956 = vld [vmem:[#allocation3 + $0x90] sm:$0xff]
      %v957 = vld [vmem:[#allocation3 + $0x98] sm:$0xff]
      %v958 = vld [vmem:[#allocation3 + $0xa0] sm:$0xff]
      %v959 = vld [vmem:[#allocation3 + $0xa8] sm:$0xff]
      %v960 = vld [vmem:[#allocation3 + $0xb0] sm:$0xff]
      %v961 = vld [vmem:[#allocation3 + $0xb8] sm:$0xff]
      %v962 = vld [vmem:[#allocation3 + $0xc0] sm:$0xff]
      %v963 = vld [vmem:[#allocation3 + $0xc8] sm:$0xff]
      %v964 = vld [vmem:[#allocation3 + $0xd0] sm:$0xff]
      %v965 = vld [vmem:[#allocation3 + $0xd8] sm:$0xff]
      %v966 = vld [vmem:[#allocation3 + $0xe0] sm:$0xff]
      %v967 = vld [vmem:[#allocation3 + $0xe8] sm:$0xff]
      %v968 = vld [vmem:[#allocation3 + $0xf0] sm:$0xff]
      %v969 = vld [vmem:[#allocation3 + $0xf8] sm:$0xff]
      %v970 = vld [vmem:[#allocation3 + $0x100] sm:$0xff]
      %v971 = vld [vmem:[#allocation3 + $0x108] sm:$0xff]
      %v972 = vld [vmem:[#allocation3 + $0x110] sm:$0xff]
      %v973 = vld [vmem:[#allocation3 + $0x118] sm:$0xff]
      %v974 = vld [vmem:[#allocation3 + $0x120] sm:$0xff]
      %v975 = vld [vmem:[#allocation3 + $0x128] sm:$0xff]
      %v976 = vld [vmem:[#allocation3 + $0x130] sm:$0xff]
      %v977 = vld [vmem:[#allocation3 + $0x138] sm:$0xff]
      %v978 = vld [vmem:[#allocation3 + $0x140] sm:$0xff]
      %v979 = vld [vmem:[#allocation3 + $0x148] sm:$0xff]
      %v980 = vld [vmem:[#allocation3 + $0x150] sm:$0xff]
      %v981 = vld [vmem:[#allocation3 + $0x158] sm:$0xff]
      %v982 = vld [vmem:[#allocation3 + $0x160] sm:$0xff]
      %v983 = vld [vmem:[#allocation3 + $0x168] sm:$0xff]
      %v984 = vld [vmem:[#allocation3 + $0x170] sm:$0xff]
      %v985 = vld [vmem:[#allocation3 + $0x178] sm:$0xff]
      %v986 = vld [vmem:[#allocation3 + $0x180] sm:$0xff]
      %v987 = vld [vmem:[#allocation3 + $0x188] sm:$0xff]
      %v988 = vld [vmem:[#allocation3 + $0x190] sm:$0xff]
      %v989 = vld [vmem:[#allocation3 + $0x198] sm:$0xff]
      %v990 = vld [vmem:[#allocation3 + $0x1a0] sm:$0xff]
      %v991 = vld [vmem:[#allocation3 + $0x1a8] sm:$0xff]
      %v992 = vld [vmem:[#allocation3 + $0x1b0] sm:$0xff]
      %v993 = vld [vmem:[#allocation3 + $0x1b8] sm:$0xff]
      %v994 = vld [vmem:[#allocation3 + $0x1c0] sm:$0xff]
      %v995 = vld [vmem:[#allocation3 + $0x1c8] sm:$0xff]
      %v996 = vld [vmem:[#allocation3 + $0x1d0] sm:$0xff]
      %v997 = vld [vmem:[#allocation3 + $0x1d8] sm:$0xff]
      %v998 = vld [vmem:[#allocation3 + $0x1e0] sm:$0xff]
      %v999 = vld [vmem:[#allocation3 + $0x1e8] sm:$0xff]
      %v1000 = vld [vmem:[#allocation3 + $0x1f0] sm:$0xff]
      %v1001 = vld [vmem:[#allocation3 + $0x1f8] sm:$0xff]
      %v1002 = vld [vmem:[#allocation3 + $0x200] sm:$0xff]
      %v1003 = vld [vmem:[#allocation3 + $0x208] sm:$0xff]
      %v1004 = vld [vmem:[#allocation3 + $0x210] sm:$0xff]
      %v1005 = vld [vmem:[#allocation3 + $0x218] sm:$0xff]
      %v1006 = vld [vmem:[#allocation3 + $0x220] sm:$0xff]
      %v1007 = vld [vmem:[#allocation3 + $0x228] sm:$0xff]
      %v1008 = vld [vmem:[#allocation3 + $0x230] sm:$0xff]
      %v1009 = vld [vmem:[#allocation3 + $0x238] sm:$0xff]
      %v1010 = vld [vmem:[#allocation3 + $0x240] sm:$0xff]
      %v1011 = vld [vmem:[#allocation3 + $0x248] sm:$0xff]
      %v1012 = vld [vmem:[#allocation3 + $0x250] sm:$0xff]
      %v1013 = vld [vmem:[#allocation3 + $0x258] sm:$0xff]
      %v1014 = vld [vmem:[#allocation3 + $0x260] sm:$0xff]
      %v1015 = vld [vmem:[#allocation3 + $0x268] sm:$0xff]
      %v1016 = vld [vmem:[#allocation3 + $0x270] sm:$0xff]
      %v1017 = vld [vmem:[#allocation3 + $0x278] sm:$0xff]
      %v1018 = vld [vmem:[#allocation3 + $0x280] sm:$0xff]
      %v1019 = vld [vmem:[#allocation3 + $0x288] sm:$0xff]
      %v1020 = vld [vmem:[#allocation3 + $0x290] sm:$0xff]
      %v1021 = vld [vmem:[#allocation3 + $0x298] sm:$0xff]
      %v1022 = vld [vmem:[#allocation3 + $0x2a0] sm:$0xff]
      %v1023 = vld [vmem:[#allocation3 + $0x2a8] sm:$0xff]
      %v1024 = vld [vmem:[#allocation3 + $0x2b0] sm:$0xff]
      %v1025 = vld [vmem:[#allocation3 + $0x2b8] sm:$0xff]
      %v1026 = vld [vmem:[#allocation3 + $0x2c0] sm:$0xff]
      %v1027 = vld [vmem:[#allocation3 + $0x2c8] sm:$0xff]
      %v1028 = vld [vmem:[#allocation3 + $0x2d0] sm:$0xff]
      %v1029 = vld [vmem:[#allocation3 + $0x2d8] sm:$0xff]
      %v1030 = vld [vmem:[#allocation3 + $0x2e0] sm:$0xff]
      %v1031 = vld [vmem:[#allocation3 + $0x2e8] sm:$0xff]
      %v1032 = vld [vmem:[#allocation3 + $0x2f0] sm:$0xff]
      %v1033 = vld [vmem:[#allocation3 + $0x2f8] sm:$0xff]
      %v1034 = vld [vmem:[#allocation3 + $0x300] sm:$0xff]
      %v1035 = vld [vmem:[#allocation3 + $0x308] sm:$0xff]
      %v1036 = vld [vmem:[#allocation3 + $0x310] sm:$0xff]
      %v1037 = vld [vmem:[#allocation3 + $0x318] sm:$0xff]
      %v1038 = vld [vmem:[#allocation3 + $0x320] sm:$0xff]
      %v1039 = vld [vmem:[#allocation3 + $0x328] sm:$0xff]
      %v1040 = vld [vmem:[#allocation3 + $0x330] sm:$0xff]
      %v1041 = vld [vmem:[#allocation3 + $0x338] sm:$0xff]
      %v1042 = vld [vmem:[#allocation3 + $0x340] sm:$0xff]
      %v1043 = vld [vmem:[#allocation3 + $0x348] sm:$0xff]
      %v1044 = vld [vmem:[#allocation3 + $0x350] sm:$0xff]
      %v1045 = vld [vmem:[#allocation3 + $0x358] sm:$0xff]
      %v1046 = vld [vmem:[#allocation3 + $0x360] sm:$0xff]
      %v1047 = vld [vmem:[#allocation3 + $0x368] sm:$0xff]
      %v1048 = vld [vmem:[#allocation3 + $0x370] sm:$0xff]
      %v1049 = vld [vmem:[#allocation3 + $0x378] sm:$0xff]
      %v1050 = vld [vmem:[#allocation3 + $0x380] sm:$0xff]
      %v1051 = vld [vmem:[#allocation3 + $0x388] sm:$0xff]
      %v1052 = vld [vmem:[#allocation3 + $0x390] sm:$0xff]
      %v1053 = vld [vmem:[#allocation3 + $0x398] sm:$0xff]
      %v1054 = vld [vmem:[#allocation3 + $0x3a0] sm:$0xff]
      %v1055 = vld [vmem:[#allocation3 + $0x3a8] sm:$0xff]
      %v1056 = vld [vmem:[#allocation3 + $0x3b0] sm:$0xff]
      %v1057 = vld [vmem:[#allocation3 + $0x3b8] sm:$0xff]
      %v1058 = vld [vmem:[#allocation3 + $0x3c0] sm:$0xff]
      %v1059 = vld [vmem:[#allocation3 + $0x3c8] sm:$0xff]
      %v1060 = vld [vmem:[#allocation3 + $0x3d0] sm:$0xff]
      %v1061 = vld [vmem:[#allocation3 + $0x3d8] sm:$0xff]
      %v1062 = vld [vmem:[#allocation3 + $0x3e0] sm:$0xff]
      %v1063 = vld [vmem:[#allocation3 + $0x3e8] sm:$0xff]
      %v1064 = vld [vmem:[#allocation3 + $0x3f0] sm:$0xff]
      %v1065 = vld [vmem:[#allocation3 + $0x3f8] sm:$0xff]
      %v1066 = vld [vmem:[#allocation3 + $0x400] sm:$0xff]
      %v1067 = vld [vmem:[#allocation3 + $0x408] sm:$0xff]
      %v1068 = vld [vmem:[#allocation3 + $0x410] sm:$0xff]
      %v1069 = vld [vmem:[#allocation3 + $0x418] sm:$0xff]
      %v1070 = vld [vmem:[#allocation3 + $0x420] sm:$0xff]
      %v1071 = vld [vmem:[#allocation3 + $0x428] sm:$0xff]
      %v1072 = vld [vmem:[#allocation3 + $0x430] sm:$0xff]
      %v1073 = vld [vmem:[#allocation3 + $0x438] sm:$0xff]
      %v1074 = vld [vmem:[#allocation3 + $0x440] sm:$0xff]
      %v1075 = vld [vmem:[#allocation3 + $0x448] sm:$0xff]
      %v1076 = vld [vmem:[#allocation3 + $0x450] sm:$0xff]
      %v1077 = vld [vmem:[#allocation3 + $0x458] sm:$0xff]
      %v1078 = vld [vmem:[#allocation3 + $0x460] sm:$0xff]
      %v1079 = vld [vmem:[#allocation3 + $0x468] sm:$0xff]
      %v1080 = vld [vmem:[#allocation3 + $0x470] sm:$0xff]
      %v1081 = vld [vmem:[#allocation3 + $0x478] sm:$0xff]
      %v1082 = vld [vmem:[#allocation3 + $0x480] sm:$0xff]
      %v1083 = vld [vmem:[#allocation3 + $0x488] sm:$0xff]
      %v1084 = vld [vmem:[#allocation3 + $0x490] sm:$0xff]
      %v1085 = vld [vmem:[#allocation3 + $0x498] sm:$0xff]
      %v1086 = vld [vmem:[#allocation3 + $0x4a0] sm:$0xff]
      %v1087 = vld [vmem:[#allocation3 + $0x4a8] sm:$0xff]
      %v1088 = vld [vmem:[#allocation3 + $0x4b0] sm:$0xff]
      %v1089 = vld [vmem:[#allocation3 + $0x4b8] sm:$0xff]
      %v1090 = vld [vmem:[#allocation3 + $0x4c0] sm:$0xff]
      %v1091 = vld [vmem:[#allocation3 + $0x4c8] sm:$0xff]
      %v1092 = vld [vmem:[#allocation3 + $0x4d0] sm:$0xff]
      %v1093 = vld [vmem:[#allocation3 + $0x4d8] sm:$0xff]
      %v1094 = vld [vmem:[#allocation3 + $0x4e0] sm:$0xff]
      %v1095 = vld [vmem:[#allocation3 + $0x4e8] sm:$0xff]
      %v1096 = vld [vmem:[#allocation3 + $0x4f0] sm:$0xff]
      %v1097 = vld [vmem:[#allocation3 + $0x4f8] sm:$0xff]
      %v1098 = vld [vmem:[#allocation3 + $0x500] sm:$0xff]
      %v1099 = vld [vmem:[#allocation3 + $0x508] sm:$0xff]
      %v1100 = vld [vmem:[#allocation3 + $0x510] sm:$0xff]
      %v1101 = vld [vmem:[#allocation3 + $0x518] sm:$0xff]
      %v1102 = vld [vmem:[#allocation3 + $0x520] sm:$0xff]
      %v1103 = vld [vmem:[#allocation3 + $0x528] sm:$0xff]
      %v1104 = vld [vmem:[#allocation3 + $0x530] sm:$0xff]
      %v1105 = vld [vmem:[#allocation3 + $0x538] sm:$0xff]
      %v1106 = vld [vmem:[#allocation3 + $0x540] sm:$0xff]
      %v1107 = vld [vmem:[#allocation3 + $0x548] sm:$0xff]
      %v1108 = vld [vmem:[#allocation3 + $0x550] sm:$0xff]
      %v1109 = vld [vmem:[#allocation3 + $0x558] sm:$0xff]
      %v1110 = vld [vmem:[#allocation3 + $0x560] sm:$0xff]
      %v1111 = vld [vmem:[#allocation3 + $0x568] sm:$0xff]
      %v1112 = vld [vmem:[#allocation3 + $0x570] sm:$0xff]
      %v1113 = vld [vmem:[#allocation3 + $0x578] sm:$0xff]
      %v1114 = vld [vmem:[#allocation3 + $0x580] sm:$0xff]
      %v1115 = vld [vmem:[#allocation3 + $0x588] sm:$0xff]
      %v1116 = vld [vmem:[#allocation3 + $0x590] sm:$0xff]
      %v1117 = vld [vmem:[#allocation3 + $0x598] sm:$0xff]
      %v1118 = vld [vmem:[#allocation3 + $0x5a0] sm:$0xff]
      %v1119 = vld [vmem:[#allocation3 + $0x5a8] sm:$0xff]
      %v1120 = vld [vmem:[#allocation3 + $0x5b0] sm:$0xff]
      %v1121 = vld [vmem:[#allocation3 + $0x5b8] sm:$0xff]
      %v1122 = vld [vmem:[#allocation3 + $0x5c0] sm:$0xff]
      %v1123 = vld [vmem:[#allocation3 + $0x5c8] sm:$0xff]
      %v1124 = vld [vmem:[#allocation3 + $0x5d0] sm:$0xff]
      %v1125 = vld [vmem:[#allocation3 + $0x5d8] sm:$0xff]
      %v1126 = vld [vmem:[#allocation3 + $0x5e0] sm:$0xff]
      %v1127 = vld [vmem:[#allocation3 + $0x5e8] sm:$0xff]
      %v1128 = vld [vmem:[#allocation3 + $0x5f0] sm:$0xff]
      %v1129 = vld [vmem:[#allocation3 + $0x5f8] sm:$0xff]
      %v1130 = vld [vmem:[#allocation3 + $0x600] sm:$0xff]
      %v1131 = vld [vmem:[#allocation3 + $0x608] sm:$0xff]
      %v1132 = vld [vmem:[#allocation3 + $0x610] sm:$0xff]
      %v1133 = vld [vmem:[#allocation3 + $0x618] sm:$0xff]
      %v1134 = vld [vmem:[#allocation3 + $0x620] sm:$0xff]
      %v1135 = vld [vmem:[#allocation3 + $0x628] sm:$0xff]
      %v1136 = vld [vmem:[#allocation3 + $0x630] sm:$0xff]
      %v1137 = vld [vmem:[#allocation3 + $0x638] sm:$0xff]
      %v1138 = vld [vmem:[#allocation3 + $0x640] sm:$0xff]
      %v1139 = vld [vmem:[#allocation3 + $0x648] sm:$0xff]
      %v1140 = vld [vmem:[#allocation3 + $0x650] sm:$0xff]
      %v1141 = vld [vmem:[#allocation3 + $0x658] sm:$0xff]
      %v1142 = vld [vmem:[#allocation3 + $0x660] sm:$0xff]
      %v1143 = vld [vmem:[#allocation3 + $0x668] sm:$0xff]
      %v1144 = vld [vmem:[#allocation3 + $0x670] sm:$0xff]
      %v1145 = vld [vmem:[#allocation3 + $0x678] sm:$0xff]
      %v1146 = vld [vmem:[#allocation3 + $0x680] sm:$0xff]
      %v1147 = vld [vmem:[#allocation3 + $0x688] sm:$0xff]
      %v1148 = vld [vmem:[#allocation3 + $0x690] sm:$0xff]
      %v1149 = vld [vmem:[#allocation3 + $0x698] sm:$0xff]
      %v1150 = vld [vmem:[#allocation3 + $0x6a0] sm:$0xff]
      %v1151 = vld [vmem:[#allocation3 + $0x6a8] sm:$0xff]
      %v1152 = vld [vmem:[#allocation3 + $0x6b0] sm:$0xff]
      %v1153 = vld [vmem:[#allocation3 + $0x6b8] sm:$0xff]
      %v1154 = vld [vmem:[#allocation3 + $0x6c0] sm:$0xff]
      %v1155 = vld [vmem:[#allocation3 + $0x6c8] sm:$0xff]
      %v1156 = vld [vmem:[#allocation3 + $0x6d0] sm:$0xff]
      %v1157 = vld [vmem:[#allocation3 + $0x6d8] sm:$0xff]
      %v1158 = vld [vmem:[#allocation3 + $0x6e0] sm:$0xff]
      %v1159 = vld [vmem:[#allocation3 + $0x6e8] sm:$0xff]
      %v1160 = vld [vmem:[#allocation3 + $0x6f0] sm:$0xff]
      %v1161 = vld [vmem:[#allocation3 + $0x6f8] sm:$0xff]
      %v1162 = vld [vmem:[#allocation3 + $0x700] sm:$0xff]
      %v1163 = vld [vmem:[#allocation3 + $0x708] sm:$0xff]
      %v1164 = vld [vmem:[#allocation3 + $0x710] sm:$0xff]
      %v1165 = vld [vmem:[#allocation3 + $0x718] sm:$0xff]
      %v1166 = vld [vmem:[#allocation3 + $0x720] sm:$0xff]
      %v1167 = vld [vmem:[#allocation3 + $0x728] sm:$0xff]
      %v1168 = vld [vmem:[#allocation3 + $0x730] sm:$0xff]
      %v1169 = vld [vmem:[#allocation3 + $0x738] sm:$0xff]
      %v1170 = vld [vmem:[#allocation3 + $0x740] sm:$0xff]
      %v1171 = vld [vmem:[#allocation3 + $0x748] sm:$0xff]
      %v1172 = vld [vmem:[#allocation3 + $0x750] sm:$0xff]
      %v1173 = vld [vmem:[#allocation3 + $0x758] sm:$0xff]
      %v1174 = vld [vmem:[#allocation3 + $0x760] sm:$0xff]
      %v1175 = vld [vmem:[#allocation3 + $0x768] sm:$0xff]
      %v1176 = vld [vmem:[#allocation3 + $0x770] sm:$0xff]
      %v1177 = vld [vmem:[#allocation3 + $0x778] sm:$0xff]
      %v1178 = vld [vmem:[#allocation3 + $0x780] sm:$0xff]
      %v1179 = vld [vmem:[#allocation3 + $0x788] sm:$0xff]
      %v1180 = vld [vmem:[#allocation3 + $0x790] sm:$0xff]
      %v1181 = vld [vmem:[#allocation3 + $0x798] sm:$0xff]
      %v1182 = vld [vmem:[#allocation3 + $0x7a0] sm:$0xff]
      %v1183 = vld [vmem:[#allocation3 + $0x7a8] sm:$0xff]
      %v1184 = vld [vmem:[#allocation3 + $0x7b0] sm:$0xff]
      %v1185 = vld [vmem:[#allocation3 + $0x7b8] sm:$0xff]
      %v1186 = vld [vmem:[#allocation3 + $0x7c0] sm:$0xff]
      %v1187 = vld [vmem:[#allocation3 + $0x7c8] sm:$0xff]
      %v1188 = vld [vmem:[#allocation3 + $0x7d0] sm:$0xff]
      %v1189 = vld [vmem:[#allocation3 + $0x7d8] sm:$0xff]
      %v1190 = vld [vmem:[#allocation3 + $0x7e0] sm:$0xff]
      %v1191 = vld [vmem:[#allocation3 + $0x7e8] sm:$0xff]
      %v1192 = vld [vmem:[#allocation3 + $0x7f0] sm:$0xff]
      %v1193 = vld [vmem:[#allocation3 + $0x7f8] sm:$0xff]
      %v1194 = vld [vmem:[#allocation3 + $0x800] sm:$0xff]
      %v1195 = vld [vmem:[#allocation3 + $0x808] sm:$0xff]
      %v1196 = vld [vmem:[#allocation3 + $0x810] sm:$0xff]
      %v1197 = vld [vmem:[#allocation3 + $0x818] sm:$0xff]
      %v1198 = vld [vmem:[#allocation3 + $0x820] sm:$0xff]
      %v1199 = vld [vmem:[#allocation3 + $0x828] sm:$0xff]
      %v1200 = vld [vmem:[#allocation3 + $0x830] sm:$0xff]
      %v1201 = vld [vmem:[#allocation3 + $0x838] sm:$0xff]
      %v1202 = vld [vmem:[#allocation3 + $0x840] sm:$0xff]
      %v1203 = vld [vmem:[#allocation3 + $0x848] sm:$0xff]
      %v1204 = vld [vmem:[#allocation3 + $0x850] sm:$0xff]
      %v1205 = vld [vmem:[#allocation3 + $0x858] sm:$0xff]
      %v1206 = vld [vmem:[#allocation3 + $0x860] sm:$0xff]
      %v1207 = vld [vmem:[#allocation3 + $0x868] sm:$0xff]
      %v1208 = vld [vmem:[#allocation3 + $0x870] sm:$0xff]
      %v1209 = vld [vmem:[#allocation3 + $0x878] sm:$0xff]
      %v1210 = vld [vmem:[#allocation3 + $0x880] sm:$0xff]
      %v1211 = vld [vmem:[#allocation3 + $0x888] sm:$0xff]
      %v1212 = vld [vmem:[#allocation3 + $0x890] sm:$0xff]
      %v1213 = vld [vmem:[#allocation3 + $0x898] sm:$0xff]
      %v1214 = vld [vmem:[#allocation3 + $0x8a0] sm:$0xff]
      %v1215 = vld [vmem:[#allocation3 + $0x8a8] sm:$0xff]
      %v1216 = vld [vmem:[#allocation3 + $0x8b0] sm:$0xff]
      %v1217 = vld [vmem:[#allocation3 + $0x8b8] sm:$0xff]
      %v1218 = vld [vmem:[#allocation3 + $0x8c0] sm:$0xff]
      %v1219 = vld [vmem:[#allocation3 + $0x8c8] sm:$0xff]
      %v1220 = vld [vmem:[#allocation3 + $0x8d0] sm:$0xff]
      %v1221 = vld [vmem:[#allocation3 + $0x8d8] sm:$0xff]
      %v1222 = vld [vmem:[#allocation3 + $0x8e0] sm:$0xff]
      %v1223 = vld [vmem:[#allocation3 + $0x8e8] sm:$0xff]
      %v1224 = vld [vmem:[#allocation3 + $0x8f0] sm:$0xff]
      %v1225 = vld [vmem:[#allocation3 + $0x8f8] sm:$0xff]
      %v1226 = vld [vmem:[%s1] sm:$0xff]
      %v1227 = vld [vmem:[%s1 + $0x8] sm:$0xff]
      %v1228 = vld [vmem:[%s1 + $0x10] sm:$0xff]
      %v1229 = vld [vmem:[%s1 + $0x18] sm:$0xff]
      %v1230 = vld [vmem:[%s1 + $0x20] sm:$0xff]
      %v1231 = vld [vmem:[%s1 + $0x28] sm:$0xff]
      %v1232 = vld [vmem:[%s1 + $0x30] sm:$0xff]
      %v1233 = vld [vmem:[%s1 + $0x38] sm:$0xff]
      %v1234 = vld [vmem:[%s1 + $0x40] sm:$0xff]
      %v1235 = vld [vmem:[%s1 + $0x48] sm:$0xff]
      %v1236 = vld [vmem:[%s1 + $0x50] sm:$0xff]
      %v1237 = vld [vmem:[%s1 + $0x58] sm:$0xff]
      %v1238 = vld [vmem:[%s1 + $0x60] sm:$0xff]
      %v1239 = vld [vmem:[%s1 + $0x68] sm:$0xff]
      %v1240 = vld [vmem:[%s1 + $0x70] sm:$0xff]
      %v1241 = vld [vmem:[%s1 + $0x78] sm:$0xff]
      %v1242 = vld [vmem:[%s1 + $0x80] sm:$0xff]
      %v1243 = vld [vmem:[%s1 + $0x88] sm:$0xff]
      %v1244 = vld [vmem:[%s1 + $0x90] sm:$0xff]
      %v1245 = vld [vmem:[%s1 + $0x98] sm:$0xff]
      %v1246 = vld [vmem:[%s1 + $0xa0] sm:$0xff]
      %v1247 = vld [vmem:[%s1 + $0xa8] sm:$0xff]
      %v1248 = vld [vmem:[%s1 + $0xb0] sm:$0xff]
      %v1249 = vld [vmem:[%s1 + $0xb8] sm:$0xff]
      %v1250 = vld [vmem:[%s1 + $0xc0] sm:$0xff]
      %v1251 = vld [vmem:[%s1 + $0xc8] sm:$0xff]
      %v1252 = vld [vmem:[%s1 + $0xd0] sm:$0xff]
      %v1253 = vld [vmem:[%s1 + $0xd8] sm:$0xff]
      %v1254 = vld [vmem:[%s1 + $0xe0] sm:$0xff]
      %v1255 = vld [vmem:[%s1 + $0xe8] sm:$0xff]
      %v1256 = vld [vmem:[%s1 + $0xf0] sm:$0xff]
      %v1257 = vld [vmem:[%s1 + $0xf8] sm:$0xff]
      %v1258 = vld [vmem:[%s1 + $0x100] sm:$0xff]
      %v1259 = vld [vmem:[%s1 + $0x108] sm:$0xff]
      %v1260 = vld [vmem:[%s1 + $0x110] sm:$0xff]
      %v1261 = vld [vmem:[%s1 + $0x118] sm:$0xff]
      %v1262 = vld [vmem:[%s1 + $0x120] sm:$0xff]
      %v1263 = vld [vmem:[%s1 + $0x128] sm:$0xff]
      %v1264 = vld [vmem:[%s1 + $0x130] sm:$0xff]
      %v1265 = vld [vmem:[%s1 + $0x138] sm:$0xff]
      %v1266 = vld [vmem:[%s1 + $0x140] sm:$0xff]
      %v1267 = vld [vmem:[%s1 + $0x148] sm:$0xff]
      %v1268 = vld [vmem:[%s1 + $0x150] sm:$0xff]
      %v1269 = vld [vmem:[%s1 + $0x158] sm:$0xff]
      %v1270 = vld [vmem:[%s1 + $0x160] sm:$0xff]
      %v1271 = vld [vmem:[%s1 + $0x168] sm:$0xff]
      %v1272 = vld [vmem:[%s1 + $0x170] sm:$0xff]
      %v1273 = vld [vmem:[%s1 + $0x178] sm:$0xff]
      %v1274 = vld [vmem:[%s1 + $0x180] sm:$0xff]
      %v1275 = vld [vmem:[%s1 + $0x188] sm:$0xff]
      %v1276 = vld [vmem:[%s1 + $0x190] sm:$0xff]
      %v1277 = vld [vmem:[%s1 + $0x198] sm:$0xff]
      %v1278 = vld [vmem:[%s1 + $0x1a0] sm:$0xff]
      %v1279 = vld [vmem:[%s1 + $0x1a8] sm:$0xff]
      %v1280 = vld [vmem:[%s1 + $0x1b0] sm:$0xff]
      %v1281 = vld [vmem:[%s1 + $0x1b8] sm:$0xff]
      %v1282 = vld [vmem:[%s1 + $0x1c0] sm:$0xff]
      %v1283 = vld [vmem:[%s1 + $0x1c8] sm:$0xff]
      %v1284 = vld [vmem:[%s1 + $0x1d0] sm:$0xff]
      %v1285 = vld [vmem:[%s1 + $0x1d8] sm:$0xff]
      %v1286 = vld [vmem:[%s1 + $0x1e0] sm:$0xff]
      %v1287 = vld [vmem:[%s1 + $0x1e8] sm:$0xff]
      %v1288 = vld [vmem:[%s1 + $0x1f0] sm:$0xff]
      %v1289 = vld [vmem:[%s1 + $0x1f8] sm:$0xff]
      %v1290 = vld [vmem:[%s1 + $0x200] sm:$0xff]
      %v1291 = vld [vmem:[%s1 + $0x208] sm:$0xff]
      %v1292 = vld [vmem:[%s1 + $0x210] sm:$0xff]
      %v1293 = vld [vmem:[%s1 + $0x218] sm:$0xff]
      %v1294 = vld [vmem:[%s1 + $0x220] sm:$0xff]
      %v1295 = vld [vmem:[%s1 + $0x228] sm:$0xff]
      %v1296 = vld [vmem:[%s1 + $0x230] sm:$0xff]
      %v1297 = vld [vmem:[%s1 + $0x238] sm:$0xff]
      %v1298 = vld [vmem:[%s1 + $0x240] sm:$0xff]
      %v1299 = vld [vmem:[%s1 + $0x248] sm:$0xff]
      %v1300 = vld [vmem:[%s1 + $0x250] sm:$0xff]
      %v1301 = vld [vmem:[%s1 + $0x258] sm:$0xff]
      %v1302 = vld [vmem:[%s1 + $0x260] sm:$0xff]
      %v1303 = vld [vmem:[%s1 + $0x268] sm:$0xff]
      %v1304 = vld [vmem:[%s1 + $0x270] sm:$0xff]
      %v1305 = vld [vmem:[%s1 + $0x278] sm:$0xff]
      %v1306 = vld [vmem:[%s1 + $0x280] sm:$0xff]
      %v1307 = vld [vmem:[%s1 + $0x288] sm:$0xff]
      %v1308 = vld [vmem:[%s1 + $0x290] sm:$0xff]
      %v1309 = vld [vmem:[%s1 + $0x298] sm:$0xff]
      %v1310 = vld [vmem:[%s1 + $0x2a0] sm:$0xff]
      %v1311 = vld [vmem:[%s1 + $0x2a8] sm:$0xff]
      %v1312 = vld [vmem:[%s1 + $0x2b0] sm:$0xff]
      %v1313 = vld [vmem:[%s1 + $0x2b8] sm:$0xff]
      %v1314 = vld [vmem:[%s1 + $0x2c0] sm:$0xff]
      %v1315 = vld [vmem:[%s1 + $0x2c8] sm:$0xff]
      %v1316 = vld [vmem:[%s1 + $0x2d0] sm:$0xff]
      %v1317 = vld [vmem:[%s1 + $0x2d8] sm:$0xff]
      %v1318 = vld [vmem:[%s1 + $0x2e0] sm:$0xff]
      %v1319 = vld [vmem:[%s1 + $0x2e8] sm:$0xff]
      %v1320 = vld [vmem:[%s1 + $0x2f0] sm:$0xff]
      %v1321 = vld [vmem:[%s1 + $0x2f8] sm:$0xff]
      %v1322 = vld [vmem:[%s1 + $0x300] sm:$0xff]
      %v1323 = vld [vmem:[%s1 + $0x308] sm:$0xff]
      %v1324 = vld [vmem:[%s1 + $0x310] sm:$0xff]
      %v1325 = vld [vmem:[%s1 + $0x318] sm:$0xff]
      %v1326 = vld [vmem:[%s1 + $0x320] sm:$0xff]
      %v1327 = vld [vmem:[%s1 + $0x328] sm:$0xff]
      %v1328 = vld [vmem:[%s1 + $0x330] sm:$0xff]
      %v1329 = vld [vmem:[%s1 + $0x338] sm:$0xff]
      %v1330 = vld [vmem:[%s1 + $0x340] sm:$0xff]
      %v1331 = vld [vmem:[%s1 + $0x348] sm:$0xff]
      %v1332 = vld [vmem:[%s1 + $0x350] sm:$0xff]
      %v1333 = vld [vmem:[%s1 + $0x358] sm:$0xff]
      %v1334 = vld [vmem:[%s1 + $0x360] sm:$0xff]
      %v1335 = vld [vmem:[%s1 + $0x368] sm:$0xff]
      %v1336 = vld [vmem:[%s1 + $0x370] sm:$0xff]
      %v1337 = vld [vmem:[%s1 + $0x378] sm:$0xff]
      %v1338 = vld [vmem:[%s1 + $0x380] sm:$0xff]
      %v1339 = vld [vmem:[%s1 + $0x388] sm:$0xff]
      %v1340 = vld [vmem:[%s1 + $0x390] sm:$0xff]
      %v1341 = vld [vmem:[%s1 + $0x398] sm:$0xff]
      %v1342 = vld [vmem:[%s1 + $0x3a0] sm:$0xff]
      %v1343 = vld [vmem:[%s1 + $0x3a8] sm:$0xff]
      %v1344 = vld [vmem:[%s1 + $0x3b0] sm:$0xff]
      %v1345 = vld [vmem:[%s1 + $0x3b8] sm:$0xff]
      %v1346 = vld [vmem:[%s1 + $0x3c0] sm:$0xff]
      %v1347 = vld [vmem:[%s1 + $0x3c8] sm:$0xff]
      %v1348 = vld [vmem:[%s1 + $0x3d0] sm:$0xff]
      %v1349 = vld [vmem:[%s1 + $0x3d8] sm:$0xff]
      %v1350 = vld [vmem:[%s1 + $0x3e0] sm:$0xff]
      %v1351 = vld [vmem:[%s1 + $0x3e8] sm:$0xff]
      %v1352 = vld [vmem:[%s1 + $0x3f0] sm:$0xff]
      %v1353 = vld [vmem:[%s1 + $0x3f8] sm:$0xff]
      %v1354 = vld [vmem:[%s1 + $0x400] sm:$0xff]
      %v1355 = vld [vmem:[%s1 + $0x408] sm:$0xff]
      %v1356 = vld [vmem:[%s1 + $0x410] sm:$0xff]
      %v1357 = vld [vmem:[%s1 + $0x418] sm:$0xff]
      %v1358 = vld [vmem:[%s1 + $0x420] sm:$0xff]
      %v1359 = vld [vmem:[%s1 + $0x428] sm:$0xff]
      %v1360 = vld [vmem:[%s1 + $0x430] sm:$0xff]
      %v1361 = vld [vmem:[%s1 + $0x438] sm:$0xff]
      %v1362 = vld [vmem:[%s1 + $0x440] sm:$0xff]
      %v1363 = vld [vmem:[%s1 + $0x448] sm:$0xff]
      %v1364 = vld [vmem:[%s1 + $0x450] sm:$0xff]
      %v1365 = vld [vmem:[%s1 + $0x458] sm:$0xff]
      %v1366 = vld [vmem:[%s1 + $0x460] sm:$0xff]
      %v1367 = vld [vmem:[%s1 + $0x468] sm:$0xff]
      %v1368 = vld [vmem:[%s1 + $0x470] sm:$0xff]
      %v1369 = vld [vmem:[%s1 + $0x478] sm:$0xff]
      %v1370 = vld [vmem:[%s2] sm:$0x1]
      %v1372 = vlaneseq
      %v1373 = vshrl.u32 %v1372, 7
      %v1374 = vsub.s32 0, %v1373
      %v1375 = vrot.slane %v1370, %v1374
      %1377 = vmatprep.subr.mxu0 0.0
      %1378 = vmatpush1.msra.mxu0 %v1226
      %1379 = vmatprep.subr.mxu0 0.0
      %1380 = vmatpush1.msra.mxu0 %v1227
      %1381 = vmatprep.subr.mxu0 0.0
      %1382 = vmatpush1.msra.mxu0 %v1228
      %1383 = vmatprep.subr.mxu0 0.0
      %1384 = vmatpush1.msra.mxu0 %v1229
      %1385 = vmatprep.subr.mxu0 0.0
      %1386 = vmatpush1.msra.mxu0 %v1230
      %1387 = vmatprep.subr.mxu0 0.0
      %1388 = vmatpush1.msra.mxu0 %v1231
      %1389 = vmatprep.subr.mxu0 0.0
      %1390 = vmatpush1.msra.mxu0 %v1232
      %1391 = vmatprep.subr.mxu0 0.0
      %1392 = vmatpush1.msra.mxu0 %v1233
      %1393 = vmatprep.subr.mxu0 0.0
      %1394 = vmatpush1.msra.mxu0 %v1234
      %1395 = vmatprep.subr.mxu0 0.0
      %1396 = vmatpush1.msra.mxu0 %v1235
      %1397 = vmatprep.subr.mxu0 0.0
      %1398 = vmatpush1.msra.mxu0 %v1236
      %1399 = vmatprep.subr.mxu0 0.0
      %1400 = vmatpush1.msra.mxu0 %v1237
      %1401 = vmatprep.subr.mxu0 0.0
      %1402 = vmatpush1.msra.mxu0 %v1238
      %1403 = vmatprep.subr.mxu0 0.0
      %1404 = vmatpush1.msra.mxu0 %v1239
      %1405 = vmatprep.subr.mxu0 0.0
      %1406 = vmatpush1.msra.mxu0 %v1240
      %1407 = vmatprep.subr.mxu0 0.0
      %1408 = vmatpush1.msra.mxu0 %v1241
      %1409 = vmatprep.subr.mxu0 0.0
      %1410 = vmatpush1.msra.mxu0 %v1242
      %1411 = vmatprep.subr.mxu0 0.0
      %1412 = vmatpush1.msra.mxu0 %v1243
      %1413 = vmatprep.subr.mxu0 0.0
      %1414 = vmatpush1.msra.mxu0 %v1244
      %1415 = vmatprep.subr.mxu0 0.0
      %1416 = vmatpush1.msra.mxu0 %v1245
      %1417 = vmatprep.subr.mxu0 0.0
      %1418 = vmatpush1.msra.mxu0 %v1246
      %1419 = vmatprep.subr.mxu0 0.0
      %1420 = vmatpush1.msra.mxu0 %v1247
      %1421 = vmatprep.subr.mxu0 0.0
      %1422 = vmatpush1.msra.mxu0 %v1248
      %1423 = vmatprep.subr.mxu0 0.0
      %1424 = vmatpush1.msra.mxu0 %v1249
      %1425 = vmatprep.subr.mxu0 0.0
      %1426 = vmatpush1.msra.mxu0 %v1250
      %1427 = vmatprep.subr.mxu0 0.0
      %1428 = vmatpush1.msra.mxu0 %v1251
      %1429 = vmatprep.subr.mxu0 0.0
      %1430 = vmatpush1.msra.mxu0 %v1252
      %1431 = vmatprep.subr.mxu0 0.0
      %1432 = vmatpush1.msra.mxu0 %v1253
      %1433 = vmatprep.subr.mxu0 0.0
      %1434 = vmatpush1.msra.mxu0 %v1254
      %1435 = vmatprep.subr.mxu0 0.0
      %1436 = vmatpush1.msra.mxu0 %v1255
      %1437 = vmatprep.subr.mxu0 0.0
      %1438 = vmatpush1.msra.mxu0 %v1256
      %1439 = vmatprep.subr.mxu0 0.0
      %1440 = vmatpush1.msra.mxu0 %v1257
      %1441 = vmatprep.mubr.f32.mxu0 %v939
      %1442 = vmatmul.mubr.f32.gmra.mrb[0].mxu0 %v938
      %v1443 = vpop.f32.mrb[0].mxu0
      %v1444 = vadd.f32 %v1375, %v1443
      %v1445 = vpop.f32.mrb[0].mxu0
      %1446 = vmatprep.mubr.f32.mxu0 %v948
      %1447 = vmatmul.mubr.f32.gmra.mrb[0].mxu0 %v947
      %v1448 = vpop.f32.mrb[0].mxu0
      %v1449 = vadd.f32 %v1375, %v1448
      %v1450 = vpop.f32.mrb[0].mxu0
      %1451 = vmatprep.mubr.f32.mxu0 %v957
      %1452 = vmatmul.mubr.f32.gmra.mrb[0].mxu0 %v956
      %v1453 = vpop.f32.mrb[0].mxu0
      %v1454 = vadd.f32 %v1375, %v1453
      %v1455 = vpop.f32.mrb[0].mxu0
      %1456 = vmatprep.mubr.f32.mxu0 %v966
      %1457 = vmatmul.mubr.f32.gmra.mrb[0].mxu0 %v965
      %v1458 = vpop.f32.mrb[0].mxu0
      %v1459 = vadd.f32 %v1375, %v1458
      %v1460 = vpop.f32.mrb[0].mxu0
      %1461 = vmatprep.mubr.f32.mxu0 %v975
      %1462 = vmatmul.mubr.f32.gmra.mrb[0].mxu0 %v974
      %v1463 = vpop.f32.mrb[0].mxu0
      %v1464 = vadd.f32 %v1375, %v1463
      %v1465 = vpop.f32.mrb[0].mxu0
      %1466 = vmatprep.mubr.f32.mxu0 %v984
      %1467 = vmatmul.mubr.f32.gmra.mrb[0].mxu0 %v983
      %v1468 = vpop.f32.mrb[0].mxu0
      %v1469 = vadd.f32 %v1375, %v1468
      %v1470 = vpop.f32.mrb[0].mxu0
      %1471 = vmatprep.mubr.f32.mxu0 %v993
      %1472 = vmatmul.mubr.f32.gmra.mrb[0].mxu0 %v992
      %v1473 = vpop.f32.mrb[0].mxu0
      %v1474 = vadd.f32 %v1375, %v1473
      %v1475 = vpop.f32.mrb[0].mxu0
      %1476 = vmatprep.mubr.f32.mxu0 %v1002
      %1477 = vmatmul.mubr.f32.gmra.mrb[0].mxu0 %v1001
      %v1478 = vpop.f32.mrb[0].mxu0
      %v1479 = vadd.f32 %v1375, %v1478
      %v1480 = vpop.f32.mrb[0].mxu0
      %1481 = vmatprep.mubr.f32.mxu0 %v1011
      %1482 = vmatmul.mubr.f32.gmra.mrb[0].mxu0 %v1010
      %v1483 = vpop.f32.mrb[0].mxu0
      %v1484 = vadd.f32 %v1375, %v1483
      %v1485 = vpop.f32.mrb[0].mxu0
      %1486 = vmatprep.mubr.f32.mxu0 %v1020
      %1487 = vmatmul.mubr.f32.gmra.mrb[0].mxu0 %v1019
      %v1488 = vpop.f32.mrb[0].mxu0
      %v1489 = vadd.f32 %v1375, %v1488
      %v1490 = vpop.f32.mrb[0].mxu0
      %1491 = vmatprep.mubr.f32.mxu0 %v1029
      %1492 = vmatmul.mubr.f32.gmra.mrb[0].mxu0 %v1028
      %v1493 = vpop.f32.mrb[0].mxu0
      %v1494 = vadd.f32 %v1375, %v1493
      %v1495 = vpop.f32.mrb[0].mxu0
      %1496 = vmatprep.mubr.f32.mxu0 %v1038
      %1497 = vmatmul.mubr.f32.gmra.mrb[0].mxu0 %v1037
      %v1498 = vpop.f32.mrb[0].mxu0
      %v1499 = vadd.f32 %v1375, %v1498
      %v1500 = vpop.f32.mrb[0].mxu0
      %1501 = vmatprep.mubr.f32.mxu0 %v1047
      %1502 = vmatmul.mubr.f32.gmra.mrb[0].mxu0 %v1046
      %v1503 = vpop.f32.mrb[0].mxu0
      %v1504 = vadd.f32 %v1375, %v1503
      %v1505 = vpop.f32.mrb[0].mxu0
      %1506 = vmatprep.mubr.f32.mxu0 %v1056
      %1507 = vmatmul.mubr.f32.gmra.mrb[0].mxu0 %v1055
      %v1508 = vpop.f32.mrb[0].mxu0
      %v1509 = vadd.f32 %v1375, %v1508
      %v1510 = vpop.f32.mrb[0].mxu0
      %1511 = vmatprep.mubr.f32.mxu0 %v1065
      %1512 = vmatmul.mubr.f32.gmra.mrb[0].mxu0 %v1064
      %v1513 = vpop.f32.mrb[0].mxu0
      %v1514 = vadd.f32 %v1375, %v1513
      %v1515 = vpop.f32.mrb[0].mxu0
      %1516 = vmatprep.mubr.f32.mxu0 %v1074
      %1517 = vmatmul.mubr.f32.gmra.mrb[0].mxu0 %v1073
      %v1518 = vpop.f32.mrb[0].mxu0
      %v1519 = vadd.f32 %v1375, %v1518
      %v1520 = vpop.f32.mrb[0].mxu0
      %1521 = vmatprep.mubr.f32.mxu0 %v1083
      %1522 = vmatmul.mubr.f32.gmra.mrb[0].mxu0 %v1082
      %v1523 = vpop.f32.mrb[0].mxu0
      %v1524 = vadd.f32 %v1375, %v1523
      %v1525 = vpop.f32.mrb[0].mxu0
      %1526 = vmatprep.mubr.f32.mxu0 %v1092
      %1527 = vmatmul.mubr.f32.gmra.mrb[0].mxu0 %v1091
      %v1528 = vpop.f32.mrb[0].mxu0
      %v1529 = vadd.f32 %v1375, %v1528
      %v1530 = vpop.f32.mrb[0].mxu0
      %1531 = vmatprep.mubr.f32.mxu0 %v1101
      %1532 = vmatmul.mubr.f32.gmra.mrb[0].mxu0 %v1100
      %v1533 = vpop.f32.mrb[0].mxu0
      %v1534 = vadd.f32 %v1375, %v1533
      %v1535 = vpop.f32.mrb[0].mxu0
      %1536 = vmatprep.mubr.f32.mxu0 %v1110
      %1537 = vmatmul.mubr.f32.gmra.mrb[0].mxu0 %v1109
      %v1538 = vpop.f32.mrb[0].mxu0
      %v1539 = vadd.f32 %v1375, %v1538
      %v1540 = vpop.f32.mrb[0].mxu0
      %1541 = vmatprep.mubr.f32.mxu0 %v1119
      %1542 = vmatmul.mubr.f32.gmra.mrb[0].mxu0 %v1118
      %v1543 = vpop.f32.mrb[0].mxu0
      %v1544 = vadd.f32 %v1375, %v1543
      %v1545 = vpop.f32.mrb[0].mxu0
      %1546 = vmatprep.mubr.f32.mxu0 %v1128
      %1547 = vmatmul.mubr.f32.gmra.mrb[0].mxu0 %v1127
      %v1548 = vpop.f32.mrb[0].mxu0
      %v1549 = vadd.f32 %v1375, %v1548
      %v1550 = vpop.f32.mrb[0].mxu0
      %1551 = vmatprep.mubr.f32.mxu0 %v1137
      %1552 = vmatmul.mubr.f32.gmra.mrb[0].mxu0 %v1136
      %v1553 = vpop.f32.mrb[0].mxu0
      %v1554 = vadd.f32 %v1375, %v1553
      %v1555 = vpop.f32.mrb[0].mxu0
      %1556 = vmatprep.mubr.f32.mxu0 %v1146
      %1557 = vmatmul.mubr.f32.gmra.mrb[0].mxu0 %v1145
      %v1558 = vpop.f32.mrb[0].mxu0
      %v1559 = vadd.f32 %v1375, %v1558
      %v1560 = vpop.f32.mrb[0].mxu0
      %1561 = vmatprep.mubr.f32.mxu0 %v1155
      %1562 = vmatmul.mubr.f32.gmra.mrb[0].mxu0 %v1154
      %v1563 = vpop.f32.mrb[0].mxu0
      %v1564 = vadd.f32 %v1375, %v1563
      %v1565 = vpop.f32.mrb[0].mxu0
      %1566 = vmatprep.mubr.f32.mxu0 %v1164
      %1567 = vmatmul.mubr.f32.gmra.mrb[0].mxu0 %v1163
      %v1568 = vpop.f32.mrb[0].mxu0
      %v1569 = vadd.f32 %v1375, %v1568
      %v1570 = vpop.f32.mrb[0].mxu0
      %1571 = vmatprep.mubr.f32.mxu0 %v1173
      %1572 = vmatmul.mubr.f32.gmra.mrb[0].mxu0 %v1172
      %v1573 = vpop.f32.mrb[0].mxu0
      %v1574 = vadd.f32 %v1375, %v1573
      %v1575 = vpop.f32.mrb[0].mxu0
      %1576 = vmatprep.mubr.f32.mxu0 %v1182
      %1577 = vmatmul.mubr.f32.gmra.mrb[0].mxu0 %v1181
      %v1578 = vpop.f32.mrb[0].mxu0
      %v1579 = vadd.f32 %v1375, %v1578
      %v1580 = vpop.f32.mrb[0].mxu0
      %1581 = vmatprep.mubr.f32.mxu0 %v1191
      %1582 = vmatmul.mubr.f32.gmra.mrb[0].mxu0 %v1190
      %v1583 = vpop.f32.mrb[0].mxu0
      %v1584 = vadd.f32 %v1375, %v1583
      %v1585 = vpop.f32.mrb[0].mxu0
      %1586 = vmatprep.mubr.f32.mxu0 %v1200
      %1587 = vmatmul.mubr.f32.gmra.mrb[0].mxu0 %v1199
      %v1588 = vpop.f32.mrb[0].mxu0
      %v1589 = vadd.f32 %v1375, %v1588
      %v1590 = vpop.f32.mrb[0].mxu0
      %1591 = vmatprep.mubr.f32.mxu0 %v1209
      %1592 = vmatmul.mubr.f32.gmra.mrb[0].mxu0 %v1208
      %v1593 = vpop.f32.mrb[0].mxu0
      %v1594 = vadd.f32 %v1375, %v1593
      %v1595 = vpop.f32.mrb[0].mxu0
      %1596 = vmatprep.mubr.f32.mxu0 %v1218
      %1597 = vmatmul.mubr.f32.gmra.mrb[0].mxu0 %v1217
      %v1598 = vpop.f32.mrb[0].mxu0
      %v1599 = vadd.f32 %v1375, %v1598
      %v1600 = vpop.f32.mrb[0].mxu0
      %1601 = vdwg.mxu0
      %1602 = vmatprep.subr.mxu0 0.0
      %1603 = vmatpush1.msra.mxu0 %v1258
      %1604 = vmatprep.subr.mxu0 0.0
      %1605 = vmatpush1.msra.mxu0 %v1259
      %1606 = vmatprep.subr.mxu0 0.0
      %1607 = vmatpush1.msra.mxu0 %v1260
      %1608 = vmatprep.subr.mxu0 0.0
      %1609 = vmatpush1.msra.mxu0 %v1261
      %1610 = vmatprep.subr.mxu0 0.0
      %1611 = vmatpush1.msra.mxu0 %v1262
      %1612 = vmatprep.subr.mxu0 0.0
      %1613 = vmatpush1.msra.mxu0 %v1263
      %1614 = vmatprep.subr.mxu0 0.0
      %1615 = vmatpush1.msra.mxu0 %v1264
      %1616 = vmatprep.subr.mxu0 0.0
      %1617 = vmatpush1.msra.mxu0 %v1265
      %1618 = vmatprep.subr.mxu0 0.0
      %1619 = vmatpush1.msra.mxu0 %v1266
      %1620 = vmatprep.subr.mxu0 0.0
      %1621 = vmatpush1.msra.mxu0 %v1267
      %1622 = vmatprep.subr.mxu0 0.0
      %1623 = vmatpush1.msra.mxu0 %v1268
      %1624 = vmatprep.subr.mxu0 0.0
      %1625 = vmatpush1.msra.mxu0 %v1269
      %1626 = vmatprep.subr.mxu0 0.0
      %1627 = vmatpush1.msra.mxu0 %v1270
      %1628 = vmatprep.subr.mxu0 0.0
      %1629 = vmatpush1.msra.mxu0 %v1271
      %1630 = vmatprep.subr.mxu0 0.0
      %1631 = vmatpush1.msra.mxu0 %v1272
      %1632 = vmatprep.subr.mxu0 0.0
      %1633 = vmatpush1.msra.mxu0 %v1273
      %1634 = vmatprep.subr.mxu0 0.0
      %1635 = vmatpush1.msra.mxu0 %v1274
      %1636 = vmatprep.subr.mxu0 0.0
      %1637 = vmatpush1.msra.mxu0 %v1275
      %1638 = vmatprep.subr.mxu0 0.0
      %1639 = vmatpush1.msra.mxu0 %v1276
      %1640 = vmatprep.subr.mxu0 0.0
      %1641 = vmatpush1.msra.mxu0 %v1277
      %1642 = vmatprep.subr.mxu0 0.0
      %1643 = vmatpush1.msra.mxu0 %v1278
      %1644 = vmatprep.subr.mxu0 0.0
      %1645 = vmatpush1.msra.mxu0 %v1279
      %1646 = vmatprep.subr.mxu0 0.0
      %1647 = vmatpush1.msra.mxu0 %v1280
      %1648 = vmatprep.subr.mxu0 0.0
      %1649 = vmatpush1.msra.mxu0 %v1281
      %1650 = vmatprep.subr.mxu0 0.0
      %1651 = vmatpush1.msra.mxu0 %v1282
      %1652 = vmatprep.subr.mxu0 0.0
      %1653 = vmatpush1.msra.mxu0 %v1283
      %1654 = vmatprep.subr.mxu0 0.0
      %1655 = vmatpush1.msra.mxu0 %v1284
      %1656 = vmatprep.subr.mxu0 0.0
      %1657 = vmatpush1.msra.mxu0 %v1285
      %1658 = vmatprep.subr.mxu0 0.0
      %1659 = vmatpush1.msra.mxu0 %v1286
      %1660 = vmatprep.subr.mxu0 0.0
      %1661 = vmatpush1.msra.mxu0 %v1287
      %1662 = vmatprep.subr.mxu0 0.0
      %1663 = vmatpush1.msra.mxu0 %v1288
      %1664 = vmatprep.subr.mxu0 0.0
      %1665 = vmatpush1.msra.mxu0 %v1289
      %1666 = vmatprep.mubr.f32.mxu0 %v941
      %1667 = vmatmul.mubr.f32.gmra.mrb[0].mxu0 %v940
      %v1668 = vpop.f32.mrb[0].mxu0
      %v1669 = vadd.f32 %v1444, %v1668
      %v1670 = vpop.f32.mrb[0].mxu0
      %1671 = vmatprep.mubr.f32.mxu0 %v950
      %1672 = vmatmul.mubr.f32.gmra.mrb[0].mxu0 %v949
      %v1673 = vpop.f32.mrb[0].mxu0
      %v1674 = vadd.f32 %v1449, %v1673
      %v1675 = vpop.f32.mrb[0].mxu0
      %1676 = vmatprep.mubr.f32.mxu0 %v959
      %1677 = vmatmul.mubr.f32.gmra.mrb[0].mxu0 %v958
      %v1678 = vpop.f32.mrb[0].mxu0
      %v1679 = vadd.f32 %v1454, %v1678
      %v1680 = vpop.f32.mrb[0].mxu0
      %1681 = vmatprep.mubr.f32.mxu0 %v968
      %1682 = vmatmul.mubr.f32.gmra.mrb[0].mxu0 %v967
      %v1683 = vpop.f32.mrb[0].mxu0
      %v1684 = vadd.f32 %v1459, %v1683
      %v1685 = vpop.f32.mrb[0].mxu0
      %1686 = vmatprep.mubr.f32.mxu0 %v977
      %1687 = vmatmul.mubr.f32.gmra.mrb[0].mxu0 %v976
      %v1688 = vpop.f32.mrb[0].mxu0
      %v1689 = vadd.f32 %v1464, %v1688
      %v1690 = vpop.f32.mrb[0].mxu0
      %1691 = vmatprep.mubr.f32.mxu0 %v986
      %1692 = vmatmul.mubr.f32.gmra.mrb[0].mxu0 %v985
      %v1693 = vpop.f32.mrb[0].mxu0
      %v1694 = vadd.f32 %v1469, %v1693
      %v1695 = vpop.f32.mrb[0].mxu0
      %1696 = vmatprep.mubr.f32.mxu0 %v995
      %1697 = vmatmul.mubr.f32.gmra.mrb[0].mxu0 %v994
      %v1698 = vpop.f32.mrb[0].mxu0
      %v1699 = vadd.f32 %v1474, %v1698
      %v1700 = vpop.f32.mrb[0].mxu0
      %1701 = vmatprep.mubr.f32.mxu0 %v1004
      %1702 = vmatmul.mubr.f32.gmra.mrb[0].mxu0 %v1003
      %v1703 = vpop.f32.mrb[0].mxu0
      %v1704 = vadd.f32 %v1479, %v1703
      %v1705 = vpop.f32.mrb[0].mxu0
      %1706 = vmatprep.mubr.f32.mxu0 %v1013
      %1707 = vmatmul.mubr.f32.gmra.mrb[0].mxu0 %v1012
      %v1708 = vpop.f32.mrb[0].mxu0
      %v1709 = vadd.f32 %v1484, %v1708
      %v1710 = vpop.f32.mrb[0].mxu0
      %1711 = vmatprep.mubr.f32.mxu0 %v1022
      %1712 = vmatmul.mubr.f32.gmra.mrb[0].mxu0 %v1021
      %v1713 = vpop.f32.mrb[0].mxu0
      %v1714 = vadd.f32 %v1489, %v1713
      %v1715 = vpop.f32.mrb[0].mxu0
      %1716 = vmatprep.mubr.f32.mxu0 %v1031
      %1717 = vmatmul.mubr.f32.gmra.mrb[0].mxu0 %v1030
      %v1718 = vpop.f32.mrb[0].mxu0
      %v1719 = vadd.f32 %v1494, %v1718
      %v1720 = vpop.f32.mrb[0].mxu0
      %1721 = vmatprep.mubr.f32.mxu0 %v1040
      %1722 = vmatmul.mubr.f32.gmra.mrb[0].mxu0 %v1039
      %v1723 = vpop.f32.mrb[0].mxu0
      %v1724 = vadd.f32 %v1499, %v1723
      %v1725 = vpop.f32.mrb[0].mxu0
      %1726 = vmatprep.mubr.f32.mxu0 %v1049
      %1727 = vmatmul.mubr.f32.gmra.mrb[0].mxu0 %v1048
      %v1728 = vpop.f32.mrb[0].mxu0
      %v1729 = vadd.f32 %v1504, %v1728
      %v1730 = vpop.f32.mrb[0].mxu0
      %1731 = vmatprep.mubr.f32.mxu0 %v1058
      %1732 = vmatmul.mubr.f32.gmra.mrb[0].mxu0 %v1057
      %v1733 = vpop.f32.mrb[0].mxu0
      %v1734 = vadd.f32 %v1509, %v1733
      %v1735 = vpop.f32.mrb[0].mxu0
      %1736 = vmatprep.mubr.f32.mxu0 %v1067
      %1737 = vmatmul.mubr.f32.gmra.mrb[0].mxu0 %v1066
      %v1738 = vpop.f32.mrb[0].mxu0
      %v1739 = vadd.f32 %v1514, %v1738
      %v1740 = vpop.f32.mrb[0].mxu0
      %1741 = vmatprep.mubr.f32.mxu0 %v1076
      %1742 = vmatmul.mubr.f32.gmra.mrb[0].mxu0 %v1075
      %v1743 = vpop.f32.mrb[0].mxu0
      %v1744 = vadd.f32 %v1519, %v1743
      %v1745 = vpop.f32.mrb[0].mxu0
      %1746 = vmatprep.mubr.f32.mxu0 %v1085
      %1747 = vmatmul.mubr.f32.gmra.mrb[0].mxu0 %v1084
      %v1748 = vpop.f32.mrb[0].mxu0
      %v1749 = vadd.f32 %v1524, %v1748
      %v1750 = vpop.f32.mrb[0].mxu0
      %1751 = vmatprep.mubr.f32.mxu0 %v1094
      %1752 = vmatmul.mubr.f32.gmra.mrb[0].mxu0 %v1093
      %v1753 = vpop.f32.mrb[0].mxu0
      %v1754 = vadd.f32 %v1529, %v1753
      %v1755 = vpop.f32.mrb[0].mxu0
      %1756 = vmatprep.mubr.f32.mxu0 %v1103
      %1757 = vmatmul.mubr.f32.gmra.mrb[0].mxu0 %v1102
      %v1758 = vpop.f32.mrb[0].mxu0
      %v1759 = vadd.f32 %v1534, %v1758
      %v1760 = vpop.f32.mrb[0].mxu0
      %1761 = vmatprep.mubr.f32.mxu0 %v1112
      %1762 = vmatmul.mubr.f32.gmra.mrb[0].mxu0 %v1111
      %v1763 = vpop.f32.mrb[0].mxu0
      %v1764 = vadd.f32 %v1539, %v1763
      %v1765 = vpop.f32.mrb[0].mxu0
      %1766 = vmatprep.mubr.f32.mxu0 %v1121
      %1767 = vmatmul.mubr.f32.gmra.mrb[0].mxu0 %v1120
      %v1768 = vpop.f32.mrb[0].mxu0
      %v1769 = vadd.f32 %v1544, %v1768
      %v1770 = vpop.f32.mrb[0].mxu0
      %1771 = vmatprep.mubr.f32.mxu0 %v1130
      %1772 = vmatmul.mubr.f32.gmra.mrb[0].mxu0 %v1129
      %v1773 = vpop.f32.mrb[0].mxu0
      %v1774 = vadd.f32 %v1549, %v1773
      %v1775 = vpop.f32.mrb[0].mxu0
      %1776 = vmatprep.mubr.f32.mxu0 %v1139
      %1777 = vmatmul.mubr.f32.gmra.mrb[0].mxu0 %v1138
      %v1778 = vpop.f32.mrb[0].mxu0
      %v1779 = vadd.f32 %v1554, %v1778
      %v1780 = vpop.f32.mrb[0].mxu0
      %1781 = vmatprep.mubr.f32.mxu0 %v1148
      %1782 = vmatmul.mubr.f32.gmra.mrb[0].mxu0 %v1147
      %v1783 = vpop.f32.mrb[0].mxu0
      %v1784 = vadd.f32 %v1559, %v1783
      %v1785 = vpop.f32.mrb[0].mxu0
      %1786 = vmatprep.mubr.f32.mxu0 %v1157
      %1787 = vmatmul.mubr.f32.gmra.mrb[0].mxu0 %v1156
      %v1788 = vpop.f32.mrb[0].mxu0
      %v1789 = vadd.f32 %v1564, %v1788
      %v1790 = vpop.f32.mrb[0].mxu0
      %1791 = vmatprep.mubr.f32.mxu0 %v1166
      %1792 = vmatmul.mubr.f32.gmra.mrb[0].mxu0 %v1165
      %v1793 = vpop.f32.mrb[0].mxu0
      %v1794 = vadd.f32 %v1569, %v1793
      %v1795 = vpop.f32.mrb[0].mxu0
      %1796 = vmatprep.mubr.f32.mxu0 %v1175
      %1797 = vmatmul.mubr.f32.gmra.mrb[0].mxu0 %v1174
      %v1798 = vpop.f32.mrb[0].mxu0
      %v1799 = vadd.f32 %v1574, %v1798
      %v1800 = vpop.f32.mrb[0].mxu0
      %1801 = vmatprep.mubr.f32.mxu0 %v1184
      %1802 = vmatmul.mubr.f32.gmra.mrb[0].mxu0 %v1183
      %v1803 = vpop.f32.mrb[0].mxu0
      %v1804 = vadd.f32 %v1579, %v1803
      %v1805 = vpop.f32.mrb[0].mxu0
      %1806 = vmatprep.mubr.f32.mxu0 %v1193
      %1807 = vmatmul.mubr.f32.gmra.mrb[0].mxu0 %v1192
      %v1808 = vpop.f32.mrb[0].mxu0
      %v1809 = vadd.f32 %v1584, %v1808
      %v1810 = vpop.f32.mrb[0].mxu0
      %1811 = vmatprep.mubr.f32.mxu0 %v1202
      %1812 = vmatmul.mubr.f32.gmra.mrb[0].mxu0 %v1201
      %v1813 = vpop.f32.mrb[0].mxu0
      %v1814 = vadd.f32 %v1589, %v1813
      %v1815 = vpop.f32.mrb[0].mxu0
      %1816 = vmatprep.mubr.f32.mxu0 %v1211
      %1817 = vmatmul.mubr.f32.gmra.mrb[0].mxu0 %v1210
      %v1818 = vpop.f32.mrb[0].mxu0
      %v1819 = vadd.f32 %v1594, %v1818
      %v1820 = vpop.f32.mrb[0].mxu0
      %1821 = vmatprep.mubr.f32.mxu0 %v1220
      %1822 = vmatmul.mubr.f32.gmra.mrb[0].mxu0 %v1219
      %v1823 = vpop.f32.mrb[0].mxu0
      %v1824 = vadd.f32 %v1599, %v1823
      %v1825 = vpop.f32.mrb[0].mxu0
      %1826 = vdwg.mxu0
      %1827 = vmatprep.subr.mxu0 0.0
      %1828 = vmatpush1.msra.mxu0 %v1290
      %1829 = vmatprep.subr.mxu0 0.0
      %1830 = vmatpush1.msra.mxu0 %v1291
      %1831 = vmatprep.subr.mxu0 0.0
      %1832 = vmatpush1.msra.mxu0 %v1292
      %1833 = vmatprep.subr.mxu0 0.0
      %1834 = vmatpush1.msra.mxu0 %v1293
      %1835 = vmatprep.subr.mxu0 0.0
      %1836 = vmatpush1.msra.mxu0 %v1294
      %1837 = vmatprep.subr.mxu0 0.0
      %1838 = vmatpush1.msra.mxu0 %v1295
      %1839 = vmatprep.subr.mxu0 0.0
      %1840 = vmatpush1.msra.mxu0 %v1296
      %1841 = vmatprep.subr.mxu0 0.0
      %1842 = vmatpush1.msra.mxu0 %v1297
      %1843 = vmatprep.subr.mxu0 0.0
      %1844 = vmatpush1.msra.mxu0 %v1298
      %1845 = vmatprep.subr.mxu0 0.0
      %1846 = vmatpush1.msra.mxu0 %v1299
      %1847 = vmatprep.subr.mxu0 0.0
      %1848 = vmatpush1.msra.mxu0 %v1300
      %1849 = vmatprep.subr.mxu0 0.0
      %1850 = vmatpush1.msra.mxu0 %v1301
      %1851 = vmatprep.subr.mxu0 0.0
      %1852 = vmatpush1.msra.mxu0 %v1302
      %1853 = vmatprep.subr.mxu0 0.0
      %1854 = vmatpush1.msra.mxu0 %v1303
      %1855 = vmatprep.subr.mxu0 0.0
      %1856 = vmatpush1.msra.mxu0 %v1304
      %1857 = vmatprep.subr.mxu0 0.0
      %1858 = vmatpush1.msra.mxu0 %v1305
      %1859 = vmatprep.subr.mxu0 0.0
      %1860 = vmatpush1.msra.mxu0 %v1306
      %1861 = vmatprep.subr.mxu0 0.0
      %1862 = vmatpush1.msra.mxu0 %v1307
      %1863 = vmatprep.subr.mxu0 0.0
      %1864 = vmatpush1.msra.mxu0 %v1308
      %1865 = vmatprep.subr.mxu0 0.0
      %1866 = vmatpush1.msra.mxu0 %v1309
      %1867 = vmatprep.subr.mxu0 0.0
      %1868 = vmatpush1.msra.mxu0 %v1310
      %1869 = vmatprep.subr.mxu0 0.0
      %1870 = vmatpush1.msra.mxu0 %v1311
      %1871 = vmatprep.subr.mxu0 0.0
      %1872 = vmatpush1.msra.mxu0 %v1312
      %1873 = vmatprep.subr.mxu0 0.0
      %1874 = vmatpush1.msra.mxu0 %v1313
      %1875 = vmatprep.subr.mxu0 0.0
      %1876 = vmatpush1.msra.mxu0 %v1314
      %1877 = vmatprep.subr.mxu0 0.0
      %1878 = vmatpush1.msra.mxu0 %v1315
      %1879 = vmatprep.subr.mxu0 0.0
      %1880 = vmatpush1.msra.mxu0 %v1316
      %1881 = vmatprep.subr.mxu0 0.0
      %1882 = vmatpush1.msra.mxu0 %v1317
      %1883 = vmatprep.subr.mxu0 0.0
      %1884 = vmatpush1.msra.mxu0 %v1318
      %1885 = vmatprep.subr.mxu0 0.0
      %1886 = vmatpush1.msra.mxu0 %v1319
      %1887 = vmatprep.subr.mxu0 0.0
      %1888 = vmatpush1.msra.mxu0 %v1320
      %1889 = vmatprep.subr.mxu0 0.0
      %1890 = vmatpush1.msra.mxu0 %v1321
      %1891 = vmatprep.mubr.f32.mxu0 %v943
      %1892 = vmatmul.mubr.f32.gmra.mrb[0].mxu0 %v942
      %v1893 = vpop.f32.mrb[0].mxu0
      %v1894 = vadd.f32 %v1669, %v1893
      %v1895 = vpop.f32.mrb[0].mxu0
      %1896 = vmatprep.mubr.f32.mxu0 %v952
      %1897 = vmatmul.mubr.f32.gmra.mrb[0].mxu0 %v951
      %v1898 = vpop.f32.mrb[0].mxu0
      %v1899 = vadd.f32 %v1674, %v1898
      %v1900 = vpop.f32.mrb[0].mxu0
      %1901 = vmatprep.mubr.f32.mxu0 %v961
      %1902 = vmatmul.mubr.f32.gmra.mrb[0].mxu0 %v960
      %v1903 = vpop.f32.mrb[0].mxu0
      %v1904 = vadd.f32 %v1679, %v1903
      %v1905 = vpop.f32.mrb[0].mxu0
      %1906 = vmatprep.mubr.f32.mxu0 %v970
      %1907 = vmatmul.mubr.f32.gmra.mrb[0].mxu0 %v969
      %v1908 = vpop.f32.mrb[0].mxu0
      %v1909 = vadd.f32 %v1684, %v1908
      %v1910 = vpop.f32.mrb[0].mxu0
      %1911 = vmatprep.mubr.f32.mxu0 %v979
      %1912 = vmatmul.mubr.f32.gmra.mrb[0].mxu0 %v978
      %v1913 = vpop.f32.mrb[0].mxu0
      %v1914 = vadd.f32 %v1689, %v1913
      %v1915 = vpop.f32.mrb[0].mxu0
      %1916 = vmatprep.mubr.f32.mxu0 %v988
      %1917 = vmatmul.mubr.f32.gmra.mrb[0].mxu0 %v987
      %v1918 = vpop.f32.mrb[0].mxu0
      %v1919 = vadd.f32 %v1694, %v1918
      %v1920 = vpop.f32.mrb[0].mxu0
      %1921 = vmatprep.mubr.f32.mxu0 %v997
      %1922 = vmatmul.mubr.f32.gmra.mrb[0].mxu0 %v996
      %v1923 = vpop.f32.mrb[0].mxu0
      %v1924 = vadd.f32 %v1699, %v1923
      %v1925 = vpop.f32.mrb[0].mxu0
      %1926 = vmatprep.mubr.f32.mxu0 %v1006
      %1927 = vmatmul.mubr.f32.gmra.mrb[0].mxu0 %v1005
      %v1928 = vpop.f32.mrb[0].mxu0
      %v1929 = vadd.f32 %v1704, %v1928
      %v1930 = vpop.f32.mrb[0].mxu0
      %1931 = vmatprep.mubr.f32.mxu0 %v1015
      %1932 = vmatmul.mubr.f32.gmra.mrb[0].mxu0 %v1014
      %v1933 = vpop.f32.mrb[0].mxu0
      %v1934 = vadd.f32 %v1709, %v1933
      %v1935 = vpop.f32.mrb[0].mxu0
      %1936 = vmatprep.mubr.f32.mxu0 %v1024
      %1937 = vmatmul.mubr.f32.gmra.mrb[0].mxu0 %v1023
      %v1938 = vpop.f32.mrb[0].mxu0
      %v1939 = vadd.f32 %v1714, %v1938
      %v1940 = vpop.f32.mrb[0].mxu0
      %1941 = vmatprep.mubr.f32.mxu0 %v1033
      %1942 = vmatmul.mubr.f32.gmra.mrb[0].mxu0 %v1032
      %v1943 = vpop.f32.mrb[0].mxu0
      %v1944 = vadd.f32 %v1719, %v1943
      %v1945 = vpop.f32.mrb[0].mxu0
      %1946 = vmatprep.mubr.f32.mxu0 %v1042
      %1947 = vmatmul.mubr.f32.gmra.mrb[0].mxu0 %v1041
      %v1948 = vpop.f32.mrb[0].mxu0
      %v1949 = vadd.f32 %v1724, %v1948
      %v1950 = vpop.f32.mrb[0].mxu0
      %1951 = vmatprep.mubr.f32.mxu0 %v1051
      %1952 = vmatmul.mubr.f32.gmra.mrb[0].mxu0 %v1050
      %v1953 = vpop.f32.mrb[0].mxu0
      %v1954 = vadd.f32 %v1729, %v1953
      %v1955 = vpop.f32.mrb[0].mxu0
      %1956 = vmatprep.mubr.f32.mxu0 %v1060
      %1957 = vmatmul.mubr.f32.gmra.mrb[0].mxu0 %v1059
      %v1958 = vpop.f32.mrb[0].mxu0
      %v1959 = vadd.f32 %v1734, %v1958
      %v1960 = vpop.f32.mrb[0].mxu0
      %1961 = vmatprep.mubr.f32.mxu0 %v1069
      %1962 = vmatmul.mubr.f32.gmra.mrb[0].mxu0 %v1068
      %v1963 = vpop.f32.mrb[0].mxu0
      %v1964 = vadd.f32 %v1739, %v1963
      %v1965 = vpop.f32.mrb[0].mxu0
      %1966 = vmatprep.mubr.f32.mxu0 %v1078
      %1967 = vmatmul.mubr.f32.gmra.mrb[0].mxu0 %v1077
      %v1968 = vpop.f32.mrb[0].mxu0
      %v1969 = vadd.f32 %v1744, %v1968
      %v1970 = vpop.f32.mrb[0].mxu0
      %1971 = vmatprep.mubr.f32.mxu0 %v1087
      %1972 = vmatmul.mubr.f32.gmra.mrb[0].mxu0 %v1086
      %v1973 = vpop.f32.mrb[0].mxu0
      %v1974 = vadd.f32 %v1749, %v1973
      %v1975 = vpop.f32.mrb[0].mxu0
      %1976 = vmatprep.mubr.f32.mxu0 %v1096
      %1977 = vmatmul.mubr.f32.gmra.mrb[0].mxu0 %v1095
      %v1978 = vpop.f32.mrb[0].mxu0
      %v1979 = vadd.f32 %v1754, %v1978
      %v1980 = vpop.f32.mrb[0].mxu0
      %1981 = vmatprep.mubr.f32.mxu0 %v1105
      %1982 = vmatmul.mubr.f32.gmra.mrb[0].mxu0 %v1104
      %v1983 = vpop.f32.mrb[0].mxu0
      %v1984 = vadd.f32 %v1759, %v1983
      %v1985 = vpop.f32.mrb[0].mxu0
      %1986 = vmatprep.mubr.f32.mxu0 %v1114
      %1987 = vmatmul.mubr.f32.gmra.mrb[0].mxu0 %v1113
      %v1988 = vpop.f32.mrb[0].mxu0
      %v1989 = vadd.f32 %v1764, %v1988
      %v1990 = vpop.f32.mrb[0].mxu0
      %1991 = vmatprep.mubr.f32.mxu0 %v1123
      %1992 = vmatmul.mubr.f32.gmra.mrb[0].mxu0 %v1122
      %v1993 = vpop.f32.mrb[0].mxu0
      %v1994 = vadd.f32 %v1769, %v1993
      %v1995 = vpop.f32.mrb[0].mxu0
      %1996 = vmatprep.mubr.f32.mxu0 %v1132
      %1997 = vmatmul.mubr.f32.gmra.mrb[0].mxu0 %v1131
      %v1998 = vpop.f32.mrb[0].mxu0
      %v1999 = vadd.f32 %v1774, %v1998
      %v2000 = vpop.f32.mrb[0].mxu0
      %2001 = vmatprep.mubr.f32.mxu0 %v1141
      %2002 = vmatmul.mubr.f32.gmra.mrb[0].mxu0 %v1140
      %v2003 = vpop.f32.mrb[0].mxu0
      %v2004 = vadd.f32 %v1779, %v2003
      %v2005 = vpop.f32.mrb[0].mxu0
      %2006 = vmatprep.mubr.f32.mxu0 %v1150
      %2007 = vmatmul.mubr.f32.gmra.mrb[0].mxu0 %v1149
      %v2008 = vpop.f32.mrb[0].mxu0
      %v2009 = vadd.f32 %v1784, %v2008
      %v2010 = vpop.f32.mrb[0].mxu0
      %2011 = vmatprep.mubr.f32.mxu0 %v1159
      %2012 = vmatmul.mubr.f32.gmra.mrb[0].mxu0 %v1158
      %v2013 = vpop.f32.mrb[0].mxu0
      %v2014 = vadd.f32 %v1789, %v2013
      %v2015 = vpop.f32.mrb[0].mxu0
      %2016 = vmatprep.mubr.f32.mxu0 %v1168
      %2017 = vmatmul.mubr.f32.gmra.mrb[0].mxu0 %v1167
      %v2018 = vpop.f32.mrb[0].mxu0
      %v2019 = vadd.f32 %v1794, %v2018
      %v2020 = vpop.f32.mrb[0].mxu0
      %2021 = vmatprep.mubr.f32.mxu0 %v1177
      %2022 = vmatmul.mubr.f32.gmra.mrb[0].mxu0 %v1176
      %v2023 = vpop.f32.mrb[0].mxu0
      %v2024 = vadd.f32 %v1799, %v2023
      %v2025 = vpop.f32.mrb[0].mxu0
      %2026 = vmatprep.mubr.f32.mxu0 %v1186
      %2027 = vmatmul.mubr.f32.gmra.mrb[0].mxu0 %v1185
      %v2028 = vpop.f32.mrb[0].mxu0
      %v2029 = vadd.f32 %v1804, %v2028
      %v2030 = vpop.f32.mrb[0].mxu0
      %2031 = vmatprep.mubr.f32.mxu0 %v1195
      %2032 = vmatmul.mubr.f32.gmra.mrb[0].mxu0 %v1194
      %v2033 = vpop.f32.mrb[0].mxu0
      %v2034 = vadd.f32 %v1809, %v2033
      %v2035 = vpop.f32.mrb[0].mxu0
      %2036 = vmatprep.mubr.f32.mxu0 %v1204
      %2037 = vmatmul.mubr.f32.gmra.mrb[0].mxu0 %v1203
      %v2038 = vpop.f32.mrb[0].mxu0
      %v2039 = vadd.f32 %v1814, %v2038
      %v2040 = vpop.f32.mrb[0].mxu0
      %2041 = vmatprep.mubr.f32.mxu0 %v1213
      %2042 = vmatmul.mubr.f32.gmra.mrb[0].mxu0 %v1212
      %v2043 = vpop.f32.mrb[0].mxu0
      %v2044 = vadd.f32 %v1819, %v2043
      %v2045 = vpop.f32.mrb[0].mxu0
      %2046 = vmatprep.mubr.f32.mxu0 %v1222
      %2047 = vmatmul.mubr.f32.gmra.mrb[0].mxu0 %v1221
      %v2048 = vpop.f32.mrb[0].mxu0
      %v2049 = vadd.f32 %v1824, %v2048
      %v2050 = vpop.f32.mrb[0].mxu0
      %2051 = vdwg.mxu0
      %2052 = vmatprep.subr.mxu0 0.0
      %2053 = vmatpush1.msra.mxu0 %v1322
      %2054 = vmatprep.subr.mxu0 0.0
      %2055 = vmatpush1.msra.mxu0 %v1323
      %2056 = vmatprep.subr.mxu0 0.0
      %2057 = vmatpush1.msra.mxu0 %v1324
      %2058 = vmatprep.subr.mxu0 0.0
      %2059 = vmatpush1.msra.mxu0 %v1325
      %2060 = vmatprep.subr.mxu0 0.0
      %2061 = vmatpush1.msra.mxu0 %v1326
      %2062 = vmatprep.subr.mxu0 0.0
      %2063 = vmatpush1.msra.mxu0 %v1327
      %2064 = vmatprep.subr.mxu0 0.0
      %2065 = vmatpush1.msra.mxu0 %v1328
      %2066 = vmatprep.subr.mxu0 0.0
      %2067 = vmatpush1.msra.mxu0 %v1329
      %2068 = vmatprep.subr.mxu0 0.0
      %2069 = vmatpush1.msra.mxu0 %v1330
      %2070 = vmatprep.subr.mxu0 0.0
      %2071 = vmatpush1.msra.mxu0 %v1331
      %2072 = vmatprep.subr.mxu0 0.0
      %2073 = vmatpush1.msra.mxu0 %v1332
      %2074 = vmatprep.subr.mxu0 0.0
      %2075 = vmatpush1.msra.mxu0 %v1333
      %2076 = vmatprep.subr.mxu0 0.0
      %2077 = vmatpush1.msra.mxu0 %v1334
      %2078 = vmatprep.subr.mxu0 0.0
      %2079 = vmatpush1.msra.mxu0 %v1335
      %2080 = vmatprep.subr.mxu0 0.0
      %2081 = vmatpush1.msra.mxu0 %v1336
      %2082 = vmatprep.subr.mxu0 0.0
      %2083 = vmatpush1.msra.mxu0 %v1337
      %2084 = vmatprep.subr.mxu0 0.0
      %2085 = vmatpush1.msra.mxu0 %v1338
      %2086 = vmatprep.subr.mxu0 0.0
      %2087 = vmatpush1.msra.mxu0 %v1339
      %2088 = vmatprep.subr.mxu0 0.0
      %2089 = vmatpush1.msra.mxu0 %v1340
      %2090 = vmatprep.subr.mxu0 0.0
      %2091 = vmatpush1.msra.mxu0 %v1341
      %2092 = vmatprep.subr.mxu0 0.0
      %2093 = vmatpush1.msra.mxu0 %v1342
      %2094 = vmatprep.subr.mxu0 0.0
      %2095 = vmatpush1.msra.mxu0 %v1343
      %2096 = vmatprep.subr.mxu0 0.0
      %2097 = vmatpush1.msra.mxu0 %v1344
      %2098 = vmatprep.subr.mxu0 0.0
      %2099 = vmatpush1.msra.mxu0 %v1345
      %2100 = vmatprep.subr.mxu0 0.0
      %2101 = vmatpush1.msra.mxu0 %v1346
      %2102 = vmatprep.subr.mxu0 0.0
      %2103 = vmatpush1.msra.mxu0 %v1347
      %2104 = vmatprep.subr.mxu0 0.0
      %2105 = vmatpush1.msra.mxu0 %v1348
      %2106 = vmatprep.subr.mxu0 0.0
      %2107 = vmatpush1.msra.mxu0 %v1349
      %2108 = vmatprep.subr.mxu0 0.0
      %2109 = vmatpush1.msra.mxu0 %v1350
      %2110 = vmatprep.subr.mxu0 0.0
      %2111 = vmatpush1.msra.mxu0 %v1351
      %2112 = vmatprep.subr.mxu0 0.0
      %2113 = vmatpush1.msra.mxu0 %v1352
      %2114 = vmatprep.subr.mxu0 0.0
      %2115 = vmatpush1.msra.mxu0 %v1353
      %2116 = vmatprep.mubr.f32.mxu0 %v945
      %2117 = vmatmul.mubr.f32.gmra.mrb[0].mxu0 %v944
      %v2118 = vpop.f32.mrb[0].mxu0
      %v2119 = vadd.f32 %v1894, %v2118
      %v2120 = vpop.f32.mrb[0].mxu0
      %2121 = vmatprep.mubr.f32.mxu0 %v954
      %2122 = vmatmul.mubr.f32.gmra.mrb[0].mxu0 %v953
      %v2123 = vpop.f32.mrb[0].mxu0
      %v2124 = vadd.f32 %v1899, %v2123
      %v2125 = vpop.f32.mrb[0].mxu0
      %2126 = vmatprep.mubr.f32.mxu0 %v963
      %2127 = vmatmul.mubr.f32.gmra.mrb[0].mxu0 %v962
      %v2128 = vpop.f32.mrb[0].mxu0
      %v2129 = vadd.f32 %v1904, %v2128
      %v2130 = vpop.f32.mrb[0].mxu0
      %2131 = vmatprep.mubr.f32.mxu0 %v972
      %2132 = vmatmul.mubr.f32.gmra.mrb[0].mxu0 %v971
      %v2133 = vpop.f32.mrb[0].mxu0
      %v2134 = vadd.f32 %v1909, %v2133
      %v2135 = vpop.f32.mrb[0].mxu0
      %2136 = vmatprep.mubr.f32.mxu0 %v981
      %2137 = vmatmul.mubr.f32.gmra.mrb[0].mxu0 %v980
      %v2138 = vpop.f32.mrb[0].mxu0
      %v2139 = vadd.f32 %v1914, %v2138
      %v2140 = vpop.f32.mrb[0].mxu0
      %2141 = vmatprep.mubr.f32.mxu0 %v990
      %2142 = vmatmul.mubr.f32.gmra.mrb[0].mxu0 %v989
      %v2143 = vpop.f32.mrb[0].mxu0
      %v2144 = vadd.f32 %v1919, %v2143
      %v2145 = vpop.f32.mrb[0].mxu0
      %2146 = vmatprep.mubr.f32.mxu0 %v999
      %2147 = vmatmul.mubr.f32.gmra.mrb[0].mxu0 %v998
      %v2148 = vpop.f32.mrb[0].mxu0
      %v2149 = vadd.f32 %v1924, %v2148
      %v2150 = vpop.f32.mrb[0].mxu0
      %2151 = vmatprep.mubr.f32.mxu0 %v1008
      %2152 = vmatmul.mubr.f32.gmra.mrb[0].mxu0 %v1007
      %v2153 = vpop.f32.mrb[0].mxu0
      %v2154 = vadd.f32 %v1929, %v2153
      %v2155 = vpop.f32.mrb[0].mxu0
      %2156 = vmatprep.mubr.f32.mxu0 %v1017
      %2157 = vmatmul.mubr.f32.gmra.mrb[0].mxu0 %v1016
      %v2158 = vpop.f32.mrb[0].mxu0
      %v2159 = vadd.f32 %v1934, %v2158
      %v2160 = vpop.f32.mrb[0].mxu0
      %2161 = vmatprep.mubr.f32.mxu0 %v1026
      %2162 = vmatmul.mubr.f32.gmra.mrb[0].mxu0 %v1025
      %v2163 = vpop.f32.mrb[0].mxu0
      %v2164 = vadd.f32 %v1939, %v2163
      %v2165 = vpop.f32.mrb[0].mxu0
      %2166 = vmatprep.mubr.f32.mxu0 %v1035
      %2167 = vmatmul.mubr.f32.gmra.mrb[0].mxu0 %v1034
      %v2168 = vpop.f32.mrb[0].mxu0
      %v2169 = vadd.f32 %v1944, %v2168
      %v2170 = vpop.f32.mrb[0].mxu0
      %2171 = vmatprep.mubr.f32.mxu0 %v1044
      %2172 = vmatmul.mubr.f32.gmra.mrb[0].mxu0 %v1043
      %v2173 = vpop.f32.mrb[0].mxu0
      %v2174 = vadd.f32 %v1949, %v2173
      %v2175 = vpop.f32.mrb[0].mxu0
      %2176 = vmatprep.mubr.f32.mxu0 %v1053
      %2177 = vmatmul.mubr.f32.gmra.mrb[0].mxu0 %v1052
      %v2178 = vpop.f32.mrb[0].mxu0
      %v2179 = vadd.f32 %v1954, %v2178
      %v2180 = vpop.f32.mrb[0].mxu0
      %2181 = vmatprep.mubr.f32.mxu0 %v1062
      %2182 = vmatmul.mubr.f32.gmra.mrb[0].mxu0 %v1061
      %v2183 = vpop.f32.mrb[0].mxu0
      %v2184 = vadd.f32 %v1959, %v2183
      %v2185 = vpop.f32.mrb[0].mxu0
      %2186 = vmatprep.mubr.f32.mxu0 %v1071
      %2187 = vmatmul.mubr.f32.gmra.mrb[0].mxu0 %v1070
      %v2188 = vpop.f32.mrb[0].mxu0
      %v2189 = vadd.f32 %v1964, %v2188
      %v2190 = vpop.f32.mrb[0].mxu0
      %2191 = vmatprep.mubr.f32.mxu0 %v1080
      %2192 = vmatmul.mubr.f32.gmra.mrb[0].mxu0 %v1079
      %v2193 = vpop.f32.mrb[0].mxu0
      %v2194 = vadd.f32 %v1969, %v2193
      %v2195 = vpop.f32.mrb[0].mxu0
      %2196 = vmatprep.mubr.f32.mxu0 %v1089
      %2197 = vmatmul.mubr.f32.gmra.mrb[0].mxu0 %v1088
      %v2198 = vpop.f32.mrb[0].mxu0
      %v2199 = vadd.f32 %v1974, %v2198
      %v2200 = vpop.f32.mrb[0].mxu0
      %2201 = vmatprep.mubr.f32.mxu0 %v1098
      %2202 = vmatmul.mubr.f32.gmra.mrb[0].mxu0 %v1097
      %v2203 = vpop.f32.mrb[0].mxu0
      %v2204 = vadd.f32 %v1979, %v2203
      %v2205 = vpop.f32.mrb[0].mxu0
      %2206 = vmatprep.mubr.f32.mxu0 %v1107
      %2207 = vmatmul.mubr.f32.gmra.mrb[0].mxu0 %v1106
      %v2208 = vpop.f32.mrb[0].mxu0
      %v2209 = vadd.f32 %v1984, %v2208
      %v2210 = vpop.f32.mrb[0].mxu0
      %2211 = vmatprep.mubr.f32.mxu0 %v1116
      %2212 = vmatmul.mubr.f32.gmra.mrb[0].mxu0 %v1115
      %v2213 = vpop.f32.mrb[0].mxu0
      %v2214 = vadd.f32 %v1989, %v2213
      %v2215 = vpop.f32.mrb[0].mxu0
      %2216 = vmatprep.mubr.f32.mxu0 %v1125
      %2217 = vmatmul.mubr.f32.gmra.mrb[0].mxu0 %v1124
      %v2218 = vpop.f32.mrb[0].mxu0
      %v2219 = vadd.f32 %v1994, %v2218
      %v2220 = vpop.f32.mrb[0].mxu0
      %2221 = vmatprep.mubr.f32.mxu0 %v1134
      %2222 = vmatmul.mubr.f32.gmra.mrb[0].mxu0 %v1133
      %v2223 = vpop.f32.mrb[0].mxu0
      %v2224 = vadd.f32 %v1999, %v2223
      %v2225 = vpop.f32.mrb[0].mxu0
      %2226 = vmatprep.mubr.f32.mxu0 %v1143
      %2227 = vmatmul.mubr.f32.gmra.mrb[0].mxu0 %v1142
      %v2228 = vpop.f32.mrb[0].mxu0
      %v2229 = vadd.f32 %v2004, %v2228
      %v2230 = vpop.f32.mrb[0].mxu0
      %2231 = vmatprep.mubr.f32.mxu0 %v1152
      %2232 = vmatmul.mubr.f32.gmra.mrb[0].mxu0 %v1151
      %v2233 = vpop.f32.mrb[0].mxu0
      %v2234 = vadd.f32 %v2009, %v2233
      %v2235 = vpop.f32.mrb[0].mxu0
      %2236 = vmatprep.mubr.f32.mxu0 %v1161
      %2237 = vmatmul.mubr.f32.gmra.mrb[0].mxu0 %v1160
      %v2238 = vpop.f32.mrb[0].mxu0
      %v2239 = vadd.f32 %v2014, %v2238
      %v2240 = vpop.f32.mrb[0].mxu0
      %2241 = vmatprep.mubr.f32.mxu0 %v1170
      %2242 = vmatmul.mubr.f32.gmra.mrb[0].mxu0 %v1169
      %v2243 = vpop.f32.mrb[0].mxu0
      %v2244 = vadd.f32 %v2019, %v2243
      %v2245 = vpop.f32.mrb[0].mxu0
      %2246 = vmatprep.mubr.f32.mxu0 %v1179
      %2247 = vmatmul.mubr.f32.gmra.mrb[0].mxu0 %v1178
      %v2248 = vpop.f32.mrb[0].mxu0
      %v2249 = vadd.f32 %v2024, %v2248
      %v2250 = vpop.f32.mrb[0].mxu0
      %2251 = vmatprep.mubr.f32.mxu0 %v1188
      %2252 = vmatmul.mubr.f32.gmra.mrb[0].mxu0 %v1187
      %v2253 = vpop.f32.mrb[0].mxu0
      %v2254 = vadd.f32 %v2029, %v2253
      %v2255 = vpop.f32.mrb[0].mxu0
      %2256 = vmatprep.mubr.f32.mxu0 %v1197
      %2257 = vmatmul.mubr.f32.gmra.mrb[0].mxu0 %v1196
      %v2258 = vpop.f32.mrb[0].mxu0
      %v2259 = vadd.f32 %v2034, %v2258
      %v2260 = vpop.f32.mrb[0].mxu0
      %2261 = vmatprep.mubr.f32.mxu0 %v1206
      %2262 = vmatmul.mubr.f32.gmra.mrb[0].mxu0 %v1205
      %v2263 = vpop.f32.mrb[0].mxu0
      %v2264 = vadd.f32 %v2039, %v2263
      %v2265 = vpop.f32.mrb[0].mxu0
      %2266 = vmatprep.mubr.f32.mxu0 %v1215
      %2267 = vmatmul.mubr.f32.gmra.mrb[0].mxu0 %v1214
      %v2268 = vpop.f32.mrb[0].mxu0
      %v2269 = vadd.f32 %v2044, %v2268
      %v2270 = vpop.f32.mrb[0].mxu0
      %2271 = vmatprep.mubr.f32.mxu0 %v1224
      %2272 = vmatmul.mubr.f32.gmra.mrb[0].mxu0 %v1223
      %v2273 = vpop.f32.mrb[0].mxu0
      %v2274 = vadd.f32 %v2049, %v2273
      %v2275 = vpop.f32.mrb[0].mxu0
      %2276 = vdwg.mxu0
      %2277 = vmatprep.subr.mxu0 0.0
      %2278 = vmatpush1.msra.mxu0 %v1354
      %2279 = vmatprep.subr.mxu0 0.0
      %2280 = vmatpush1.msra.mxu0 %v1355
      %2281 = vmatprep.subr.mxu0 0.0
      %2282 = vmatpush1.msra.mxu0 %v1356
      %2283 = vmatprep.subr.mxu0 0.0
      %2284 = vmatpush1.msra.mxu0 %v1357
      %2285 = vmatprep.subr.mxu0 0.0
      %2286 = vmatpush1.msra.mxu0 %v1358
      %2287 = vmatprep.subr.mxu0 0.0
      %2288 = vmatpush1.msra.mxu0 %v1359
      %2289 = vmatprep.subr.mxu0 0.0
      %2290 = vmatpush1.msra.mxu0 %v1360
      %2291 = vmatprep.subr.mxu0 0.0
      %2292 = vmatpush1.msra.mxu0 %v1361
      %2293 = vmatprep.subr.mxu0 0.0
      %2294 = vmatpush1.msra.mxu0 %v1362
      %2295 = vmatprep.subr.mxu0 0.0
      %2296 = vmatpush1.msra.mxu0 %v1363
      %2297 = vmatprep.subr.mxu0 0.0
      %2298 = vmatpush1.msra.mxu0 %v1364
      %2299 = vmatprep.subr.mxu0 0.0
      %2300 = vmatpush1.msra.mxu0 %v1365
      %2301 = vmatprep.subr.mxu0 0.0
      %2302 = vmatpush1.msra.mxu0 %v1366
      %2303 = vmatprep.subr.mxu0 0.0
      %2304 = vmatpush1.msra.mxu0 %v1367
      %2305 = vmatprep.subr.mxu0 0.0
      %2306 = vmatpush1.msra.mxu0 %v1368
      %2307 = vmatprep.subr.mxu0 0.0
      %2308 = vmatpush1.msra.mxu0 %v1369
      %2309 = vmatprep.subr.mxu0 0.0
      %2310 = vmatpush1.msra.mxu0 0.0
      %2311 = vmatprep.subr.mxu0 0.0
      %2312 = vmatpush1.msra.mxu0 0.0
      %2313 = vmatprep.subr.mxu0 0.0
      %2314 = vmatpush1.msra.mxu0 0.0
      %2315 = vmatprep.subr.mxu0 0.0
      %2316 = vmatpush1.msra.mxu0 0.0
      %2317 = vmatprep.subr.mxu0 0.0
      %2318 = vmatpush1.msra.mxu0 0.0
      %2319 = vmatprep.subr.mxu0 0.0
      %2320 = vmatpush1.msra.mxu0 0.0
      %2321 = vmatprep.subr.mxu0 0.0
      %2322 = vmatpush1.msra.mxu0 0.0
      %2323 = vmatprep.subr.mxu0 0.0
      %2324 = vmatpush1.msra.mxu0 0.0
      %2325 = vmatprep.subr.mxu0 0.0
      %2326 = vmatpush1.msra.mxu0 0.0
      %2327 = vmatprep.subr.mxu0 0.0
      %2328 = vmatpush1.msra.mxu0 0.0
      %2329 = vmatprep.subr.mxu0 0.0
      %2330 = vmatpush1.msra.mxu0 0.0
      %2331 = vmatprep.subr.mxu0 0.0
      %2332 = vmatpush1.msra.mxu0 0.0
      %2333 = vmatprep.subr.mxu0 0.0
      %2334 = vmatpush1.msra.mxu0 0.0
      %2335 = vmatprep.subr.mxu0 0.0
      %2336 = vmatpush1.msra.mxu0 0.0
      %2337 = vmatprep.subr.mxu0 0.0
      %2338 = vmatpush1.msra.mxu0 0.0
      %2339 = vmatprep.subr.mxu0 0.0
      %2340 = vmatpush1.msra.mxu0 0.0
      %2341 = vmatprep.mubr.f32.mxu0 0.0
      %2342 = vmatmul.mubr.f32.gmra.mrb[0].mxu0 %v946
      %v2343 = vpop.f32.mrb[0].mxu0
      %v2344 = vadd.f32 %v2119, %v2343
      %v2345 = vpop.f32.mrb[0].mxu0
      %2346 = vmatprep.mubr.f32.mxu0 0.0
      %2347 = vmatmul.mubr.f32.gmra.mrb[0].mxu0 %v955
      %v2348 = vpop.f32.mrb[0].mxu0
      %v2349 = vadd.f32 %v2124, %v2348
      %v2350 = vpop.f32.mrb[0].mxu0
      %2351 = vmatprep.mubr.f32.mxu0 0.0
      %2352 = vmatmul.mubr.f32.gmra.mrb[0].mxu0 %v964
      %v2353 = vpop.f32.mrb[0].mxu0
      %v2354 = vadd.f32 %v2129, %v2353
      %v2355 = vpop.f32.mrb[0].mxu0
      %2356 = vmatprep.mubr.f32.mxu0 0.0
      %2357 = vmatmul.mubr.f32.gmra.mrb[0].mxu0 %v973
      %v2358 = vpop.f32.mrb[0].mxu0
      %v2359 = vadd.f32 %v2134, %v2358
      %v2360 = vpop.f32.mrb[0].mxu0
      %2361 = vmatprep.mubr.f32.mxu0 0.0
      %2362 = vmatmul.mubr.f32.gmra.mrb[0].mxu0 %v982
      %v2363 = vpop.f32.mrb[0].mxu0
      %v2364 = vadd.f32 %v2139, %v2363
      %v2365 = vpop.f32.mrb[0].mxu0
      %2366 = vmatprep.mubr.f32.mxu0 0.0
      %2367 = vmatmul.mubr.f32.gmra.mrb[0].mxu0 %v991
      %v2368 = vpop.f32.mrb[0].mxu0
      %v2369 = vadd.f32 %v2144, %v2368
      %v2370 = vpop.f32.mrb[0].mxu0
      %2371 = vmatprep.mubr.f32.mxu0 0.0
      %2372 = vmatmul.mubr.f32.gmra.mrb[0].mxu0 %v1000
      %v2373 = vpop.f32.mrb[0].mxu0
      %v2374 = vadd.f32 %v2149, %v2373
      %v2375 = vpop.f32.mrb[0].mxu0
      %2376 = vmatprep.mubr.f32.mxu0 0.0
      %2377 = vmatmul.mubr.f32.gmra.mrb[0].mxu0 %v1009
      %v2378 = vpop.f32.mrb[0].mxu0
      %v2379 = vadd.f32 %v2154, %v2378
      %v2380 = vpop.f32.mrb[0].mxu0
      %2381 = vmatprep.mubr.f32.mxu0 0.0
      %2382 = vmatmul.mubr.f32.gmra.mrb[0].mxu0 %v1018
      %v2383 = vpop.f32.mrb[0].mxu0
      %v2384 = vadd.f32 %v2159, %v2383
      %v2385 = vpop.f32.mrb[0].mxu0
      %2386 = vmatprep.mubr.f32.mxu0 0.0
      %2387 = vmatmul.mubr.f32.gmra.mrb[0].mxu0 %v1027
      %v2388 = vpop.f32.mrb[0].mxu0
      %v2389 = vadd.f32 %v2164, %v2388
      %v2390 = vpop.f32.mrb[0].mxu0
      %2391 = vmatprep.mubr.f32.mxu0 0.0
      %2392 = vmatmul.mubr.f32.gmra.mrb[0].mxu0 %v1036
      %v2393 = vpop.f32.mrb[0].mxu0
      %v2394 = vadd.f32 %v2169, %v2393
      %v2395 = vpop.f32.mrb[0].mxu0
      %2396 = vmatprep.mubr.f32.mxu0 0.0
      %2397 = vmatmul.mubr.f32.gmra.mrb[0].mxu0 %v1045
      %v2398 = vpop.f32.mrb[0].mxu0
      %v2399 = vadd.f32 %v2174, %v2398
      %v2400 = vpop.f32.mrb[0].mxu0
      %2401 = vmatprep.mubr.f32.mxu0 0.0
      %2402 = vmatmul.mubr.f32.gmra.mrb[0].mxu0 %v1054
      %v2403 = vpop.f32.mrb[0].mxu0
      %v2404 = vadd.f32 %v2179, %v2403
      %v2405 = vpop.f32.mrb[0].mxu0
      %2406 = vmatprep.mubr.f32.mxu0 0.0
      %2407 = vmatmul.mubr.f32.gmra.mrb[0].mxu0 %v1063
      %v2408 = vpop.f32.mrb[0].mxu0
      %v2409 = vadd.f32 %v2184, %v2408
      %v2410 = vpop.f32.mrb[0].mxu0
      %2411 = vmatprep.mubr.f32.mxu0 0.0
      %2412 = vmatmul.mubr.f32.gmra.mrb[0].mxu0 %v1072
      %v2413 = vpop.f32.mrb[0].mxu0
      %v2414 = vadd.f32 %v2189, %v2413
      %v2415 = vpop.f32.mrb[0].mxu0
      %2416 = vmatprep.mubr.f32.mxu0 0.0
      %2417 = vmatmul.mubr.f32.gmra.mrb[0].mxu0 %v1081
      %v2418 = vpop.f32.mrb[0].mxu0
      %v2419 = vadd.f32 %v2194, %v2418
      %v2420 = vpop.f32.mrb[0].mxu0
      %2421 = vmatprep.mubr.f32.mxu0 0.0
      %2422 = vmatmul.mubr.f32.gmra.mrb[0].mxu0 %v1090
      %v2423 = vpop.f32.mrb[0].mxu0
      %v2424 = vadd.f32 %v2199, %v2423
      %v2425 = vpop.f32.mrb[0].mxu0
      %2426 = vmatprep.mubr.f32.mxu0 0.0
      %2427 = vmatmul.mubr.f32.gmra.mrb[0].mxu0 %v1099
      %v2428 = vpop.f32.mrb[0].mxu0
      %v2429 = vadd.f32 %v2204, %v2428
      %v2430 = vpop.f32.mrb[0].mxu0
      %2431 = vmatprep.mubr.f32.mxu0 0.0
      %2432 = vmatmul.mubr.f32.gmra.mrb[0].mxu0 %v1108
      %v2433 = vpop.f32.mrb[0].mxu0
      %v2434 = vadd.f32 %v2209, %v2433
      %v2435 = vpop.f32.mrb[0].mxu0
      %2436 = vmatprep.mubr.f32.mxu0 0.0
      %2437 = vmatmul.mubr.f32.gmra.mrb[0].mxu0 %v1117
      %v2438 = vpop.f32.mrb[0].mxu0
      %v2439 = vadd.f32 %v2214, %v2438
      %v2440 = vpop.f32.mrb[0].mxu0
      %2441 = vmatprep.mubr.f32.mxu0 0.0
      %2442 = vmatmul.mubr.f32.gmra.mrb[0].mxu0 %v1126
      %v2443 = vpop.f32.mrb[0].mxu0
      %v2444 = vadd.f32 %v2219, %v2443
      %v2445 = vpop.f32.mrb[0].mxu0
      %2446 = vmatprep.mubr.f32.mxu0 0.0
      %2447 = vmatmul.mubr.f32.gmra.mrb[0].mxu0 %v1135
      %v2448 = vpop.f32.mrb[0].mxu0
      %v2449 = vadd.f32 %v2224, %v2448
      %v2450 = vpop.f32.mrb[0].mxu0
      %2451 = vmatprep.mubr.f32.mxu0 0.0
      %2452 = vmatmul.mubr.f32.gmra.mrb[0].mxu0 %v1144
      %v2453 = vpop.f32.mrb[0].mxu0
      %v2454 = vadd.f32 %v2229, %v2453
      %v2455 = vpop.f32.mrb[0].mxu0
      %2456 = vmatprep.mubr.f32.mxu0 0.0
      %2457 = vmatmul.mubr.f32.gmra.mrb[0].mxu0 %v1153
      %v2458 = vpop.f32.mrb[0].mxu0
      %v2459 = vadd.f32 %v2234, %v2458
      %v2460 = vpop.f32.mrb[0].mxu0
      %2461 = vmatprep.mubr.f32.mxu0 0.0
      %2462 = vmatmul.mubr.f32.gmra.mrb[0].mxu0 %v1162
      %v2463 = vpop.f32.mrb[0].mxu0
      %v2464 = vadd.f32 %v2239, %v2463
      %v2465 = vpop.f32.mrb[0].mxu0
      %2466 = vmatprep.mubr.f32.mxu0 0.0
      %2467 = vmatmul.mubr.f32.gmra.mrb[0].mxu0 %v1171
      %v2468 = vpop.f32.mrb[0].mxu0
      %v2469 = vadd.f32 %v2244, %v2468
      %v2470 = vpop.f32.mrb[0].mxu0
      %2471 = vmatprep.mubr.f32.mxu0 0.0
      %2472 = vmatmul.mubr.f32.gmra.mrb[0].mxu0 %v1180
      %v2473 = vpop.f32.mrb[0].mxu0
      %v2474 = vadd.f32 %v2249, %v2473
      %v2475 = vpop.f32.mrb[0].mxu0
      %2476 = vmatprep.mubr.f32.mxu0 0.0
      %2477 = vmatmul.mubr.f32.gmra.mrb[0].mxu0 %v1189
      %v2478 = vpop.f32.mrb[0].mxu0
      %v2479 = vadd.f32 %v2254, %v2478
      %v2480 = vpop.f32.mrb[0].mxu0
      %2481 = vmatprep.mubr.f32.mxu0 0.0
      %2482 = vmatmul.mubr.f32.gmra.mrb[0].mxu0 %v1198
      %v2483 = vpop.f32.mrb[0].mxu0
      %v2484 = vadd.f32 %v2259, %v2483
      %v2485 = vpop.f32.mrb[0].mxu0
      %2486 = vmatprep.mubr.f32.mxu0 0.0
      %2487 = vmatmul.mubr.f32.gmra.mrb[0].mxu0 %v1207
      %v2488 = vpop.f32.mrb[0].mxu0
      %v2489 = vadd.f32 %v2264, %v2488
      %v2490 = vpop.f32.mrb[0].mxu0
      %2491 = vmatprep.mubr.f32.mxu0 0.0
      %2492 = vmatmul.mubr.f32.gmra.mrb[0].mxu0 %v1216
      %v2493 = vpop.f32.mrb[0].mxu0
      %v2494 = vadd.f32 %v2269, %v2493
      %v2495 = vpop.f32.mrb[0].mxu0
      %2496 = vmatprep.mubr.f32.mxu0 0.0
      %2497 = vmatmul.mubr.f32.gmra.mrb[0].mxu0 %v1225
      %v2498 = vpop.f32.mrb[0].mxu0
      %v2499 = vadd.f32 %v2274, %v2498
      %v2500 = vpop.f32.mrb[0].mxu0
      %2501 = vdwg.mxu0
      %2502 = vst [vmem:[%s209] sm:$0xff] %v2344
      %2503 = vst [vmem:[%s209 + $0x8] sm:$0xff] %v2349
      %2504 = vst [vmem:[%s209 + $0x10] sm:$0xff] %v2354
      %2505 = vst [vmem:[%s209 + $0x18] sm:$0xff] %v2359
      %2506 = vst [vmem:[%s209 + $0x20] sm:$0xff] %v2364
      %2507 = vst [vmem:[%s209 + $0x28] sm:$0xff] %v2369
      %2508 = vst [vmem:[%s209 + $0x30] sm:$0xff] %v2374
      %2509 = vst [vmem:[%s209 + $0x38] sm:$0xff] %v2379
      %2510 = vst [vmem:[%s209 + $0x40] sm:$0xff] %v2384
      %2511 = vst [vmem:[%s209 + $0x48] sm:$0xff] %v2389
      %2512 = vst [vmem:[%s209 + $0x50] sm:$0xff] %v2394
      %2513 = vst [vmem:[%s209 + $0x58] sm:$0xff] %v2399
      %2514 = vst [vmem:[%s209 + $0x60] sm:$0xff] %v2404
      %2515 = vst [vmem:[%s209 + $0x68] sm:$0xff] %v2409
      %2516 = vst [vmem:[%s209 + $0x70] sm:$0xff] %v2414
      %2517 = vst [vmem:[%s209 + $0x78] sm:$0xff] %v2419
      %2518 = vst [vmem:[%s209 + $0x80] sm:$0xff] %v2424
      %2519 = vst [vmem:[%s209 + $0x88] sm:$0xff] %v2429
      %2520 = vst [vmem:[%s209 + $0x90] sm:$0xff] %v2434
      %2521 = vst [vmem:[%s209 + $0x98] sm:$0xff] %v2439
      %2522 = vst [vmem:[%s209 + $0xa0] sm:$0xff] %v2444
      %2523 = vst [vmem:[%s209 + $0xa8] sm:$0xff] %v2449
      %2524 = vst [vmem:[%s209 + $0xb0] sm:$0xff] %v2454
      %2525 = vst [vmem:[%s209 + $0xb8] sm:$0xff] %v2459
      %2526 = vst [vmem:[%s209 + $0xc0] sm:$0xff] %v2464
      %2527 = vst [vmem:[%s209 + $0xc8] sm:$0xff] %v2469
      %2528 = vst [vmem:[%s209 + $0xd0] sm:$0xff] %v2474
      %2529 = vst [vmem:[%s209 + $0xd8] sm:$0xff] %v2479
      %2530 = vst [vmem:[%s209 + $0xe0] sm:$0xff] %v2484
      %2531 = vst [vmem:[%s209 + $0xe8] sm:$0xff] %v2489
      %2532 = vst [vmem:[%s209 + $0xf0] sm:$0xff] %v2494
      %2533 = vst [vmem:[%s209 + $0xf8] sm:$0xff] %v2499
      %v2534 = vadd.f32 %v2344, %v2349
      %v2535 = vadd.f32 %v2534, %v2354
      %v2536 = vadd.f32 %v2535, %v2359
      %v2537 = vadd.f32 %v2536, %v2364
      %v2538 = vadd.f32 %v2537, %v2369
      %v2539 = vadd.f32 %v2538, %v2374
      %v2540 = vadd.f32 %v2539, %v2379
      %v2541 = vadd.f32 %v2540, %v2384
      %v2542 = vadd.f32 %v2541, %v2389
      %v2543 = vadd.f32 %v2542, %v2394
      %v2544 = vadd.f32 %v2543, %v2399
      %v2545 = vadd.f32 %v2544, %v2404
      %v2546 = vadd.f32 %v2545, %v2409
      %v2547 = vadd.f32 %v2546, %v2414
      %v2548 = vadd.f32 %v2547, %v2419
      %v2549 = vadd.f32 %v2548, %v2424
      %v2550 = vadd.f32 %v2549, %v2429
      %v2551 = vadd.f32 %v2550, %v2434
      %v2552 = vadd.f32 %v2551, %v2439
      %v2553 = vadd.f32 %v2552, %v2444
      %v2554 = vadd.f32 %v2553, %v2449
      %v2555 = vadd.f32 %v2554, %v2454
      %v2556 = vadd.f32 %v2555, %v2459
      %v2557 = vadd.f32 %v2556, %v2464
      %v2558 = vadd.f32 %v2557, %v2469
      %v2559 = vadd.f32 %v2558, %v2474
      %v2560 = vadd.f32 %v2559, %v2479
      %v2561 = vadd.f32 %v2560, %v2484
      %v2562 = vadd.f32 %v2561, %v2489
      %v2563 = vadd.f32 %v2562, %v2494
      %v2564 = vadd.f32 %v2563, %v2499
      %v2565 = vrot.slane %v2564, 4
      %v2566 = vadd.f32 %v2564, %v2565
      %v2567 = vrot.slane %v2566, 2
      %v2568 = vadd.f32 %v2566, %v2567
      %v2569 = vrot.slane %v2568, 1
      %v2570 = vadd.f32 %v2568, %v2569
      %v2571 = vmul.f32 %v2344, %v2344
      %v2572 = vmul.f32 %v2349, %v2349
      %v2573 = vmul.f32 %v2354, %v2354
      %v2574 = vmul.f32 %v2359, %v2359
      %v2575 = vmul.f32 %v2364, %v2364
      %v2576 = vmul.f32 %v2369, %v2369
      %v2577 = vmul.f32 %v2374, %v2374
      %v2578 = vmul.f32 %v2379, %v2379
      %v2579 = vmul.f32 %v2384, %v2384
      %v2580 = vmul.f32 %v2389, %v2389
      %v2581 = vmul.f32 %v2394, %v2394
      %v2582 = vmul.f32 %v2399, %v2399
      %v2583 = vmul.f32 %v2404, %v2404
      %v2584 = vmul.f32 %v2409, %v2409
      %v2585 = vmul.f32 %v2414, %v2414
      %v2586 = vmul.f32 %v2419, %v2419
      %v2587 = vmul.f32 %v2424, %v2424
      %v2588 = vmul.f32 %v2429, %v2429
      %v2589 = vmul.f32 %v2434, %v2434
      %v2590 = vmul.f32 %v2439, %v2439
      %v2591 = vmul.f32 %v2444, %v2444
      %v2592 = vmul.f32 %v2449, %v2449
      %v2593 = vmul.f32 %v2454, %v2454
      %v2594 = vmul.f32 %v2459, %v2459
      %v2595 = vmul.f32 %v2464, %v2464
      %v2596 = vmul.f32 %v2469, %v2469
      %v2597 = vmul.f32 %v2474, %v2474
      %v2598 = vmul.f32 %v2479, %v2479
      %v2599 = vmul.f32 %v2484, %v2484
      %v2600 = vmul.f32 %v2489, %v2489
      %v2601 = vmul.f32 %v2494, %v2494
      %v2602 = vmul.f32 %v2499, %v2499
      %v2603 = vadd.f32 %v2571, %v2572
      %v2604 = vadd.f32 %v2603, %v2573
      %v2605 = vadd.f32 %v2604, %v2574
      %v2606 = vadd.f32 %v2605, %v2575
      %v2607 = vadd.f32 %v2606, %v2576
      %v2608 = vadd.f32 %v2607, %v2577
      %v2609 = vadd.f32 %v2608, %v2578
      %v2610 = vadd.f32 %v2609, %v2579
      %v2611 = vadd.f32 %v2610, %v2580
      %v2612 = vadd.f32 %v2611, %v2581
      %v2613 = vadd.f32 %v2612, %v2582
      %v2614 = vadd.f32 %v2613, %v2583
      %v2615 = vadd.f32 %v2614, %v2584
      %v2616 = vadd.f32 %v2615, %v2585
      %v2617 = vadd.f32 %v2616, %v2586
      %v2618 = vadd.f32 %v2617, %v2587
      %v2619 = vadd.f32 %v2618, %v2588
      %v2620 = vadd.f32 %v2619, %v2589
      %v2621 = vadd.f32 %v2620, %v2590
      %v2622 = vadd.f32 %v2621, %v2591
      %v2623 = vadd.f32 %v2622, %v2592
      %v2624 = vadd.f32 %v2623, %v2593
      %v2625 = vadd.f32 %v2624, %v2594
      %v2626 = vadd.f32 %v2625, %v2595
      %v2627 = vadd.f32 %v2626, %v2596
      %v2628 = vadd.f32 %v2627, %v2597
      %v2629 = vadd.f32 %v2628, %v2598
      %v2630 = vadd.f32 %v2629, %v2599
      %v2631 = vadd.f32 %v2630, %v2600
      %v2632 = vadd.f32 %v2631, %v2601
      %v2633 = vadd.f32 %v2632, %v2602
      %v2634 = vrot.slane %v2633, 4
      %v2635 = vadd.f32 %v2633, %v2634
      %v2636 = vrot.slane %v2635, 2
      %v2637 = vadd.f32 %v2635, %v2636
      %v2638 = vrot.slane %v2637, 1
      %v2639 = vadd.f32 %v2637, %v2638
      %vm2640 = vcmask 1040384
      %v2641 = vsel %vm2640, %v2570, %v2639
      %2642 = vst [vmem:[%s214] sm:$0x3] %v2641
      %s2643 = smul.u32 32, %s16
      %p2644 = scmp.lt.s32.totalorder %s2643, 63
      %s2645 = scalar_select %p2644, %s2643, 63
      %s2646 = smul.addr %s2645, 8
      %s2647 = scalar_lea.vmem %s3, %s2646
      %p2648 = scmp.lt.s32.totalorder %s16, 1
      %s2649 = scalar_select %p2648, %s16, 1
      %s2650 = smul.addr %s2649, 2
      %s2651 = scalar_lea.vmem %s4, %s2650
      // Predicated region
      $region33: #{block21d_forward.5} parent=31 // pred_check
        %p2652 = pneg %p102
      $region34: #{block21d_forward.5} parent=31 // pred_check_branch
        %2654 = sbr.rel (%p2652) target = $region36
      $region35: #{block21d_forward.5} parent=31 // pred_region
        %s2655 = smul.u32 32, %s16
      $region36: #{block21d_forward.5} parent=31 // pred_fallthru
        _
      // Predicated region
      $region37: #{block21d_forward.5} parent=31 // pred_check
        %p2656 = pneg %p128
      $region38: #{block21d_forward.5} parent=31 // pred_check_branch
        %2658 = sbr.rel (%p2656) target = $region40
      $region39: #{block21d_forward.5} parent=31 // pred_region
        _
      $region40: #{block21d_forward.5} parent=31 // pred_fallthru
        _
    $region32: #{block21d_forward.5} parent=5 // pred_fallthru
      _
    %p2659 = scmp.le.s32.totalorder 2, %s11
    // Predicated region
    $region41: #{block21d_forward.5} parent=5 // pred_check
      %p2660 = pneg %p2659
    $region42: #{block21d_forward.5} parent=5 // pred_check_branch
      %2662 = sbr.rel (%p2660) target = $region44
    $region43: #{block21d_forward.5} parent=5 // pred_region
      %s2663 = ssub.s32 %s11, 2
      // Predicated region
      $region45: #{block21d_forward.5} parent=43 // pred_check
        %p2664 = pneg %p108
      $region46: #{block21d_forward.5} parent=43 // pred_check_branch
        %2666 = sbr.rel (%p2664) target = $region48
      $region47: #{block21d_forward.5} parent=43 // pred_region
        %s2667 = smul.u32 32, %s17
        %p2668 = scmp.lt.s32.totalorder %s2667, 63
        %s2669 = scalar_select %p2668, %s2667, 63
        %s2670 = smul.addr %s2669, 8
        %s2671 = scalar_lea.vmem %s3, %s2670
      $region48: #{block21d_forward.5} parent=43 // pred_fallthru
        _
      // Predicated region
      $region49: #{block21d_forward.5} parent=43 // pred_check
        %p2672 = pneg %p134
      $region50: #{block21d_forward.5} parent=43 // pred_check_branch
        %2674 = sbr.rel (%p2672) target = $region52
      $region51: #{block21d_forward.5} parent=43 // pred_region
        %p2675 = scmp.lt.s32.totalorder %s17, 1
        %s2676 = scalar_select %p2675, %s17, 1
        %s2677 = smul.addr %s2676, 2
        %s2678 = scalar_lea.vmem %s4, %s2677
      $region52: #{block21d_forward.5} parent=43 // pred_fallthru
        _
    $region44: #{block21d_forward.5} parent=5 // pred_fallthru
      _
  $region6: #{block21d_forward.5} parent=0 // loop_footer
    %s15 = sadd.s32 1, %s11
  $region7: #{block21d_forward.5} parent=0 // loop_footer_branch
    %10 = sbr.rel target = $region3
  $region8: #{block21d_forward.5} parent=0 // loop_exit
    _

// kernel: block21d_forward.7
$region0: #{block21d_forward.7}
  #allocation0 [shape = 'u32[]', space=smem, size = 0x4, offset = 0x4, fixed_abs, tag = 'smem constant byte address 0x4 - core index']
  #allocation1 [shape = 'u32[144,128]{1,0:T(1,128)}', space=vmem, size = 0x12000, scoped, tag = 'internal scratch']
  #allocation2 [shape = 'f32[4,10,10,128]{3,2,1,0:T(8,128)}', space=vmem, size = 0x50000, scoped, tag = 'scratch operand']
  #allocation3 [shape = 'f32[256,1152]{1,0:T(8,128)}', space=vmem, size = 0x120000, scoped, tag = 'scratch operand']
  %s0 = inlined_call_operand.vmem [shape: f32[8,8,8,128], index: 0, kind: input, shape index: {}]
  %s1 = inlined_call_operand.vmem [shape: f32[1,128], index: 1, kind: input, shape index: {}]
  %s2 = inlined_call_operand.vmem [shape: f32[1,128], index: 2, kind: input, shape index: {}]
  %s3 = inlined_call_operand.vmem [shape: f32[1152,128], index: 3, kind: input, shape index: {}]
  %s4 = inlined_call_operand.vmem [shape: f32[1,128], index: 4, kind: input, shape index: {}]
  %s5 = inlined_call_operand.vmem [shape: f32[512,128], index: 5, kind: output, shape index: {0}]
  %s6 = inlined_call_operand.vmem [shape: f32[2,2,128], index: 6, kind: output, shape index: {1}]
  %7 = xla_tuple %s5, %s6
  %s8 = sld [smem:[#allocation0]]
  $region61: #{block21d_forward.7} parent=0
    _
  %s10 = ssub.s32 1, %s8
  %s11 = scalar_select 0, %s10, %s8
  loop: start=0, step=1, limit=4
  $region2: #{block21d_forward.7} parent=0 // loop_pre_header
    _
  $region3: #{block21d_forward.7} parent=0 // loop_header
    %s13 = sphi 0, %s17
    %p14 = scmp.ge.s32.totalorder %s13, 4
    %s23 = sphi 0, %s25
    %s26 = sphi 0, %s23
    %s27 = sphi 0, %s26
    %s43 = sphi 0, %s27
    %s47 = sphi 0, %s47
    %s49 = sphi 0, %s47
    %s50 = sphi 0, %s49
    %s64 = sphi 0, %s50
    %s68 = sphi 0, %s68
    %s70 = sphi 0, %s68
    %s71 = sphi 0, %s70
    %s85 = sphi 0, %s71
    %s89 = sphi 0, %s89
    %s91 = sphi 0, %s89
    %s92 = sphi 0, %s91
    %s106 = sphi 0, %s92
    %s110 = sphi 0, %s110
    %s112 = sphi 0, %s110
    %s113 = sphi 0, %s112
    %s127 = sphi 0, %s113
    %s133 = sphi 0, %s135
    %s136 = sphi 0, %s133
    %s137 = sphi 0, %s136
    %s153 = sphi 0, %s137
    %s159 = sphi 0, %s161
    %s162 = sphi 0, %s159
    %s163 = sphi 0, %s162
    %s179 = sphi 0, %s163
  $region4: #{block21d_forward.7} parent=0 // loop_header_branch
    %16 = sbr.rel (%p14) target = $region8
  $region5: #{block21d_forward.7} parent=0 // loop_body
    %s18 = ssub.s32 %s13, 1
    %s19 = ssub.s32 %s13, 2
    %s20 = sadd.s32 %s13, 1
    %s21 = ssub.s32 %s13, %s20
    %p22 = scmp.eq.s32.totalorder %s21, 0
    %s24 = sadd.s32 %s23, 1
    %s25 = scalar_select %p22, %s23, %s24
    %p28 = pneg %p22
    %p29 = scmp.eq.s32.totalorder %s13, 1
    %p30 = por %p28, %p29
    %p31 = scmp.ne.s32.totalorder %s23, %s26
    %p32 = scmp.eq.s32.totalorder %s13, 0
    %p33 = por %p31, %p32
    %p34 = scmp.ne.s32.totalorder %s23, %s26
    %p35 = scmp.eq.s32.totalorder %s18, 1
    %p36 = por %p34, %p35
    %p37 = scmp.ne.s32.totalorder %s26, %s27
    %p38 = scmp.eq.s32.totalorder %s18, 0
    %p39 = por %p37, %p38
    %p40 = scmp.ne.s32.totalorder %s26, %s27
    %p41 = scmp.eq.s32.totalorder %s19, 1
    %p42 = por %p40, %p41
    %p44 = scmp.ne.s32.totalorder %s27, %s43
    %p45 = scmp.eq.s32.totalorder %s19, 0
    %p46 = por %p44, %p45
    %s48 = sadd.s32 %s47, 1
    %p51 = scmp.eq.s32.totalorder %s13, 1
    %p52 = scmp.ne.s32.totalorder %s47, %s49
    %p53 = scmp.eq.s32.totalorder %s13, 0
    %p54 = por %p52, %p53
    %p55 = scmp.ne.s32.totalorder %s47, %s49
    %p56 = scmp.eq.s32.totalorder %s18, 1
    %p57 = por %p55, %p56
    %p58 = scmp.ne.s32.totalorder %s49, %s50
    %p59 = scmp.eq.s32.totalorder %s18, 0
    %p60 = por %p58, %p59
    %p61 = scmp.ne.s32.totalorder %s49, %s50
    %p62 = scmp.eq.s32.totalorder %s19, 1
    %p63 = por %p61, %p62
    %p65 = scmp.ne.s32.totalorder %s50, %s64
    %p66 = scmp.eq.s32.totalorder %s19, 0
    %p67 = por %p65, %p66
    %s69 = sadd.s32 %s68, 1
    %p72 = scmp.eq.s32.totalorder %s13, 1
    %p73 = scmp.ne.s32.totalorder %s68, %s70
    %p74 = scmp.eq.s32.totalorder %s13, 0
    %p75 = por %p73, %p74
    %p76 = scmp.ne.s32.totalorder %s68, %s70
    %p77 = scmp.eq.s32.totalorder %s18, 1
    %p78 = por %p76, %p77
    %p79 = scmp.ne.s32.totalorder %s70, %s71
    %p80 = scmp.eq.s32.totalorder %s18, 0
    %p81 = por %p79, %p80
    %p82 = scmp.ne.s32.totalorder %s70, %s71
    %p83 = scmp.eq.s32.totalorder %s19, 1
    %p84 = por %p82, %p83
    %p86 = scmp.ne.s32.totalorder %s71, %s85
    %p87 = scmp.eq.s32.totalorder %s19, 0
    %p88 = por %p86, %p87
    %s90 = sadd.s32 %s89, 1
    %p93 = scmp.eq.s32.totalorder %s13, 1
    %p94 = scmp.ne.s32.totalorder %s89, %s91
    %p95 = scmp.eq.s32.totalorder %s13, 0
    %p96 = por %p94, %p95
    %p97 = scmp.ne.s32.totalorder %s89, %s91
    %p98 = scmp.eq.s32.totalorder %s18, 1
    %p99 = por %p97, %p98
    %p100 = scmp.ne.s32.totalorder %s91, %s92
    %p101 = scmp.eq.s32.totalorder %s18, 0
    %p102 = por %p100, %p101
    %p103 = scmp.ne.s32.totalorder %s91, %s92
    %p104 = scmp.eq.s32.totalorder %s19, 1
    %p105 = por %p103, %p104
    %p107 = scmp.ne.s32.totalorder %s92, %s106
    %p108 = scmp.eq.s32.totalorder %s19, 0
    %p109 = por %p107, %p108
    %s111 = sadd.s32 %s110, 1
    %p114 = scmp.eq.s32.totalorder %s13, 1
    %p115 = scmp.ne.s32.totalorder %s110, %s112
    %p116 = scmp.eq.s32.totalorder %s13, 0
    %p117 = por %p115, %p116
    %p118 = scmp.ne.s32.totalorder %s110, %s112
    %p119 = scmp.eq.s32.totalorder %s18, 1
    %p120 = por %p118, %p119
    %p121 = scmp.ne.s32.totalorder %s112, %s113
    %p122 = scmp.eq.s32.totalorder %s18, 0
    %p123 = por %p121, %p122
    %p124 = scmp.ne.s32.totalorder %s112, %s113
    %p125 = scmp.eq.s32.totalorder %s19, 1
    %p126 = por %p124, %p125
    %p128 = scmp.ne.s32.totalorder %s113, %s127
    %p129 = scmp.eq.s32.totalorder %s19, 0
    %p130 = por %p128, %p129
    %s131 = ssub.s32 %s13, %s20
    %p132 = scmp.eq.s32.totalorder %s131, 0
    %s134 = sadd.s32 %s133, 1
    %s135 = scalar_select %p132, %s133, %s134
    %p138 = pneg %p132
    %p139 = scmp.eq.s32.totalorder %s13, 1
    %p140 = por %p138, %p139
    %p141 = scmp.ne.s32.totalorder %s133, %s136
    %p142 = scmp.eq.s32.totalorder %s13, 0
    %p143 = por %p141, %p142
    %p144 = scmp.ne.s32.totalorder %s133, %s136
    %p145 = scmp.eq.s32.totalorder %s18, 1
    %p146 = por %p144, %p145
    %p147 = scmp.ne.s32.totalorder %s136, %s137
    %p148 = scmp.eq.s32.totalorder %s18, 0
    %p149 = por %p147, %p148
    %p150 = scmp.ne.s32.totalorder %s136, %s137
    %p151 = scmp.eq.s32.totalorder %s19, 1
    %p152 = por %p150, %p151
    %p154 = scmp.ne.s32.totalorder %s137, %s153
    %p155 = scmp.eq.s32.totalorder %s19, 0
    %p156 = por %p154, %p155
    %s157 = ssub.s32 %s13, %s20
    %p158 = scmp.eq.s32.totalorder %s157, 0
    %s160 = sadd.s32 %s159, 1
    %s161 = scalar_select %p158, %s159, %s160
    %p164 = pneg %p158
    %p165 = scmp.eq.s32.totalorder %s13, 1
    %p166 = por %p164, %p165
    %p167 = scmp.ne.s32.totalorder %s159, %s162
    %p168 = scmp.eq.s32.totalorder %s13, 0
    %p169 = por %p167, %p168
    %p170 = scmp.ne.s32.totalorder %s159, %s162
    %p171 = scmp.eq.s32.totalorder %s18, 1
    %p172 = por %p170, %p171
    %p173 = scmp.ne.s32.totalorder %s162, %s163
    %p174 = scmp.eq.s32.totalorder %s18, 0
    %p175 = por %p173, %p174
    %p176 = scmp.ne.s32.totalorder %s162, %s163
    %p177 = scmp.eq.s32.totalorder %s19, 1
    %p178 = por %p176, %p177
    %p180 = scmp.ne.s32.totalorder %s163, %s179
    %p181 = scmp.eq.s32.totalorder %s19, 0
    %p182 = por %p180, %p181
    %p183 = scmp.le.s32.totalorder 1, %s13
    %p184 = scmp.lt.s32.totalorder %s13, 3
    %p185 = pnand %p183, %p184
    %p186 = pneg %p185
    // Predicated region
    $region9: #{block21d_forward.7} parent=5 // pred_check
      _
    $region10: #{block21d_forward.7} parent=5 // pred_check_branch
      %188 = sbr.rel (%p185) target = $region12
    $region11: #{block21d_forward.7} parent=5 // pred_region
      %s189 = ssub.s32 %s13, 1
      // Predicated region
      $region13: #{block21d_forward.7} parent=11 // pred_check
        %p190 = pneg %p60
      $region14: #{block21d_forward.7} parent=11 // pred_check_branch
        %192 = sbr.rel (%p190) target = $region16
      $region15: #{block21d_forward.7} parent=11 // pred_region
        _
      $region16: #{block21d_forward.7} parent=11 // pred_fallthru
        _
      // Predicated region
      $region17: #{block21d_forward.7} parent=11 // pred_check
        %p193 = pneg %p81
      $region18: #{block21d_forward.7} parent=11 // pred_check_branch
        %195 = sbr.rel (%p193) target = $region20
      $region19: #{block21d_forward.7} parent=11 // pred_region
        _
      $region20: #{block21d_forward.7} parent=11 // pred_fallthru
        _
      // Predicated region
      $region21: #{block21d_forward.7} parent=11 // pred_check
        %p196 = pneg %p102
      $region22: #{block21d_forward.7} parent=11 // pred_check_branch
        %198 = sbr.rel (%p196) target = $region24
      $region23: #{block21d_forward.7} parent=11 // pred_region
        _
      $region24: #{block21d_forward.7} parent=11 // pred_fallthru
        _
      // Predicated region
      $region25: #{block21d_forward.7} parent=11 // pred_check
        %p199 = pneg %p123
      $region26: #{block21d_forward.7} parent=11 // pred_check_branch
        %201 = sbr.rel (%p199) target = $region28
      $region27: #{block21d_forward.7} parent=11 // pred_region
        _
      $region28: #{block21d_forward.7} parent=11 // pred_fallthru
        _
    $region12: #{block21d_forward.7} parent=5 // pred_fallthru
      _
    %p202 = scmp.lt.s32.totalorder %s13, 2
    // Predicated region
    $region29: #{block21d_forward.7} parent=5 // pred_check
      %p203 = pneg %p202
    $region30: #{block21d_forward.7} parent=5 // pred_check_branch
      %205 = sbr.rel (%p203) target = $region32
    $region31: #{block21d_forward.7} parent=5 // pred_region
      // Predicated region
      $region33: #{block21d_forward.7} parent=31 // pred_check
        %p206 = pneg %p33
      $region34: #{block21d_forward.7} parent=31 // pred_check_branch
        %208 = sbr.rel (%p206) target = $region36
      $region35: #{block21d_forward.7} parent=31 // pred_region
        %s209 = smul.u32 4, %s13
        %p210 = scmp.lt.s32.totalorder %s209, 7
        %s211 = scalar_select %p210, %s209, 7
        %s212 = smul.addr %s211, 8
        %s213 = smul.addr %s212, 8
        %s214 = scalar_lea.vmem %s0, %s213
        %s215 = smul.u32 4, %s13
      $region36: #{block21d_forward.7} parent=31 // pred_fallthru
        _
    $region32: #{block21d_forward.7} parent=5 // pred_fallthru
      _
    %p216 = scmp.le.s32.totalorder 1, %s13
    %p217 = scmp.lt.s32.totalorder %s13, 3
    %p218 = pnand %p216, %p217
    %p219 = pneg %p218
    // Predicated region
    $region37: #{block21d_forward.7} parent=5 // pred_check
      _
    $region38: #{block21d_forward.7} parent=5 // pred_check_branch
      %221 = sbr.rel (%p218) target = $region40
    $region39: #{block21d_forward.7} parent=5 // pred_region
      %s222 = ssub.s32 %s13, 1
      %s223 = smul.u32 4, %s18
      %p224 = scmp.lt.s32.totalorder %s223, 7
      %s225 = scalar_select %p224, %s223, 7
      %s226 = smul.addr %s225, 8
      %s227 = smul.addr %s226, 8
      %s228 = scalar_lea.vmem %s0, %s227
      %p229 = pneg %p39
      %p230 = pneg %p36
      %p231 = pneg %p60
      %p232 = pneg %p57
      %p233 = pneg %p81
      %p234 = pneg %p78
      %p235 = pneg %p102
      %p236 = pneg %p99
      %p237 = pneg %p123
      %p238 = pneg %p120
      %p239 = pneg %p149
      %p240 = pneg %p146
      %s241 = smul.u32 32, %s18
      %p242 = scmp.lt.s32.totalorder %s241, 63
      %s243 = scalar_select %p242, %s241, 63
      %s244 = smul.addr %s243, 8
      %s245 = scalar_lea.vmem %s5, %s244
      %p246 = pneg %p175
      %p247 = pneg %p172
      %p248 = scmp.lt.s32.totalorder %s18, 1
      %s249 = scalar_select %p248, %s18, 1
      %s250 = smul.addr %s249, 2
      %s251 = scalar_lea.vmem %s6, %s250
      %s252 = smul.u32 4, %s18
      %p253 = scmp.lt.s32.totalorder %s252, 7
      %s254 = scalar_select %p253, %s252, 7
      %s255 = smul.addr %s254, 8
      %s256 = smul.addr %s255, 8
      %s257 = scalar_lea.vmem %s0, %s256
      %s258 = smul.u32 4, %s18
      %s259 = smul.u32 32, %s18
      %p260 = scmp.lt.s32.totalorder %s259, 63
      %s261 = scalar_select %p260, %s259, 63
      %s262 = smul.addr %s261, 8
      %s263 = scalar_lea.vmem %s5, %s262
      %s264 = smul.u32 32, %s18
      %p265 = scmp.lt.s32.totalorder %s18, 1
      %s266 = scalar_select %p265, %s18, 1
      %s267 = smul.addr %s266, 2
      %s268 = scalar_lea.vmem %s6, %s267
      %v269 = vld [vmem:[%s257] sm:$0xff]
      %v270 = vld [vmem:[%s257 + $0x8] sm:$0xff]
      %v271 = vld [vmem:[%s257 + $0x10] sm:$0xff]
      %v272 = vld [vmem:[%s257 + $0x18] sm:$0xff]
      %v273 = vld [vmem:[%s257 + $0x20] sm:$0xff]
      %v274 = vld [vmem:[%s257 + $0x28] sm:$0xff]
      %v275 = vld [vmem:[%s257 + $0x30] sm:$0xff]
      %v276 = vld [vmem:[%s257 + $0x38] sm:$0xff]
      %v277 = vld [vmem:[%s257 + $0x40] sm:$0xff]
      %v278 = vld [vmem:[%s257 + $0x48] sm:$0xff]
      %v279 = vld [vmem:[%s257 + $0x50] sm:$0xff]
      %v280 = vld [vmem:[%s257 + $0x58] sm:$0xff]
      %v281 = vld [vmem:[%s257 + $0x60] sm:$0xff]
      %v282 = vld [vmem:[%s257 + $0x68] sm:$0xff]
      %v283 = vld [vmem:[%s257 + $0x70] sm:$0xff]
      %v284 = vld [vmem:[%s257 + $0x78] sm:$0xff]
      %v285 = vld [vmem:[%s257 + $0x80] sm:$0xff]
      %v286 = vld [vmem:[%s257 + $0x88] sm:$0xff]
      %v287 = vld [vmem:[%s257 + $0x90] sm:$0xff]
      %v288 = vld [vmem:[%s257 + $0x98] sm:$0xff]
      %v289 = vld [vmem:[%s257 + $0xa0] sm:$0xff]
      %v290 = vld [vmem:[%s257 + $0xa8] sm:$0xff]
      %v291 = vld [vmem:[%s257 + $0xb0] sm:$0xff]
      %v292 = vld [vmem:[%s257 + $0xb8] sm:$0xff]
      %v293 = vld [vmem:[%s257 + $0xc0] sm:$0xff]
      %v294 = vld [vmem:[%s257 + $0xc8] sm:$0xff]
      %v295 = vld [vmem:[%s257 + $0xd0] sm:$0xff]
      %v296 = vld [vmem:[%s257 + $0xd8] sm:$0xff]
      %v297 = vld [vmem:[%s257 + $0xe0] sm:$0xff]
      %v298 = vld [vmem:[%s257 + $0xe8] sm:$0xff]
      %v299 = vld [vmem:[%s257 + $0xf0] sm:$0xff]
      %v300 = vld [vmem:[%s257 + $0xf8] sm:$0xff]
      %v301 = vld [vmem:[%s1] sm:$0x1]
      %v303 = vlaneseq
      %v304 = vshrl.u32 %v303, 7
      %v305 = vsub.s32 0, %v304
      %v306 = vrot.slane %v301, %v305
      %v308 = vmul.f32 %v269, %v306
      %v309 = vmul.f32 %v270, %v306
      %v310 = vmul.f32 %v271, %v306
      %v311 = vmul.f32 %v272, %v306
      %v312 = vmul.f32 %v273, %v306
      %v313 = vmul.f32 %v274, %v306
      %v314 = vmul.f32 %v275, %v306
      %v315 = vmul.f32 %v276, %v306
      %v316 = vmul.f32 %v277, %v306
      %v317 = vmul.f32 %v278, %v306
      %v318 = vmul.f32 %v279, %v306
      %v319 = vmul.f32 %v280, %v306
      %v320 = vmul.f32 %v281, %v306
      %v321 = vmul.f32 %v282, %v306
      %v322 = vmul.f32 %v283, %v306
      %v323 = vmul.f32 %v284, %v306
      %v324 = vmul.f32 %v285, %v306
      %v325 = vmul.f32 %v286, %v306
      %v326 = vmul.f32 %v287, %v306
      %v327 = vmul.f32 %v288, %v306
      %v328 = vmul.f32 %v289, %v306
      %v329 = vmul.f32 %v290, %v306
      %v330 = vmul.f32 %v291, %v306
      %v331 = vmul.f32 %v292, %v306
      %v332 = vmul.f32 %v293, %v306
      %v333 = vmul.f32 %v294, %v306
      %v334 = vmul.f32 %v295, %v306
      %v335 = vmul.f32 %v296, %v306
      %v336 = vmul.f32 %v297, %v306
      %v337 = vmul.f32 %v298, %v306
      %v338 = vmul.f32 %v299, %v306
      %v339 = vmul.f32 %v300, %v306
      %v340 = vld [vmem:[%s2] sm:$0x1]
      %v342 = vlaneseq
      %v343 = vshrl.u32 %v342, 7
      %v344 = vsub.s32 0, %v343
      %v345 = vrot.slane %v340, %v344
      %v347 = vadd.f32 %v308, %v345
      %v348 = vadd.f32 %v309, %v345
      %v349 = vadd.f32 %v310, %v345
      %v350 = vadd.f32 %v311, %v345
      %v351 = vadd.f32 %v312, %v345
      %v352 = vadd.f32 %v313, %v345
      %v353 = vadd.f32 %v314, %v345
      %v354 = vadd.f32 %v315, %v345
      %v355 = vadd.f32 %v316, %v345
      %v356 = vadd.f32 %v317, %v345
      %v357 = vadd.f32 %v318, %v345
      %v358 = vadd.f32 %v319, %v345
      %v359 = vadd.f32 %v320, %v345
      %v360 = vadd.f32 %v321, %v345
      %v361 = vadd.f32 %v322, %v345
      %v362 = vadd.f32 %v323, %v345
      %v363 = vadd.f32 %v324, %v345
      %v364 = vadd.f32 %v325, %v345
      %v365 = vadd.f32 %v326, %v345
      %v366 = vadd.f32 %v327, %v345
      %v367 = vadd.f32 %v328, %v345
      %v368 = vadd.f32 %v329, %v345
      %v369 = vadd.f32 %v330, %v345
      %v370 = vadd.f32 %v331, %v345
      %v371 = vadd.f32 %v332, %v345
      %v372 = vadd.f32 %v333, %v345
      %v373 = vadd.f32 %v334, %v345
      %v374 = vadd.f32 %v335, %v345
      %v375 = vadd.f32 %v336, %v345
      %v376 = vadd.f32 %v337, %v345
      %v377 = vadd.f32 %v338, %v345
      %v378 = vadd.f32 %v339, %v345
      %v379 = vmax.f32 %v347, 0.0
      %v380 = vmax.f32 %v348, 0.0
      %v381 = vmax.f32 %v349, 0.0
      %v382 = vmax.f32 %v350, 0.0
      %v383 = vmax.f32 %v351, 0.0
      %v384 = vmax.f32 %v352, 0.0
      %v385 = vmax.f32 %v353, 0.0
      %v386 = vmax.f32 %v354, 0.0
      %v387 = vmax.f32 %v355, 0.0
      %v388 = vmax.f32 %v356, 0.0
      %v389 = vmax.f32 %v357, 0.0
      %v390 = vmax.f32 %v358, 0.0
      %v391 = vmax.f32 %v359, 0.0
      %v392 = vmax.f32 %v360, 0.0
      %v393 = vmax.f32 %v361, 0.0
      %v394 = vmax.f32 %v362, 0.0
      %v395 = vmax.f32 %v363, 0.0
      %v396 = vmax.f32 %v364, 0.0
      %v397 = vmax.f32 %v365, 0.0
      %v398 = vmax.f32 %v366, 0.0
      %v399 = vmax.f32 %v367, 0.0
      %v400 = vmax.f32 %v368, 0.0
      %v401 = vmax.f32 %v369, 0.0
      %v402 = vmax.f32 %v370, 0.0
      %v403 = vmax.f32 %v371, 0.0
      %v404 = vmax.f32 %v372, 0.0
      %v405 = vmax.f32 %v373, 0.0
      %v406 = vmax.f32 %v374, 0.0
      %v407 = vmax.f32 %v375, 0.0
      %v408 = vmax.f32 %v376, 0.0
      %v409 = vmax.f32 %v377, 0.0
      %v410 = vmax.f32 %v378, 0.0
      %411 = vst [vmem:[#allocation2] sm:$0xff] 0.0
      %412 = vst [vmem:[#allocation2 + $0x8] sm:$0x3] 0.0
      %413 = vst [vmem:[#allocation2 + $0xa0] sm:$0xff] 0.0
      %414 = vst [vmem:[#allocation2 + $0xa8] sm:$0x3] 0.0
      %415 = vst [vmem:[#allocation2 + $0x140] sm:$0xff] 0.0
      %416 = vst [vmem:[#allocation2 + $0x148] sm:$0x3] 0.0
      %417 = vst [vmem:[#allocation2 + $0x1e0] sm:$0xff] 0.0
      %418 = vst [vmem:[#allocation2 + $0x1e8] sm:$0x3] 0.0
      %s419 = scalar_lea.vmem [#allocation2], 144
      %420 = vst [vmem:[%s419] sm:$0xff] 0.0
      %421 = vst [vmem:[%s419 + $0x8] sm:$0x3] 0.0
      %422 = vst [vmem:[%s419 + $0xa0] sm:$0xff] 0.0
      %423 = vst [vmem:[%s419 + $0xa8] sm:$0x3] 0.0
      %424 = vst [vmem:[%s419 + $0x140] sm:$0xff] 0.0
      %425 = vst [vmem:[%s419 + $0x148] sm:$0x3] 0.0
      %426 = vst [vmem:[%s419 + $0x1e0] sm:$0xff] 0.0
      %427 = vst [vmem:[%s419 + $0x1e8] sm:$0x3] 0.0
      %s428 = scalar_lea.vmem [#allocation2], 16
      %429 = vst [vmem:[%s428] sm:$0x1] 0.0
      %430 = vst [vmem:[%s428 + $0x10] sm:$0x1] 0.0
      %431 = vst [vmem:[%s428 + $0x20] sm:$0x1] 0.0
      %432 = vst [vmem:[%s428 + $0x30] sm:$0x1] 0.0
      %433 = vst [vmem:[%s428 + $0x40] sm:$0x1] 0.0
      %434 = vst [vmem:[%s428 + $0x50] sm:$0x1] 0.0
      %435 = vst [vmem:[%s428 + $0x60] sm:$0x1] 0.0
      %436 = vst [vmem:[%s428 + $0x70] sm:$0x1] 0.0
      %437 = vst [vmem:[%s428 + $0xa0] sm:$0x1] 0.0
      %438 = vst [vmem:[%s428 + $0xb0] sm:$0x1] 0.0
      %439 = vst [vmem:[%s428 + $0xc0] sm:$0x1] 0.0
      %440 = vst [vmem:[%s428 + $0xd0] sm:$0x1] 0.0
      %441 = vst [vmem:[%s428 + $0xe0] sm:$0x1] 0.0
      %442 = vst [vmem:[%s428 + $0xf0] sm:$0x1] 0.0
      %443 = vst [vmem:[%s428 + $0x100] sm:$0x1] 0.0
      %444 = vst [vmem:[%s428 + $0x110] sm:$0x1] 0.0
      %445 = vst [vmem:[%s428 + $0x140] sm:$0x1] 0.0
      %446 = vst [vmem:[%s428 + $0x150] sm:$0x1] 0.0
      %447 = vst [vmem:[%s428 + $0x160] sm:$0x1] 0.0
      %448 = vst [vmem:[%s428 + $0x170] sm:$0x1] 0.0
      %449 = vst [vmem:[%s428 + $0x180] sm:$0x1] 0.0
      %450 = vst [vmem:[%s428 + $0x190] sm:$0x1] 0.0
      %451 = vst [vmem:[%s428 + $0x1a0] sm:$0x1] 0.0
      %452 = vst [vmem:[%s428 + $0x1b0] sm:$0x1] 0.0
      %453 = vst [vmem:[%s428 + $0x1e0] sm:$0x1] 0.0
      %454 = vst [vmem:[%s428 + $0x1f0] sm:$0x1] 0.0
      %455 = vst [vmem:[%s428 + $0x200] sm:$0x1] 0.0
      %456 = vst [vmem:[%s428 + $0x210] sm:$0x1] 0.0
      %457 = vst [vmem:[%s428 + $0x220] sm:$0x1] 0.0
      %458 = vst [vmem:[%s428 + $0x230] sm:$0x1] 0.0
      %459 = vst [vmem:[%s428 + $0x240] sm:$0x1] 0.0
      %460 = vst [vmem:[%s428 + $0x250] sm:$0x1] 0.0
      %461 = vst [vmem:[%s428 + $0x9] sm:$0x1] 0.0
      %462 = vst [vmem:[%s428 + $0x19] sm:$0x1] 0.0
      %463 = vst [vmem:[%s428 + $0x29] sm:$0x1] 0.0
      %464 = vst [vmem:[%s428 + $0x39] sm:$0x1] 0.0
      %465 = vst [vmem:[%s428 + $0x49] sm:$0x1] 0.0
      %466 = vst [vmem:[%s428 + $0x59] sm:$0x1] 0.0
      %467 = vst [vmem:[%s428 + $0x69] sm:$0x1] 0.0
      %468 = vst [vmem:[%s428 + $0x79] sm:$0x1] 0.0
      %469 = vst [vmem:[%s428 + $0xa9] sm:$0x1] 0.0
      %470 = vst [vmem:[%s428 + $0xb9] sm:$0x1] 0.0
      %471 = vst [vmem:[%s428 + $0xc9] sm:$0x1] 0.0
      %472 = vst [vmem:[%s428 + $0xd9] sm:$0x1] 0.0
      %473 = vst [vmem:[%s428 + $0xe9] sm:$0x1] 0.0
      %474 = vst [vmem:[%s428 + $0xf9] sm:$0x1] 0.0
      %475 = vst [vmem:[%s428 + $0x109] sm:$0x1] 0.0
      %476 = vst [vmem:[%s428 + $0x119] sm:$0x1] 0.0
      %477 = vst [vmem:[%s428 + $0x149] sm:$0x1] 0.0
      %478 = vst [vmem:[%s428 + $0x159] sm:$0x1] 0.0
      %479 = vst [vmem:[%s428 + $0x169] sm:$0x1] 0.0
      %480 = vst [vmem:[%s428 + $0x179] sm:$0x1] 0.0
      %481 = vst [vmem:[%s428 + $0x189] sm:$0x1] 0.0
      %482 = vst [vmem:[%s428 + $0x199] sm:$0x1] 0.0
      %483 = vst [vmem:[%s428 + $0x1a9] sm:$0x1] 0.0
      %484 = vst [vmem:[%s428 + $0x1b9] sm:$0x1] 0.0
      %485 = vst [vmem:[%s428 + $0x1e9] sm:$0x1] 0.0
      %486 = vst [vmem:[%s428 + $0x1f9] sm:$0x1] 0.0
      %487 = vst [vmem:[%s428 + $0x209] sm:$0x1] 0.0
      %488 = vst [vmem:[%s428 + $0x219] sm:$0x1] 0.0
      %489 = vst [vmem:[%s428 + $0x229] sm:$0x1] 0.0
      %490 = vst [vmem:[%s428 + $0x239] sm:$0x1] 0.0
      %491 = vst [vmem:[%s428 + $0x249] sm:$0x1] 0.0
      %492 = vst [vmem:[%s428 + $0x259] sm:$0x1] 0.0
      %493 = vst [vmem:[%s428 + $0x1] sm:$0xff] %v379
      %494 = vst [vmem:[%s428 + $0x11] sm:$0xff] %v380
      %495 = vst [vmem:[%s428 + $0x21] sm:$0xff] %v381
      %496 = vst [vmem:[%s428 + $0x31] sm:$0xff] %v382
      %497 = vst [vmem:[%s428 + $0x41] sm:$0xff] %v383
      %498 = vst [vmem:[%s428 + $0x51] sm:$0xff] %v384
      %499 = vst [vmem:[%s428 + $0x61] sm:$0xff] %v385
      %500 = vst [vmem:[%s428 + $0x71] sm:$0xff] %v386
      %501 = vst [vmem:[%s428 + $0xa1] sm:$0xff] %v387
      %502 = vst [vmem:[%s428 + $0xb1] sm:$0xff] %v388
      %503 = vst [vmem:[%s428 + $0xc1] sm:$0xff] %v389
      %504 = vst [vmem:[%s428 + $0xd1] sm:$0xff] %v390
      %505 = vst [vmem:[%s428 + $0xe1] sm:$0xff] %v391
      %506 = vst [vmem:[%s428 + $0xf1] sm:$0xff] %v392
      %507 = vst [vmem:[%s428 + $0x101] sm:$0xff] %v393
      %508 = vst [vmem:[%s428 + $0x111] sm:$0xff] %v394
      %509 = vst [vmem:[%s428 + $0x141] sm:$0xff] %v395
      %510 = vst [vmem:[%s428 + $0x151] sm:$0xff] %v396
      %511 = vst [vmem:[%s428 + $0x161] sm:$0xff] %v397
      %512 = vst [vmem:[%s428 + $0x171] sm:$0xff] %v398
      %513 = vst [vmem:[%s428 + $0x181] sm:$0xff] %v399
      %514 = vst [vmem:[%s428 + $0x191] sm:$0xff] %v400
      %515 = vst [vmem:[%s428 + $0x1a1] sm:$0xff] %v401
      %516 = vst [vmem:[%s428 + $0x1b1] sm:$0xff] %v402
      %517 = vst [vmem:[%s428 + $0x1e1] sm:$0xff] %v403
      %518 = vst [vmem:[%s428 + $0x1f1] sm:$0xff] %v404
      %519 = vst [vmem:[%s428 + $0x201] sm:$0xff] %v405
      %520 = vst [vmem:[%s428 + $0x211] sm:$0xff] %v406
      %521 = vst [vmem:[%s428 + $0x221] sm:$0xff] %v407
      %522 = vst [vmem:[%s428 + $0x231] sm:$0xff] %v408
      %523 = vst [vmem:[%s428 + $0x241] sm:$0xff] %v409
      %524 = vst [vmem:[%s428 + $0x251] sm:$0xff] %v410
      %v525 = vld [vmem:[#allocation2] sm:$0xff]
      %v526 = vld [vmem:[#allocation2 + $0x10] sm:$0xff]
      %v527 = vld [vmem:[#allocation2 + $0x20] sm:$0xff]
      %v528 = vld [vmem:[#allocation2 + $0x30] sm:$0xff]
      %v529 = vld [vmem:[#allocation2 + $0x40] sm:$0xff]
      %v530 = vld [vmem:[#allocation2 + $0x50] sm:$0xff]
      %v531 = vld [vmem:[#allocation2 + $0x60] sm:$0xff]
      %v532 = vld [vmem:[#allocation2 + $0x70] sm:$0xff]
      %v533 = vld [vmem:[#allocation2 + $0xa0] sm:$0xff]
      %v534 = vld [vmem:[#allocation2 + $0xb0] sm:$0xff]
      %v535 = vld [vmem:[#allocation2 + $0xc0] sm:$0xff]
      %v536 = vld [vmem:[#allocation2 + $0xd0] sm:$0xff]
      %v537 = vld [vmem:[#allocation2 + $0xe0] sm:$0xff]
      %v538 = vld [vmem:[#allocation2 + $0xf0] sm:$0xff]
      %v539 = vld [vmem:[#allocation2 + $0x100] sm:$0xff]
      %v540 = vld [vmem:[#allocation2 + $0x110] sm:$0xff]
      %v541 = vld [vmem:[#allocation2 + $0x140] sm:$0xff]
      %v542 = vld [vmem:[#allocation2 + $0x150] sm:$0xff]
      %v543 = vld [vmem:[#allocation2 + $0x160] sm:$0xff]
      %v544 = vld [vmem:[#allocation2 + $0x170] sm:$0xff]
      %v545 = vld [vmem:[#allocation2 + $0x180] sm:$0xff]
      %v546 = vld [vmem:[#allocation2 + $0x190] sm:$0xff]
      %v547 = vld [vmem:[#allocation2 + $0x1a0] sm:$0xff]
      %v548 = vld [vmem:[#allocation2 + $0x1b0] sm:$0xff]
      %v549 = vld [vmem:[#allocation2 + $0x1e0] sm:$0xff]
      %v550 = vld [vmem:[#allocation2 + $0x1f0] sm:$0xff]
      %v551 = vld [vmem:[#allocation2 + $0x200] sm:$0xff]
      %v552 = vld [vmem:[#allocation2 + $0x210] sm:$0xff]
      %v553 = vld [vmem:[#allocation2 + $0x220] sm:$0xff]
      %v554 = vld [vmem:[#allocation2 + $0x230] sm:$0xff]
      %v555 = vld [vmem:[#allocation2 + $0x240] sm:$0xff]
      %v556 = vld [vmem:[#allocation2 + $0x250] sm:$0xff]
      %557 = vst [vmem:[#allocation3] sm:$0xff] %v525
      %558 = vst [vmem:[#allocation3 + $0x48] sm:$0xff] %v526
      %559 = vst [vmem:[#allocation3 + $0x90] sm:$0xff] %v527
      %560 = vst [vmem:[#allocation3 + $0xd8] sm:$0xff] %v528
      %561 = vst [vmem:[#allocation3 + $0x120] sm:$0xff] %v529
      %562 = vst [vmem:[#allocation3 + $0x168] sm:$0xff] %v530
      %563 = vst [vmem:[#allocation3 + $0x1b0] sm:$0xff] %v531
      %564 = vst [vmem:[#allocation3 + $0x1f8] sm:$0xff] %v532
      %565 = vst [vmem:[#allocation3 + $0x240] sm:$0xff] %v533
      %566 = vst [vmem:[#allocation3 + $0x288] sm:$0xff] %v534
      %567 = vst [vmem:[#allocation3 + $0x2d0] sm:$0xff] %v535
      %568 = vst [vmem:[#allocation3 + $0x318] sm:$0xff] %v536
      %569 = vst [vmem:[#allocation3 + $0x360] sm:$0xff] %v537
      %570 = vst [vmem:[#allocation3 + $0x3a8] sm:$0xff] %v538
      %571 = vst [vmem:[#allocation3 + $0x3f0] sm:$0xff] %v539
      %572 = vst [vmem:[#allocation3 + $0x438] sm:$0xff] %v540
      %573 = vst [vmem:[#allocation3 + $0x480] sm:$0xff] %v541
      %574 = vst [vmem:[#allocation3 + $0x4c8] sm:$0xff] %v542
      %575 = vst [vmem:[#allocation3 + $0x510] sm:$0xff] %v543
      %576 = vst [vmem:[#allocation3 + $0x558] sm:$0xff] %v544
      %577 = vst [vmem:[#allocation3 + $0x5a0] sm:$0xff] %v545
      %578 = vst [vmem:[#allocation3 + $0x5e8] sm:$0xff] %v546
      %579 = vst [vmem:[#allocation3 + $0x630] sm:$0xff] %v547
      %580 = vst [vmem:[#allocation3 + $0x678] sm:$0xff] %v548
      %581 = vst [vmem:[#allocation3 + $0x6c0] sm:$0xff] %v549
      %582 = vst [vmem:[#allocation3 + $0x708] sm:$0xff] %v550
      %583 = vst [vmem:[#allocation3 + $0x750] sm:$0xff] %v551
      %584 = vst [vmem:[#allocation3 + $0x798] sm:$0xff] %v552
      %585 = vst [vmem:[#allocation3 + $0x7e0] sm:$0xff] %v553
      %586 = vst [vmem:[#allocation3 + $0x828] sm:$0xff] %v554
      %587 = vst [vmem:[#allocation3 + $0x870] sm:$0xff] %v555
      %588 = vst [vmem:[#allocation3 + $0x8b8] sm:$0xff] %v556
      %v589 = vld [vmem:[#allocation2 + $0x1] sm:$0xff]
      %v590 = vld [vmem:[#allocation2 + $0x11] sm:$0xff]
      %v591 = vld [vmem:[#allocation2 + $0x21] sm:$0xff]
      %v592 = vld [vmem:[#allocation2 + $0x31] sm:$0xff]
      %v593 = vld [vmem:[#allocation2 + $0x41] sm:$0xff]
      %v594 = vld [vmem:[#allocation2 + $0x51] sm:$0xff]
      %v595 = vld [vmem:[#allocation2 + $0x61] sm:$0xff]
      %v596 = vld [vmem:[#allocation2 + $0x71] sm:$0xff]
      %v597 = vld [vmem:[#allocation2 + $0xa1] sm:$0xff]
      %v598 = vld [vmem:[#allocation2 + $0xb1] sm:$0xff]
      %v599 = vld [vmem:[#allocation2 + $0xc1] sm:$0xff]
      %v600 = vld [vmem:[#allocation2 + $0xd1] sm:$0xff]
      %v601 = vld [vmem:[#allocation2 + $0xe1] sm:$0xff]
      %v602 = vld [vmem:[#allocation2 + $0xf1] sm:$0xff]
      %v603 = vld [vmem:[#allocation2 + $0x101] sm:$0xff]
      %v604 = vld [vmem:[#allocation2 + $0x111] sm:$0xff]
      %v605 = vld [vmem:[#allocation2 + $0x141] sm:$0xff]
      %v606 = vld [vmem:[#allocation2 + $0x151] sm:$0xff]
      %v607 = vld [vmem:[#allocation2 + $0x161] sm:$0xff]
      %v608 = vld [vmem:[#allocation2 + $0x171] sm:$0xff]
      %v609 = vld [vmem:[#allocation2 + $0x181] sm:$0xff]
      %v610 = vld [vmem:[#allocation2 + $0x191] sm:$0xff]
      %v611 = vld [vmem:[#allocation2 + $0x1a1] sm:$0xff]
      %v612 = vld [vmem:[#allocation2 + $0x1b1] sm:$0xff]
      %v613 = vld [vmem:[#allocation2 + $0x1e1] sm:$0xff]
      %v614 = vld [vmem:[#allocation2 + $0x1f1] sm:$0xff]
      %v615 = vld [vmem:[#allocation2 + $0x201] sm:$0xff]
      %v616 = vld [vmem:[#allocation2 + $0x211] sm:$0xff]
      %v617 = vld [vmem:[#allocation2 + $0x221] sm:$0xff]
      %v618 = vld [vmem:[#allocation2 + $0x231] sm:$0xff]
      %v619 = vld [vmem:[#allocation2 + $0x241] sm:$0xff]
      %v620 = vld [vmem:[#allocation2 + $0x251] sm:$0xff]
      %621 = vst [vmem:[#allocation3 + $0x8] sm:$0xff] %v589
      %622 = vst [vmem:[#allocation3 + $0x50] sm:$0xff] %v590
      %623 = vst [vmem:[#allocation3 + $0x98] sm:$0xff] %v591
      %624 = vst [vmem:[#allocation3 + $0xe0] sm:$0xff] %v592
      %625 = vst [vmem:[#allocation3 + $0x128] sm:$0xff] %v593
      %626 = vst [vmem:[#allocation3 + $0x170] sm:$0xff] %v594
      %627 = vst [vmem:[#allocation3 + $0x1b8] sm:$0xff] %v595
      %628 = vst [vmem:[#allocation3 + $0x200] sm:$0xff] %v596
      %629 = vst [vmem:[#allocation3 + $0x248] sm:$0xff] %v597
      %630 = vst [vmem:[#allocation3 + $0x290] sm:$0xff] %v598
      %631 = vst [vmem:[#allocation3 + $0x2d8] sm:$0xff] %v599
      %632 = vst [vmem:[#allocation3 + $0x320] sm:$0xff] %v600
      %633 = vst [vmem:[#allocation3 + $0x368] sm:$0xff] %v601
      %634 = vst [vmem:[#allocation3 + $0x3b0] sm:$0xff] %v602
      %635 = vst [vmem:[#allocation3 + $0x3f8] sm:$0xff] %v603
      %636 = vst [vmem:[#allocation3 + $0x440] sm:$0xff] %v604
      %637 = vst [vmem:[#allocation3 + $0x488] sm:$0xff] %v605
      %638 = vst [vmem:[#allocation3 + $0x4d0] sm:$0xff] %v606
      %639 = vst [vmem:[#allocation3 + $0x518] sm:$0xff] %v607
      %640 = vst [vmem:[#allocation3 + $0x560] sm:$0xff] %v608
      %641 = vst [vmem:[#allocation3 + $0x5a8] sm:$0xff] %v609
      %642 = vst [vmem:[#allocation3 + $0x5f0] sm:$0xff] %v610
      %643 = vst [vmem:[#allocation3 + $0x638] sm:$0xff] %v611
      %644 = vst [vmem:[#allocation3 + $0x680] sm:$0xff] %v612
      %645 = vst [vmem:[#allocation3 + $0x6c8] sm:$0xff] %v613
      %646 = vst [vmem:[#allocation3 + $0x710] sm:$0xff] %v614
      %647 = vst [vmem:[#allocation3 + $0x758] sm:$0xff] %v615
      %648 = vst [vmem:[#allocation3 + $0x7a0] sm:$0xff] %v616
      %649 = vst [vmem:[#allocation3 + $0x7e8] sm:$0xff] %v617
      %650 = vst [vmem:[#allocation3 + $0x830] sm:$0xff] %v618
      %651 = vst [vmem:[#allocation3 + $0x878] sm:$0xff] %v619
      %652 = vst [vmem:[#allocation3 + $0x8c0] sm:$0xff] %v620
      %v653 = vld [vmem:[#allocation2 + $0x2] sm:$0xff]
      %v654 = vld [vmem:[#allocation2 + $0x12] sm:$0xff]
      %v655 = vld [vmem:[#allocation2 + $0x22] sm:$0xff]
      %v656 = vld [vmem:[#allocation2 + $0x32] sm:$0xff]
      %v657 = vld [vmem:[#allocation2 + $0x42] sm:$0xff]
      %v658 = vld [vmem:[#allocation2 + $0x52] sm:$0xff]
      %v659 = vld [vmem:[#allocation2 + $0x62] sm:$0xff]
      %v660 = vld [vmem:[#allocation2 + $0x72] sm:$0xff]
      %v661 = vld [vmem:[#allocation2 + $0xa2] sm:$0xff]
      %v662 = vld [vmem:[#allocation2 + $0xb2] sm:$0xff]
      %v663 = vld [vmem:[#allocation2 + $0xc2] sm:$0xff]
      %v664 = vld [vmem:[#allocation2 + $0xd2] sm:$0xff]
      %v665 = vld [vmem:[#allocation2 + $0xe2] sm:$0xff]
      %v666 = vld [vmem:[#allocation2 + $0xf2] sm:$0xff]
      %v667 = vld [vmem:[#allocation2 + $0x102] sm:$0xff]
      %v668 = vld [vmem:[#allocation2 + $0x112] sm:$0xff]
      %v669 = vld [vmem:[#allocation2 + $0x142] sm:$0xff]
      %v670 = vld [vmem:[#allocation2 + $0x152] sm:$0xff]
      %v671 = vld [vmem:[#allocation2 + $0x162] sm:$0xff]
      %v672 = vld [vmem:[#allocation2 + $0x172] sm:$0xff]
      %v673 = vld [vmem:[#allocation2 + $0x182] sm:$0xff]
      %v674 = vld [vmem:[#allocation2 + $0x192] sm:$0xff]
      %v675 = vld [vmem:[#allocation2 + $0x1a2] sm:$0xff]
      %v676 = vld [vmem:[#allocation2 + $0x1b2] sm:$0xff]
      %v677 = vld [vmem:[#allocation2 + $0x1e2] sm:$0xff]
      %v678 = vld [vmem:[#allocation2 + $0x1f2] sm:$0xff]
      %v679 = vld [vmem:[#allocation2 + $0x202] sm:$0xff]
      %v680 = vld [vmem:[#allocation2 + $0x212] sm:$0xff]
      %v681 = vld [vmem:[#allocation2 + $0x222] sm:$0xff]
      %v682 = vld [vmem:[#allocation2 + $0x232] sm:$0xff]
      %v683 = vld [vmem:[#allocation2 + $0x242] sm:$0xff]
      %v684 = vld [vmem:[#allocation2 + $0x252] sm:$0xff]
      %685 = vst [vmem:[#allocation3 + $0x10] sm:$0xff] %v653
      %686 = vst [vmem:[#allocation3 + $0x58] sm:$0xff] %v654
      %687 = vst [vmem:[#allocation3 + $0xa0] sm:$0xff] %v655
      %688 = vst [vmem:[#allocation3 + $0xe8] sm:$0xff] %v656
      %689 = vst [vmem:[#allocation3 + $0x130] sm:$0xff] %v657
      %690 = vst [vmem:[#allocation3 + $0x178] sm:$0xff] %v658
      %691 = vst [vmem:[#allocation3 + $0x1c0] sm:$0xff] %v659
      %692 = vst [vmem:[#allocation3 + $0x208] sm:$0xff] %v660
      %693 = vst [vmem:[#allocation3 + $0x250] sm:$0xff] %v661
      %694 = vst [vmem:[#allocation3 + $0x298] sm:$0xff] %v662
      %695 = vst [vmem:[#allocation3 + $0x2e0] sm:$0xff] %v663
      %696 = vst [vmem:[#allocation3 + $0x328] sm:$0xff] %v664
      %697 = vst [vmem:[#allocation3 + $0x370] sm:$0xff] %v665
      %698 = vst [vmem:[#allocation3 + $0x3b8] sm:$0xff] %v666
      %699 = vst [vmem:[#allocation3 + $0x400] sm:$0xff] %v667
      %700 = vst [vmem:[#allocation3 + $0x448] sm:$0xff] %v668
      %701 = vst [vmem:[#allocation3 + $0x490] sm:$0xff] %v669
      %702 = vst [vmem:[#allocation3 + $0x4d8] sm:$0xff] %v670
      %703 = vst [vmem:[#allocation3 + $0x520] sm:$0xff] %v671
      %704 = vst [vmem:[#allocation3 + $0x568] sm:$0xff] %v672
      %705 = vst [vmem:[#allocation3 + $0x5b0] sm:$0xff] %v673
      %706 = vst [vmem:[#allocation3 + $0x5f8] sm:$0xff] %v674
      %707 = vst [vmem:[#allocation3 + $0x640] sm:$0xff] %v675
      %708 = vst [vmem:[#allocation3 + $0x688] sm:$0xff] %v676
      %709 = vst [vmem:[#allocation3 + $0x6d0] sm:$0xff] %v677
      %710 = vst [vmem:[#allocation3 + $0x718] sm:$0xff] %v678
      %711 = vst [vmem:[#allocation3 + $0x760] sm:$0xff] %v679
      %712 = vst [vmem:[#allocation3 + $0x7a8] sm:$0xff] %v680
      %713 = vst [vmem:[#allocation3 + $0x7f0] sm:$0xff] %v681
      %714 = vst [vmem:[#allocation3 + $0x838] sm:$0xff] %v682
      %715 = vst [vmem:[#allocation3 + $0x880] sm:$0xff] %v683
      %716 = vst [vmem:[#allocation3 + $0x8c8] sm:$0xff] %v684
      %v717 = vld [vmem:[%s428] sm:$0xff]
      %v718 = vld [vmem:[%s428 + $0x10] sm:$0xff]
      %v719 = vld [vmem:[%s428 + $0x20] sm:$0xff]
      %v720 = vld [vmem:[%s428 + $0x30] sm:$0xff]
      %v721 = vld [vmem:[%s428 + $0x40] sm:$0xff]
      %v722 = vld [vmem:[%s428 + $0x50] sm:$0xff]
      %v723 = vld [vmem:[%s428 + $0x60] sm:$0xff]
      %v724 = vld [vmem:[%s428 + $0x70] sm:$0xff]
      %v725 = vld [vmem:[%s428 + $0xa0] sm:$0xff]
      %v726 = vld [vmem:[%s428 + $0xb0] sm:$0xff]
      %v727 = vld [vmem:[%s428 + $0xc0] sm:$0xff]
      %v728 = vld [vmem:[%s428 + $0xd0] sm:$0xff]
      %v729 = vld [vmem:[%s428 + $0xe0] sm:$0xff]
      %v730 = vld [vmem:[%s428 + $0xf0] sm:$0xff]
      %v731 = vld [vmem:[%s428 + $0x100] sm:$0xff]
      %v732 = vld [vmem:[%s428 + $0x110] sm:$0xff]
      %v733 = vld [vmem:[%s428 + $0x140] sm:$0xff]
      %v734 = vld [vmem:[%s428 + $0x150] sm:$0xff]
      %v735 = vld [vmem:[%s428 + $0x160] sm:$0xff]
      %v736 = vld [vmem:[%s428 + $0x170] sm:$0xff]
      %v737 = vld [vmem:[%s428 + $0x180] sm:$0xff]
      %v738 = vld [vmem:[%s428 + $0x190] sm:$0xff]
      %v739 = vld [vmem:[%s428 + $0x1a0] sm:$0xff]
      %v740 = vld [vmem:[%s428 + $0x1b0] sm:$0xff]
      %v741 = vld [vmem:[%s428 + $0x1e0] sm:$0xff]
      %v742 = vld [vmem:[%s428 + $0x1f0] sm:$0xff]
      %v743 = vld [vmem:[%s428 + $0x200] sm:$0xff]
      %v744 = vld [vmem:[%s428 + $0x210] sm:$0xff]
      %v745 = vld [vmem:[%s428 + $0x220] sm:$0xff]
      %v746 = vld [vmem:[%s428 + $0x230] sm:$0xff]
      %v747 = vld [vmem:[%s428 + $0x240] sm:$0xff]
      %v748 = vld [vmem:[%s428 + $0x250] sm:$0xff]
      %749 = vst [vmem:[#allocation3 + $0x18] sm:$0xff] %v717
      %750 = vst [vmem:[#allocation3 + $0x60] sm:$0xff] %v718
      %751 = vst [vmem:[#allocation3 + $0xa8] sm:$0xff] %v719
      %752 = vst [vmem:[#allocation3 + $0xf0] sm:$0xff] %v720
      %753 = vst [vmem:[#allocation3 + $0x138] sm:$0xff] %v721
      %754 = vst [vmem:[#allocation3 + $0x180] sm:$0xff] %v722
      %755 = vst [vmem:[#allocation3 + $0x1c8] sm:$0xff] %v723
      %756 = vst [vmem:[#allocation3 + $0x210] sm:$0xff] %v724
      %757 = vst [vmem:[#allocation3 + $0x258] sm:$0xff] %v725
      %758 = vst [vmem:[#allocation3 + $0x2a0] sm:$0xff] %v726
      %759 = vst [vmem:[#allocation3 + $0x2e8] sm:$0xff] %v727
      %760 = vst [vmem:[#allocation3 + $0x330] sm:$0xff] %v728
      %761 = vst [vmem:[#allocation3 + $0x378] sm:$0xff] %v729
      %762 = vst [vmem:[#allocation3 + $0x3c0] sm:$0xff] %v730
      %763 = vst [vmem:[#allocation3 + $0x408] sm:$0xff] %v731
      %764 = vst [vmem:[#allocation3 + $0x450] sm:$0xff] %v732
      %765 = vst [vmem:[#allocation3 + $0x498] sm:$0xff] %v733
      %766 = vst [vmem:[#allocation3 + $0x4e0] sm:$0xff] %v734
      %767 = vst [vmem:[#allocation3 + $0x528] sm:$0xff] %v735
      %768 = vst [vmem:[#allocation3 + $0x570] sm:$0xff] %v736
      %769 = vst [vmem:[#allocation3 + $0x5b8] sm:$0xff] %v737
      %770 = vst [vmem:[#allocation3 + $0x600] sm:$0xff] %v738
      %771 = vst [vmem:[#allocation3 + $0x648] sm:$0xff] %v739
      %772 = vst [vmem:[#allocation3 + $0x690] sm:$0xff] %v740
      %773 = vst [vmem:[#allocation3 + $0x6d8] sm:$0xff] %v741
      %774 = vst [vmem:[#allocation3 + $0x720] sm:$0xff] %v742
      %775 = vst [vmem:[#allocation3 + $0x768] sm:$0xff] %v743
      %776 = vst [vmem:[#allocation3 + $0x7b0] sm:$0xff] %v744
      %777 = vst [vmem:[#allocation3 + $0x7f8] sm:$0xff] %v745
      %778 = vst [vmem:[#allocation3 + $0x840] sm:$0xff] %v746
      %779 = vst [vmem:[#allocation3 + $0x888] sm:$0xff] %v747
      %780 = vst [vmem:[#allocation3 + $0x8d0] sm:$0xff] %v748
      %v781 = vld [vmem:[%s428 + $0x1] sm:$0xff]
      %v782 = vld [vmem:[%s428 + $0x11] sm:$0xff]
      %v783 = vld [vmem:[%s428 + $0x21] sm:$0xff]
      %v784 = vld [vmem:[%s428 + $0x31] sm:$0xff]
      %v785 = vld [vmem:[%s428 + $0x41] sm:$0xff]
      %v786 = vld [vmem:[%s428 + $0x51] sm:$0xff]
      %v787 = vld [vmem:[%s428 + $0x61] sm:$0xff]
      %v788 = vld [vmem:[%s428 + $0x71] sm:$0xff]
      %v789 = vld [vmem:[%s428 + $0xa1] sm:$0xff]
      %v790 = vld [vmem:[%s428 + $0xb1] sm:$0xff]
      %v791 = vld [vmem:[%s428 + $0xc1] sm:$0xff]
      %v792 = vld [vmem:[%s428 + $0xd1] sm:$0xff]
      %v793 = vld [vmem:[%s428 + $0xe1] sm:$0xff]
      %v794 = vld [vmem:[%s428 + $0xf1] sm:$0xff]
      %v795 = vld [vmem:[%s428 + $0x101] sm:$0xff]
      %v796 = vld [vmem:[%s428 + $0x111] sm:$0xff]
      %v797 = vld [vmem:[%s428 + $0x141] sm:$0xff]
      %v798 = vld [vmem:[%s428 + $0x151] sm:$0xff]
      %v799 = vld [vmem:[%s428 + $0x161] sm:$0xff]
      %v800 = vld [vmem:[%s428 + $0x171] sm:$0xff]
      %v801 = vld [vmem:[%s428 + $0x181] sm:$0xff]
      %v802 = vld [vmem:[%s428 + $0x191] sm:$0xff]
      %v803 = vld [vmem:[%s428 + $0x1a1] sm:$0xff]
      %v804 = vld [vmem:[%s428 + $0x1b1] sm:$0xff]
      %v805 = vld [vmem:[%s428 + $0x1e1] sm:$0xff]
      %v806 = vld [vmem:[%s428 + $0x1f1] sm:$0xff]
      %v807 = vld [vmem:[%s428 + $0x201] sm:$0xff]
      %v808 = vld [vmem:[%s428 + $0x211] sm:$0xff]
      %v809 = vld [vmem:[%s428 + $0x221] sm:$0xff]
      %v810 = vld [vmem:[%s428 + $0x231] sm:$0xff]
      %v811 = vld [vmem:[%s428 + $0x241] sm:$0xff]
      %v812 = vld [vmem:[%s428 + $0x251] sm:$0xff]
      %813 = vst [vmem:[#allocation3 + $0x20] sm:$0xff] %v781
      %814 = vst [vmem:[#allocation3 + $0x68] sm:$0xff] %v782
      %815 = vst [vmem:[#allocation3 + $0xb0] sm:$0xff] %v783
      %816 = vst [vmem:[#allocation3 + $0xf8] sm:$0xff] %v784
      %817 = vst [vmem:[#allocation3 + $0x140] sm:$0xff] %v785
      %818 = vst [vmem:[#allocation3 + $0x188] sm:$0xff] %v786
      %819 = vst [vmem:[#allocation3 + $0x1d0] sm:$0xff] %v787
      %820 = vst [vmem:[#allocation3 + $0x218] sm:$0xff] %v788
      %821 = vst [vmem:[#allocation3 + $0x260] sm:$0xff] %v789
      %822 = vst [vmem:[#allocation3 + $0x2a8] sm:$0xff] %v790
      %823 = vst [vmem:[#allocation3 + $0x2f0] sm:$0xff] %v791
      %824 = vst [vmem:[#allocation3 + $0x338] sm:$0xff] %v792
      %825 = vst [vmem:[#allocation3 + $0x380] sm:$0xff] %v793
      %826 = vst [vmem:[#allocation3 + $0x3c8] sm:$0xff] %v794
      %827 = vst [vmem:[#allocation3 + $0x410] sm:$0xff] %v795
      %828 = vst [vmem:[#allocation3 + $0x458] sm:$0xff] %v796
      %829 = vst [vmem:[#allocation3 + $0x4a0] sm:$0xff] %v797
      %830 = vst [vmem:[#allocation3 + $0x4e8] sm:$0xff] %v798
      %831 = vst [vmem:[#allocation3 + $0x530] sm:$0xff] %v799
      %832 = vst [vmem:[#allocation3 + $0x578] sm:$0xff] %v800
      %833 = vst [vmem:[#allocation3 + $0x5c0] sm:$0xff] %v801
      %834 = vst [vmem:[#allocation3 + $0x608] sm:$0xff] %v802
      %835 = vst [vmem:[#allocation3 + $0x650] sm:$0xff] %v803
      %836 = vst [vmem:[#allocation3 + $0x698] sm:$0xff] %v804
      %837 = vst [vmem:[#allocation3 + $0x6e0] sm:$0xff] %v805
      %838 = vst [vmem:[#allocation3 + $0x728] sm:$0xff] %v806
      %839 = vst [vmem:[#allocation3 + $0x770] sm:$0xff] %v807
      %840 = vst [vmem:[#allocation3 + $0x7b8] sm:$0xff] %v808
      %841 = vst [vmem:[#allocation3 + $0x800] sm:$0xff] %v809
      %842 = vst [vmem:[#allocation3 + $0x848] sm:$0xff] %v810
      %843 = vst [vmem:[#allocation3 + $0x890] sm:$0xff] %v811
      %844 = vst [vmem:[#allocation3 + $0x8d8] sm:$0xff] %v812
      %v845 = vld [vmem:[%s428 + $0x2] sm:$0xff]
      %v846 = vld [vmem:[%s428 + $0x12] sm:$0xff]
      %v847 = vld [vmem:[%s428 + $0x22] sm:$0xff]
      %v848 = vld [vmem:[%s428 + $0x32] sm:$0xff]
      %v849 = vld [vmem:[%s428 + $0x42] sm:$0xff]
      %v850 = vld [vmem:[%s428 + $0x52] sm:$0xff]
      %v851 = vld [vmem:[%s428 + $0x62] sm:$0xff]
      %v852 = vld [vmem:[%s428 + $0x72] sm:$0xff]
      %v853 = vld [vmem:[%s428 + $0xa2] sm:$0xff]
      %v854 = vld [vmem:[%s428 + $0xb2] sm:$0xff]
      %v855 = vld [vmem:[%s428 + $0xc2] sm:$0xff]
      %v856 = vld [vmem:[%s428 + $0xd2] sm:$0xff]
      %v857 = vld [vmem:[%s428 + $0xe2] sm:$0xff]
      %v858 = vld [vmem:[%s428 + $0xf2] sm:$0xff]
      %v859 = vld [vmem:[%s428 + $0x102] sm:$0xff]
      %v860 = vld [vmem:[%s428 + $0x112] sm:$0xff]
      %v861 = vld [vmem:[%s428 + $0x142] sm:$0xff]
      %v862 = vld [vmem:[%s428 + $0x152] sm:$0xff]
      %v863 = vld [vmem:[%s428 + $0x162] sm:$0xff]
      %v864 = vld [vmem:[%s428 + $0x172] sm:$0xff]
      %v865 = vld [vmem:[%s428 + $0x182] sm:$0xff]
      %v866 = vld [vmem:[%s428 + $0x192] sm:$0xff]
      %v867 = vld [vmem:[%s428 + $0x1a2] sm:$0xff]
      %v868 = vld [vmem:[%s428 + $0x1b2] sm:$0xff]
      %v869 = vld [vmem:[%s428 + $0x1e2] sm:$0xff]
      %v870 = vld [vmem:[%s428 + $0x1f2] sm:$0xff]
      %v871 = vld [vmem:[%s428 + $0x202] sm:$0xff]
      %v872 = vld [vmem:[%s428 + $0x212] sm:$0xff]
      %v873 = vld [vmem:[%s428 + $0x222] sm:$0xff]
      %v874 = vld [vmem:[%s428 + $0x232] sm:$0xff]
      %v875 = vld [vmem:[%s428 + $0x242] sm:$0xff]
      %v876 = vld [vmem:[%s428 + $0x252] sm:$0xff]
      %877 = vst [vmem:[#allocation3 + $0x28] sm:$0xff] %v845
      %878 = vst [vmem:[#allocation3 + $0x70] sm:$0xff] %v846
      %879 = vst [vmem:[#allocation3 + $0xb8] sm:$0xff] %v847
      %880 = vst [vmem:[#allocation3 + $0x100] sm:$0xff] %v848
      %881 = vst [vmem:[#allocation3 + $0x148] sm:$0xff] %v849
      %882 = vst [vmem:[#allocation3 + $0x190] sm:$0xff] %v850
      %883 = vst [vmem:[#allocation3 + $0x1d8] sm:$0xff] %v851
      %884 = vst [vmem:[#allocation3 + $0x220] sm:$0xff] %v852
      %885 = vst [vmem:[#allocation3 + $0x268] sm:$0xff] %v853
      %886 = vst [vmem:[#allocation3 + $0x2b0] sm:$0xff] %v854
      %887 = vst [vmem:[#allocation3 + $0x2f8] sm:$0xff] %v855
      %888 = vst [vmem:[#allocation3 + $0x340] sm:$0xff] %v856
      %889 = vst [vmem:[#allocation3 + $0x388] sm:$0xff] %v857
      %890 = vst [vmem:[#allocation3 + $0x3d0] sm:$0xff] %v858
      %891 = vst [vmem:[#allocation3 + $0x418] sm:$0xff] %v859
      %892 = vst [vmem:[#allocation3 + $0x460] sm:$0xff] %v860
      %893 = vst [vmem:[#allocation3 + $0x4a8] sm:$0xff] %v861
      %894 = vst [vmem:[#allocation3 + $0x4f0] sm:$0xff] %v862
      %895 = vst [vmem:[#allocation3 + $0x538] sm:$0xff] %v863
      %896 = vst [vmem:[#allocation3 + $0x580] sm:$0xff] %v864
      %897 = vst [vmem:[#allocation3 + $0x5c8] sm:$0xff] %v865
      %898 = vst [vmem:[#allocation3 + $0x610] sm:$0xff] %v866
      %899 = vst [vmem:[#allocation3 + $0x658] sm:$0xff] %v867
      %900 = vst [vmem:[#allocation3 + $0x6a0] sm:$0xff] %v868
      %901 = vst [vmem:[#allocation3 + $0x6e8] sm:$0xff] %v869
      %902 = vst [vmem:[#allocation3 + $0x730] sm:$0xff] %v870
      %903 = vst [vmem:[#allocation3 + $0x778] sm:$0xff] %v871
      %904 = vst [vmem:[#allocation3 + $0x7c0] sm:$0xff] %v872
      %905 = vst [vmem:[#allocation3 + $0x808] sm:$0xff] %v873
      %906 = vst [vmem:[#allocation3 + $0x850] sm:$0xff] %v874
      %907 = vst [vmem:[#allocation3 + $0x898] sm:$0xff] %v875
      %908 = vst [vmem:[#allocation3 + $0x8e0] sm:$0xff] %v876
      %s909 = scalar_lea.vmem [#allocation2], 32
      %v910 = vld [vmem:[%s909] sm:$0xff]
      %v911 = vld [vmem:[%s909 + $0x10] sm:$0xff]
      %v912 = vld [vmem:[%s909 + $0x20] sm:$0xff]
      %v913 = vld [vmem:[%s909 + $0x30] sm:$0xff]
      %v914 = vld [vmem:[%s909 + $0x40] sm:$0xff]
      %v915 = vld [vmem:[%s909 + $0x50] sm:$0xff]
      %v916 = vld [vmem:[%s909 + $0x60] sm:$0xff]
      %v917 = vld [vmem:[%s909 + $0x70] sm:$0xff]
      %v918 = vld [vmem:[%s909 + $0xa0] sm:$0xff]
      %v919 = vld [vmem:[%s909 + $0xb0] sm:$0xff]
      %v920 = vld [vmem:[%s909 + $0xc0] sm:$0xff]
      %v921 = vld [vmem:[%s909 + $0xd0] sm:$0xff]
      %v922 = vld [vmem:[%s909 + $0xe0] sm:$0xff]
      %v923 = vld [vmem:[%s909 + $0xf0] sm:$0xff]
      %v924 = vld [vmem:[%s909 + $0x100] sm:$0xff]
      %v925 = vld [vmem:[%s909 + $0x110] sm:$0xff]
      %v926 = vld [vmem:[%s909 + $0x140] sm:$0xff]
      %v927 = vld [vmem:[%s909 + $0x150] sm:$0xff]
      %v928 = vld [vmem:[%s909 + $0x160] sm:$0xff]
      %v929 = vld [vmem:[%s909 + $0x170] sm:$0xff]
      %v930 = vld [vmem:[%s909 + $0x180] sm:$0xff]
      %v931 = vld [vmem:[%s909 + $0x190] sm:$0xff]
      %v932 = vld [vmem:[%s909 + $0x1a0] sm:$0xff]
      %v933 = vld [vmem:[%s909 + $0x1b0] sm:$0xff]
      %v934 = vld [vmem:[%s909 + $0x1e0] sm:$0xff]
      %v935 = vld [vmem:[%s909 + $0x1f0] sm:$0xff]
      %v936 = vld [vmem:[%s909 + $0x200] sm:$0xff]
      %v937 = vld [vmem:[%s909 + $0x210] sm:$0xff]
      %v938 = vld [vmem:[%s909 + $0x220] sm:$0xff]
      %v939 = vld [vmem:[%s909 + $0x230] sm:$0xff]
      %v940 = vld [vmem:[%s909 + $0x240] sm:$0xff]
      %v941 = vld [vmem:[%s909 + $0x250] sm:$0xff]
      %942 = vst [vmem:[#allocation3 + $0x30] sm:$0xff] %v910
      %943 = vst [vmem:[#allocation3 + $0x78] sm:$0xff] %v911
      %944 = vst [vmem:[#allocation3 + $0xc0] sm:$0xff] %v912
      %945 = vst [vmem:[#allocation3 + $0x108] sm:$0xff] %v913
      %946 = vst [vmem:[#allocation3 + $0x150] sm:$0xff] %v914
      %947 = vst [vmem:[#allocation3 + $0x198] sm:$0xff] %v915
      %948 = vst [vmem:[#allocation3 + $0x1e0] sm:$0xff] %v916
      %949 = vst [vmem:[#allocation3 + $0x228] sm:$0xff] %v917
      %950 = vst [vmem:[#allocation3 + $0x270] sm:$0xff] %v918
      %951 = vst [vmem:[#allocation3 + $0x2b8] sm:$0xff] %v919
      %952 = vst [vmem:[#allocation3 + $0x300] sm:$0xff] %v920
      %953 = vst [vmem:[#allocation3 + $0x348] sm:$0xff] %v921
      %954 = vst [vmem:[#allocation3 + $0x390] sm:$0xff] %v922
      %955 = vst [vmem:[#allocation3 + $0x3d8] sm:$0xff] %v923
      %956 = vst [vmem:[#allocation3 + $0x420] sm:$0xff] %v924
      %957 = vst [vmem:[#allocation3 + $0x468] sm:$0xff] %v925
      %958 = vst [vmem:[#allocation3 + $0x4b0] sm:$0xff] %v926
      %959 = vst [vmem:[#allocation3 + $0x4f8] sm:$0xff] %v927
      %960 = vst [vmem:[#allocation3 + $0x540] sm:$0xff] %v928
      %961 = vst [vmem:[#allocation3 + $0x588] sm:$0xff] %v929
      %962 = vst [vmem:[#allocation3 + $0x5d0] sm:$0xff] %v930
      %963 = vst [vmem:[#allocation3 + $0x618] sm:$0xff] %v931
      %964 = vst [vmem:[#allocation3 + $0x660] sm:$0xff] %v932
      %965 = vst [vmem:[#allocation3 + $0x6a8] sm:$0xff] %v933
      %966 = vst [vmem:[#allocation3 + $0x6f0] sm:$0xff] %v934
      %967 = vst [vmem:[#allocation3 + $0x738] sm:$0xff] %v935
      %968 = vst [vmem:[#allocation3 + $0x780] sm:$0xff] %v936
      %969 = vst [vmem:[#allocation3 + $0x7c8] sm:$0xff] %v937
      %970 = vst [vmem:[#allocation3 + $0x810] sm:$0xff] %v938
      %971 = vst [vmem:[#allocation3 + $0x858] sm:$0xff] %v939
      %972 = vst [vmem:[#allocation3 + $0x8a0] sm:$0xff] %v940
      %973 = vst [vmem:[#allocation3 + $0x8e8] sm:$0xff] %v941
      %v974 = vld [vmem:[%s909 + $0x1] sm:$0xff]
      %v975 = vld [vmem:[%s909 + $0x11] sm:$0xff]
      %v976 = vld [vmem:[%s909 + $0x21] sm:$0xff]
      %v977 = vld [vmem:[%s909 + $0x31] sm:$0xff]
      %v978 = vld [vmem:[%s909 + $0x41] sm:$0xff]
      %v979 = vld [vmem:[%s909 + $0x51] sm:$0xff]
      %v980 = vld [vmem:[%s909 + $0x61] sm:$0xff]
      %v981 = vld [vmem:[%s909 + $0x71] sm:$0xff]
      %v982 = vld [vmem:[%s909 + $0xa1] sm:$0xff]
      %v983 = vld [vmem:[%s909 + $0xb1] sm:$0xff]
      %v984 = vld [vmem:[%s909 + $0xc1] sm:$0xff]
      %v985 = vld [vmem:[%s909 + $0xd1] sm:$0xff]
      %v986 = vld [vmem:[%s909 + $0xe1] sm:$0xff]
      %v987 = vld [vmem:[%s909 + $0xf1] sm:$0xff]
      %v988 = vld [vmem:[%s909 + $0x101] sm:$0xff]
      %v989 = vld [vmem:[%s909 + $0x111] sm:$0xff]
      %v990 = vld [vmem:[%s909 + $0x141] sm:$0xff]
      %v991 = vld [vmem:[%s909 + $0x151] sm:$0xff]
      %v992 = vld [vmem:[%s909 + $0x161] sm:$0xff]
      %v993 = vld [vmem:[%s909 + $0x171] sm:$0xff]
      %v994 = vld [vmem:[%s909 + $0x181] sm:$0xff]
      %v995 = vld [vmem:[%s909 + $0x191] sm:$0xff]
      %v996 = vld [vmem:[%s909 + $0x1a1] sm:$0xff]
      %v997 = vld [vmem:[%s909 + $0x1b1] sm:$0xff]
      %v998 = vld [vmem:[%s909 + $0x1e1] sm:$0xff]
      %v999 = vld [vmem:[%s909 + $0x1f1] sm:$0xff]
      %v1000 = vld [vmem:[%s909 + $0x201] sm:$0xff]
      %v1001 = vld [vmem:[%s909 + $0x211] sm:$0xff]
      %v1002 = vld [vmem:[%s909 + $0x221] sm:$0xff]
      %v1003 = vld [vmem:[%s909 + $0x231] sm:$0xff]
      %v1004 = vld [vmem:[%s909 + $0x241] sm:$0xff]
      %v1005 = vld [vmem:[%s909 + $0x251] sm:$0xff]
      %1006 = vst [vmem:[#allocation3 + $0x38] sm:$0xff] %v974
      %1007 = vst [vmem:[#allocation3 + $0x80] sm:$0xff] %v975
      %1008 = vst [vmem:[#allocation3 + $0xc8] sm:$0xff] %v976
      %1009 = vst [vmem:[#allocation3 + $0x110] sm:$0xff] %v977
      %1010 = vst [vmem:[#allocation3 + $0x158] sm:$0xff] %v978
      %1011 = vst [vmem:[#allocation3 + $0x1a0] sm:$0xff] %v979
      %1012 = vst [vmem:[#allocation3 + $0x1e8] sm:$0xff] %v980
      %1013 = vst [vmem:[#allocation3 + $0x230] sm:$0xff] %v981
      %1014 = vst [vmem:[#allocation3 + $0x278] sm:$0xff] %v982
      %1015 = vst [vmem:[#allocation3 + $0x2c0] sm:$0xff] %v983
      %1016 = vst [vmem:[#allocation3 + $0x308] sm:$0xff] %v984
      %1017 = vst [vmem:[#allocation3 + $0x350] sm:$0xff] %v985
      %1018 = vst [vmem:[#allocation3 + $0x398] sm:$0xff] %v986
      %1019 = vst [vmem:[#allocation3 + $0x3e0] sm:$0xff] %v987
      %1020 = vst [vmem:[#allocation3 + $0x428] sm:$0xff] %v988
      %1021 = vst [vmem:[#allocation3 + $0x470] sm:$0xff] %v989
      %1022 = vst [vmem:[#allocation3 + $0x4b8] sm:$0xff] %v990
      %1023 = vst [vmem:[#allocation3 + $0x500] sm:$0xff] %v991
      %1024 = vst [vmem:[#allocation3 + $0x548] sm:$0xff] %v992
      %1025 = vst [vmem:[#allocation3 + $0x590] sm:$0xff] %v993
      %1026 = vst [vmem:[#allocation3 + $0x5d8] sm:$0xff] %v994
      %1027 = vst [vmem:[#allocation3 + $0x620] sm:$0xff] %v995
      %1028 = vst [vmem:[#allocation3 + $0x668] sm:$0xff] %v996
      %1029 = vst [vmem:[#allocation3 + $0x6b0] sm:$0xff] %v997
      %1030 = vst [vmem:[#allocation3 + $0x6f8] sm:$0xff] %v998
      %1031 = vst [vmem:[#allocation3 + $0x740] sm:$0xff] %v999
      %1032 = vst [vmem:[#allocation3 + $0x788] sm:$0xff] %v1000
      %1033 = vst [vmem:[#allocation3 + $0x7d0] sm:$0xff] %v1001
      %1034 = vst [vmem:[#allocation3 + $0x818] sm:$0xff] %v1002
      %1035 = vst [vmem:[#allocation3 + $0x860] sm:$0xff] %v1003
      %1036 = vst [vmem:[#allocation3 + $0x8a8] sm:$0xff] %v1004
      %1037 = vst [vmem:[#allocation3 + $0x8f0] sm:$0xff] %v1005
      %v1038 = vld [vmem:[%s909 + $0x2] sm:$0xff]
      %v1039 = vld [vmem:[%s909 + $0x12] sm:$0xff]
      %v1040 = vld [vmem:[%s909 + $0x22] sm:$0xff]
      %v1041 = vld [vmem:[%s909 + $0x32] sm:$0xff]
      %v1042 = vld [vmem:[%s909 + $0x42] sm:$0xff]
      %v1043 = vld [vmem:[%s909 + $0x52] sm:$0xff]
      %v1044 = vld [vmem:[%s909 + $0x62] sm:$0xff]
      %v1045 = vld [vmem:[%s909 + $0x72] sm:$0xff]
      %v1046 = vld [vmem:[%s909 + $0xa2] sm:$0xff]
      %v1047 = vld [vmem:[%s909 + $0xb2] sm:$0xff]
      %v1048 = vld [vmem:[%s909 + $0xc2] sm:$0xff]
      %v1049 = vld [vmem:[%s909 + $0xd2] sm:$0xff]
      %v1050 = vld [vmem:[%s909 + $0xe2] sm:$0xff]
      %v1051 = vld [vmem:[%s909 + $0xf2] sm:$0xff]
      %v1052 = vld [vmem:[%s909 + $0x102] sm:$0xff]
      %v1053 = vld [vmem:[%s909 + $0x112] sm:$0xff]
      %v1054 = vld [vmem:[%s909 + $0x142] sm:$0xff]
      %v1055 = vld [vmem:[%s909 + $0x152] sm:$0xff]
      %v1056 = vld [vmem:[%s909 + $0x162] sm:$0xff]
      %v1057 = vld [vmem:[%s909 + $0x172] sm:$0xff]
      %v1058 = vld [vmem:[%s909 + $0x182] sm:$0xff]
      %v1059 = vld [vmem:[%s909 + $0x192] sm:$0xff]
      %v1060 = vld [vmem:[%s909 + $0x1a2] sm:$0xff]
      %v1061 = vld [vmem:[%s909 + $0x1b2] sm:$0xff]
      %v1062 = vld [vmem:[%s909 + $0x1e2] sm:$0xff]
      %v1063 = vld [vmem:[%s909 + $0x1f2] sm:$0xff]
      %v1064 = vld [vmem:[%s909 + $0x202] sm:$0xff]
      %v1065 = vld [vmem:[%s909 + $0x212] sm:$0xff]
      %v1066 = vld [vmem:[%s909 + $0x222] sm:$0xff]
      %v1067 = vld [vmem:[%s909 + $0x232] sm:$0xff]
      %v1068 = vld [vmem:[%s909 + $0x242] sm:$0xff]
      %v1069 = vld [vmem:[%s909 + $0x252] sm:$0xff]
      %1070 = vst [vmem:[#allocation3 + $0x40] sm:$0xff] %v1038
      %1071 = vst [vmem:[#allocation3 + $0x88] sm:$0xff] %v1039
      %1072 = vst [vmem:[#allocation3 + $0xd0] sm:$0xff] %v1040
      %1073 = vst [vmem:[#allocation3 + $0x118] sm:$0xff] %v1041
      %1074 = vst [vmem:[#allocation3 + $0x160] sm:$0xff] %v1042
      %1075 = vst [vmem:[#allocation3 + $0x1a8] sm:$0xff] %v1043
      %1076 = vst [vmem:[#allocation3 + $0x1f0] sm:$0xff] %v1044
      %1077 = vst [vmem:[#allocation3 + $0x238] sm:$0xff] %v1045
      %1078 = vst [vmem:[#allocation3 + $0x280] sm:$0xff] %v1046
      %1079 = vst [vmem:[#allocation3 + $0x2c8] sm:$0xff] %v1047
      %1080 = vst [vmem:[#allocation3 + $0x310] sm:$0xff] %v1048
      %1081 = vst [vmem:[#allocation3 + $0x358] sm:$0xff] %v1049
      %1082 = vst [vmem:[#allocation3 + $0x3a0] sm:$0xff] %v1050
      %1083 = vst [vmem:[#allocation3 + $0x3e8] sm:$0xff] %v1051
      %1084 = vst [vmem:[#allocation3 + $0x430] sm:$0xff] %v1052
      %1085 = vst [vmem:[#allocation3 + $0x478] sm:$0xff] %v1053
      %1086 = vst [vmem:[#allocation3 + $0x4c0] sm:$0xff] %v1054
      %1087 = vst [vmem:[#allocation3 + $0x508] sm:$0xff] %v1055
      %1088 = vst [vmem:[#allocation3 + $0x550] sm:$0xff] %v1056
      %1089 = vst [vmem:[#allocation3 + $0x598] sm:$0xff] %v1057
      %1090 = vst [vmem:[#allocation3 + $0x5e0] sm:$0xff] %v1058
      %1091 = vst [vmem:[#allocation3 + $0x628] sm:$0xff] %v1059
      %1092 = vst [vmem:[#allocation3 + $0x670] sm:$0xff] %v1060
      %1093 = vst [vmem:[#allocation3 + $0x6b8] sm:$0xff] %v1061
      %1094 = vst [vmem:[#allocation3 + $0x700] sm:$0xff] %v1062
      %1095 = vst [vmem:[#allocation3 + $0x748] sm:$0xff] %v1063
      %1096 = vst [vmem:[#allocation3 + $0x790] sm:$0xff] %v1064
      %1097 = vst [vmem:[#allocation3 + $0x7d8] sm:$0xff] %v1065
      %1098 = vst [vmem:[#allocation3 + $0x820] sm:$0xff] %v1066
      %1099 = vst [vmem:[#allocation3 + $0x868] sm:$0xff] %v1067
      %1100 = vst [vmem:[#allocation3 + $0x8b0] sm:$0xff] %v1068
      %1101 = vst [vmem:[#allocation3 + $0x8f8] sm:$0xff] %v1069
      %v1102 = vld [vmem:[#allocation3] sm:$0xff]
      %v1103 = vld [vmem:[#allocation3 + $0x8] sm:$0xff]
      %v1104 = vld [vmem:[#allocation3 + $0x10] sm:$0xff]
      %v1105 = vld [vmem:[#allocation3 + $0x18] sm:$0xff]
      %v1106 = vld [vmem:[#allocation3 + $0x20] sm:$0xff]
      %v1107 = vld [vmem:[#allocation3 + $0x28] sm:$0xff]
      %v1108 = vld [vmem:[#allocation3 + $0x30] sm:$0xff]
      %v1109 = vld [vmem:[#allocation3 + $0x38] sm:$0xff]
      %v1110 = vld [vmem:[#allocation3 + $0x40] sm:$0xff]
      %v1111 = vld [vmem:[#allocation3 + $0x48] sm:$0xff]
      %v1112 = vld [vmem:[#allocation3 + $0x50] sm:$0xff]
      %v1113 = vld [vmem:[#allocation3 + $0x58] sm:$0xff]
      %v1114 = vld [vmem:[#allocation3 + $0x60] sm:$0xff]
      %v1115 = vld [vmem:[#allocation3 + $0x68] sm:$0xff]
      %v1116 = vld [vmem:[#allocation3 + $0x70] sm:$0xff]
      %v1117 = vld [vmem:[#allocation3 + $0x78] sm:$0xff]
      %v1118 = vld [vmem:[#allocation3 + $0x80] sm:$0xff]
      %v1119 = vld [vmem:[#allocation3 + $0x88] sm:$0xff]
      %v1120 = vld [vmem:[#allocation3 + $0x90] sm:$0xff]
      %v1121 = vld [vmem:[#allocation3 + $0x98] sm:$0xff]
      %v1122 = vld [vmem:[#allocation3 + $0xa0] sm:$0xff]
      %v1123 = vld [vmem:[#allocation3 + $0xa8] sm:$0xff]
      %v1124 = vld [vmem:[#allocation3 + $0xb0] sm:$0xff]
      %v1125 = vld [vmem:[#allocation3 + $0xb8] sm:$0xff]
      %v1126 = vld [vmem:[#allocation3 + $0xc0] sm:$0xff]
      %v1127 = vld [vmem:[#allocation3 + $0xc8] sm:$0xff]
      %v1128 = vld [vmem:[#allocation3 + $0xd0] sm:$0xff]
      %v1129 = vld [vmem:[#allocation3 + $0xd8] sm:$0xff]
      %v1130 = vld [vmem:[#allocation3 + $0xe0] sm:$0xff]
      %v1131 = vld [vmem:[#allocation3 + $0xe8] sm:$0xff]
      %v1132 = vld [vmem:[#allocation3 + $0xf0] sm:$0xff]
      %v1133 = vld [vmem:[#allocation3 + $0xf8] sm:$0xff]
      %v1134 = vld [vmem:[#allocation3 + $0x100] sm:$0xff]
      %v1135 = vld [vmem:[#allocation3 + $0x108] sm:$0xff]
      %v1136 = vld [vmem:[#allocation3 + $0x110] sm:$0xff]
      %v1137 = vld [vmem:[#allocation3 + $0x118] sm:$0xff]
      %v1138 = vld [vmem:[#allocation3 + $0x120] sm:$0xff]
      %v1139 = vld [vmem:[#allocation3 + $0x128] sm:$0xff]
      %v1140 = vld [vmem:[#allocation3 + $0x130] sm:$0xff]
      %v1141 = vld [vmem:[#allocation3 + $0x138] sm:$0xff]
      %v1142 = vld [vmem:[#allocation3 + $0x140] sm:$0xff]
      %v1143 = vld [vmem:[#allocation3 + $0x148] sm:$0xff]
      %v1144 = vld [vmem:[#allocation3 + $0x150] sm:$0xff]
      %v1145 = vld [vmem:[#allocation3 + $0x158] sm:$0xff]
      %v1146 = vld [vmem:[#allocation3 + $0x160] sm:$0xff]
      %v1147 = vld [vmem:[#allocation3 + $0x168] sm:$0xff]
      %v1148 = vld [vmem:[#allocation3 + $0x170] sm:$0xff]
      %v1149 = vld [vmem:[#allocation3 + $0x178] sm:$0xff]
      %v1150 = vld [vmem:[#allocation3 + $0x180] sm:$0xff]
      %v1151 = vld [vmem:[#allocation3 + $0x188] sm:$0xff]
      %v1152 = vld [vmem:[#allocation3 + $0x190] sm:$0xff]
      %v1153 = vld [vmem:[#allocation3 + $0x198] sm:$0xff]
      %v1154 = vld [vmem:[#allocation3 + $0x1a0] sm:$0xff]
      %v1155 = vld [vmem:[#allocation3 + $0x1a8] sm:$0xff]
      %v1156 = vld [vmem:[#allocation3 + $0x1b0] sm:$0xff]
      %v1157 = vld [vmem:[#allocation3 + $0x1b8] sm:$0xff]
      %v1158 = vld [vmem:[#allocation3 + $0x1c0] sm:$0xff]
      %v1159 = vld [vmem:[#allocation3 + $0x1c8] sm:$0xff]
      %v1160 = vld [vmem:[#allocation3 + $0x1d0] sm:$0xff]
      %v1161 = vld [vmem:[#allocation3 + $0x1d8] sm:$0xff]
      %v1162 = vld [vmem:[#allocation3 + $0x1e0] sm:$0xff]
      %v1163 = vld [vmem:[#allocation3 + $0x1e8] sm:$0xff]
      %v1164 = vld [vmem:[#allocation3 + $0x1f0] sm:$0xff]
      %v1165 = vld [vmem:[#allocation3 + $0x1f8] sm:$0xff]
      %v1166 = vld [vmem:[#allocation3 + $0x200] sm:$0xff]
      %v1167 = vld [vmem:[#allocation3 + $0x208] sm:$0xff]
      %v1168 = vld [vmem:[#allocation3 + $0x210] sm:$0xff]
      %v1169 = vld [vmem:[#allocation3 + $0x218] sm:$0xff]
      %v1170 = vld [vmem:[#allocation3 + $0x220] sm:$0xff]
      %v1171 = vld [vmem:[#allocation3 + $0x228] sm:$0xff]
      %v1172 = vld [vmem:[#allocation3 + $0x230] sm:$0xff]
      %v1173 = vld [vmem:[#allocation3 + $0x238] sm:$0xff]
      %v1174 = vld [vmem:[#allocation3 + $0x240] sm:$0xff]
      %v1175 = vld [vmem:[#allocation3 + $0x248] sm:$0xff]
      %v1176 = vld [vmem:[#allocation3 + $0x250] sm:$0xff]
      %v1177 = vld [vmem:[#allocation3 + $0x258] sm:$0xff]
      %v1178 = vld [vmem:[#allocation3 + $0x260] sm:$0xff]
      %v1179 = vld [vmem:[#allocation3 + $0x268] sm:$0xff]
      %v1180 = vld [vmem:[#allocation3 + $0x270] sm:$0xff]
      %v1181 = vld [vmem:[#allocation3 + $0x278] sm:$0xff]
      %v1182 = vld [vmem:[#allocation3 + $0x280] sm:$0xff]
      %v1183 = vld [vmem:[#allocation3 + $0x288] sm:$0xff]
      %v1184 = vld [vmem:[#allocation3 + $0x290] sm:$0xff]
      %v1185 = vld [vmem:[#allocation3 + $0x298] sm:$0xff]
      %v1186 = vld [vmem:[#allocation3 + $0x2a0] sm:$0xff]
      %v1187 = vld [vmem:[#allocation3 + $0x2a8] sm:$0xff]
      %v1188 = vld [vmem:[#allocation3 + $0x2b0] sm:$0xff]
      %v1189 = vld [vmem:[#allocation3 + $0x2b8] sm:$0xff]
      %v1190 = vld [vmem:[#allocation3 + $0x2c0] sm:$0xff]
      %v1191 = vld [vmem:[#allocation3 + $0x2c8] sm:$0xff]
      %v1192 = vld [vmem:[#allocation3 + $0x2d0] sm:$0xff]
      %v1193 = vld [vmem:[#allocation3 + $0x2d8] sm:$0xff]
      %v1194 = vld [vmem:[#allocation3 + $0x2e0] sm:$0xff]
      %v1195 = vld [vmem:[#allocation3 + $0x2e8] sm:$0xff]
      %v1196 = vld [vmem:[#allocation3 + $0x2f0] sm:$0xff]
      %v1197 = vld [vmem:[#allocation3 + $0x2f8] sm:$0xff]
      %v1198 = vld [vmem:[#allocation3 + $0x300] sm:$0xff]
      %v1199 = vld [vmem:[#allocation3 + $0x308] sm:$0xff]
      %v1200 = vld [vmem:[#allocation3 + $0x310] sm:$0xff]
      %v1201 = vld [vmem:[#allocation3 + $0x318] sm:$0xff]
      %v1202 = vld [vmem:[#allocation3 + $0x320] sm:$0xff]
      %v1203 = vld [vmem:[#allocation3 + $0x328] sm:$0xff]
      %v1204 = vld [vmem:[#allocation3 + $0x330] sm:$0xff]
      %v1205 = vld [vmem:[#allocation3 + $0x338] sm:$0xff]
      %v1206 = vld [vmem:[#allocation3 + $0x340] sm:$0xff]
      %v1207 = vld [vmem:[#allocation3 + $0x348] sm:$0xff]
      %v1208 = vld [vmem:[#allocation3 + $0x350] sm:$0xff]
      %v1209 = vld [vmem:[#allocation3 + $0x358] sm:$0xff]
      %v1210 = vld [vmem:[#allocation3 + $0x360] sm:$0xff]
      %v1211 = vld [vmem:[#allocation3 + $0x368] sm:$0xff]
      %v1212 = vld [vmem:[#allocation3 + $0x370] sm:$0xff]
      %v1213 = vld [vmem:[#allocation3 + $0x378] sm:$0xff]
      %v1214 = vld [vmem:[#allocation3 + $0x380] sm:$0xff]
      %v1215 = vld [vmem:[#allocation3 + $0x388] sm:$0xff]
      %v1216 = vld [vmem:[#allocation3 + $0x390] sm:$0xff]
      %v1217 = vld [vmem:[#allocation3 + $0x398] sm:$0xff]
      %v1218 = vld [vmem:[#allocation3 + $0x3a0] sm:$0xff]
      %v1219 = vld [vmem:[#allocation3 + $0x3a8] sm:$0xff]
      %v1220 = vld [vmem:[#allocation3 + $0x3b0] sm:$0xff]
      %v1221 = vld [vmem:[#allocation3 + $0x3b8] sm:$0xff]
      %v1222 = vld [vmem:[#allocation3 + $0x3c0] sm:$0xff]
      %v1223 = vld [vmem:[#allocation3 + $0x3c8] sm:$0xff]
      %v1224 = vld [vmem:[#allocation3 + $0x3d0] sm:$0xff]
      %v1225 = vld [vmem:[#allocation3 + $0x3d8] sm:$0xff]
      %v1226 = vld [vmem:[#allocation3 + $0x3e0] sm:$0xff]
      %v1227 = vld [vmem:[#allocation3 + $0x3e8] sm:$0xff]
      %v1228 = vld [vmem:[#allocation3 + $0x3f0] sm:$0xff]
      %v1229 = vld [vmem:[#allocation3 + $0x3f8] sm:$0xff]
      %v1230 = vld [vmem:[#allocation3 + $0x400] sm:$0xff]
      %v1231 = vld [vmem:[#allocation3 + $0x408] sm:$0xff]
      %v1232 = vld [vmem:[#allocation3 + $0x410] sm:$0xff]
      %v1233 = vld [vmem:[#allocation3 + $0x418] sm:$0xff]
      %v1234 = vld [vmem:[#allocation3 + $0x420] sm:$0xff]
      %v1235 = vld [vmem:[#allocation3 + $0x428] sm:$0xff]
      %v1236 = vld [vmem:[#allocation3 + $0x430] sm:$0xff]
      %v1237 = vld [vmem:[#allocation3 + $0x438] sm:$0xff]
      %v1238 = vld [vmem:[#allocation3 + $0x440] sm:$0xff]
      %v1239 = vld [vmem:[#allocation3 + $0x448] sm:$0xff]
      %v1240 = vld [vmem:[#allocation3 + $0x450] sm:$0xff]
      %v1241 = vld [vmem:[#allocation3 + $0x458] sm:$0xff]
      %v1242 = vld [vmem:[#allocation3 + $0x460] sm:$0xff]
      %v1243 = vld [vmem:[#allocation3 + $0x468] sm:$0xff]
      %v1244 = vld [vmem:[#allocation3 + $0x470] sm:$0xff]
      %v1245 = vld [vmem:[#allocation3 + $0x478] sm:$0xff]
      %v1246 = vld [vmem:[#allocation3 + $0x480] sm:$0xff]
      %v1247 = vld [vmem:[#allocation3 + $0x488] sm:$0xff]
      %v1248 = vld [vmem:[#allocation3 + $0x490] sm:$0xff]
      %v1249 = vld [vmem:[#allocation3 + $0x498] sm:$0xff]
      %v1250 = vld [vmem:[#allocation3 + $0x4a0] sm:$0xff]
      %v1251 = vld [vmem:[#allocation3 + $0x4a8] sm:$0xff]
      %v1252 = vld [vmem:[#allocation3 + $0x4b0] sm:$0xff]
      %v1253 = vld [vmem:[#allocation3 + $0x4b8] sm:$0xff]
      %v1254 = vld [vmem:[#allocation3 + $0x4c0] sm:$0xff]
      %v1255 = vld [vmem:[#allocation3 + $0x4c8] sm:$0xff]
      %v1256 = vld [vmem:[#allocation3 + $0x4d0] sm:$0xff]
      %v1257 = vld [vmem:[#allocation3 + $0x4d8] sm:$0xff]
      %v1258 = vld [vmem:[#allocation3 + $0x4e0] sm:$0xff]
      %v1259 = vld [vmem:[#allocation3 + $0x4e8] sm:$0xff]
      %v1260 = vld [vmem:[#allocation3 + $0x4f0] sm:$0xff]
      %v1261 = vld [vmem:[#allocation3 + $0x4f8] sm:$0xff]
      %v1262 = vld [vmem:[#allocation3 + $0x500] sm:$0xff]
      %v1263 = vld [vmem:[#allocation3 + $0x508] sm:$0xff]
      %v1264 = vld [vmem:[#allocation3 + $0x510] sm:$0xff]
      %v1265 = vld [vmem:[#allocation3 + $0x518] sm:$0xff]
      %v1266 = vld [vmem:[#allocation3 + $0x520] sm:$0xff]
      %v1267 = vld [vmem:[#allocation3 + $0x528] sm:$0xff]
      %v1268 = vld [vmem:[#allocation3 + $0x530] sm:$0xff]
      %v1269 = vld [vmem:[#allocation3 + $0x538] sm:$0xff]
      %v1270 = vld [vmem:[#allocation3 + $0x540] sm:$0xff]
      %v1271 = vld [vmem:[#allocation3 + $0x548] sm:$0xff]
      %v1272 = vld [vmem:[#allocation3 + $0x550] sm:$0xff]
      %v1273 = vld [vmem:[#allocation3 + $0x558] sm:$0xff]
      %v1274 = vld [vmem:[#allocation3 + $0x560] sm:$0xff]
      %v1275 = vld [vmem:[#allocation3 + $0x568] sm:$0xff]
      %v1276 = vld [vmem:[#allocation3 + $0x570] sm:$0xff]
      %v1277 = vld [vmem:[#allocation3 + $0x578] sm:$0xff]
      %v1278 = vld [vmem:[#allocation3 + $0x580] sm:$0xff]
      %v1279 = vld [vmem:[#allocation3 + $0x588] sm:$0xff]
      %v1280 = vld [vmem:[#allocation3 + $0x590] sm:$0xff]
      %v1281 = vld [vmem:[#allocation3 + $0x598] sm:$0xff]
      %v1282 = vld [vmem:[#allocation3 + $0x5a0] sm:$0xff]
      %v1283 = vld [vmem:[#allocation3 + $0x5a8] sm:$0xff]
      %v1284 = vld [vmem:[#allocation3 + $0x5b0] sm:$0xff]
      %v1285 = vld [vmem:[#allocation3 + $0x5b8] sm:$0xff]
      %v1286 = vld [vmem:[#allocation3 + $0x5c0] sm:$0xff]
      %v1287 = vld [vmem:[#allocation3 + $0x5c8] sm:$0xff]
      %v1288 = vld [vmem:[#allocation3 + $0x5d0] sm:$0xff]
      %v1289 = vld [vmem:[#allocation3 + $0x5d8] sm:$0xff]
      %v1290 = vld [vmem:[#allocation3 + $0x5e0] sm:$0xff]
      %v1291 = vld [vmem:[#allocation3 + $0x5e8] sm:$0xff]
      %v1292 = vld [vmem:[#allocation3 + $0x5f0] sm:$0xff]
      %v1293 = vld [vmem:[#allocation3 + $0x5f8] sm:$0xff]
      %v1294 = vld [vmem:[#allocation3 + $0x600] sm:$0xff]
      %v1295 = vld [vmem:[#allocation3 + $0x608] sm:$0xff]
      %v1296 = vld [vmem:[#allocation3 + $0x610] sm:$0xff]
      %v1297 = vld [vmem:[#allocation3 + $0x618] sm:$0xff]
      %v1298 = vld [vmem:[#allocation3 + $0x620] sm:$0xff]
      %v1299 = vld [vmem:[#allocation3 + $0x628] sm:$0xff]
      %v1300 = vld [vmem:[#allocation3 + $0x630] sm:$0xff]
      %v1301 = vld [vmem:[#allocation3 + $0x638] sm:$0xff]
      %v1302 = vld [vmem:[#allocation3 + $0x640] sm:$0xff]
      %v1303 = vld [vmem:[#allocation3 + $0x648] sm:$0xff]
      %v1304 = vld [vmem:[#allocation3 + $0x650] sm:$0xff]
      %v1305 = vld [vmem:[#allocation3 + $0x658] sm:$0xff]
      %v1306 = vld [vmem:[#allocation3 + $0x660] sm:$0xff]
      %v1307 = vld [vmem:[#allocation3 + $0x668] sm:$0xff]
      %v1308 = vld [vmem:[#allocation3 + $0x670] sm:$0xff]
      %v1309 = vld [vmem:[#allocation3 + $0x678] sm:$0xff]
      %v1310 = vld [vmem:[#allocation3 + $0x680] sm:$0xff]
      %v1311 = vld [vmem:[#allocation3 + $0x688] sm:$0xff]
      %v1312 = vld [vmem:[#allocation3 + $0x690] sm:$0xff]
      %v1313 = vld [vmem:[#allocation3 + $0x698] sm:$0xff]
      %v1314 = vld [vmem:[#allocation3 + $0x6a0] sm:$0xff]
      %v1315 = vld [vmem:[#allocation3 + $0x6a8] sm:$0xff]
      %v1316 = vld [vmem:[#allocation3 + $0x6b0] sm:$0xff]
      %v1317 = vld [vmem:[#allocation3 + $0x6b8] sm:$0xff]
      %v1318 = vld [vmem:[#allocation3 + $0x6c0] sm:$0xff]
      %v1319 = vld [vmem:[#allocation3 + $0x6c8] sm:$0xff]
      %v1320 = vld [vmem:[#allocation3 + $0x6d0] sm:$0xff]
      %v1321 = vld [vmem:[#allocation3 + $0x6d8] sm:$0xff]
      %v1322 = vld [vmem:[#allocation3 + $0x6e0] sm:$0xff]
      %v1323 = vld [vmem:[#allocation3 + $0x6e8] sm:$0xff]
      %v1324 = vld [vmem:[#allocation3 + $0x6f0] sm:$0xff]
      %v1325 = vld [vmem:[#allocation3 + $0x6f8] sm:$0xff]
      %v1326 = vld [vmem:[#allocation3 + $0x700] sm:$0xff]
      %v1327 = vld [vmem:[#allocation3 + $0x708] sm:$0xff]
      %v1328 = vld [vmem:[#allocation3 + $0x710] sm:$0xff]
      %v1329 = vld [vmem:[#allocation3 + $0x718] sm:$0xff]
      %v1330 = vld [vmem:[#allocation3 + $0x720] sm:$0xff]
      %v1331 = vld [vmem:[#allocation3 + $0x728] sm:$0xff]
      %v1332 = vld [vmem:[#allocation3 + $0x730] sm:$0xff]
      %v1333 = vld [vmem:[#allocation3 + $0x738] sm:$0xff]
      %v1334 = vld [vmem:[#allocation3 + $0x740] sm:$0xff]
      %v1335 = vld [vmem:[#allocation3 + $0x748] sm:$0xff]
      %v1336 = vld [vmem:[#allocation3 + $0x750] sm:$0xff]
      %v1337 = vld [vmem:[#allocation3 + $0x758] sm:$0xff]
      %v1338 = vld [vmem:[#allocation3 + $0x760] sm:$0xff]
      %v1339 = vld [vmem:[#allocation3 + $0x768] sm:$0xff]
      %v1340 = vld [vmem:[#allocation3 + $0x770] sm:$0xff]
      %v1341 = vld [vmem:[#allocation3 + $0x778] sm:$0xff]
      %v1342 = vld [vmem:[#allocation3 + $0x780] sm:$0xff]
      %v1343 = vld [vmem:[#allocation3 + $0x788] sm:$0xff]
      %v1344 = vld [vmem:[#allocation3 + $0x790] sm:$0xff]
      %v1345 = vld [vmem:[#allocation3 + $0x798] sm:$0xff]
      %v1346 = vld [vmem:[#allocation3 + $0x7a0] sm:$0xff]
      %v1347 = vld [vmem:[#allocation3 + $0x7a8] sm:$0xff]
      %v1348 = vld [vmem:[#allocation3 + $0x7b0] sm:$0xff]
      %v1349 = vld [vmem:[#allocation3 + $0x7b8] sm:$0xff]
      %v1350 = vld [vmem:[#allocation3 + $0x7c0] sm:$0xff]
      %v1351 = vld [vmem:[#allocation3 + $0x7c8] sm:$0xff]
      %v1352 = vld [vmem:[#allocation3 + $0x7d0] sm:$0xff]
      %v1353 = vld [vmem:[#allocation3 + $0x7d8] sm:$0xff]
      %v1354 = vld [vmem:[#allocation3 + $0x7e0] sm:$0xff]
      %v1355 = vld [vmem:[#allocation3 + $0x7e8] sm:$0xff]
      %v1356 = vld [vmem:[#allocation3 + $0x7f0] sm:$0xff]
      %v1357 = vld [vmem:[#allocation3 + $0x7f8] sm:$0xff]
      %v1358 = vld [vmem:[#allocation3 + $0x800] sm:$0xff]
      %v1359 = vld [vmem:[#allocation3 + $0x808] sm:$0xff]
      %v1360 = vld [vmem:[#allocation3 + $0x810] sm:$0xff]
      %v1361 = vld [vmem:[#allocation3 + $0x818] sm:$0xff]
      %v1362 = vld [vmem:[#allocation3 + $0x820] sm:$0xff]
      %v1363 = vld [vmem:[#allocation3 + $0x828] sm:$0xff]
      %v1364 = vld [vmem:[#allocation3 + $0x830] sm:$0xff]
      %v1365 = vld [vmem:[#allocation3 + $0x838] sm:$0xff]
      %v1366 = vld [vmem:[#allocation3 + $0x840] sm:$0xff]
      %v1367 = vld [vmem:[#allocation3 + $0x848] sm:$0xff]
      %v1368 = vld [vmem:[#allocation3 + $0x850] sm:$0xff]
      %v1369 = vld [vmem:[#allocation3 + $0x858] sm:$0xff]
      %v1370 = vld [vmem:[#allocation3 + $0x860] sm:$0xff]
      %v1371 = vld [vmem:[#allocation3 + $0x868] sm:$0xff]
      %v1372 = vld [vmem:[#allocation3 + $0x870] sm:$0xff]
      %v1373 = vld [vmem:[#allocation3 + $0x878] sm:$0xff]
      %v1374 = vld [vmem:[#allocation3 + $0x880] sm:$0xff]
      %v1375 = vld [vmem:[#allocation3 + $0x888] sm:$0xff]
      %v1376 = vld [vmem:[#allocation3 + $0x890] sm:$0xff]
      %v1377 = vld [vmem:[#allocation3 + $0x898] sm:$0xff]
      %v1378 = vld [vmem:[#allocation3 + $0x8a0] sm:$0xff]
      %v1379 = vld [vmem:[#allocation3 + $0x8a8] sm:$0xff]
      %v1380 = vld [vmem:[#allocation3 + $0x8b0] sm:$0xff]
      %v1381 = vld [vmem:[#allocation3 + $0x8b8] sm:$0xff]
      %v1382 = vld [vmem:[#allocation3 + $0x8c0] sm:$0xff]
      %v1383 = vld [vmem:[#allocation3 + $0x8c8] sm:$0xff]
      %v1384 = vld [vmem:[#allocation3 + $0x8d0] sm:$0xff]
      %v1385 = vld [vmem:[#allocation3 + $0x8d8] sm:$0xff]
      %v1386 = vld [vmem:[#allocation3 + $0x8e0] sm:$0xff]
      %v1387 = vld [vmem:[#allocation3 + $0x8e8] sm:$0xff]
      %v1388 = vld [vmem:[#allocation3 + $0x8f0] sm:$0xff]
      %v1389 = vld [vmem:[#allocation3 + $0x8f8] sm:$0xff]
      %v1390 = vld [vmem:[%s3] sm:$0xff]
      %v1391 = vld [vmem:[%s3 + $0x8] sm:$0xff]
      %v1392 = vld [vmem:[%s3 + $0x10] sm:$0xff]
      %v1393 = vld [vmem:[%s3 + $0x18] sm:$0xff]
      %v1394 = vld [vmem:[%s3 + $0x20] sm:$0xff]
      %v1395 = vld [vmem:[%s3 + $0x28] sm:$0xff]
      %v1396 = vld [vmem:[%s3 + $0x30] sm:$0xff]
      %v1397 = vld [vmem:[%s3 + $0x38] sm:$0xff]
      %v1398 = vld [vmem:[%s3 + $0x40] sm:$0xff]
      %v1399 = vld [vmem:[%s3 + $0x48] sm:$0xff]
      %v1400 = vld [vmem:[%s3 + $0x50] sm:$0xff]
      %v1401 = vld [vmem:[%s3 + $0x58] sm:$0xff]
      %v1402 = vld [vmem:[%s3 + $0x60] sm:$0xff]
      %v1403 = vld [vmem:[%s3 + $0x68] sm:$0xff]
      %v1404 = vld [vmem:[%s3 + $0x70] sm:$0xff]
      %v1405 = vld [vmem:[%s3 + $0x78] sm:$0xff]
      %v1406 = vld [vmem:[%s3 + $0x80] sm:$0xff]
      %v1407 = vld [vmem:[%s3 + $0x88] sm:$0xff]
      %v1408 = vld [vmem:[%s3 + $0x90] sm:$0xff]
      %v1409 = vld [vmem:[%s3 + $0x98] sm:$0xff]
      %v1410 = vld [vmem:[%s3 + $0xa0] sm:$0xff]
      %v1411 = vld [vmem:[%s3 + $0xa8] sm:$0xff]
      %v1412 = vld [vmem:[%s3 + $0xb0] sm:$0xff]
      %v1413 = vld [vmem:[%s3 + $0xb8] sm:$0xff]
      %v1414 = vld [vmem:[%s3 + $0xc0] sm:$0xff]
      %v1415 = vld [vmem:[%s3 + $0xc8] sm:$0xff]
      %v1416 = vld [vmem:[%s3 + $0xd0] sm:$0xff]
      %v1417 = vld [vmem:[%s3 + $0xd8] sm:$0xff]
      %v1418 = vld [vmem:[%s3 + $0xe0] sm:$0xff]
      %v1419 = vld [vmem:[%s3 + $0xe8] sm:$0xff]
      %v1420 = vld [vmem:[%s3 + $0xf0] sm:$0xff]
      %v1421 = vld [vmem:[%s3 + $0xf8] sm:$0xff]
      %v1422 = vld [vmem:[%s3 + $0x100] sm:$0xff]
      %v1423 = vld [vmem:[%s3 + $0x108] sm:$0xff]
      %v1424 = vld [vmem:[%s3 + $0x110] sm:$0xff]
      %v1425 = vld [vmem:[%s3 + $0x118] sm:$0xff]
      %v1426 = vld [vmem:[%s3 + $0x120] sm:$0xff]
      %v1427 = vld [vmem:[%s3 + $0x128] sm:$0xff]
      %v1428 = vld [vmem:[%s3 + $0x130] sm:$0xff]
      %v1429 = vld [vmem:[%s3 + $0x138] sm:$0xff]
      %v1430 = vld [vmem:[%s3 + $0x140] sm:$0xff]
      %v1431 = vld [vmem:[%s3 + $0x148] sm:$0xff]
      %v1432 = vld [vmem:[%s3 + $0x150] sm:$0xff]
      %v1433 = vld [vmem:[%s3 + $0x158] sm:$0xff]
      %v1434 = vld [vmem:[%s3 + $0x160] sm:$0xff]
      %v1435 = vld [vmem:[%s3 + $0x168] sm:$0xff]
      %v1436 = vld [vmem:[%s3 + $0x170] sm:$0xff]
      %v1437 = vld [vmem:[%s3 + $0x178] sm:$0xff]
      %v1438 = vld [vmem:[%s3 + $0x180] sm:$0xff]
      %v1439 = vld [vmem:[%s3 + $0x188] sm:$0xff]
      %v1440 = vld [vmem:[%s3 + $0x190] sm:$0xff]
      %v1441 = vld [vmem:[%s3 + $0x198] sm:$0xff]
      %v1442 = vld [vmem:[%s3 + $0x1a0] sm:$0xff]
      %v1443 = vld [vmem:[%s3 + $0x1a8] sm:$0xff]
      %v1444 = vld [vmem:[%s3 + $0x1b0] sm:$0xff]
      %v1445 = vld [vmem:[%s3 + $0x1b8] sm:$0xff]
      %v1446 = vld [vmem:[%s3 + $0x1c0] sm:$0xff]
      %v1447 = vld [vmem:[%s3 + $0x1c8] sm:$0xff]
      %v1448 = vld [vmem:[%s3 + $0x1d0] sm:$0xff]
      %v1449 = vld [vmem:[%s3 + $0x1d8] sm:$0xff]
      %v1450 = vld [vmem:[%s3 + $0x1e0] sm:$0xff]
      %v1451 = vld [vmem:[%s3 + $0x1e8] sm:$0xff]
      %v1452 = vld [vmem:[%s3 + $0x1f0] sm:$0xff]
      %v1453 = vld [vmem:[%s3 + $0x1f8] sm:$0xff]
      %v1454 = vld [vmem:[%s3 + $0x200] sm:$0xff]
      %v1455 = vld [vmem:[%s3 + $0x208] sm:$0xff]
      %v1456 = vld [vmem:[%s3 + $0x210] sm:$0xff]
      %v1457 = vld [vmem:[%s3 + $0x218] sm:$0xff]
      %v1458 = vld [vmem:[%s3 + $0x220] sm:$0xff]
      %v1459 = vld [vmem:[%s3 + $0x228] sm:$0xff]
      %v1460 = vld [vmem:[%s3 + $0x230] sm:$0xff]
      %v1461 = vld [vmem:[%s3 + $0x238] sm:$0xff]
      %v1462 = vld [vmem:[%s3 + $0x240] sm:$0xff]
      %v1463 = vld [vmem:[%s3 + $0x248] sm:$0xff]
      %v1464 = vld [vmem:[%s3 + $0x250] sm:$0xff]
      %v1465 = vld [vmem:[%s3 + $0x258] sm:$0xff]
      %v1466 = vld [vmem:[%s3 + $0x260] sm:$0xff]
      %v1467 = vld [vmem:[%s3 + $0x268] sm:$0xff]
      %v1468 = vld [vmem:[%s3 + $0x270] sm:$0xff]
      %v1469 = vld [vmem:[%s3 + $0x278] sm:$0xff]
      %v1470 = vld [vmem:[%s3 + $0x280] sm:$0xff]
      %v1471 = vld [vmem:[%s3 + $0x288] sm:$0xff]
      %v1472 = vld [vmem:[%s3 + $0x290] sm:$0xff]
      %v1473 = vld [vmem:[%s3 + $0x298] sm:$0xff]
      %v1474 = vld [vmem:[%s3 + $0x2a0] sm:$0xff]
      %v1475 = vld [vmem:[%s3 + $0x2a8] sm:$0xff]
      %v1476 = vld [vmem:[%s3 + $0x2b0] sm:$0xff]
      %v1477 = vld [vmem:[%s3 + $0x2b8] sm:$0xff]
      %v1478 = vld [vmem:[%s3 + $0x2c0] sm:$0xff]
      %v1479 = vld [vmem:[%s3 + $0x2c8] sm:$0xff]
      %v1480 = vld [vmem:[%s3 + $0x2d0] sm:$0xff]
      %v1481 = vld [vmem:[%s3 + $0x2d8] sm:$0xff]
      %v1482 = vld [vmem:[%s3 + $0x2e0] sm:$0xff]
      %v1483 = vld [vmem:[%s3 + $0x2e8] sm:$0xff]
      %v1484 = vld [vmem:[%s3 + $0x2f0] sm:$0xff]
      %v1485 = vld [vmem:[%s3 + $0x2f8] sm:$0xff]
      %v1486 = vld [vmem:[%s3 + $0x300] sm:$0xff]
      %v1487 = vld [vmem:[%s3 + $0x308] sm:$0xff]
      %v1488 = vld [vmem:[%s3 + $0x310] sm:$0xff]
      %v1489 = vld [vmem:[%s3 + $0x318] sm:$0xff]
      %v1490 = vld [vmem:[%s3 + $0x320] sm:$0xff]
      %v1491 = vld [vmem:[%s3 + $0x328] sm:$0xff]
      %v1492 = vld [vmem:[%s3 + $0x330] sm:$0xff]
      %v1493 = vld [vmem:[%s3 + $0x338] sm:$0xff]
      %v1494 = vld [vmem:[%s3 + $0x340] sm:$0xff]
      %v1495 = vld [vmem:[%s3 + $0x348] sm:$0xff]
      %v1496 = vld [vmem:[%s3 + $0x350] sm:$0xff]
      %v1497 = vld [vmem:[%s3 + $0x358] sm:$0xff]
      %v1498 = vld [vmem:[%s3 + $0x360] sm:$0xff]
      %v1499 = vld [vmem:[%s3 + $0x368] sm:$0xff]
      %v1500 = vld [vmem:[%s3 + $0x370] sm:$0xff]
      %v1501 = vld [vmem:[%s3 + $0x378] sm:$0xff]
      %v1502 = vld [vmem:[%s3 + $0x380] sm:$0xff]
      %v1503 = vld [vmem:[%s3 + $0x388] sm:$0xff]
      %v1504 = vld [vmem:[%s3 + $0x390] sm:$0xff]
      %v1505 = vld [vmem:[%s3 + $0x398] sm:$0xff]
      %v1506 = vld [vmem:[%s3 + $0x3a0] sm:$0xff]
      %v1507 = vld [vmem:[%s3 + $0x3a8] sm:$0xff]
      %v1508 = vld [vmem:[%s3 + $0x3b0] sm:$0xff]
      %v1509 = vld [vmem:[%s3 + $0x3b8] sm:$0xff]
      %v1510 = vld [vmem:[%s3 + $0x3c0] sm:$0xff]
      %v1511 = vld [vmem:[%s3 + $0x3c8] sm:$0xff]
      %v1512 = vld [vmem:[%s3 + $0x3d0] sm:$0xff]
      %v1513 = vld [vmem:[%s3 + $0x3d8] sm:$0xff]
      %v1514 = vld [vmem:[%s3 + $0x3e0] sm:$0xff]
      %v1515 = vld [vmem:[%s3 + $0x3e8] sm:$0xff]
      %v1516 = vld [vmem:[%s3 + $0x3f0] sm:$0xff]
      %v1517 = vld [vmem:[%s3 + $0x3f8] sm:$0xff]
      %v1518 = vld [vmem:[%s3 + $0x400] sm:$0xff]
      %v1519 = vld [vmem:[%s3 + $0x408] sm:$0xff]
      %v1520 = vld [vmem:[%s3 + $0x410] sm:$0xff]
      %v1521 = vld [vmem:[%s3 + $0x418] sm:$0xff]
      %v1522 = vld [vmem:[%s3 + $0x420] sm:$0xff]
      %v1523 = vld [vmem:[%s3 + $0x428] sm:$0xff]
      %v1524 = vld [vmem:[%s3 + $0x430] sm:$0xff]
      %v1525 = vld [vmem:[%s3 + $0x438] sm:$0xff]
      %v1526 = vld [vmem:[%s3 + $0x440] sm:$0xff]
      %v1527 = vld [vmem:[%s3 + $0x448] sm:$0xff]
      %v1528 = vld [vmem:[%s3 + $0x450] sm:$0xff]
      %v1529 = vld [vmem:[%s3 + $0x458] sm:$0xff]
      %v1530 = vld [vmem:[%s3 + $0x460] sm:$0xff]
      %v1531 = vld [vmem:[%s3 + $0x468] sm:$0xff]
      %v1532 = vld [vmem:[%s3 + $0x470] sm:$0xff]
      %v1533 = vld [vmem:[%s3 + $0x478] sm:$0xff]
      %v1534 = vld [vmem:[%s4] sm:$0x1]
      %v1536 = vlaneseq
      %v1537 = vshrl.u32 %v1536, 7
      %v1538 = vsub.s32 0, %v1537
      %v1539 = vrot.slane %v1534, %v1538
      %1541 = vmatprep.subr.mxu0 0.0
      %1542 = vmatpush1.msra.mxu0 %v1390
      %1543 = vmatprep.subr.mxu0 0.0
      %1544 = vmatpush1.msra.mxu0 %v1391
      %1545 = vmatprep.subr.mxu0 0.0
      %1546 = vmatpush1.msra.mxu0 %v1392
      %1547 = vmatprep.subr.mxu0 0.0
      %1548 = vmatpush1.msra.mxu0 %v1393
      %1549 = vmatprep.subr.mxu0 0.0
      %1550 = vmatpush1.msra.mxu0 %v1394
      %1551 = vmatprep.subr.mxu0 0.0
      %1552 = vmatpush1.msra.mxu0 %v1395
      %1553 = vmatprep.subr.mxu0 0.0
      %1554 = vmatpush1.msra.mxu0 %v1396
      %1555 = vmatprep.subr.mxu0 0.0
      %1556 = vmatpush1.msra.mxu0 %v1397
      %1557 = vmatprep.subr.mxu0 0.0
      %1558 = vmatpush1.msra.mxu0 %v1398
      %1559 = vmatprep.subr.mxu0 0.0
      %1560 = vmatpush1.msra.mxu0 %v1399
      %1561 = vmatprep.subr.mxu0 0.0
      %1562 = vmatpush1.msra.mxu0 %v1400
      %1563 = vmatprep.subr.mxu0 0.0
      %1564 = vmatpush1.msra.mxu0 %v1401
      %1565 = vmatprep.subr.mxu0 0.0
      %1566 = vmatpush1.msra.mxu0 %v1402
      %1567 = vmatprep.subr.mxu0 0.0
      %1568 = vmatpush1.msra.mxu0 %v1403
      %1569 = vmatprep.subr.mxu0 0.0
      %1570 = vmatpush1.msra.mxu0 %v1404
      %1571 = vmatprep.subr.mxu0 0.0
      %1572 = vmatpush1.msra.mxu0 %v1405
      %1573 = vmatprep.subr.mxu0 0.0
      %1574 = vmatpush1.msra.mxu0 %v1406
      %1575 = vmatprep.subr.mxu0 0.0
      %1576 = vmatpush1.msra.mxu0 %v1407
      %1577 = vmatprep.subr.mxu0 0.0
      %1578 = vmatpush1.msra.mxu0 %v1408
      %1579 = vmatprep.subr.mxu0 0.0
      %1580 = vmatpush1.msra.mxu0 %v1409
      %1581 = vmatprep.subr.mxu0 0.0
      %1582 = vmatpush1.msra.mxu0 %v1410
      %1583 = vmatprep.subr.mxu0 0.0
      %1584 = vmatpush1.msra.mxu0 %v1411
      %1585 = vmatprep.subr.mxu0 0.0
      %1586 = vmatpush1.msra.mxu0 %v1412
      %1587 = vmatprep.subr.mxu0 0.0
      %1588 = vmatpush1.msra.mxu0 %v1413
      %1589 = vmatprep.subr.mxu0 0.0
      %1590 = vmatpush1.msra.mxu0 %v1414
      %1591 = vmatprep.subr.mxu0 0.0
      %1592 = vmatpush1.msra.mxu0 %v1415
      %1593 = vmatprep.subr.mxu0 0.0
      %1594 = vmatpush1.msra.mxu0 %v1416
      %1595 = vmatprep.subr.mxu0 0.0
      %1596 = vmatpush1.msra.mxu0 %v1417
      %1597 = vmatprep.subr.mxu0 0.0
      %1598 = vmatpush1.msra.mxu0 %v1418
      %1599 = vmatprep.subr.mxu0 0.0
      %1600 = vmatpush1.msra.mxu0 %v1419
      %1601 = vmatprep.subr.mxu0 0.0
      %1602 = vmatpush1.msra.mxu0 %v1420
      %1603 = vmatprep.subr.mxu0 0.0
      %1604 = vmatpush1.msra.mxu0 %v1421
      %1605 = vmatprep.mubr.f32.mxu0 %v1103
      %1606 = vmatmul.mubr.f32.gmra.mrb[0].mxu0 %v1102
      %v1607 = vpop.f32.mrb[0].mxu0
      %v1608 = vadd.f32 %v1539, %v1607
      %v1609 = vpop.f32.mrb[0].mxu0
      %1610 = vmatprep.mubr.f32.mxu0 %v1112
      %1611 = vmatmul.mubr.f32.gmra.mrb[0].mxu0 %v1111
      %v1612 = vpop.f32.mrb[0].mxu0
      %v1613 = vadd.f32 %v1539, %v1612
      %v1614 = vpop.f32.mrb[0].mxu0
      %1615 = vmatprep.mubr.f32.mxu0 %v1121
      %1616 = vmatmul.mubr.f32.gmra.mrb[0].mxu0 %v1120
      %v1617 = vpop.f32.mrb[0].mxu0
      %v1618 = vadd.f32 %v1539, %v1617
      %v1619 = vpop.f32.mrb[0].mxu0
      %1620 = vmatprep.mubr.f32.mxu0 %v1130
      %1621 = vmatmul.mubr.f32.gmra.mrb[0].mxu0 %v1129
      %v1622 = vpop.f32.mrb[0].mxu0
      %v1623 = vadd.f32 %v1539, %v1622
      %v1624 = vpop.f32.mrb[0].mxu0
      %1625 = vmatprep.mubr.f32.mxu0 %v1139
      %1626 = vmatmul.mubr.f32.gmra.mrb[0].mxu0 %v1138
      %v1627 = vpop.f32.mrb[0].mxu0
      %v1628 = vadd.f32 %v1539, %v1627
      %v1629 = vpop.f32.mrb[0].mxu0
      %1630 = vmatprep.mubr.f32.mxu0 %v1148
      %1631 = vmatmul.mubr.f32.gmra.mrb[0].mxu0 %v1147
      %v1632 = vpop.f32.mrb[0].mxu0
      %v1633 = vadd.f32 %v1539, %v1632
      %v1634 = vpop.f32.mrb[0].mxu0
      %1635 = vmatprep.mubr.f32.mxu0 %v1157
      %1636 = vmatmul.mubr.f32.gmra.mrb[0].mxu0 %v1156
      %v1637 = vpop.f32.mrb[0].mxu0
      %v1638 = vadd.f32 %v1539, %v1637
      %v1639 = vpop.f32.mrb[0].mxu0
      %1640 = vmatprep.mubr.f32.mxu0 %v1166
      %1641 = vmatmul.mubr.f32.gmra.mrb[0].mxu0 %v1165
      %v1642 = vpop.f32.mrb[0].mxu0
      %v1643 = vadd.f32 %v1539, %v1642
      %v1644 = vpop.f32.mrb[0].mxu0
      %1645 = vmatprep.mubr.f32.mxu0 %v1175
      %1646 = vmatmul.mubr.f32.gmra.mrb[0].mxu0 %v1174
      %v1647 = vpop.f32.mrb[0].mxu0
      %v1648 = vadd.f32 %v1539, %v1647
      %v1649 = vpop.f32.mrb[0].mxu0
      %1650 = vmatprep.mubr.f32.mxu0 %v1184
      %1651 = vmatmul.mubr.f32.gmra.mrb[0].mxu0 %v1183
      %v1652 = vpop.f32.mrb[0].mxu0
      %v1653 = vadd.f32 %v1539, %v1652
      %v1654 = vpop.f32.mrb[0].mxu0
      %1655 = vmatprep.mubr.f32.mxu0 %v1193
      %1656 = vmatmul.mubr.f32.gmra.mrb[0].mxu0 %v1192
      %v1657 = vpop.f32.mrb[0].mxu0
      %v1658 = vadd.f32 %v1539, %v1657
      %v1659 = vpop.f32.mrb[0].mxu0
      %1660 = vmatprep.mubr.f32.mxu0 %v1202
      %1661 = vmatmul.mubr.f32.gmra.mrb[0].mxu0 %v1201
      %v1662 = vpop.f32.mrb[0].mxu0
      %v1663 = vadd.f32 %v1539, %v1662
      %v1664 = vpop.f32.mrb[0].mxu0
      %1665 = vmatprep.mubr.f32.mxu0 %v1211
      %1666 = vmatmul.mubr.f32.gmra.mrb[0].mxu0 %v1210
      %v1667 = vpop.f32.mrb[0].mxu0
      %v1668 = vadd.f32 %v1539, %v1667
      %v1669 = vpop.f32.mrb[0].mxu0
      %1670 = vmatprep.mubr.f32.mxu0 %v1220
      %1671 = vmatmul.mubr.f32.gmra.mrb[0].mxu0 %v1219
      %v1672 = vpop.f32.mrb[0].mxu0
      %v1673 = vadd.f32 %v1539, %v1672
      %v1674 = vpop.f32.mrb[0].mxu0
      %1675 = vmatprep.mubr.f32.mxu0 %v1229
      %1676 = vmatmul.mubr.f32.gmra.mrb[0].mxu0 %v1228
      %v1677 = vpop.f32.mrb[0].mxu0
      %v1678 = vadd.f32 %v1539, %v1677
      %v1679 = vpop.f32.mrb[0].mxu0
      %1680 = vmatprep.mubr.f32.mxu0 %v1238
      %1681 = vmatmul.mubr.f32.gmra.mrb[0].mxu0 %v1237
      %v1682 = vpop.f32.mrb[0].mxu0
      %v1683 = vadd.f32 %v1539, %v1682
      %v1684 = vpop.f32.mrb[0].mxu0
      %1685 = vmatprep.mubr.f32.mxu0 %v1247
      %1686 = vmatmul.mubr.f32.gmra.mrb[0].mxu0 %v1246
      %v1687 = vpop.f32.mrb[0].mxu0
      %v1688 = vadd.f32 %v1539, %v1687
      %v1689 = vpop.f32.mrb[0].mxu0
      %1690 = vmatprep.mubr.f32.mxu0 %v1256
      %1691 = vmatmul.mubr.f32.gmra.mrb[0].mxu0 %v1255
      %v1692 = vpop.f32.mrb[0].mxu0
      %v1693 = vadd.f32 %v1539, %v1692
      %v1694 = vpop.f32.mrb[0].mxu0
      %1695 = vmatprep.mubr.f32.mxu0 %v1265
      %1696 = vmatmul.mubr.f32.gmra.mrb[0].mxu0 %v1264
      %v1697 = vpop.f32.mrb[0].mxu0
      %v1698 = vadd.f32 %v1539, %v1697
      %v1699 = vpop.f32.mrb[0].mxu0
      %1700 = vmatprep.mubr.f32.mxu0 %v1274
      %1701 = vmatmul.mubr.f32.gmra.mrb[0].mxu0 %v1273
      %v1702 = vpop.f32.mrb[0].mxu0
      %v1703 = vadd.f32 %v1539, %v1702
      %v1704 = vpop.f32.mrb[0].mxu0
      %1705 = vmatprep.mubr.f32.mxu0 %v1283
      %1706 = vmatmul.mubr.f32.gmra.mrb[0].mxu0 %v1282
      %v1707 = vpop.f32.mrb[0].mxu0
      %v1708 = vadd.f32 %v1539, %v1707
      %v1709 = vpop.f32.mrb[0].mxu0
      %1710 = vmatprep.mubr.f32.mxu0 %v1292
      %1711 = vmatmul.mubr.f32.gmra.mrb[0].mxu0 %v1291
      %v1712 = vpop.f32.mrb[0].mxu0
      %v1713 = vadd.f32 %v1539, %v1712
      %v1714 = vpop.f32.mrb[0].mxu0
      %1715 = vmatprep.mubr.f32.mxu0 %v1301
      %1716 = vmatmul.mubr.f32.gmra.mrb[0].mxu0 %v1300
      %v1717 = vpop.f32.mrb[0].mxu0
      %v1718 = vadd.f32 %v1539, %v1717
      %v1719 = vpop.f32.mrb[0].mxu0
      %1720 = vmatprep.mubr.f32.mxu0 %v1310
      %1721 = vmatmul.mubr.f32.gmra.mrb[0].mxu0 %v1309
      %v1722 = vpop.f32.mrb[0].mxu0
      %v1723 = vadd.f32 %v1539, %v1722
      %v1724 = vpop.f32.mrb[0].mxu0
      %1725 = vmatprep.mubr.f32.mxu0 %v1319
      %1726 = vmatmul.mubr.f32.gmra.mrb[0].mxu0 %v1318
      %v1727 = vpop.f32.mrb[0].mxu0
      %v1728 = vadd.f32 %v1539, %v1727
      %v1729 = vpop.f32.mrb[0].mxu0
      %1730 = vmatprep.mubr.f32.mxu0 %v1328
      %1731 = vmatmul.mubr.f32.gmra.mrb[0].mxu0 %v1327
      %v1732 = vpop.f32.mrb[0].mxu0
      %v1733 = vadd.f32 %v1539, %v1732
      %v1734 = vpop.f32.mrb[0].mxu0
      %1735 = vmatprep.mubr.f32.mxu0 %v1337
      %1736 = vmatmul.mubr.f32.gmra.mrb[0].mxu0 %v1336
      %v1737 = vpop.f32.mrb[0].mxu0
      %v1738 = vadd.f32 %v1539, %v1737
      %v1739 = vpop.f32.mrb[0].mxu0
      %1740 = vmatprep.mubr.f32.mxu0 %v1346
      %1741 = vmatmul.mubr.f32.gmra.mrb[0].mxu0 %v1345
      %v1742 = vpop.f32.mrb[0].mxu0
      %v1743 = vadd.f32 %v1539, %v1742
      %v1744 = vpop.f32.mrb[0].mxu0
      %1745 = vmatprep.mubr.f32.mxu0 %v1355
      %1746 = vmatmul.mubr.f32.gmra.mrb[0].mxu0 %v1354
      %v1747 = vpop.f32.mrb[0].mxu0
      %v1748 = vadd.f32 %v1539, %v1747
      %v1749 = vpop.f32.mrb[0].mxu0
      %1750 = vmatprep.mubr.f32.mxu0 %v1364
      %1751 = vmatmul.mubr.f32.gmra.mrb[0].mxu0 %v1363
      %v1752 = vpop.f32.mrb[0].mxu0
      %v1753 = vadd.f32 %v1539, %v1752
      %v1754 = vpop.f32.mrb[0].mxu0
      %1755 = vmatprep.mubr.f32.mxu0 %v1373
      %1756 = vmatmul.mubr.f32.gmra.mrb[0].mxu0 %v1372
      %v1757 = vpop.f32.mrb[0].mxu0
      %v1758 = vadd.f32 %v1539, %v1757
      %v1759 = vpop.f32.mrb[0].mxu0
      %1760 = vmatprep.mubr.f32.mxu0 %v1382
      %1761 = vmatmul.mubr.f32.gmra.mrb[0].mxu0 %v1381
      %v1762 = vpop.f32.mrb[0].mxu0
      %v1763 = vadd.f32 %v1539, %v1762
      %v1764 = vpop.f32.mrb[0].mxu0
      %1765 = vdwg.mxu0
      %1766 = vmatprep.subr.mxu0 0.0
      %1767 = vmatpush1.msra.mxu0 %v1422
      %1768 = vmatprep.subr.mxu0 0.0
      %1769 = vmatpush1.msra.mxu0 %v1423
      %1770 = vmatprep.subr.mxu0 0.0
      %1771 = vmatpush1.msra.mxu0 %v1424
      %1772 = vmatprep.subr.mxu0 0.0
      %1773 = vmatpush1.msra.mxu0 %v1425
      %1774 = vmatprep.subr.mxu0 0.0
      %1775 = vmatpush1.msra.mxu0 %v1426
      %1776 = vmatprep.subr.mxu0 0.0
      %1777 = vmatpush1.msra.mxu0 %v1427
      %1778 = vmatprep.subr.mxu0 0.0
      %1779 = vmatpush1.msra.mxu0 %v1428
      %1780 = vmatprep.subr.mxu0 0.0
      %1781 = vmatpush1.msra.mxu0 %v1429
      %1782 = vmatprep.subr.mxu0 0.0
      %1783 = vmatpush1.msra.mxu0 %v1430
      %1784 = vmatprep.subr.mxu0 0.0
      %1785 = vmatpush1.msra.mxu0 %v1431
      %1786 = vmatprep.subr.mxu0 0.0
      %1787 = vmatpush1.msra.mxu0 %v1432
      %1788 = vmatprep.subr.mxu0 0.0
      %1789 = vmatpush1.msra.mxu0 %v1433
      %1790 = vmatprep.subr.mxu0 0.0
      %1791 = vmatpush1.msra.mxu0 %v1434
      %1792 = vmatprep.subr.mxu0 0.0
      %1793 = vmatpush1.msra.mxu0 %v1435
      %1794 = vmatprep.subr.mxu0 0.0
      %1795 = vmatpush1.msra.mxu0 %v1436
      %1796 = vmatprep.subr.mxu0 0.0
      %1797 = vmatpush1.msra.mxu0 %v1437
      %1798 = vmatprep.subr.mxu0 0.0
      %1799 = vmatpush1.msra.mxu0 %v1438
      %1800 = vmatprep.subr.mxu0 0.0
      %1801 = vmatpush1.msra.mxu0 %v1439
      %1802 = vmatprep.subr.mxu0 0.0
      %1803 = vmatpush1.msra.mxu0 %v1440
      %1804 = vmatprep.subr.mxu0 0.0
      %1805 = vmatpush1.msra.mxu0 %v1441
      %1806 = vmatprep.subr.mxu0 0.0
      %1807 = vmatpush1.msra.mxu0 %v1442
      %1808 = vmatprep.subr.mxu0 0.0
      %1809 = vmatpush1.msra.mxu0 %v1443
      %1810 = vmatprep.subr.mxu0 0.0
      %1811 = vmatpush1.msra.mxu0 %v1444
      %1812 = vmatprep.subr.mxu0 0.0
      %1813 = vmatpush1.msra.mxu0 %v1445
      %1814 = vmatprep.subr.mxu0 0.0
      %1815 = vmatpush1.msra.mxu0 %v1446
      %1816 = vmatprep.subr.mxu0 0.0
      %1817 = vmatpush1.msra.mxu0 %v1447
      %1818 = vmatprep.subr.mxu0 0.0
      %1819 = vmatpush1.msra.mxu0 %v1448
      %1820 = vmatprep.subr.mxu0 0.0
      %1821 = vmatpush1.msra.mxu0 %v1449
      %1822 = vmatprep.subr.mxu0 0.0
      %1823 = vmatpush1.msra.mxu0 %v1450
      %1824 = vmatprep.subr.mxu0 0.0
      %1825 = vmatpush1.msra.mxu0 %v1451
      %1826 = vmatprep.subr.mxu0 0.0
      %1827 = vmatpush1.msra.mxu0 %v1452
      %1828 = vmatprep.subr.mxu0 0.0
      %1829 = vmatpush1.msra.mxu0 %v1453
      %1830 = vmatprep.mubr.f32.mxu0 %v1105
      %1831 = vmatmul.mubr.f32.gmra.mrb[0].mxu0 %v1104
      %v1832 = vpop.f32.mrb[0].mxu0
      %v1833 = vadd.f32 %v1608, %v1832
      %v1834 = vpop.f32.mrb[0].mxu0
      %1835 = vmatprep.mubr.f32.mxu0 %v1114
      %1836 = vmatmul.mubr.f32.gmra.mrb[0].mxu0 %v1113
      %v1837 = vpop.f32.mrb[0].mxu0
      %v1838 = vadd.f32 %v1613, %v1837
      %v1839 = vpop.f32.mrb[0].mxu0
      %1840 = vmatprep.mubr.f32.mxu0 %v1123
      %1841 = vmatmul.mubr.f32.gmra.mrb[0].mxu0 %v1122
      %v1842 = vpop.f32.mrb[0].mxu0
      %v1843 = vadd.f32 %v1618, %v1842
      %v1844 = vpop.f32.mrb[0].mxu0
      %1845 = vmatprep.mubr.f32.mxu0 %v1132
      %1846 = vmatmul.mubr.f32.gmra.mrb[0].mxu0 %v1131
      %v1847 = vpop.f32.mrb[0].mxu0
      %v1848 = vadd.f32 %v1623, %v1847
      %v1849 = vpop.f32.mrb[0].mxu0
      %1850 = vmatprep.mubr.f32.mxu0 %v1141
      %1851 = vmatmul.mubr.f32.gmra.mrb[0].mxu0 %v1140
      %v1852 = vpop.f32.mrb[0].mxu0
      %v1853 = vadd.f32 %v1628, %v1852
      %v1854 = vpop.f32.mrb[0].mxu0
      %1855 = vmatprep.mubr.f32.mxu0 %v1150
      %1856 = vmatmul.mubr.f32.gmra.mrb[0].mxu0 %v1149
      %v1857 = vpop.f32.mrb[0].mxu0
      %v1858 = vadd.f32 %v1633, %v1857
      %v1859 = vpop.f32.mrb[0].mxu0
      %1860 = vmatprep.mubr.f32.mxu0 %v1159
      %1861 = vmatmul.mubr.f32.gmra.mrb[0].mxu0 %v1158
      %v1862 = vpop.f32.mrb[0].mxu0
      %v1863 = vadd.f32 %v1638, %v1862
      %v1864 = vpop.f32.mrb[0].mxu0
      %1865 = vmatprep.mubr.f32.mxu0 %v1168
      %1866 = vmatmul.mubr.f32.gmra.mrb[0].mxu0 %v1167
      %v1867 = vpop.f32.mrb[0].mxu0
      %v1868 = vadd.f32 %v1643, %v1867
      %v1869 = vpop.f32.mrb[0].mxu0
      %1870 = vmatprep.mubr.f32.mxu0 %v1177
      %1871 = vmatmul.mubr.f32.gmra.mrb[0].mxu0 %v1176
      %v1872 = vpop.f32.mrb[0].mxu0
      %v1873 = vadd.f32 %v1648, %v1872
      %v1874 = vpop.f32.mrb[0].mxu0
      %1875 = vmatprep.mubr.f32.mxu0 %v1186
      %1876 = vmatmul.mubr.f32.gmra.mrb[0].mxu0 %v1185
      %v1877 = vpop.f32.mrb[0].mxu0
      %v1878 = vadd.f32 %v1653, %v1877
      %v1879 = vpop.f32.mrb[0].mxu0
      %1880 = vmatprep.mubr.f32.mxu0 %v1195
      %1881 = vmatmul.mubr.f32.gmra.mrb[0].mxu0 %v1194
      %v1882 = vpop.f32.mrb[0].mxu0
      %v1883 = vadd.f32 %v1658, %v1882
      %v1884 = vpop.f32.mrb[0].mxu0
      %1885 = vmatprep.mubr.f32.mxu0 %v1204
      %1886 = vmatmul.mubr.f32.gmra.mrb[0].mxu0 %v1203
      %v1887 = vpop.f32.mrb[0].mxu0
      %v1888 = vadd.f32 %v1663, %v1887
      %v1889 = vpop.f32.mrb[0].mxu0
      %1890 = vmatprep.mubr.f32.mxu0 %v1213
      %1891 = vmatmul.mubr.f32.gmra.mrb[0].mxu0 %v1212
      %v1892 = vpop.f32.mrb[0].mxu0
      %v1893 = vadd.f32 %v1668, %v1892
      %v1894 = vpop.f32.mrb[0].mxu0
      %1895 = vmatprep.mubr.f32.mxu0 %v1222
      %1896 = vmatmul.mubr.f32.gmra.mrb[0].mxu0 %v1221
      %v1897 = vpop.f32.mrb[0].mxu0
      %v1898 = vadd.f32 %v1673, %v1897
      %v1899 = vpop.f32.mrb[0].mxu0
      %1900 = vmatprep.mubr.f32.mxu0 %v1231
      %1901 = vmatmul.mubr.f32.gmra.mrb[0].mxu0 %v1230
      %v1902 = vpop.f32.mrb[0].mxu0
      %v1903 = vadd.f32 %v1678, %v1902
      %v1904 = vpop.f32.mrb[0].mxu0
      %1905 = vmatprep.mubr.f32.mxu0 %v1240
      %1906 = vmatmul.mubr.f32.gmra.mrb[0].mxu0 %v1239
      %v1907 = vpop.f32.mrb[0].mxu0
      %v1908 = vadd.f32 %v1683, %v1907
      %v1909 = vpop.f32.mrb[0].mxu0
      %1910 = vmatprep.mubr.f32.mxu0 %v1249
      %1911 = vmatmul.mubr.f32.gmra.mrb[0].mxu0 %v1248
      %v1912 = vpop.f32.mrb[0].mxu0
      %v1913 = vadd.f32 %v1688, %v1912
      %v1914 = vpop.f32.mrb[0].mxu0
      %1915 = vmatprep.mubr.f32.mxu0 %v1258
      %1916 = vmatmul.mubr.f32.gmra.mrb[0].mxu0 %v1257
      %v1917 = vpop.f32.mrb[0].mxu0
      %v1918 = vadd.f32 %v1693, %v1917
      %v1919 = vpop.f32.mrb[0].mxu0
      %1920 = vmatprep.mubr.f32.mxu0 %v1267
      %1921 = vmatmul.mubr.f32.gmra.mrb[0].mxu0 %v1266
      %v1922 = vpop.f32.mrb[0].mxu0
      %v1923 = vadd.f32 %v1698, %v1922
      %v1924 = vpop.f32.mrb[0].mxu0
      %1925 = vmatprep.mubr.f32.mxu0 %v1276
      %1926 = vmatmul.mubr.f32.gmra.mrb[0].mxu0 %v1275
      %v1927 = vpop.f32.mrb[0].mxu0
      %v1928 = vadd.f32 %v1703, %v1927
      %v1929 = vpop.f32.mrb[0].mxu0
      %1930 = vmatprep.mubr.f32.mxu0 %v1285
      %1931 = vmatmul.mubr.f32.gmra.mrb[0].mxu0 %v1284
      %v1932 = vpop.f32.mrb[0].mxu0
      %v1933 = vadd.f32 %v1708, %v1932
      %v1934 = vpop.f32.mrb[0].mxu0
      %1935 = vmatprep.mubr.f32.mxu0 %v1294
      %1936 = vmatmul.mubr.f32.gmra.mrb[0].mxu0 %v1293
      %v1937 = vpop.f32.mrb[0].mxu0
      %v1938 = vadd.f32 %v1713, %v1937
      %v1939 = vpop.f32.mrb[0].mxu0
      %1940 = vmatprep.mubr.f32.mxu0 %v1303
      %1941 = vmatmul.mubr.f32.gmra.mrb[0].mxu0 %v1302
      %v1942 = vpop.f32.mrb[0].mxu0
      %v1943 = vadd.f32 %v1718, %v1942
      %v1944 = vpop.f32.mrb[0].mxu0
      %1945 = vmatprep.mubr.f32.mxu0 %v1312
      %1946 = vmatmul.mubr.f32.gmra.mrb[0].mxu0 %v1311
      %v1947 = vpop.f32.mrb[0].mxu0
      %v1948 = vadd.f32 %v1723, %v1947
      %v1949 = vpop.f32.mrb[0].mxu0
      %1950 = vmatprep.mubr.f32.mxu0 %v1321
      %1951 = vmatmul.mubr.f32.gmra.mrb[0].mxu0 %v1320
      %v1952 = vpop.f32.mrb[0].mxu0
      %v1953 = vadd.f32 %v1728, %v1952
      %v1954 = vpop.f32.mrb[0].mxu0
      %1955 = vmatprep.mubr.f32.mxu0 %v1330
      %1956 = vmatmul.mubr.f32.gmra.mrb[0].mxu0 %v1329
      %v1957 = vpop.f32.mrb[0].mxu0
      %v1958 = vadd.f32 %v1733, %v1957
      %v1959 = vpop.f32.mrb[0].mxu0
      %1960 = vmatprep.mubr.f32.mxu0 %v1339
      %1961 = vmatmul.mubr.f32.gmra.mrb[0].mxu0 %v1338
      %v1962 = vpop.f32.mrb[0].mxu0
      %v1963 = vadd.f32 %v1738, %v1962
      %v1964 = vpop.f32.mrb[0].mxu0
      %1965 = vmatprep.mubr.f32.mxu0 %v1348
      %1966 = vmatmul.mubr.f32.gmra.mrb[0].mxu0 %v1347
      %v1967 = vpop.f32.mrb[0].mxu0
      %v1968 = vadd.f32 %v1743, %v1967
      %v1969 = vpop.f32.mrb[0].mxu0
      %1970 = vmatprep.mubr.f32.mxu0 %v1357
      %1971 = vmatmul.mubr.f32.gmra.mrb[0].mxu0 %v1356
      %v1972 = vpop.f32.mrb[0].mxu0
      %v1973 = vadd.f32 %v1748, %v1972
      %v1974 = vpop.f32.mrb[0].mxu0
      %1975 = vmatprep.mubr.f32.mxu0 %v1366
      %1976 = vmatmul.mubr.f32.gmra.mrb[0].mxu0 %v1365
      %v1977 = vpop.f32.mrb[0].mxu0
      %v1978 = vadd.f32 %v1753, %v1977
      %v1979 = vpop.f32.mrb[0].mxu0
      %1980 = vmatprep.mubr.f32.mxu0 %v1375
      %1981 = vmatmul.mubr.f32.gmra.mrb[0].mxu0 %v1374
      %v1982 = vpop.f32.mrb[0].mxu0
      %v1983 = vadd.f32 %v1758, %v1982
      %v1984 = vpop.f32.mrb[0].mxu0
      %1985 = vmatprep.mubr.f32.mxu0 %v1384
      %1986 = vmatmul.mubr.f32.gmra.mrb[0].mxu0 %v1383
      %v1987 = vpop.f32.mrb[0].mxu0
      %v1988 = vadd.f32 %v1763, %v1987
      %v1989 = vpop.f32.mrb[0].mxu0
      %1990 = vdwg.mxu0
      %1991 = vmatprep.subr.mxu0 0.0
      %1992 = vmatpush1.msra.mxu0 %v1454
      %1993 = vmatprep.subr.mxu0 0.0
      %1994 = vmatpush1.msra.mxu0 %v1455
      %1995 = vmatprep.subr.mxu0 0.0
      %1996 = vmatpush1.msra.mxu0 %v1456
      %1997 = vmatprep.subr.mxu0 0.0
      %1998 = vmatpush1.msra.mxu0 %v1457
      %1999 = vmatprep.subr.mxu0 0.0
      %2000 = vmatpush1.msra.mxu0 %v1458
      %2001 = vmatprep.subr.mxu0 0.0
      %2002 = vmatpush1.msra.mxu0 %v1459
      %2003 = vmatprep.subr.mxu0 0.0
      %2004 = vmatpush1.msra.mxu0 %v1460
      %2005 = vmatprep.subr.mxu0 0.0
      %2006 = vmatpush1.msra.mxu0 %v1461
      %2007 = vmatprep.subr.mxu0 0.0
      %2008 = vmatpush1.msra.mxu0 %v1462
      %2009 = vmatprep.subr.mxu0 0.0
      %2010 = vmatpush1.msra.mxu0 %v1463
      %2011 = vmatprep.subr.mxu0 0.0
      %2012 = vmatpush1.msra.mxu0 %v1464
      %2013 = vmatprep.subr.mxu0 0.0
      %2014 = vmatpush1.msra.mxu0 %v1465
      %2015 = vmatprep.subr.mxu0 0.0
      %2016 = vmatpush1.msra.mxu0 %v1466
      %2017 = vmatprep.subr.mxu0 0.0
      %2018 = vmatpush1.msra.mxu0 %v1467
      %2019 = vmatprep.subr.mxu0 0.0
      %2020 = vmatpush1.msra.mxu0 %v1468
      %2021 = vmatprep.subr.mxu0 0.0
      %2022 = vmatpush1.msra.mxu0 %v1469
      %2023 = vmatprep.subr.mxu0 0.0
      %2024 = vmatpush1.msra.mxu0 %v1470
      %2025 = vmatprep.subr.mxu0 0.0
      %2026 = vmatpush1.msra.mxu0 %v1471
      %2027 = vmatprep.subr.mxu0 0.0
      %2028 = vmatpush1.msra.mxu0 %v1472
      %2029 = vmatprep.subr.mxu0 0.0
      %2030 = vmatpush1.msra.mxu0 %v1473
      %2031 = vmatprep.subr.mxu0 0.0
      %2032 = vmatpush1.msra.mxu0 %v1474
      %2033 = vmatprep.subr.mxu0 0.0
      %2034 = vmatpush1.msra.mxu0 %v1475
      %2035 = vmatprep.subr.mxu0 0.0
      %2036 = vmatpush1.msra.mxu0 %v1476
      %2037 = vmatprep.subr.mxu0 0.0
      %2038 = vmatpush1.msra.mxu0 %v1477
      %2039 = vmatprep.subr.mxu0 0.0
      %2040 = vmatpush1.msra.mxu0 %v1478
      %2041 = vmatprep.subr.mxu0 0.0
      %2042 = vmatpush1.msra.mxu0 %v1479
      %2043 = vmatprep.subr.mxu0 0.0
      %2044 = vmatpush1.msra.mxu0 %v1480
      %2045 = vmatprep.subr.mxu0 0.0
      %2046 = vmatpush1.msra.mxu0 %v1481
      %2047 = vmatprep.subr.mxu0 0.0
      %2048 = vmatpush1.msra.mxu0 %v1482
      %2049 = vmatprep.subr.mxu0 0.0
      %2050 = vmatpush1.msra.mxu0 %v1483
      %2051 = vmatprep.subr.mxu0 0.0
      %2052 = vmatpush1.msra.mxu0 %v1484
      %2053 = vmatprep.subr.mxu0 0.0
      %2054 = vmatpush1.msra.mxu0 %v1485
      %2055 = vmatprep.mubr.f32.mxu0 %v1107
      %2056 = vmatmul.mubr.f32.gmra.mrb[0].mxu0 %v1106
      %v2057 = vpop.f32.mrb[0].mxu0
      %v2058 = vadd.f32 %v1833, %v2057
      %v2059 = vpop.f32.mrb[0].mxu0
      %2060 = vmatprep.mubr.f32.mxu0 %v1116
      %2061 = vmatmul.mubr.f32.gmra.mrb[0].mxu0 %v1115
      %v2062 = vpop.f32.mrb[0].mxu0
      %v2063 = vadd.f32 %v1838, %v2062
      %v2064 = vpop.f32.mrb[0].mxu0
      %2065 = vmatprep.mubr.f32.mxu0 %v1125
      %2066 = vmatmul.mubr.f32.gmra.mrb[0].mxu0 %v1124
      %v2067 = vpop.f32.mrb[0].mxu0
      %v2068 = vadd.f32 %v1843, %v2067
      %v2069 = vpop.f32.mrb[0].mxu0
      %2070 = vmatprep.mubr.f32.mxu0 %v1134
      %2071 = vmatmul.mubr.f32.gmra.mrb[0].mxu0 %v1133
      %v2072 = vpop.f32.mrb[0].mxu0
      %v2073 = vadd.f32 %v1848, %v2072
      %v2074 = vpop.f32.mrb[0].mxu0
      %2075 = vmatprep.mubr.f32.mxu0 %v1143
      %2076 = vmatmul.mubr.f32.gmra.mrb[0].mxu0 %v1142
      %v2077 = vpop.f32.mrb[0].mxu0
      %v2078 = vadd.f32 %v1853, %v2077
      %v2079 = vpop.f32.mrb[0].mxu0
      %2080 = vmatprep.mubr.f32.mxu0 %v1152
      %2081 = vmatmul.mubr.f32.gmra.mrb[0].mxu0 %v1151
      %v2082 = vpop.f32.mrb[0].mxu0
      %v2083 = vadd.f32 %v1858, %v2082
      %v2084 = vpop.f32.mrb[0].mxu0
      %2085 = vmatprep.mubr.f32.mxu0 %v1161
      %2086 = vmatmul.mubr.f32.gmra.mrb[0].mxu0 %v1160
      %v2087 = vpop.f32.mrb[0].mxu0
      %v2088 = vadd.f32 %v1863, %v2087
      %v2089 = vpop.f32.mrb[0].mxu0
      %2090 = vmatprep.mubr.f32.mxu0 %v1170
      %2091 = vmatmul.mubr.f32.gmra.mrb[0].mxu0 %v1169
      %v2092 = vpop.f32.mrb[0].mxu0
      %v2093 = vadd.f32 %v1868, %v2092
      %v2094 = vpop.f32.mrb[0].mxu0
      %2095 = vmatprep.mubr.f32.mxu0 %v1179
      %2096 = vmatmul.mubr.f32.gmra.mrb[0].mxu0 %v1178
      %v2097 = vpop.f32.mrb[0].mxu0
      %v2098 = vadd.f32 %v1873, %v2097
      %v2099 = vpop.f32.mrb[0].mxu0
      %2100 = vmatprep.mubr.f32.mxu0 %v1188
      %2101 = vmatmul.mubr.f32.gmra.mrb[0].mxu0 %v1187
      %v2102 = vpop.f32.mrb[0].mxu0
      %v2103 = vadd.f32 %v1878, %v2102
      %v2104 = vpop.f32.mrb[0].mxu0
      %2105 = vmatprep.mubr.f32.mxu0 %v1197
      %2106 = vmatmul.mubr.f32.gmra.mrb[0].mxu0 %v1196
      %v2107 = vpop.f32.mrb[0].mxu0
      %v2108 = vadd.f32 %v1883, %v2107
      %v2109 = vpop.f32.mrb[0].mxu0
      %2110 = vmatprep.mubr.f32.mxu0 %v1206
      %2111 = vmatmul.mubr.f32.gmra.mrb[0].mxu0 %v1205
      %v2112 = vpop.f32.mrb[0].mxu0
      %v2113 = vadd.f32 %v1888, %v2112
      %v2114 = vpop.f32.mrb[0].mxu0
      %2115 = vmatprep.mubr.f32.mxu0 %v1215
      %2116 = vmatmul.mubr.f32.gmra.mrb[0].mxu0 %v1214
      %v2117 = vpop.f32.mrb[0].mxu0
      %v2118 = vadd.f32 %v1893, %v2117
      %v2119 = vpop.f32.mrb[0].mxu0
      %2120 = vmatprep.mubr.f32.mxu0 %v1224
      %2121 = vmatmul.mubr.f32.gmra.mrb[0].mxu0 %v1223
      %v2122 = vpop.f32.mrb[0].mxu0
      %v2123 = vadd.f32 %v1898, %v2122
      %v2124 = vpop.f32.mrb[0].mxu0
      %2125 = vmatprep.mubr.f32.mxu0 %v1233
      %2126 = vmatmul.mubr.f32.gmra.mrb[0].mxu0 %v1232
      %v2127 = vpop.f32.mrb[0].mxu0
      %v2128 = vadd.f32 %v1903, %v2127
      %v2129 = vpop.f32.mrb[0].mxu0
      %2130 = vmatprep.mubr.f32.mxu0 %v1242
      %2131 = vmatmul.mubr.f32.gmra.mrb[0].mxu0 %v1241
      %v2132 = vpop.f32.mrb[0].mxu0
      %v2133 = vadd.f32 %v1908, %v2132
      %v2134 = vpop.f32.mrb[0].mxu0
      %2135 = vmatprep.mubr.f32.mxu0 %v1251
      %2136 = vmatmul.mubr.f32.gmra.mrb[0].mxu0 %v1250
      %v2137 = vpop.f32.mrb[0].mxu0
      %v2138 = vadd.f32 %v1913, %v2137
      %v2139 = vpop.f32.mrb[0].mxu0
      %2140 = vmatprep.mubr.f32.mxu0 %v1260
      %2141 = vmatmul.mubr.f32.gmra.mrb[0].mxu0 %v1259
      %v2142 = vpop.f32.mrb[0].mxu0
      %v2143 = vadd.f32 %v1918, %v2142
      %v2144 = vpop.f32.mrb[0].mxu0
      %2145 = vmatprep.mubr.f32.mxu0 %v1269
      %2146 = vmatmul.mubr.f32.gmra.mrb[0].mxu0 %v1268
      %v2147 = vpop.f32.mrb[0].mxu0
      %v2148 = vadd.f32 %v1923, %v2147
      %v2149 = vpop.f32.mrb[0].mxu0
      %2150 = vmatprep.mubr.f32.mxu0 %v1278
      %2151 = vmatmul.mubr.f32.gmra.mrb[0].mxu0 %v1277
      %v2152 = vpop.f32.mrb[0].mxu0
      %v2153 = vadd.f32 %v1928, %v2152
      %v2154 = vpop.f32.mrb[0].mxu0
      %2155 = vmatprep.mubr.f32.mxu0 %v1287
      %2156 = vmatmul.mubr.f32.gmra.mrb[0].mxu0 %v1286
      %v2157 = vpop.f32.mrb[0].mxu0
      %v2158 = vadd.f32 %v1933, %v2157
      %v2159 = vpop.f32.mrb[0].mxu0
      %2160 = vmatprep.mubr.f32.mxu0 %v1296
      %2161 = vmatmul.mubr.f32.gmra.mrb[0].mxu0 %v1295
      %v2162 = vpop.f32.mrb[0].mxu0
      %v2163 = vadd.f32 %v1938, %v2162
      %v2164 = vpop.f32.mrb[0].mxu0
      %2165 = vmatprep.mubr.f32.mxu0 %v1305
      %2166 = vmatmul.mubr.f32.gmra.mrb[0].mxu0 %v1304
      %v2167 = vpop.f32.mrb[0].mxu0
      %v2168 = vadd.f32 %v1943, %v2167
      %v2169 = vpop.f32.mrb[0].mxu0
      %2170 = vmatprep.mubr.f32.mxu0 %v1314
      %2171 = vmatmul.mubr.f32.gmra.mrb[0].mxu0 %v1313
      %v2172 = vpop.f32.mrb[0].mxu0
      %v2173 = vadd.f32 %v1948, %v2172
      %v2174 = vpop.f32.mrb[0].mxu0
      %2175 = vmatprep.mubr.f32.mxu0 %v1323
      %2176 = vmatmul.mubr.f32.gmra.mrb[0].mxu0 %v1322
      %v2177 = vpop.f32.mrb[0].mxu0
      %v2178 = vadd.f32 %v1953, %v2177
      %v2179 = vpop.f32.mrb[0].mxu0
      %2180 = vmatprep.mubr.f32.mxu0 %v1332
      %2181 = vmatmul.mubr.f32.gmra.mrb[0].mxu0 %v1331
      %v2182 = vpop.f32.mrb[0].mxu0
      %v2183 = vadd.f32 %v1958, %v2182
      %v2184 = vpop.f32.mrb[0].mxu0
      %2185 = vmatprep.mubr.f32.mxu0 %v1341
      %2186 = vmatmul.mubr.f32.gmra.mrb[0].mxu0 %v1340
      %v2187 = vpop.f32.mrb[0].mxu0
      %v2188 = vadd.f32 %v1963, %v2187
      %v2189 = vpop.f32.mrb[0].mxu0
      %2190 = vmatprep.mubr.f32.mxu0 %v1350
      %2191 = vmatmul.mubr.f32.gmra.mrb[0].mxu0 %v1349
      %v2192 = vpop.f32.mrb[0].mxu0
      %v2193 = vadd.f32 %v1968, %v2192
      %v2194 = vpop.f32.mrb[0].mxu0
      %2195 = vmatprep.mubr.f32.mxu0 %v1359
      %2196 = vmatmul.mubr.f32.gmra.mrb[0].mxu0 %v1358
      %v2197 = vpop.f32.mrb[0].mxu0
      %v2198 = vadd.f32 %v1973, %v2197
      %v2199 = vpop.f32.mrb[0].mxu0
      %2200 = vmatprep.mubr.f32.mxu0 %v1368
      %2201 = vmatmul.mubr.f32.gmra.mrb[0].mxu0 %v1367
      %v2202 = vpop.f32.mrb[0].mxu0
      %v2203 = vadd.f32 %v1978, %v2202
      %v2204 = vpop.f32.mrb[0].mxu0
      %2205 = vmatprep.mubr.f32.mxu0 %v1377
      %2206 = vmatmul.mubr.f32.gmra.mrb[0].mxu0 %v1376
      %v2207 = vpop.f32.mrb[0].mxu0
      %v2208 = vadd.f32 %v1983, %v2207
      %v2209 = vpop.f32.mrb[0].mxu0
      %2210 = vmatprep.mubr.f32.mxu0 %v1386
      %2211 = vmatmul.mubr.f32.gmra.mrb[0].mxu0 %v1385
      %v2212 = vpop.f32.mrb[0].mxu0
      %v2213 = vadd.f32 %v1988, %v2212
      %v2214 = vpop.f32.mrb[0].mxu0
      %2215 = vdwg.mxu0
      %2216 = vmatprep.subr.mxu0 0.0
      %2217 = vmatpush1.msra.mxu0 %v1486
      %2218 = vmatprep.subr.mxu0 0.0
      %2219 = vmatpush1.msra.mxu0 %v1487
      %2220 = vmatprep.subr.mxu0 0.0
      %2221 = vmatpush1.msra.mxu0 %v1488
      %2222 = vmatprep.subr.mxu0 0.0
      %2223 = vmatpush1.msra.mxu0 %v1489
      %2224 = vmatprep.subr.mxu0 0.0
      %2225 = vmatpush1.msra.mxu0 %v1490
      %2226 = vmatprep.subr.mxu0 0.0
      %2227 = vmatpush1.msra.mxu0 %v1491
      %2228 = vmatprep.subr.mxu0 0.0
      %2229 = vmatpush1.msra.mxu0 %v1492
      %2230 = vmatprep.subr.mxu0 0.0
      %2231 = vmatpush1.msra.mxu0 %v1493
      %2232 = vmatprep.subr.mxu0 0.0
      %2233 = vmatpush1.msra.mxu0 %v1494
      %2234 = vmatprep.subr.mxu0 0.0
      %2235 = vmatpush1.msra.mxu0 %v1495
      %2236 = vmatprep.subr.mxu0 0.0
      %2237 = vmatpush1.msra.mxu0 %v1496
      %2238 = vmatprep.subr.mxu0 0.0
      %2239 = vmatpush1.msra.mxu0 %v1497
      %2240 = vmatprep.subr.mxu0 0.0
      %2241 = vmatpush1.msra.mxu0 %v1498
      %2242 = vmatprep.subr.mxu0 0.0
      %2243 = vmatpush1.msra.mxu0 %v1499
      %2244 = vmatprep.subr.mxu0 0.0
      %2245 = vmatpush1.msra.mxu0 %v1500
      %2246 = vmatprep.subr.mxu0 0.0
      %2247 = vmatpush1.msra.mxu0 %v1501
      %2248 = vmatprep.subr.mxu0 0.0
      %2249 = vmatpush1.msra.mxu0 %v1502
      %2250 = vmatprep.subr.mxu0 0.0
      %2251 = vmatpush1.msra.mxu0 %v1503
      %2252 = vmatprep.subr.mxu0 0.0
      %2253 = vmatpush1.msra.mxu0 %v1504
      %2254 = vmatprep.subr.mxu0 0.0
      %2255 = vmatpush1.msra.mxu0 %v1505
      %2256 = vmatprep.subr.mxu0 0.0
      %2257 = vmatpush1.msra.mxu0 %v1506
      %2258 = vmatprep.subr.mxu0 0.0
      %2259 = vmatpush1.msra.mxu0 %v1507
      %2260 = vmatprep.subr.mxu0 0.0
      %2261 = vmatpush1.msra.mxu0 %v1508
      %2262 = vmatprep.subr.mxu0 0.0
      %2263 = vmatpush1.msra.mxu0 %v1509
      %2264 = vmatprep.subr.mxu0 0.0
      %2265 = vmatpush1.msra.mxu0 %v1510
      %2266 = vmatprep.subr.mxu0 0.0
      %2267 = vmatpush1.msra.mxu0 %v1511
      %2268 = vmatprep.subr.mxu0 0.0
      %2269 = vmatpush1.msra.mxu0 %v1512
      %2270 = vmatprep.subr.mxu0 0.0
      %2271 = vmatpush1.msra.mxu0 %v1513
      %2272 = vmatprep.subr.mxu0 0.0
      %2273 = vmatpush1.msra.mxu0 %v1514
      %2274 = vmatprep.subr.mxu0 0.0
      %2275 = vmatpush1.msra.mxu0 %v1515
      %2276 = vmatprep.subr.mxu0 0.0
      %2277 = vmatpush1.msra.mxu0 %v1516
      %2278 = vmatprep.subr.mxu0 0.0
      %2279 = vmatpush1.msra.mxu0 %v1517
      %2280 = vmatprep.mubr.f32.mxu0 %v1109
      %2281 = vmatmul.mubr.f32.gmra.mrb[0].mxu0 %v1108
      %v2282 = vpop.f32.mrb[0].mxu0
      %v2283 = vadd.f32 %v2058, %v2282
      %v2284 = vpop.f32.mrb[0].mxu0
      %2285 = vmatprep.mubr.f32.mxu0 %v1118
      %2286 = vmatmul.mubr.f32.gmra.mrb[0].mxu0 %v1117
      %v2287 = vpop.f32.mrb[0].mxu0
      %v2288 = vadd.f32 %v2063, %v2287
      %v2289 = vpop.f32.mrb[0].mxu0
      %2290 = vmatprep.mubr.f32.mxu0 %v1127
      %2291 = vmatmul.mubr.f32.gmra.mrb[0].mxu0 %v1126
      %v2292 = vpop.f32.mrb[0].mxu0
      %v2293 = vadd.f32 %v2068, %v2292
      %v2294 = vpop.f32.mrb[0].mxu0
      %2295 = vmatprep.mubr.f32.mxu0 %v1136
      %2296 = vmatmul.mubr.f32.gmra.mrb[0].mxu0 %v1135
      %v2297 = vpop.f32.mrb[0].mxu0
      %v2298 = vadd.f32 %v2073, %v2297
      %v2299 = vpop.f32.mrb[0].mxu0
      %2300 = vmatprep.mubr.f32.mxu0 %v1145
      %2301 = vmatmul.mubr.f32.gmra.mrb[0].mxu0 %v1144
      %v2302 = vpop.f32.mrb[0].mxu0
      %v2303 = vadd.f32 %v2078, %v2302
      %v2304 = vpop.f32.mrb[0].mxu0
      %2305 = vmatprep.mubr.f32.mxu0 %v1154
      %2306 = vmatmul.mubr.f32.gmra.mrb[0].mxu0 %v1153
      %v2307 = vpop.f32.mrb[0].mxu0
      %v2308 = vadd.f32 %v2083, %v2307
      %v2309 = vpop.f32.mrb[0].mxu0
      %2310 = vmatprep.mubr.f32.mxu0 %v1163
      %2311 = vmatmul.mubr.f32.gmra.mrb[0].mxu0 %v1162
      %v2312 = vpop.f32.mrb[0].mxu0
      %v2313 = vadd.f32 %v2088, %v2312
      %v2314 = vpop.f32.mrb[0].mxu0
      %2315 = vmatprep.mubr.f32.mxu0 %v1172
      %2316 = vmatmul.mubr.f32.gmra.mrb[0].mxu0 %v1171
      %v2317 = vpop.f32.mrb[0].mxu0
      %v2318 = vadd.f32 %v2093, %v2317
      %v2319 = vpop.f32.mrb[0].mxu0
      %2320 = vmatprep.mubr.f32.mxu0 %v1181
      %2321 = vmatmul.mubr.f32.gmra.mrb[0].mxu0 %v1180
      %v2322 = vpop.f32.mrb[0].mxu0
      %v2323 = vadd.f32 %v2098, %v2322
      %v2324 = vpop.f32.mrb[0].mxu0
      %2325 = vmatprep.mubr.f32.mxu0 %v1190
      %2326 = vmatmul.mubr.f32.gmra.mrb[0].mxu0 %v1189
      %v2327 = vpop.f32.mrb[0].mxu0
      %v2328 = vadd.f32 %v2103, %v2327
      %v2329 = vpop.f32.mrb[0].mxu0
      %2330 = vmatprep.mubr.f32.mxu0 %v1199
      %2331 = vmatmul.mubr.f32.gmra.mrb[0].mxu0 %v1198
      %v2332 = vpop.f32.mrb[0].mxu0
      %v2333 = vadd.f32 %v2108, %v2332
      %v2334 = vpop.f32.mrb[0].mxu0
      %2335 = vmatprep.mubr.f32.mxu0 %v1208
      %2336 = vmatmul.mubr.f32.gmra.mrb[0].mxu0 %v1207
      %v2337 = vpop.f32.mrb[0].mxu0
      %v2338 = vadd.f32 %v2113, %v2337
      %v2339 = vpop.f32.mrb[0].mxu0
      %2340 = vmatprep.mubr.f32.mxu0 %v1217
      %2341 = vmatmul.mubr.f32.gmra.mrb[0].mxu0 %v1216
      %v2342 = vpop.f32.mrb[0].mxu0
      %v2343 = vadd.f32 %v2118, %v2342
      %v2344 = vpop.f32.mrb[0].mxu0
      %2345 = vmatprep.mubr.f32.mxu0 %v1226
      %2346 = vmatmul.mubr.f32.gmra.mrb[0].mxu0 %v1225
      %v2347 = vpop.f32.mrb[0].mxu0
      %v2348 = vadd.f32 %v2123, %v2347
      %v2349 = vpop.f32.mrb[0].mxu0
      %2350 = vmatprep.mubr.f32.mxu0 %v1235
      %2351 = vmatmul.mubr.f32.gmra.mrb[0].mxu0 %v1234
      %v2352 = vpop.f32.mrb[0].mxu0
      %v2353 = vadd.f32 %v2128, %v2352
      %v2354 = vpop.f32.mrb[0].mxu0
      %2355 = vmatprep.mubr.f32.mxu0 %v1244
      %2356 = vmatmul.mubr.f32.gmra.mrb[0].mxu0 %v1243
      %v2357 = vpop.f32.mrb[0].mxu0
      %v2358 = vadd.f32 %v2133, %v2357
      %v2359 = vpop.f32.mrb[0].mxu0
      %2360 = vmatprep.mubr.f32.mxu0 %v1253
      %2361 = vmatmul.mubr.f32.gmra.mrb[0].mxu0 %v1252
      %v2362 = vpop.f32.mrb[0].mxu0
      %v2363 = vadd.f32 %v2138, %v2362
      %v2364 = vpop.f32.mrb[0].mxu0
      %2365 = vmatprep.mubr.f32.mxu0 %v1262
      %2366 = vmatmul.mubr.f32.gmra.mrb[0].mxu0 %v1261
      %v2367 = vpop.f32.mrb[0].mxu0
      %v2368 = vadd.f32 %v2143, %v2367
      %v2369 = vpop.f32.mrb[0].mxu0
      %2370 = vmatprep.mubr.f32.mxu0 %v1271
      %2371 = vmatmul.mubr.f32.gmra.mrb[0].mxu0 %v1270
      %v2372 = vpop.f32.mrb[0].mxu0
      %v2373 = vadd.f32 %v2148, %v2372
      %v2374 = vpop.f32.mrb[0].mxu0
      %2375 = vmatprep.mubr.f32.mxu0 %v1280
      %2376 = vmatmul.mubr.f32.gmra.mrb[0].mxu0 %v1279
      %v2377 = vpop.f32.mrb[0].mxu0
      %v2378 = vadd.f32 %v2153, %v2377
      %v2379 = vpop.f32.mrb[0].mxu0
      %2380 = vmatprep.mubr.f32.mxu0 %v1289
      %2381 = vmatmul.mubr.f32.gmra.mrb[0].mxu0 %v1288
      %v2382 = vpop.f32.mrb[0].mxu0
      %v2383 = vadd.f32 %v2158, %v2382
      %v2384 = vpop.f32.mrb[0].mxu0
      %2385 = vmatprep.mubr.f32.mxu0 %v1298
      %2386 = vmatmul.mubr.f32.gmra.mrb[0].mxu0 %v1297
      %v2387 = vpop.f32.mrb[0].mxu0
      %v2388 = vadd.f32 %v2163, %v2387
      %v2389 = vpop.f32.mrb[0].mxu0
      %2390 = vmatprep.mubr.f32.mxu0 %v1307
      %2391 = vmatmul.mubr.f32.gmra.mrb[0].mxu0 %v1306
      %v2392 = vpop.f32.mrb[0].mxu0
      %v2393 = vadd.f32 %v2168, %v2392
      %v2394 = vpop.f32.mrb[0].mxu0
      %2395 = vmatprep.mubr.f32.mxu0 %v1316
      %2396 = vmatmul.mubr.f32.gmra.mrb[0].mxu0 %v1315
      %v2397 = vpop.f32.mrb[0].mxu0
      %v2398 = vadd.f32 %v2173, %v2397
      %v2399 = vpop.f32.mrb[0].mxu0
      %2400 = vmatprep.mubr.f32.mxu0 %v1325
      %2401 = vmatmul.mubr.f32.gmra.mrb[0].mxu0 %v1324
      %v2402 = vpop.f32.mrb[0].mxu0
      %v2403 = vadd.f32 %v2178, %v2402
      %v2404 = vpop.f32.mrb[0].mxu0
      %2405 = vmatprep.mubr.f32.mxu0 %v1334
      %2406 = vmatmul.mubr.f32.gmra.mrb[0].mxu0 %v1333
      %v2407 = vpop.f32.mrb[0].mxu0
      %v2408 = vadd.f32 %v2183, %v2407
      %v2409 = vpop.f32.mrb[0].mxu0
      %2410 = vmatprep.mubr.f32.mxu0 %v1343
      %2411 = vmatmul.mubr.f32.gmra.mrb[0].mxu0 %v1342
      %v2412 = vpop.f32.mrb[0].mxu0
      %v2413 = vadd.f32 %v2188, %v2412
      %v2414 = vpop.f32.mrb[0].mxu0
      %2415 = vmatprep.mubr.f32.mxu0 %v1352
      %2416 = vmatmul.mubr.f32.gmra.mrb[0].mxu0 %v1351
      %v2417 = vpop.f32.mrb[0].mxu0
      %v2418 = vadd.f32 %v2193, %v2417
      %v2419 = vpop.f32.mrb[0].mxu0
      %2420 = vmatprep.mubr.f32.mxu0 %v1361
      %2421 = vmatmul.mubr.f32.gmra.mrb[0].mxu0 %v1360
      %v2422 = vpop.f32.mrb[0].mxu0
      %v2423 = vadd.f32 %v2198, %v2422
      %v2424 = vpop.f32.mrb[0].mxu0
      %2425 = vmatprep.mubr.f32.mxu0 %v1370
      %2426 = vmatmul.mubr.f32.gmra.mrb[0].mxu0 %v1369
      %v2427 = vpop.f32.mrb[0].mxu0
      %v2428 = vadd.f32 %v2203, %v2427
      %v2429 = vpop.f32.mrb[0].mxu0
      %2430 = vmatprep.mubr.f32.mxu0 %v1379
      %2431 = vmatmul.mubr.f32.gmra.mrb[0].mxu0 %v1378
      %v2432 = vpop.f32.mrb[0].mxu0
      %v2433 = vadd.f32 %v2208, %v2432
      %v2434 = vpop.f32.mrb[0].mxu0
      %2435 = vmatprep.mubr.f32.mxu0 %v1388
      %2436 = vmatmul.mubr.f32.gmra.mrb[0].mxu0 %v1387
      %v2437 = vpop.f32.mrb[0].mxu0
      %v2438 = vadd.f32 %v2213, %v2437
      %v2439 = vpop.f32.mrb[0].mxu0
      %2440 = vdwg.mxu0
      %2441 = vmatprep.subr.mxu0 0.0
      %2442 = vmatpush1.msra.mxu0 %v1518
      %2443 = vmatprep.subr.mxu0 0.0
      %2444 = vmatpush1.msra.mxu0 %v1519
      %2445 = vmatprep.subr.mxu0 0.0
      %2446 = vmatpush1.msra.mxu0 %v1520
      %2447 = vmatprep.subr.mxu0 0.0
      %2448 = vmatpush1.msra.mxu0 %v1521
      %2449 = vmatprep.subr.mxu0 0.0
      %2450 = vmatpush1.msra.mxu0 %v1522
      %2451 = vmatprep.subr.mxu0 0.0
      %2452 = vmatpush1.msra.mxu0 %v1523
      %2453 = vmatprep.subr.mxu0 0.0
      %2454 = vmatpush1.msra.mxu0 %v1524
      %2455 = vmatprep.subr.mxu0 0.0
      %2456 = vmatpush1.msra.mxu0 %v1525
      %2457 = vmatprep.subr.mxu0 0.0
      %2458 = vmatpush1.msra.mxu0 %v1526
      %2459 = vmatprep.subr.mxu0 0.0
      %2460 = vmatpush1.msra.mxu0 %v1527
      %2461 = vmatprep.subr.mxu0 0.0
      %2462 = vmatpush1.msra.mxu0 %v1528
      %2463 = vmatprep.subr.mxu0 0.0
      %2464 = vmatpush1.msra.mxu0 %v1529
      %2465 = vmatprep.subr.mxu0 0.0
      %2466 = vmatpush1.msra.mxu0 %v1530
      %2467 = vmatprep.subr.mxu0 0.0
      %2468 = vmatpush1.msra.mxu0 %v1531
      %2469 = vmatprep.subr.mxu0 0.0
      %2470 = vmatpush1.msra.mxu0 %v1532
      %2471 = vmatprep.subr.mxu0 0.0
      %2472 = vmatpush1.msra.mxu0 %v1533
      %2473 = vmatprep.subr.mxu0 0.0
      %2474 = vmatpush1.msra.mxu0 0.0
      %2475 = vmatprep.subr.mxu0 0.0
      %2476 = vmatpush1.msra.mxu0 0.0
      %2477 = vmatprep.subr.mxu0 0.0
      %2478 = vmatpush1.msra.mxu0 0.0
      %2479 = vmatprep.subr.mxu0 0.0
      %2480 = vmatpush1.msra.mxu0 0.0
      %2481 = vmatprep.subr.mxu0 0.0
      %2482 = vmatpush1.msra.mxu0 0.0
      %2483 = vmatprep.subr.mxu0 0.0
      %2484 = vmatpush1.msra.mxu0 0.0
      %2485 = vmatprep.subr.mxu0 0.0
      %2486 = vmatpush1.msra.mxu0 0.0
      %2487 = vmatprep.subr.mxu0 0.0
      %2488 = vmatpush1.msra.mxu0 0.0
      %2489 = vmatprep.subr.mxu0 0.0
      %2490 = vmatpush1.msra.mxu0 0.0
      %2491 = vmatprep.subr.mxu0 0.0
      %2492 = vmatpush1.msra.mxu0 0.0
      %2493 = vmatprep.subr.mxu0 0.0
      %2494 = vmatpush1.msra.mxu0 0.0
      %2495 = vmatprep.subr.mxu0 0.0
      %2496 = vmatpush1.msra.mxu0 0.0
      %2497 = vmatprep.subr.mxu0 0.0
      %2498 = vmatpush1.msra.mxu0 0.0
      %2499 = vmatprep.subr.mxu0 0.0
      %2500 = vmatpush1.msra.mxu0 0.0
      %2501 = vmatprep.subr.mxu0 0.0
      %2502 = vmatpush1.msra.mxu0 0.0
      %2503 = vmatprep.subr.mxu0 0.0
      %2504 = vmatpush1.msra.mxu0 0.0
      %2505 = vmatprep.mubr.f32.mxu0 0.0
      %2506 = vmatmul.mubr.f32.gmra.mrb[0].mxu0 %v1110
      %v2507 = vpop.f32.mrb[0].mxu0
      %v2508 = vadd.f32 %v2283, %v2507
      %v2509 = vpop.f32.mrb[0].mxu0
      %2510 = vmatprep.mubr.f32.mxu0 0.0
      %2511 = vmatmul.mubr.f32.gmra.mrb[0].mxu0 %v1119
      %v2512 = vpop.f32.mrb[0].mxu0
      %v2513 = vadd.f32 %v2288, %v2512
      %v2514 = vpop.f32.mrb[0].mxu0
      %2515 = vmatprep.mubr.f32.mxu0 0.0
      %2516 = vmatmul.mubr.f32.gmra.mrb[0].mxu0 %v1128
      %v2517 = vpop.f32.mrb[0].mxu0
      %v2518 = vadd.f32 %v2293, %v2517
      %v2519 = vpop.f32.mrb[0].mxu0
      %2520 = vmatprep.mubr.f32.mxu0 0.0
      %2521 = vmatmul.mubr.f32.gmra.mrb[0].mxu0 %v1137
      %v2522 = vpop.f32.mrb[0].mxu0
      %v2523 = vadd.f32 %v2298, %v2522
      %v2524 = vpop.f32.mrb[0].mxu0
      %2525 = vmatprep.mubr.f32.mxu0 0.0
      %2526 = vmatmul.mubr.f32.gmra.mrb[0].mxu0 %v1146
      %v2527 = vpop.f32.mrb[0].mxu0
      %v2528 = vadd.f32 %v2303, %v2527
      %v2529 = vpop.f32.mrb[0].mxu0
      %2530 = vmatprep.mubr.f32.mxu0 0.0
      %2531 = vmatmul.mubr.f32.gmra.mrb[0].mxu0 %v1155
      %v2532 = vpop.f32.mrb[0].mxu0
      %v2533 = vadd.f32 %v2308, %v2532
      %v2534 = vpop.f32.mrb[0].mxu0
      %2535 = vmatprep.mubr.f32.mxu0 0.0
      %2536 = vmatmul.mubr.f32.gmra.mrb[0].mxu0 %v1164
      %v2537 = vpop.f32.mrb[0].mxu0
      %v2538 = vadd.f32 %v2313, %v2537
      %v2539 = vpop.f32.mrb[0].mxu0
      %2540 = vmatprep.mubr.f32.mxu0 0.0
      %2541 = vmatmul.mubr.f32.gmra.mrb[0].mxu0 %v1173
      %v2542 = vpop.f32.mrb[0].mxu0
      %v2543 = vadd.f32 %v2318, %v2542
      %v2544 = vpop.f32.mrb[0].mxu0
      %2545 = vmatprep.mubr.f32.mxu0 0.0
      %2546 = vmatmul.mubr.f32.gmra.mrb[0].mxu0 %v1182
      %v2547 = vpop.f32.mrb[0].mxu0
      %v2548 = vadd.f32 %v2323, %v2547
      %v2549 = vpop.f32.mrb[0].mxu0
      %2550 = vmatprep.mubr.f32.mxu0 0.0
      %2551 = vmatmul.mubr.f32.gmra.mrb[0].mxu0 %v1191
      %v2552 = vpop.f32.mrb[0].mxu0
      %v2553 = vadd.f32 %v2328, %v2552
      %v2554 = vpop.f32.mrb[0].mxu0
      %2555 = vmatprep.mubr.f32.mxu0 0.0
      %2556 = vmatmul.mubr.f32.gmra.mrb[0].mxu0 %v1200
      %v2557 = vpop.f32.mrb[0].mxu0
      %v2558 = vadd.f32 %v2333, %v2557
      %v2559 = vpop.f32.mrb[0].mxu0
      %2560 = vmatprep.mubr.f32.mxu0 0.0
      %2561 = vmatmul.mubr.f32.gmra.mrb[0].mxu0 %v1209
      %v2562 = vpop.f32.mrb[0].mxu0
      %v2563 = vadd.f32 %v2338, %v2562
      %v2564 = vpop.f32.mrb[0].mxu0
      %2565 = vmatprep.mubr.f32.mxu0 0.0
      %2566 = vmatmul.mubr.f32.gmra.mrb[0].mxu0 %v1218
      %v2567 = vpop.f32.mrb[0].mxu0
      %v2568 = vadd.f32 %v2343, %v2567
      %v2569 = vpop.f32.mrb[0].mxu0
      %2570 = vmatprep.mubr.f32.mxu0 0.0
      %2571 = vmatmul.mubr.f32.gmra.mrb[0].mxu0 %v1227
      %v2572 = vpop.f32.mrb[0].mxu0
      %v2573 = vadd.f32 %v2348, %v2572
      %v2574 = vpop.f32.mrb[0].mxu0
      %2575 = vmatprep.mubr.f32.mxu0 0.0
      %2576 = vmatmul.mubr.f32.gmra.mrb[0].mxu0 %v1236
      %v2577 = vpop.f32.mrb[0].mxu0
      %v2578 = vadd.f32 %v2353, %v2577
      %v2579 = vpop.f32.mrb[0].mxu0
      %2580 = vmatprep.mubr.f32.mxu0 0.0
      %2581 = vmatmul.mubr.f32.gmra.mrb[0].mxu0 %v1245
      %v2582 = vpop.f32.mrb[0].mxu0
      %v2583 = vadd.f32 %v2358, %v2582
      %v2584 = vpop.f32.mrb[0].mxu0
      %2585 = vmatprep.mubr.f32.mxu0 0.0
      %2586 = vmatmul.mubr.f32.gmra.mrb[0].mxu0 %v1254
      %v2587 = vpop.f32.mrb[0].mxu0
      %v2588 = vadd.f32 %v2363, %v2587
      %v2589 = vpop.f32.mrb[0].mxu0
      %2590 = vmatprep.mubr.f32.mxu0 0.0
      %2591 = vmatmul.mubr.f32.gmra.mrb[0].mxu0 %v1263
      %v2592 = vpop.f32.mrb[0].mxu0
      %v2593 = vadd.f32 %v2368, %v2592
      %v2594 = vpop.f32.mrb[0].mxu0
      %2595 = vmatprep.mubr.f32.mxu0 0.0
      %2596 = vmatmul.mubr.f32.gmra.mrb[0].mxu0 %v1272
      %v2597 = vpop.f32.mrb[0].mxu0
      %v2598 = vadd.f32 %v2373, %v2597
      %v2599 = vpop.f32.mrb[0].mxu0
      %2600 = vmatprep.mubr.f32.mxu0 0.0
      %2601 = vmatmul.mubr.f32.gmra.mrb[0].mxu0 %v1281
      %v2602 = vpop.f32.mrb[0].mxu0
      %v2603 = vadd.f32 %v2378, %v2602
      %v2604 = vpop.f32.mrb[0].mxu0
      %2605 = vmatprep.mubr.f32.mxu0 0.0
      %2606 = vmatmul.mubr.f32.gmra.mrb[0].mxu0 %v1290
      %v2607 = vpop.f32.mrb[0].mxu0
      %v2608 = vadd.f32 %v2383, %v2607
      %v2609 = vpop.f32.mrb[0].mxu0
      %2610 = vmatprep.mubr.f32.mxu0 0.0
      %2611 = vmatmul.mubr.f32.gmra.mrb[0].mxu0 %v1299
      %v2612 = vpop.f32.mrb[0].mxu0
      %v2613 = vadd.f32 %v2388, %v2612
      %v2614 = vpop.f32.mrb[0].mxu0
      %2615 = vmatprep.mubr.f32.mxu0 0.0
      %2616 = vmatmul.mubr.f32.gmra.mrb[0].mxu0 %v1308
      %v2617 = vpop.f32.mrb[0].mxu0
      %v2618 = vadd.f32 %v2393, %v2617
      %v2619 = vpop.f32.mrb[0].mxu0
      %2620 = vmatprep.mubr.f32.mxu0 0.0
      %2621 = vmatmul.mubr.f32.gmra.mrb[0].mxu0 %v1317
      %v2622 = vpop.f32.mrb[0].mxu0
      %v2623 = vadd.f32 %v2398, %v2622
      %v2624 = vpop.f32.mrb[0].mxu0
      %2625 = vmatprep.mubr.f32.mxu0 0.0
      %2626 = vmatmul.mubr.f32.gmra.mrb[0].mxu0 %v1326
      %v2627 = vpop.f32.mrb[0].mxu0
      %v2628 = vadd.f32 %v2403, %v2627
      %v2629 = vpop.f32.mrb[0].mxu0
      %2630 = vmatprep.mubr.f32.mxu0 0.0
      %2631 = vmatmul.mubr.f32.gmra.mrb[0].mxu0 %v1335
      %v2632 = vpop.f32.mrb[0].mxu0
      %v2633 = vadd.f32 %v2408, %v2632
      %v2634 = vpop.f32.mrb[0].mxu0
      %2635 = vmatprep.mubr.f32.mxu0 0.0
      %2636 = vmatmul.mubr.f32.gmra.mrb[0].mxu0 %v1344
      %v2637 = vpop.f32.mrb[0].mxu0
      %v2638 = vadd.f32 %v2413, %v2637
      %v2639 = vpop.f32.mrb[0].mxu0
      %2640 = vmatprep.mubr.f32.mxu0 0.0
      %2641 = vmatmul.mubr.f32.gmra.mrb[0].mxu0 %v1353
      %v2642 = vpop.f32.mrb[0].mxu0
      %v2643 = vadd.f32 %v2418, %v2642
      %v2644 = vpop.f32.mrb[0].mxu0
      %2645 = vmatprep.mubr.f32.mxu0 0.0
      %2646 = vmatmul.mubr.f32.gmra.mrb[0].mxu0 %v1362
      %v2647 = vpop.f32.mrb[0].mxu0
      %v2648 = vadd.f32 %v2423, %v2647
      %v2649 = vpop.f32.mrb[0].mxu0
      %2650 = vmatprep.mubr.f32.mxu0 0.0
      %2651 = vmatmul.mubr.f32.gmra.mrb[0].mxu0 %v1371
      %v2652 = vpop.f32.mrb[0].mxu0
      %v2653 = vadd.f32 %v2428, %v2652
      %v2654 = vpop.f32.mrb[0].mxu0
      %2655 = vmatprep.mubr.f32.mxu0 0.0
      %2656 = vmatmul.mubr.f32.gmra.mrb[0].mxu0 %v1380
      %v2657 = vpop.f32.mrb[0].mxu0
      %v2658 = vadd.f32 %v2433, %v2657
      %v2659 = vpop.f32.mrb[0].mxu0
      %2660 = vmatprep.mubr.f32.mxu0 0.0
      %2661 = vmatmul.mubr.f32.gmra.mrb[0].mxu0 %v1389
      %v2662 = vpop.f32.mrb[0].mxu0
      %v2663 = vadd.f32 %v2438, %v2662
      %v2664 = vpop.f32.mrb[0].mxu0
      %2665 = vdwg.mxu0
      %2666 = vst [vmem:[%s263] sm:$0xff] %v2508
      %2667 = vst [vmem:[%s263 + $0x8] sm:$0xff] %v2513
      %2668 = vst [vmem:[%s263 + $0x10] sm:$0xff] %v2518
      %2669 = vst [vmem:[%s263 + $0x18] sm:$0xff] %v2523
      %2670 = vst [vmem:[%s263 + $0x20] sm:$0xff] %v2528
      %2671 = vst [vmem:[%s263 + $0x28] sm:$0xff] %v2533
      %2672 = vst [vmem:[%s263 + $0x30] sm:$0xff] %v2538
      %2673 = vst [vmem:[%s263 + $0x38] sm:$0xff] %v2543
      %2674 = vst [vmem:[%s263 + $0x40] sm:$0xff] %v2548
      %2675 = vst [vmem:[%s263 + $0x48] sm:$0xff] %v2553
      %2676 = vst [vmem:[%s263 + $0x50] sm:$0xff] %v2558
      %2677 = vst [vmem:[%s263 + $0x58] sm:$0xff] %v2563
      %2678 = vst [vmem:[%s263 + $0x60] sm:$0xff] %v2568
      %2679 = vst [vmem:[%s263 + $0x68] sm:$0xff] %v2573
      %2680 = vst [vmem:[%s263 + $0x70] sm:$0xff] %v2578
      %2681 = vst [vmem:[%s263 + $0x78] sm:$0xff] %v2583
      %2682 = vst [vmem:[%s263 + $0x80] sm:$0xff] %v2588
      %2683 = vst [vmem:[%s263 + $0x88] sm:$0xff] %v2593
      %2684 = vst [vmem:[%s263 + $0x90] sm:$0xff] %v2598
      %2685 = vst [vmem:[%s263 + $0x98] sm:$0xff] %v2603
      %2686 = vst [vmem:[%s263 + $0xa0] sm:$0xff] %v2608
      %2687 = vst [vmem:[%s263 + $0xa8] sm:$0xff] %v2613
      %2688 = vst [vmem:[%s263 + $0xb0] sm:$0xff] %v2618
      %2689 = vst [vmem:[%s263 + $0xb8] sm:$0xff] %v2623
      %2690 = vst [vmem:[%s263 + $0xc0] sm:$0xff] %v2628
      %2691 = vst [vmem:[%s263 + $0xc8] sm:$0xff] %v2633
      %2692 = vst [vmem:[%s263 + $0xd0] sm:$0xff] %v2638
      %2693 = vst [vmem:[%s263 + $0xd8] sm:$0xff] %v2643
      %2694 = vst [vmem:[%s263 + $0xe0] sm:$0xff] %v2648
      %2695 = vst [vmem:[%s263 + $0xe8] sm:$0xff] %v2653
      %2696 = vst [vmem:[%s263 + $0xf0] sm:$0xff] %v2658
      %2697 = vst [vmem:[%s263 + $0xf8] sm:$0xff] %v2663
      %v2698 = vadd.f32 %v2508, %v2513
      %v2699 = vadd.f32 %v2698, %v2518
      %v2700 = vadd.f32 %v2699, %v2523
      %v2701 = vadd.f32 %v2700, %v2528
      %v2702 = vadd.f32 %v2701, %v2533
      %v2703 = vadd.f32 %v2702, %v2538
      %v2704 = vadd.f32 %v2703, %v2543
      %v2705 = vadd.f32 %v2704, %v2548
      %v2706 = vadd.f32 %v2705, %v2553
      %v2707 = vadd.f32 %v2706, %v2558
      %v2708 = vadd.f32 %v2707, %v2563
      %v2709 = vadd.f32 %v2708, %v2568
      %v2710 = vadd.f32 %v2709, %v2573
      %v2711 = vadd.f32 %v2710, %v2578
      %v2712 = vadd.f32 %v2711, %v2583
      %v2713 = vadd.f32 %v2712, %v2588
      %v2714 = vadd.f32 %v2713, %v2593
      %v2715 = vadd.f32 %v2714, %v2598
      %v2716 = vadd.f32 %v2715, %v2603
      %v2717 = vadd.f32 %v2716, %v2608
      %v2718 = vadd.f32 %v2717, %v2613
      %v2719 = vadd.f32 %v2718, %v2618
      %v2720 = vadd.f32 %v2719, %v2623
      %v2721 = vadd.f32 %v2720, %v2628
      %v2722 = vadd.f32 %v2721, %v2633
      %v2723 = vadd.f32 %v2722, %v2638
      %v2724 = vadd.f32 %v2723, %v2643
      %v2725 = vadd.f32 %v2724, %v2648
      %v2726 = vadd.f32 %v2725, %v2653
      %v2727 = vadd.f32 %v2726, %v2658
      %v2728 = vadd.f32 %v2727, %v2663
      %v2729 = vrot.slane %v2728, 4
      %v2730 = vadd.f32 %v2728, %v2729
      %v2731 = vrot.slane %v2730, 2
      %v2732 = vadd.f32 %v2730, %v2731
      %v2733 = vrot.slane %v2732, 1
      %v2734 = vadd.f32 %v2732, %v2733
      %v2735 = vmul.f32 %v2508, %v2508
      %v2736 = vmul.f32 %v2513, %v2513
      %v2737 = vmul.f32 %v2518, %v2518
      %v2738 = vmul.f32 %v2523, %v2523
      %v2739 = vmul.f32 %v2528, %v2528
      %v2740 = vmul.f32 %v2533, %v2533
      %v2741 = vmul.f32 %v2538, %v2538
      %v2742 = vmul.f32 %v2543, %v2543
      %v2743 = vmul.f32 %v2548, %v2548
      %v2744 = vmul.f32 %v2553, %v2553
      %v2745 = vmul.f32 %v2558, %v2558
      %v2746 = vmul.f32 %v2563, %v2563
      %v2747 = vmul.f32 %v2568, %v2568
      %v2748 = vmul.f32 %v2573, %v2573
      %v2749 = vmul.f32 %v2578, %v2578
      %v2750 = vmul.f32 %v2583, %v2583
      %v2751 = vmul.f32 %v2588, %v2588
      %v2752 = vmul.f32 %v2593, %v2593
      %v2753 = vmul.f32 %v2598, %v2598
      %v2754 = vmul.f32 %v2603, %v2603
      %v2755 = vmul.f32 %v2608, %v2608
      %v2756 = vmul.f32 %v2613, %v2613
      %v2757 = vmul.f32 %v2618, %v2618
      %v2758 = vmul.f32 %v2623, %v2623
      %v2759 = vmul.f32 %v2628, %v2628
      %v2760 = vmul.f32 %v2633, %v2633
      %v2761 = vmul.f32 %v2638, %v2638
      %v2762 = vmul.f32 %v2643, %v2643
      %v2763 = vmul.f32 %v2648, %v2648
      %v2764 = vmul.f32 %v2653, %v2653
      %v2765 = vmul.f32 %v2658, %v2658
      %v2766 = vmul.f32 %v2663, %v2663
      %v2767 = vadd.f32 %v2735, %v2736
      %v2768 = vadd.f32 %v2767, %v2737
      %v2769 = vadd.f32 %v2768, %v2738
      %v2770 = vadd.f32 %v2769, %v2739
      %v2771 = vadd.f32 %v2770, %v2740
      %v2772 = vadd.f32 %v2771, %v2741
      %v2773 = vadd.f32 %v2772, %v2742
      %v2774 = vadd.f32 %v2773, %v2743
      %v2775 = vadd.f32 %v2774, %v2744
      %v2776 = vadd.f32 %v2775, %v2745
      %v2777 = vadd.f32 %v2776, %v2746
      %v2778 = vadd.f32 %v2777, %v2747
      %v2779 = vadd.f32 %v2778, %v2748
      %v2780 = vadd.f32 %v2779, %v2749
      %v2781 = vadd.f32 %v2780, %v2750
      %v2782 = vadd.f32 %v2781, %v2751
      %v2783 = vadd.f32 %v2782, %v2752
      %v2784 = vadd.f32 %v2783, %v2753
      %v2785 = vadd.f32 %v2784, %v2754
      %v2786 = vadd.f32 %v2785, %v2755
      %v2787 = vadd.f32 %v2786, %v2756
      %v2788 = vadd.f32 %v2787, %v2757
      %v2789 = vadd.f32 %v2788, %v2758
      %v2790 = vadd.f32 %v2789, %v2759
      %v2791 = vadd.f32 %v2790, %v2760
      %v2792 = vadd.f32 %v2791, %v2761
      %v2793 = vadd.f32 %v2792, %v2762
      %v2794 = vadd.f32 %v2793, %v2763
      %v2795 = vadd.f32 %v2794, %v2764
      %v2796 = vadd.f32 %v2795, %v2765
      %v2797 = vadd.f32 %v2796, %v2766
      %v2798 = vrot.slane %v2797, 4
      %v2799 = vadd.f32 %v2797, %v2798
      %v2800 = vrot.slane %v2799, 2
      %v2801 = vadd.f32 %v2799, %v2800
      %v2802 = vrot.slane %v2801, 1
      %v2803 = vadd.f32 %v2801, %v2802
      %vm2804 = vcmask 1040384
      %v2805 = vsel %vm2804, %v2734, %v2803
      %2806 = vst [vmem:[%s268] sm:$0x3] %v2805
      %s2807 = smul.u32 32, %s18
      %p2808 = scmp.lt.s32.totalorder %s2807, 63
      %s2809 = scalar_select %p2808, %s2807, 63
      %s2810 = smul.addr %s2809, 8
      %s2811 = scalar_lea.vmem %s5, %s2810
      %p2812 = scmp.lt.s32.totalorder %s18, 1
      %s2813 = scalar_select %p2812, %s18, 1
      %s2814 = smul.addr %s2813, 2
      %s2815 = scalar_lea.vmem %s6, %s2814
      // Predicated region
      $region41: #{block21d_forward.7} parent=39 // pred_check
        %p2816 = pneg %p146
      $region42: #{block21d_forward.7} parent=39 // pred_check_branch
        %2818 = sbr.rel (%p2816) target = $region44
      $region43: #{block21d_forward.7} parent=39 // pred_region
        %s2819 = smul.u32 32, %s18
      $region44: #{block21d_forward.7} parent=39 // pred_fallthru
        _
      // Predicated region
      $region45: #{block21d_forward.7} parent=39 // pred_check
        %p2820 = pneg %p172
      $region46: #{block21d_forward.7} parent=39 // pred_check_branch
        %2822 = sbr.rel (%p2820) target = $region48
      $region47: #{block21d_forward.7} parent=39 // pred_region
        _
      $region48: #{block21d_forward.7} parent=39 // pred_fallthru
        _
    $region40: #{block21d_forward.7} parent=5 // pred_fallthru
      _
    %p2823 = scmp.le.s32.totalorder 2, %s13
    // Predicated region
    $region49: #{block21d_forward.7} parent=5 // pred_check
      %p2824 = pneg %p2823
    $region50: #{block21d_forward.7} parent=5 // pred_check_branch
      %2826 = sbr.rel (%p2824) target = $region52
    $region51: #{block21d_forward.7} parent=5 // pred_region
      %s2827 = ssub.s32 %s13, 2
      // Predicated region
      $region53: #{block21d_forward.7} parent=51 // pred_check
        %p2828 = pneg %p152
      $region54: #{block21d_forward.7} parent=51 // pred_check_branch
        %2830 = sbr.rel (%p2828) target = $region56
      $region55: #{block21d_forward.7} parent=51 // pred_region
        %s2831 = smul.u32 32, %s19
        %p2832 = scmp.lt.s32.totalorder %s2831, 63
        %s2833 = scalar_select %p2832, %s2831, 63
        %s2834 = smul.addr %s2833, 8
        %s2835 = scalar_lea.vmem %s5, %s2834
      $region56: #{block21d_forward.7} parent=51 // pred_fallthru
        _
      // Predicated region
      $region57: #{block21d_forward.7} parent=51 // pred_check
        %p2836 = pneg %p178
      $region58: #{block21d_forward.7} parent=51 // pred_check_branch
        %2838 = sbr.rel (%p2836) target = $region60
      $region59: #{block21d_forward.7} parent=51 // pred_region
        %p2839 = scmp.lt.s32.totalorder %s19, 1
        %s2840 = scalar_select %p2839, %s19, 1
        %s2841 = smul.addr %s2840, 2
        %s2842 = scalar_lea.vmem %s6, %s2841
      $region60: #{block21d_forward.7} parent=51 // pred_fallthru
        _
    $region52: #{block21d_forward.7} parent=5 // pred_fallthru
      _
  $region6: #{block21d_forward.7} parent=0 // loop_footer
    %s17 = sadd.s32 1, %s13
  $region7: #{block21d_forward.7} parent=0 // loop_footer_branch
    %12 = sbr.rel target = $region3
  $region8: #{block21d_forward.7} parent=0 // loop_exit
    _

</llo_original>
